<compile_context>
chip_gen: v6e
topology: v6e:2x2x1
jax: 0.10.0
libtpu: 0.0.40
codegen_flags: <defaults>
</compile_context>

<pallas_src>
import math

import jax
import jax.numpy as jnp
from jax.experimental import pallas as pl
from jax.experimental.pallas import tpu as pltpu


# -------------------- small (synthetic) MobileBERT config --------------------
VOCAB = 64
EMB = 128            # MobileBERT embedding_size
HIDDEN = 512         # MobileBERT hidden_size (== D_in of the classifier head)
INTRA = 128          # intra_bottleneck_size (true_hidden_size)
HEADS = 4
HEAD_DIM = INTRA // HEADS
INTER = 512          # intermediate_size
NUM_LAYERS = 2       # TODO(synk): real google/mobilebert-uncased has 24 layers; reduced for the demo
NUM_FFN = 4          # num_feedforward_networks (3 FFN blocks + layer intermediate/output)
MAX_POS = 64


# -------------------- fused model kernel (grid = (batch_blocks, layers)) --------------------
def _fused_kernel(mask_ref, tri_ref, pt_ref, emb_w_ref, emb_vp_ref,
                  w_h2_ref, vp_h2_ref,
                  w_qk_ref, vp_qk_ref,
                  w_ao_ref, vp_ao_ref,
                  w_fi_ref, vp_fi_ref,
                  w_fo_ref, vp_fo_ref,
                  w_ob_ref, vp_ob_ref,
                  pool_w_ref, head_vp_ref,
                  logits_ref, h_acc):
    """Embeddings (l==0) + one MobileBERT layer per grid step + pooler/classifier (l==last).

    The hidden state for the current batch block stays resident in the VMEM scratch
    `h_acc` across the (arbitrary) layer axis."""
    bf16 = jnp.bfloat16
    layer = pl.program_id(1)
    Bt, S, _ = h_acc.shape
    M = Bt * S

    # ---- embedding transform: NoNorm((trigram @ W + b) + (pos + type)) at layer 0 ----
    @pl.when(layer == 0)
    def _():
        vp = emb_vp_ref[...]                                  # (3, HIDDEN): bias/gamma/beta
        tri = tri_ref[...].reshape(M, 3 * EMB)                # bf16
        y = jnp.dot(tri, emb_w_ref[...], preferred_element_type=jnp.float32) + vp[0:1, :]
        y3 = y.reshape(Bt, S, HIDDEN) + pt_ref[...][None, :, :]
        h_acc[...] = y3 * vp[1:2, :][None, :, :] + vp[2:3, :][None, :, :]
        # TODO(synk): embedding dropout is identity at inference time.

    # NOTE: this read must stay after the @pl.when(layer == 0) init above.
    h2 = h_acc[...].reshape(M, HIDDEN)                        # (M, HIDDEN) f32

    # ---- merged bottleneck-in | shared-QK | value projection: one (512 x 384) matmul ----
    vp = vp_h2_ref[...]                                       # (3, 3*INTRA): bias/gamma/beta
    proj = jnp.dot(h2.astype(bf16), w_h2_ref[...], preferred_element_type=jnp.float32)
    proj = (proj + vp[0:1, :]) * vp[1:2, :] + vp[2:3, :]      # NoNorm (identity on V slice)
    layer_input = proj[:, 0:INTRA]                            # bottleneck input (NoNorm'ed)
    shared_qk = proj[:, INTRA:2 * INTRA]                      # shared query/key bottleneck
    v_act = proj[:, 2 * INTRA:3 * INTRA]                      # value (from full hidden)

    # ---- merged Q | K projection from the shared bottleneck: one (128 x 256) matmul ----
    qk = jnp.dot(shared_qk.astype(bf16), w_qk_ref[...],
                 preferred_element_type=jnp.float32) + vp_qk_ref[...]
    q = qk[:, 0:INTRA]
    k = qk[:, INTRA:2 * INTRA]

    # ---- multi-head self-attention: per-head matmuls batched over the folded batch axis,
    #      bf16 MXU operands, single K=128 attn_out matmul on concatenated contexts ----
    bias = mask_ref[...]                                      # (Bt, 1, S) additive mask bias
    scale = 1.0 / math.sqrt(HEAD_DIM)
    ctx_heads = []
    for h in range(HEADS):                                    # statically unrolled (4 heads)
        sl = slice(h * HEAD_DIM, (h + 1) * HEAD_DIM)
        qh = q[:, sl].reshape(Bt, S, HEAD_DIM).astype(bf16)
        kh = k[:, sl].reshape(Bt, S, HEAD_DIM).astype(bf16)
        vh = v_act[:, sl].reshape(Bt, S, HEAD_DIM).astype(bf16)
        s = jnp.einsum("bqd,bkd->bqk", qh, kh,
                       preferred_element_type=jnp.float32) * scale
        s = s + bias
        s = s - jnp.max(s, axis=-1, keepdims=True)
        p = jnp.exp(s)
        lsum = jnp.sum(p, axis=-1, keepdims=True)             # (Bt, S, 1)
        ctx = jnp.einsum("bqk,bkd->bqd", p.astype(bf16), vh,
                         preferred_element_type=jnp.float32)
        # normalize after p@v (S*D elems); epsilon guards the approx reciprocal
        ctx_heads.append(ctx * pl.reciprocal(lsum + 1e-20, approx=True))
    ctx = jnp.concatenate(ctx_heads, axis=-1).reshape(M, INTRA)

    attn = jnp.dot(ctx.astype(bf16), w_ao_ref[...], preferred_element_type=jnp.float32)
    vp = vp_ao_ref[...]                                       # (3, INTRA)
    x = ((attn + vp[0:1, :]) + layer_input) * vp[1:2, :] + vp[2:3, :]

    # ---- stacked FFNs (3 bottleneck FFNs + layer intermediate/output) ----
    vp_fi = vp_fi_ref[...]                                    # (NUM_FFN, INTER) biases
    vp_fo = vp_fo_ref[...]                                    # (3*NUM_FFN, INTRA) bias/g/b
    for f in range(NUM_FFN):
        wi = w_fi_ref[f * INTRA:(f + 1) * INTRA, :]           # (INTRA, INTER) bf16
        inter = jnp.maximum(
            jnp.dot(x.astype(bf16), wi, preferred_element_type=jnp.float32)
            + vp_fi[f:f + 1, :], 0.0)
        wo = w_fo_ref[f * INTER:(f + 1) * INTER, :]           # (INTER, INTRA) bf16
        y = jnp.dot(inter.astype(bf16), wo, preferred_element_type=jnp.float32)
        x = ((y + vp_fo[3 * f:3 * f + 1, :]) + x) * vp_fo[3 * f + 1:3 * f + 2, :] \
            + vp_fo[3 * f + 2:3 * f + 3, :]

    # ---- bottleneck-out back to HIDDEN, residual on the full hidden ----
    y = jnp.dot(x.astype(bf16), w_ob_ref[...], preferred_element_type=jnp.float32)
    vp = vp_ob_ref[...]                                       # (3, HIDDEN)
    h_acc[...] = (((y + vp[0:1, :]) + h2) * vp[1:2, :] + vp[2:3, :]).reshape(Bt, S, HIDDEN)

    # ---- tanh pooler + classifier head on the final hidden state (fused) ----
    @pl.when(layer == pl.num_programs(1) - 1)
    def _():
        hvp = head_vp_ref[...]                                # rows: pooler_b | cls_w | cls_b
        h_first = h_acc[...][:, 0, :]                         # [CLS] rows, (Bt, HIDDEN)
        pooled = jnp.tanh(
            jnp.dot(h_first.astype(bf16), pool_w_ref[...],
                    preferred_element_type=jnp.float32) + hvp[0:1, :])
        # TODO(synk): nn.Dropout(0.2) of the classifier head is identity at inference time.
        logit = jnp.sum(pooled * hvp[1:2, :], axis=-1, keepdims=True) + hvp[2:3, 0:1]
        logits_ref[...] = jnp.broadcast_to(logit, logits_ref.shape)   # lane-dense (Bt, 128)


def _pick_bt(batch, seq, target_rows=256):
    """Fold as many batch items as possible into the M tile (target ~256 rows)."""
    bt = max(1, min(batch, target_rows // max(seq, 1)))
    while batch % bt:
        bt -= 1
    return bt


def run_model(pp, trigram, pos_type, mask_bias):
    B, S, _ = trigram.shape
    L = pp["w_h2"].shape[0]
    Bt = _pick_bt(B, S)
    nb = B // Bt

    bmap3 = lambda b, l: (b, 0, 0)       # batch-block tiles
    wmap3 = lambda b, l: (l, 0, 0)       # per-layer stacked params (leading L squeezed)
    cmap2 = lambda b, l: (0, 0)          # constant (fetched once)

    grid_spec = pltpu.PrefetchScalarGridSpec(
        num_scalar_prefetch=0,
        grid=(nb, L),
        in_specs=[
            pl.BlockSpec((Bt, 1, S), bmap3),                    # additive mask bias
            pl.BlockSpec((Bt, S, 3 * EMB), bmap3),              # trigram embeddings (bf16)
            pl.BlockSpec((S, HIDDEN), cmap2),                   # pos + type embedding
            pl.BlockSpec((3 * EMB, HIDDEN), cmap2),             # embedding dense W
            pl.BlockSpec((3, HIDDEN), cmap2),                   # embedding bias/gamma/beta
            pl.BlockSpec((None, HIDDEN, 3 * INTRA), wmap3),     # merged bn_in|bn_qk|V
            pl.BlockSpec((None, 3, 3 * INTRA), wmap3),
            pl.BlockSpec((None, INTRA, 2 * INTRA), wmap3),      # merged Q|K
            pl.BlockSpec((None, 1, 2 * INTRA), wmap3),
            pl.BlockSpec((None, INTRA, INTRA), wmap3),          # attn_out
            pl.BlockSpec((None, 3, INTRA), wmap3),
            pl.BlockSpec((None, NUM_FFN * INTRA, INTER), wmap3),  # stacked FFN in
            pl.BlockSpec((None, NUM_FFN, INTER), wmap3),
            pl.BlockSpec((None, NUM_FFN * INTER, INTRA), wmap3),  # stacked FFN out
            pl.BlockSpec((None, 3 * NUM_FFN, INTRA), wmap3),
            pl.BlockSpec((None, INTRA, HIDDEN), wmap3),         # bottleneck out
            pl.BlockSpec((None, 3, HIDDEN), wmap3),
            pl.BlockSpec((HIDDEN, HIDDEN), cmap2),              # pooler W
            pl.BlockSpec((3, HIDDEN), cmap2),                   # pooler_b | cls_w | cls_b
        ],
        out_specs=pl.BlockSpec((Bt, 128), lambda b, l: (b, 0)), # lane-dense logit slab
        scratch_shapes=[pltpu.VMEM((Bt, S, HIDDEN), jnp.float32)],
    )
    return pl.pallas_call(
        _fused_kernel,
        out_shape=jax.ShapeDtypeStruct((B, 128), jnp.float32),
        grid_spec=grid_spec,
        compiler_params=pltpu.CompilerParams(
            dimension_semantics=("parallel", "arbitrary"),
            vmem_limit_bytes=48 * 1024 * 1024),
    )(mask_bias, trigram, pos_type, pp["emb_w"], pp["emb_vp"],
      pp["w_h2"], pp["vp_h2"], pp["w_qk"], pp["vp_qk"],
      pp["w_ao"], pp["vp_ao"], pp["w_fi"], pp["vp_fi"],
      pp["w_fo"], pp["vp_fo"], pp["w_ob"], pp["vp_ob"],
      pp["pooler_w"], pp["head_vp"])


# -------------------- deterministic synthetic parameters --------------------
# TODO(synk): the PyTorch module loads 'google/mobilebert-uncased' weights; here
# parameters are initialized deterministically in-script instead.
def _dense_init(key, fan_in, fan_out):
    return {"w": 0.02 * jax.random.normal(key, (fan_in, fan_out), jnp.float32),
            "b": jnp.zeros((fan_out,), jnp.float32)}


def _nonorm_init(dim):
    return {"g": jnp.ones((dim,), jnp.float32), "b": jnp.zeros((dim,), jnp.float32)}


def init_params(key):
    keys = iter(jax.random.split(key, 256))
    p = {}
    p["word_emb"] = 0.02 * jax.random.normal(next(keys), (VOCAB, EMB), jnp.float32)
    p["pos_emb"] = 0.02 * jax.random.normal(next(keys), (MAX_POS, HIDDEN), jnp.float32)
    p["type_emb"] = 0.02 * jax.random.normal(next(keys), (2, HIDDEN), jnp.float32)
    p["emb_transform"] = _dense_init(next(keys), 3 * EMB, HIDDEN)
    p["emb_norm"] = _nonorm_init(HIDDEN)
    layers = []
    for _ in range(NUM_LAYERS):
        layers.append({
            "bn_in": _dense_init(next(keys), HIDDEN, INTRA),
            "bn_in_norm": _nonorm_init(INTRA),
            "bn_qk": _dense_init(next(keys), HIDDEN, INTRA),
            "bn_qk_norm": _nonorm_init(INTRA),
            "q": _dense_init(next(keys), INTRA, INTRA),
            "k": _dense_init(next(keys), INTRA, INTRA),
            "v": _dense_init(next(keys), HIDDEN, INTRA),
            "attn_out": _dense_init(next(keys), INTRA, INTRA),
            "attn_out_norm": _nonorm_init(INTRA),
            "ffn": [{"inter": _dense_init(next(keys), INTRA, INTER),
                     "out": _dense_init(next(keys), INTER, INTRA),
                     "norm": _nonorm_init(INTRA)} for _ in range(NUM_FFN - 1)],
            "intermediate": _dense_init(next(keys), INTRA, INTER),
            "output": _dense_init(next(keys), INTER, INTRA),
            "output_norm": _nonorm_init(INTRA),
            "out_bottleneck": _dense_init(next(keys), INTRA, HIDDEN),
            "out_bottleneck_norm": _nonorm_init(HIDDEN),
        })
    p["layers"] = layers
    p["pooler"] = _dense_init(next(keys), HIDDEN, HIDDEN)
    p["classifier_w"] = 0.02 * jax.random.normal(next(keys), (1, HIDDEN), jnp.float32)
    p["classifier_b"] = jnp.zeros((1, 1), jnp.float32)
    return p


def pack_params(p):
    """Stack per-layer weights on a leading L axis; matmul weights -> bf16, vectors stay f32."""
    bf16 = jnp.bfloat16
    layers = p["layers"]
    ones, zeros = jnp.ones((INTRA,), jnp.float32), jnp.zeros((INTRA,), jnp.float32)

    def stack(fn):
        return jnp.stack([fn(l) for l in layers], axis=0)

    def ffn_blocks(l):
        blocks = [(f["inter"], f["out"], f["norm"]) for f in l["ffn"]]
        blocks.append((l["intermediate"], l["output"], l["output_norm"]))
        return blocks

    pp = {
        "word_emb": p["word_emb"], "pos_emb": p["pos_emb"], "type_emb": p["type_emb"],
        "emb_w": p["emb_transform"]["w"].astype(bf16),
        "emb_vp": jnp.stack([p["emb_transform"]["b"],
                             p["emb_norm"]["g"], p["emb_norm"]["b"]]),
        # merged bn_in | bn_qk | V projection (gamma=1, beta=0 on the V slice)
        "w_h2": stack(lambda l: jnp.concatenate(
            [l["bn_in"]["w"], l["bn_qk"]["w"], l["v"]["w"]], axis=1)).astype(bf16),
        "vp_h2": stack(lambda l: jnp.stack([
            jnp.concatenate([l["bn_in"]["b"], l["bn_qk"]["b"], l["v"]["b"]]),
            jnp.concatenate([l["bn_in_norm"]["g"], l["bn_qk_norm"]["g"], ones]),
            jnp.concatenate([l["bn_in_norm"]["b"], l["bn_qk_norm"]["b"], zeros])])),
        # merged Q | K projection
        "w_qk": stack(lambda l: jnp.concatenate(
            [l["q"]["w"], l["k"]["w"]], axis=1)).astype(bf16),
        "vp_qk": stack(lambda l: jnp.concatenate([l["q"]["b"], l["k"]["b"]])[None, :]),
        "w_ao": stack(lambda l: l["attn_out"]["w"]).astype(bf16),
        "vp_ao": stack(lambda l: jnp.stack(
            [l["attn_out"]["b"], l["attn_out_norm"]["g"], l["attn_out_norm"]["b"]])),
        # 4 FFN blocks stacked along rows
        "w_fi": stack(lambda l: jnp.concatenate(
            [b[0]["w"] for b in ffn_blocks(l)], axis=0)).astype(bf16),
        "vp_fi": stack(lambda l: jnp.stack([b[0]["b"] for b in ffn_blocks(l)])),
        "w_fo": stack(lambda l: jnp.concatenate(
            [b[1]["w"] for b in ffn_blocks(l)], axis=0)).astype(bf16),
        "vp_fo": stack(lambda l: jnp.concatenate(
            [jnp.stack([b[1]["b"], b[2]["g"], b[2]["b"]]) for b in ffn_blocks(l)], axis=0)),
        "w_ob": stack(lambda l: l["out_bottleneck"]["w"]).astype(bf16),
        "vp_ob": stack(lambda l: jnp.stack(
            [l["out_bottleneck"]["b"], l["out_bottleneck_norm"]["g"],
             l["out_bottleneck_norm"]["b"]])),
        "pooler_w": p["pooler"]["w"].astype(bf16),
        # head_vp rows: pooler bias | classifier weight | classifier bias (broadcast)
        "head_vp": jnp.stack([p["pooler"]["b"],
                              p["classifier_w"][0],
                              jnp.broadcast_to(p["classifier_b"].reshape(()), (HIDDEN,))]),
    }
    return pp


# -------------------- forward pass --------------------
def mobilebert_classifier_forward(pp, input_ids, attention_mask):
    B, S = input_ids.shape
    f32 = jnp.float32

    # embedding gathers / trigram concat are glue; the dense + NoNorm runs in the kernel
    we = jnp.take(pp["word_emb"], input_ids, axis=0)                   # (B, S, EMB)
    left = jnp.pad(we[:, 1:], ((0, 0), (0, 1), (0, 0)))                # next-token
    right = jnp.pad(we[:, :-1], ((0, 0), (1, 0), (0, 0)))              # prev-token
    trigram = jnp.concatenate([left, we, right], axis=-1).astype(jnp.bfloat16)
    pos_type = (pp["pos_emb"][:S] + pp["type_emb"][0]).astype(f32)     # (S, HIDDEN), type_ids==0
    mask_bias = ((1.0 - attention_mask.astype(f32)) * -1e9).reshape(B, 1, S)

    logits_slab = run_model(pp, trigram, pos_type, mask_bias)          # (B, 128) lane-dense
    return logits_slab[:, 0]                                           # matches outputs.squeeze()


if __name__ == "__main__":
    key = jax.random.PRNGKey(0)
    pkey, ikey = jax.random.split(key)
    packed = pack_params(init_params(pkey))

    B, S = 2, 8
    input_ids = jax.random.randint(ikey, (B, S), 0, VOCAB, dtype=jnp.int32)
    attention_masks = jnp.array([[1] * S, [1] * 5 + [0] * (S - 5)], dtype=jnp.int32)

    fwd = jax.jit(mobilebert_classifier_forward)
    out = jax.block_until_ready(fwd(packed, input_ids, attention_masks))
    assert out.shape == (B,) and out.dtype == jnp.float32
    print("KERNEL_OK")
</pallas_src>

<mosaic_0001>
module attributes {stable_mosaic.version = 11 : i64} {
  func.func @_fused_kernel(%arg0: i32, %arg1: i32, %arg2: memref<2x1x8xf32, #tpu.memory_space<vmem>>, %arg3: memref<2x8x384xbf16, #tpu.memory_space<vmem>>, %arg4: memref<8x512xf32, #tpu.memory_space<vmem>>, %arg5: memref<384x512xbf16, #tpu.memory_space<vmem>>, %arg6: memref<3x512xf32, #tpu.memory_space<vmem>>, %arg7: memref<1x512x384xbf16, #tpu.memory_space<vmem>>, %arg8: memref<1x3x384xf32, #tpu.memory_space<vmem>>, %arg9: memref<1x128x256xbf16, #tpu.memory_space<vmem>>, %arg10: memref<1x1x256xf32, #tpu.memory_space<vmem>>, %arg11: memref<1x128x128xbf16, #tpu.memory_space<vmem>>, %arg12: memref<1x3x128xf32, #tpu.memory_space<vmem>>, %arg13: memref<1x512x512xbf16, #tpu.memory_space<vmem>>, %arg14: memref<1x4x512xf32, #tpu.memory_space<vmem>>, %arg15: memref<1x2048x128xbf16, #tpu.memory_space<vmem>>, %arg16: memref<1x12x128xf32, #tpu.memory_space<vmem>>, %arg17: memref<1x128x512xbf16, #tpu.memory_space<vmem>>, %arg18: memref<1x3x512xf32, #tpu.memory_space<vmem>>, %arg19: memref<512x512xbf16, #tpu.memory_space<vmem>>, %arg20: memref<3x512xf32, #tpu.memory_space<vmem>>, %arg21: memref<2x128xf32, #tpu.memory_space<vmem>>, %arg22: memref<2x8x512xf32, #tpu.memory_space<vmem>>) attributes {dimension_semantics = [#tpu.dimension_semantics<parallel>, #tpu.dimension_semantics<arbitrary>], iteration_bounds = array<i64: 1, 2>, scalar_prefetch = 0 : i64, scratch_operands = 1 : i64, tpu.core_type = #tpu.core_type<tc>, window_params = [{transform_indices = @transform_0, window_bounds = array<i64: 2, 1, 8>}, {transform_indices = @transform_1, window_bounds = array<i64: 2, 8, 384>}, {pipeline_mode = #tpu.pipeline_mode<synchronous>, transform_indices = @transform_2, window_bounds = array<i64: 8, 512>}, {pipeline_mode = #tpu.pipeline_mode<synchronous>, transform_indices = @transform_3, window_bounds = array<i64: 384, 512>}, {pipeline_mode = #tpu.pipeline_mode<synchronous>, transform_indices = @transform_4, window_bounds = array<i64: 3, 512>}, {transform_indices = @transform_5, window_bounds = array<i64: 1, 512, 384>}, {transform_indices = @transform_6, window_bounds = array<i64: 1, 3, 384>}, {transform_indices = @transform_7, window_bounds = array<i64: 1, 128, 256>}, {transform_indices = @transform_8, window_bounds = array<i64: 1, 1, 256>}, {transform_indices = @transform_9, window_bounds = array<i64: 1, 128, 128>}, {transform_indices = @transform_10, window_bounds = array<i64: 1, 3, 128>}, {transform_indices = @transform_11, window_bounds = array<i64: 1, 512, 512>}, {transform_indices = @transform_12, window_bounds = array<i64: 1, 4, 512>}, {transform_indices = @transform_13, window_bounds = array<i64: 1, 2048, 128>}, {transform_indices = @transform_14, window_bounds = array<i64: 1, 12, 128>}, {transform_indices = @transform_15, window_bounds = array<i64: 1, 128, 512>}, {transform_indices = @transform_16, window_bounds = array<i64: 1, 3, 512>}, {pipeline_mode = #tpu.pipeline_mode<synchronous>, transform_indices = @transform_17, window_bounds = array<i64: 512, 512>}, {pipeline_mode = #tpu.pipeline_mode<synchronous>, transform_indices = @transform_18, window_bounds = array<i64: 3, 512>}, {transform_indices = @transform_19, window_bounds = array<i64: 2, 128>}]} {
    %c0_i32 = arith.constant 0 : i32
    %0 = arith.cmpi eq, %arg1, %c0_i32 : i32
    %1 = arith.extui %0 : i1 to i32
    %c0_i32_0 = arith.constant 0 : i32
    %2 = arith.cmpi ne, %1, %c0_i32_0 : i32
    scf.if %2 {
      %c0_97 = arith.constant 0 : index
      %c0_98 = arith.constant 0 : index
      %281 = vector.load %arg6[%c0_97, %c0_98] : memref<3x512xf32, #tpu.memory_space<vmem>>, vector<3x512xf32>
      %c0_99 = arith.constant 0 : index
      %c0_100 = arith.constant 0 : index
      %c0_101 = arith.constant 0 : index
      %282 = vector.load %arg3[%c0_99, %c0_100, %c0_101] : memref<2x8x384xbf16, #tpu.memory_space<vmem>>, vector<2x8x384xbf16>
      %283 = vector.shape_cast %282 : vector<2x8x384xbf16> to vector<16x384xbf16>
      %c0_102 = arith.constant 0 : index
      %c0_103 = arith.constant 0 : index
      %284 = vector.load %arg5[%c0_102, %c0_103] : memref<384x512xbf16, #tpu.memory_space<vmem>>, vector<384x512xbf16>
      %cst_104 = arith.constant dense<0.000000e+00> : vector<16x512xf32>
      %285 = tpu.matmul %283, %284, %cst_104 {dimension_numbers = #tpu.dot_dimension_numbers<[1], [0], [0], [1], [0, 0, 1, 1], [], []>} : vector<16x384xbf16>, vector<384x512xbf16>, vector<16x512xf32> -> vector<16x512xf32>
      %286 = vector.extract_strided_slice %281 {offsets = [0, 0], sizes = [1, 512], strides = [1, 1]} : vector<3x512xf32> to vector<1x512xf32>
      %287 = vector.broadcast %286 : vector<1x512xf32> to vector<16x512xf32>
      %288 = arith.addf %285, %287 : vector<16x512xf32>
      %289 = vector.shape_cast %288 : vector<16x512xf32> to vector<2x8x512xf32>
      %c0_105 = arith.constant 0 : index
      %c0_106 = arith.constant 0 : index
      %290 = vector.load %arg4[%c0_105, %c0_106] : memref<8x512xf32, #tpu.memory_space<vmem>>, vector<8x512xf32>
      %291 = vector.shape_cast %290 : vector<8x512xf32> to vector<1x8x512xf32>
      %292 = vector.broadcast %291 : vector<1x8x512xf32> to vector<2x8x512xf32>
      %293 = arith.addf %289, %292 : vector<2x8x512xf32>
      %294 = vector.extract_strided_slice %281 {offsets = [1, 0], sizes = [1, 512], strides = [1, 1]} : vector<3x512xf32> to vector<1x512xf32>
      %295 = vector.shape_cast %294 : vector<1x512xf32> to vector<1x1x512xf32>
      %296 = vector.broadcast %295 : vector<1x1x512xf32> to vector<2x8x512xf32>
      %297 = arith.mulf %293, %296 : vector<2x8x512xf32>
      %298 = vector.extract_strided_slice %281 {offsets = [2, 0], sizes = [1, 512], strides = [1, 1]} : vector<3x512xf32> to vector<1x512xf32>
      %299 = vector.shape_cast %298 : vector<1x512xf32> to vector<1x1x512xf32>
      %300 = vector.broadcast %299 : vector<1x1x512xf32> to vector<2x8x512xf32>
      %301 = arith.addf %297, %300 : vector<2x8x512xf32>
      %c0_107 = arith.constant 0 : index
      %c0_108 = arith.constant 0 : index
      %c0_109 = arith.constant 0 : index
      %302 = vector.load %arg22[%c0_107, %c0_108, %c0_109] : memref<2x8x512xf32, #tpu.memory_space<vmem>>, vector<2x8x512xf32>
      tpu.vector_store %arg22[%c0_107, %c0_108, %c0_109], %301 {strides = array<i32>} : memref<2x8x512xf32, #tpu.memory_space<vmem>>, vector<2x8x512xf32>,
    } else {
    }
    %c0 = arith.constant 0 : index
    %c0_1 = arith.constant 0 : index
    %c0_2 = arith.constant 0 : index
    %3 = vector.load %arg22[%c0, %c0_1, %c0_2] : memref<2x8x512xf32, #tpu.memory_space<vmem>>, vector<2x8x512xf32>
    %4 = vector.shape_cast %3 : vector<2x8x512xf32> to vector<16x512xf32>
    %c0_3 = arith.constant 0 : index
    %c0_4 = arith.constant 0 : index
    %c0_5 = arith.constant 0 : index
    %5 = vector.load %arg8[%c0_3, %c0_4, %c0_5] : memref<1x3x384xf32, #tpu.memory_space<vmem>>, vector<1x3x384xf32>
    %6 = vector.shape_cast %5 : vector<1x3x384xf32> to vector<3x384xf32>
    %7 = arith.truncf %4 : vector<16x512xf32> to vector<16x512xbf16>
    %c0_6 = arith.constant 0 : index
    %c0_7 = arith.constant 0 : index
    %c0_8 = arith.constant 0 : index
    %8 = vector.load %arg7[%c0_6, %c0_7, %c0_8] : memref<1x512x384xbf16, #tpu.memory_space<vmem>>, vector<1x512x384xbf16>
    %9 = vector.shape_cast %8 : vector<1x512x384xbf16> to vector<512x384xbf16>
    %cst = arith.constant dense<0.000000e+00> : vector<16x384xf32>
    %10 = tpu.matmul %7, %9, %cst {dimension_numbers = #tpu.dot_dimension_numbers<[1], [0], [0], [1], [0, 0, 1, 1], [], []>} : vector<16x512xbf16>, vector<512x384xbf16>, vector<16x384xf32> -> vector<16x384xf32>
    %11 = vector.extract_strided_slice %6 {offsets = [0, 0], sizes = [1, 384], strides = [1, 1]} : vector<3x384xf32> to vector<1x384xf32>
    %12 = vector.broadcast %11 : vector<1x384xf32> to vector<16x384xf32>
    %13 = arith.addf %10, %12 : vector<16x384xf32>
    %14 = vector.extract_strided_slice %6 {offsets = [1, 0], sizes = [1, 384], strides = [1, 1]} : vector<3x384xf32> to vector<1x384xf32>
    %15 = vector.broadcast %14 : vector<1x384xf32> to vector<16x384xf32>
    %16 = arith.mulf %13, %15 : vector<16x384xf32>
    %17 = vector.extract_strided_slice %6 {offsets = [2, 0], sizes = [1, 384], strides = [1, 1]} : vector<3x384xf32> to vector<1x384xf32>
    %18 = vector.broadcast %17 : vector<1x384xf32> to vector<16x384xf32>
    %19 = arith.addf %16, %18 : vector<16x384xf32>
    %20 = vector.extract_strided_slice %19 {offsets = [0, 0], sizes = [16, 128], strides = [1, 1]} : vector<16x384xf32> to vector<16x128xf32>
    %21 = vector.extract_strided_slice %19 {offsets = [0, 128], sizes = [16, 128], strides = [1, 1]} : vector<16x384xf32> to vector<16x128xf32>
    %22 = vector.extract_strided_slice %19 {offsets = [0, 256], sizes = [16, 128], strides = [1, 1]} : vector<16x384xf32> to vector<16x128xf32>
    %23 = arith.truncf %21 : vector<16x128xf32> to vector<16x128xbf16>
    %c0_9 = arith.constant 0 : index
    %c0_10 = arith.constant 0 : index
    %c0_11 = arith.constant 0 : index
    %24 = vector.load %arg9[%c0_9, %c0_10, %c0_11] : memref<1x128x256xbf16, #tpu.memory_space<vmem>>, vector<1x128x256xbf16>
    %25 = vector.shape_cast %24 : vector<1x128x256xbf16> to vector<128x256xbf16>
    %cst_12 = arith.constant dense<0.000000e+00> : vector<16x256xf32>
    %26 = tpu.matmul %23, %25, %cst_12 {dimension_numbers = #tpu.dot_dimension_numbers<[1], [0], [0], [1], [0, 0, 1, 1], [], []>} : vector<16x128xbf16>, vector<128x256xbf16>, vector<16x256xf32> -> vector<16x256xf32>
    %c0_13 = arith.constant 0 : index
    %c0_14 = arith.constant 0 : index
    %c0_15 = arith.constant 0 : index
    %27 = vector.load %arg10[%c0_13, %c0_14, %c0_15] : memref<1x1x256xf32, #tpu.memory_space<vmem>>, vector<1x1x256xf32>
    %28 = vector.shape_cast %27 : vector<1x1x256xf32> to vector<1x256xf32>
    %29 = vector.broadcast %28 : vector<1x256xf32> to vector<16x256xf32>
    %30 = arith.addf %26, %29 : vector<16x256xf32>
    %31 = vector.extract_strided_slice %30 {offsets = [0, 0], sizes = [16, 128], strides = [1, 1]} : vector<16x256xf32> to vector<16x128xf32>
    %32 = vector.extract_strided_slice %30 {offsets = [0, 128], sizes = [16, 128], strides = [1, 1]} : vector<16x256xf32> to vector<16x128xf32>
    %c0_16 = arith.constant 0 : index
    %c0_17 = arith.constant 0 : index
    %c0_18 = arith.constant 0 : index
    %33 = vector.load %arg2[%c0_16, %c0_17, %c0_18] : memref<2x1x8xf32, #tpu.memory_space<vmem>>, vector<2x1x8xf32>
    %34 = vector.extract_strided_slice %31 {offsets = [0, 0], sizes = [16, 32], strides = [1, 1]} : vector<16x128xf32> to vector<16x32xf32>
    %35 = vector.shape_cast %34 : vector<16x32xf32> to vector<2x8x32xf32>
    %36 = arith.truncf %35 : vector<2x8x32xf32> to vector<2x8x32xbf16>
    %37 = vector.extract_strided_slice %32 {offsets = [0, 0], sizes = [16, 32], strides = [1, 1]} : vector<16x128xf32> to vector<16x32xf32>
    %38 = vector.shape_cast %37 : vector<16x32xf32> to vector<2x8x32xf32>
    %39 = arith.truncf %38 : vector<2x8x32xf32> to vector<2x8x32xbf16>
    %40 = vector.extract_strided_slice %22 {offsets = [0, 0], sizes = [16, 32], strides = [1, 1]} : vector<16x128xf32> to vector<16x32xf32>
    %41 = vector.shape_cast %40 : vector<16x32xf32> to vector<2x8x32xf32>
    %42 = arith.truncf %41 : vector<2x8x32xf32> to vector<2x8x32xbf16>
    "tpu.trace_start"() <{level = 10 : i32, message = "bqd,bkd->bqk"}> : () -> ()
    %cst_19 = arith.constant dense<0.000000e+00> : vector<2x8x8xf32>
    %43 = tpu.matmul %36, %39, %cst_19 {dimension_numbers = #tpu.dot_dimension_numbers<[2], [2], [1], [1], [0, 0, 0, 1, 1, 1], [0], [0]>} : vector<2x8x32xbf16>, vector<2x8x32xbf16>, vector<2x8x8xf32> -> vector<2x8x8xf32>
    "tpu.trace_stop"() : () -> ()
    %cst_20 = arith.constant 0.176776692 : f32
    %44 = vector.broadcast %cst_20 : f32 to vector<2x8x8xf32>
    %45 = arith.mulf %43, %44 : vector<2x8x8xf32>
    %46 = vector.broadcast %33 : vector<2x1x8xf32> to vector<2x8x8xf32>
    %47 = arith.addf %45, %46 : vector<2x8x8xf32>
    %cst_21 = arith.constant dense<0xFF800000> : vector<2x8xf32>
    %48 = vector.multi_reduction <maximumf>, %47, %cst_21 [2] : vector<2x8x8xf32> to vector<2x8xf32>
    %49 = vector.shape_cast %48 : vector<2x8xf32> to vector<2x8x1xf32>
    %50 = vector.broadcast %49 : vector<2x8x1xf32> to vector<2x8x8xf32>
    %51 = arith.subf %47, %50 : vector<2x8x8xf32>
    %52 = math.exp %51 : vector<2x8x8xf32>
    %cst_22 = arith.constant dense<0.000000e+00> : vector<2x8xf32>
    %53 = vector.multi_reduction <add>, %52, %cst_22 [2] : vector<2x8x8xf32> to vector<2x8xf32>
    %54 = vector.shape_cast %53 : vector<2x8xf32> to vector<2x8x1xf32>
    %55 = arith.truncf %52 : vector<2x8x8xf32> to vector<2x8x8xbf16>
    "tpu.trace_start"() <{level = 10 : i32, message = "bqk,bkd->bqd"}> : () -> ()
    %cst_23 = arith.constant dense<0.000000e+00> : vector<2x8x32xf32>
    %56 = tpu.matmul %55, %42, %cst_23 {dimension_numbers = #tpu.dot_dimension_numbers<[2], [1], [1], [2], [0, 0, 0, 1, 1, 2], [0], [0]>} : vector<2x8x8xbf16>, vector<2x8x32xbf16>, vector<2x8x32xf32> -> vector<2x8x32xf32>
    "tpu.trace_stop"() : () -> ()
    %cst_24 = arith.constant 9.99999968E-21 : f32
    %57 = vector.broadcast %cst_24 : f32 to vector<2x8x1xf32>
    %58 = arith.addf %54, %57 : vector<2x8x1xf32>
    %59 = tpu.reciprocal %58 {approx = true} : vector<2x8x1xf32> -> vector<2x8x1xf32>
    %60 = vector.broadcast %59 : vector<2x8x1xf32> to vector<2x8x32xf32>
    %61 = arith.mulf %56, %60 : vector<2x8x32xf32>
    %62 = vector.extract_strided_slice %31 {offsets = [0, 32], sizes = [16, 32], strides = [1, 1]} : vector<16x128xf32> to vector<16x32xf32>
    %63 = vector.shape_cast %62 : vector<16x32xf32> to vector<2x8x32xf32>
    %64 = arith.truncf %63 : vector<2x8x32xf32> to vector<2x8x32xbf16>
    %65 = vector.extract_strided_slice %32 {offsets = [0, 32], sizes = [16, 32], strides = [1, 1]} : vector<16x128xf32> to vector<16x32xf32>
    %66 = vector.shape_cast %65 : vector<16x32xf32> to vector<2x8x32xf32>
    %67 = arith.truncf %66 : vector<2x8x32xf32> to vector<2x8x32xbf16>
    %68 = vector.extract_strided_slice %22 {offsets = [0, 32], sizes = [16, 32], strides = [1, 1]} : vector<16x128xf32> to vector<16x32xf32>
    %69 = vector.shape_cast %68 : vector<16x32xf32> to vector<2x8x32xf32>
    %70 = arith.truncf %69 : vector<2x8x32xf32> to vector<2x8x32xbf16>
    "tpu.trace_start"() <{level = 10 : i32, message = "bqd,bkd->bqk"}> : () -> ()
    %cst_25 = arith.constant dense<0.000000e+00> : vector<2x8x8xf32>
    %71 = tpu.matmul %64, %67, %cst_25 {dimension_numbers = #tpu.dot_dimension_numbers<[2], [2], [1], [1], [0, 0, 0, 1, 1, 1], [0], [0]>} : vector<2x8x32xbf16>, vector<2x8x32xbf16>, vector<2x8x8xf32> -> vector<2x8x8xf32>
    "tpu.trace_stop"() : () -> ()
    %cst_26 = arith.constant 0.176776692 : f32
    %72 = vector.broadcast %cst_26 : f32 to vector<2x8x8xf32>
    %73 = arith.mulf %71, %72 : vector<2x8x8xf32>
    %74 = vector.broadcast %33 : vector<2x1x8xf32> to vector<2x8x8xf32>
    %75 = arith.addf %73, %74 : vector<2x8x8xf32>
    %cst_27 = arith.constant dense<0xFF800000> : vector<2x8xf32>
    %76 = vector.multi_reduction <maximumf>, %75, %cst_27 [2] : vector<2x8x8xf32> to vector<2x8xf32>
    %77 = vector.shape_cast %76 : vector<2x8xf32> to vector<2x8x1xf32>
    %78 = vector.broadcast %77 : vector<2x8x1xf32> to vector<2x8x8xf32>
    %79 = arith.subf %75, %78 : vector<2x8x8xf32>
    %80 = math.exp %79 : vector<2x8x8xf32>
    %cst_28 = arith.constant dense<0.000000e+00> : vector<2x8xf32>
    %81 = vector.multi_reduction <add>, %80, %cst_28 [2] : vector<2x8x8xf32> to vector<2x8xf32>
    %82 = vector.shape_cast %81 : vector<2x8xf32> to vector<2x8x1xf32>
    %83 = arith.truncf %80 : vector<2x8x8xf32> to vector<2x8x8xbf16>
    "tpu.trace_start"() <{level = 10 : i32, message = "bqk,bkd->bqd"}> : () -> ()
    %cst_29 = arith.constant dense<0.000000e+00> : vector<2x8x32xf32>
    %84 = tpu.matmul %83, %70, %cst_29 {dimension_numbers = #tpu.dot_dimension_numbers<[2], [1], [1], [2], [0, 0, 0, 1, 1, 2], [0], [0]>} : vector<2x8x8xbf16>, vector<2x8x32xbf16>, vector<2x8x32xf32> -> vector<2x8x32xf32>
    "tpu.trace_stop"() : () -> ()
    %cst_30 = arith.constant 9.99999968E-21 : f32
    %85 = vector.broadcast %cst_30 : f32 to vector<2x8x1xf32>
    %86 = arith.addf %82, %85 : vector<2x8x1xf32>
    %87 = tpu.reciprocal %86 {approx = true} : vector<2x8x1xf32> -> vector<2x8x1xf32>
    %88 = vector.broadcast %87 : vector<2x8x1xf32> to vector<2x8x32xf32>
    %89 = arith.mulf %84, %88 : vector<2x8x32xf32>
    %90 = vector.extract_strided_slice %31 {offsets = [0, 64], sizes = [16, 32], strides = [1, 1]} : vector<16x128xf32> to vector<16x32xf32>
    %91 = vector.shape_cast %90 : vector<16x32xf32> to vector<2x8x32xf32>
    %92 = arith.truncf %91 : vector<2x8x32xf32> to vector<2x8x32xbf16>
    %93 = vector.extract_strided_slice %32 {offsets = [0, 64], sizes = [16, 32], strides = [1, 1]} : vector<16x128xf32> to vector<16x32xf32>
    %94 = vector.shape_cast %93 : vector<16x32xf32> to vector<2x8x32xf32>
    %95 = arith.truncf %94 : vector<2x8x32xf32> to vector<2x8x32xbf16>
    %96 = vector.extract_strided_slice %22 {offsets = [0, 64], sizes = [16, 32], strides = [1, 1]} : vector<16x128xf32> to vector<16x32xf32>
    %97 = vector.shape_cast %96 : vector<16x32xf32> to vector<2x8x32xf32>
    %98 = arith.truncf %97 : vector<2x8x32xf32> to vector<2x8x32xbf16>
    "tpu.trace_start"() <{level = 10 : i32, message = "bqd,bkd->bqk"}> : () -> ()
    %cst_31 = arith.constant dense<0.000000e+00> : vector<2x8x8xf32>
    %99 = tpu.matmul %92, %95, %cst_31 {dimension_numbers = #tpu.dot_dimension_numbers<[2], [2], [1], [1], [0, 0, 0, 1, 1, 1], [0], [0]>} : vector<2x8x32xbf16>, vector<2x8x32xbf16>, vector<2x8x8xf32> -> vector<2x8x8xf32>
    "tpu.trace_stop"() : () -> ()
    %cst_32 = arith.constant 0.176776692 : f32
    %100 = vector.broadcast %cst_32 : f32 to vector<2x8x8xf32>
    %101 = arith.mulf %99, %100 : vector<2x8x8xf32>
    %102 = vector.broadcast %33 : vector<2x1x8xf32> to vector<2x8x8xf32>
    %103 = arith.addf %101, %102 : vector<2x8x8xf32>
    %cst_33 = arith.constant dense<0xFF800000> : vector<2x8xf32>
    %104 = vector.multi_reduction <maximumf>, %103, %cst_33 [2] : vector<2x8x8xf32> to vector<2x8xf32>
    %105 = vector.shape_cast %104 : vector<2x8xf32> to vector<2x8x1xf32>
    %106 = vector.broadcast %105 : vector<2x8x1xf32> to vector<2x8x8xf32>
    %107 = arith.subf %103, %106 : vector<2x8x8xf32>
    %108 = math.exp %107 : vector<2x8x8xf32>
    %cst_34 = arith.constant dense<0.000000e+00> : vector<2x8xf32>
    %109 = vector.multi_reduction <add>, %108, %cst_34 [2] : vector<2x8x8xf32> to vector<2x8xf32>
    %110 = vector.shape_cast %109 : vector<2x8xf32> to vector<2x8x1xf32>
    %111 = arith.truncf %108 : vector<2x8x8xf32> to vector<2x8x8xbf16>
    "tpu.trace_start"() <{level = 10 : i32, message = "bqk,bkd->bqd"}> : () -> ()
    %cst_35 = arith.constant dense<0.000000e+00> : vector<2x8x32xf32>
    %112 = tpu.matmul %111, %98, %cst_35 {dimension_numbers = #tpu.dot_dimension_numbers<[2], [1], [1], [2], [0, 0, 0, 1, 1, 2], [0], [0]>} : vector<2x8x8xbf16>, vector<2x8x32xbf16>, vector<2x8x32xf32> -> vector<2x8x32xf32>
    "tpu.trace_stop"() : () -> ()
    %cst_36 = arith.constant 9.99999968E-21 : f32
    %113 = vector.broadcast %cst_36 : f32 to vector<2x8x1xf32>
    %114 = arith.addf %110, %113 : vector<2x8x1xf32>
    %115 = tpu.reciprocal %114 {approx = true} : vector<2x8x1xf32> -> vector<2x8x1xf32>
    %116 = vector.broadcast %115 : vector<2x8x1xf32> to vector<2x8x32xf32>
    %117 = arith.mulf %112, %116 : vector<2x8x32xf32>
    %118 = vector.extract_strided_slice %31 {offsets = [0, 96], sizes = [16, 32], strides = [1, 1]} : vector<16x128xf32> to vector<16x32xf32>
    %119 = vector.shape_cast %118 : vector<16x32xf32> to vector<2x8x32xf32>
    %120 = arith.truncf %119 : vector<2x8x32xf32> to vector<2x8x32xbf16>
    %121 = vector.extract_strided_slice %32 {offsets = [0, 96], sizes = [16, 32], strides = [1, 1]} : vector<16x128xf32> to vector<16x32xf32>
    %122 = vector.shape_cast %121 : vector<16x32xf32> to vector<2x8x32xf32>
    %123 = arith.truncf %122 : vector<2x8x32xf32> to vector<2x8x32xbf16>
    %124 = vector.extract_strided_slice %22 {offsets = [0, 96], sizes = [16, 32], strides = [1, 1]} : vector<16x128xf32> to vector<16x32xf32>
    %125 = vector.shape_cast %124 : vector<16x32xf32> to vector<2x8x32xf32>
    %126 = arith.truncf %125 : vector<2x8x32xf32> to vector<2x8x32xbf16>
    "tpu.trace_start"() <{level = 10 : i32, message = "bqd,bkd->bqk"}> : () -> ()
    %cst_37 = arith.constant dense<0.000000e+00> : vector<2x8x8xf32>
    %127 = tpu.matmul %120, %123, %cst_37 {dimension_numbers = #tpu.dot_dimension_numbers<[2], [2], [1], [1], [0, 0, 0, 1, 1, 1], [0], [0]>} : vector<2x8x32xbf16>, vector<2x8x32xbf16>, vector<2x8x8xf32> -> vector<2x8x8xf32>
    "tpu.trace_stop"() : () -> ()
    %cst_38 = arith.constant 0.176776692 : f32
    %128 = vector.broadcast %cst_38 : f32 to vector<2x8x8xf32>
    %129 = arith.mulf %127, %128 : vector<2x8x8xf32>
    %130 = vector.broadcast %33 : vector<2x1x8xf32> to vector<2x8x8xf32>
    %131 = arith.addf %129, %130 : vector<2x8x8xf32>
    %cst_39 = arith.constant dense<0xFF800000> : vector<2x8xf32>
    %132 = vector.multi_reduction <maximumf>, %131, %cst_39 [2] : vector<2x8x8xf32> to vector<2x8xf32>
    %133 = vector.shape_cast %132 : vector<2x8xf32> to vector<2x8x1xf32>
    %134 = vector.broadcast %133 : vector<2x8x1xf32> to vector<2x8x8xf32>
    %135 = arith.subf %131, %134 : vector<2x8x8xf32>
    %136 = math.exp %135 : vector<2x8x8xf32>
    %cst_40 = arith.constant dense<0.000000e+00> : vector<2x8xf32>
    %137 = vector.multi_reduction <add>, %136, %cst_40 [2] : vector<2x8x8xf32> to vector<2x8xf32>
    %138 = vector.shape_cast %137 : vector<2x8xf32> to vector<2x8x1xf32>
    %139 = arith.truncf %136 : vector<2x8x8xf32> to vector<2x8x8xbf16>
    "tpu.trace_start"() <{level = 10 : i32, message = "bqk,bkd->bqd"}> : () -> ()
    %cst_41 = arith.constant dense<0.000000e+00> : vector<2x8x32xf32>
    %140 = tpu.matmul %139, %126, %cst_41 {dimension_numbers = #tpu.dot_dimension_numbers<[2], [1], [1], [2], [0, 0, 0, 1, 1, 2], [0], [0]>} : vector<2x8x8xbf16>, vector<2x8x32xbf16>, vector<2x8x32xf32> -> vector<2x8x32xf32>
    "tpu.trace_stop"() : () -> ()
    %cst_42 = arith.constant 9.99999968E-21 : f32
    %141 = vector.broadcast %cst_42 : f32 to vector<2x8x1xf32>
    %142 = arith.addf %138, %141 : vector<2x8x1xf32>
    %143 = tpu.reciprocal %142 {approx = true} : vector<2x8x1xf32> -> vector<2x8x1xf32>
    %144 = vector.broadcast %143 : vector<2x8x1xf32> to vector<2x8x32xf32>
    %145 = arith.mulf %140, %144 : vector<2x8x32xf32>
    %146 = tpu.concatenate %61, %89, %117, %145 in 2 : vector<2x8x32xf32>, vector<2x8x32xf32>, vector<2x8x32xf32>, vector<2x8x32xf32> -> vector<2x8x128xf32>
    %147 = vector.shape_cast %146 : vector<2x8x128xf32> to vector<16x128xf32>
    %148 = arith.truncf %147 : vector<16x128xf32> to vector<16x128xbf16>
    %c0_43 = arith.constant 0 : index
    %c0_44 = arith.constant 0 : index
    %c0_45 = arith.constant 0 : index
    %149 = vector.load %arg11[%c0_43, %c0_44, %c0_45] : memref<1x128x128xbf16, #tpu.memory_space<vmem>>, vector<1x128x128xbf16>
    %150 = vector.shape_cast %149 : vector<1x128x128xbf16> to vector<128x128xbf16>
    %cst_46 = arith.constant dense<0.000000e+00> : vector<16x128xf32>
    %151 = tpu.matmul %148, %150, %cst_46 {dimension_numbers = #tpu.dot_dimension_numbers<[1], [0], [0], [1], [0, 0, 1, 1], [], []>} : vector<16x128xbf16>, vector<128x128xbf16>, vector<16x128xf32> -> vector<16x128xf32>
    %c0_47 = arith.constant 0 : index
    %c0_48 = arith.constant 0 : index
    %c0_49 = arith.constant 0 : index
    %152 = vector.load %arg12[%c0_47, %c0_48, %c0_49] : memref<1x3x128xf32, #tpu.memory_space<vmem>>, vector<1x3x128xf32>
    %153 = vector.shape_cast %152 : vector<1x3x128xf32> to vector<3x128xf32>
    %154 = vector.extract_strided_slice %153 {offsets = [0, 0], sizes = [1, 128], strides = [1, 1]} : vector<3x128xf32> to vector<1x128xf32>
    %155 = vector.broadcast %154 : vector<1x128xf32> to vector<16x128xf32>
    %156 = arith.addf %151, %155 : vector<16x128xf32>
    %157 = arith.addf %156, %20 : vector<16x128xf32>
    %158 = vector.extract_strided_slice %153 {offsets = [1, 0], sizes = [1, 128], strides = [1, 1]} : vector<3x128xf32> to vector<1x128xf32>
    %159 = vector.broadcast %158 : vector<1x128xf32> to vector<16x128xf32>
    %160 = arith.mulf %157, %159 : vector<16x128xf32>
    %161 = vector.extract_strided_slice %153 {offsets = [2, 0], sizes = [1, 128], strides = [1, 1]} : vector<3x128xf32> to vector<1x128xf32>
    %162 = vector.broadcast %161 : vector<1x128xf32> to vector<16x128xf32>
    %163 = arith.addf %160, %162 : vector<16x128xf32>
    %c0_50 = arith.constant 0 : index
    %c0_51 = arith.constant 0 : index
    %c0_52 = arith.constant 0 : index
    %164 = vector.load %arg14[%c0_50, %c0_51, %c0_52] : memref<1x4x512xf32, #tpu.memory_space<vmem>>, vector<1x4x512xf32>
    %165 = vector.shape_cast %164 : vector<1x4x512xf32> to vector<4x512xf32>
    %c0_53 = arith.constant 0 : index
    %c0_54 = arith.constant 0 : index
    %c0_55 = arith.constant 0 : index
    %166 = vector.load %arg16[%c0_53, %c0_54, %c0_55] : memref<1x12x128xf32, #tpu.memory_space<vmem>>, vector<1x12x128xf32>
    %167 = vector.shape_cast %166 : vector<1x12x128xf32> to vector<12x128xf32>
    %c0_56 = arith.constant 0 : index
    %c0_57 = arith.constant 0 : index
    %c0_58 = arith.constant 0 : index
    %168 = vector.load %arg13[%c0_56, %c0_57, %c0_58] : memref<1x512x512xbf16, #tpu.memory_space<vmem>>, vector<1x128x512xbf16>
    %169 = vector.shape_cast %168 : vector<1x128x512xbf16> to vector<128x512xbf16>
    %170 = arith.truncf %163 : vector<16x128xf32> to vector<16x128xbf16>
    %cst_59 = arith.constant dense<0.000000e+00> : vector<16x512xf32>
    %171 = tpu.matmul %170, %169, %cst_59 {dimension_numbers = #tpu.dot_dimension_numbers<[1], [0], [0], [1], [0, 0, 1, 1], [], []>} : vector<16x128xbf16>, vector<128x512xbf16>, vector<16x512xf32> -> vector<16x512xf32>
    %172 = vector.extract_strided_slice %165 {offsets = [0, 0], sizes = [1, 512], strides = [1, 1]} : vector<4x512xf32> to vector<1x512xf32>
    %173 = vector.broadcast %172 : vector<1x512xf32> to vector<16x512xf32>
    %174 = arith.addf %171, %173 : vector<16x512xf32>
    %cst_60 = arith.constant 0.000000e+00 : f32
    %175 = vector.broadcast %cst_60 : f32 to vector<16x512xf32>
    %176 = arith.maximumf %174, %175 : vector<16x512xf32>
    %c0_61 = arith.constant 0 : index
    %c0_62 = arith.constant 0 : index
    %c0_63 = arith.constant 0 : index
    %177 = vector.load %arg15[%c0_61, %c0_62, %c0_63] : memref<1x2048x128xbf16, #tpu.memory_space<vmem>>, vector<1x512x128xbf16>
    %178 = vector.shape_cast %177 : vector<1x512x128xbf16> to vector<512x128xbf16>
    %179 = arith.truncf %176 : vector<16x512xf32> to vector<16x512xbf16>
    %cst_64 = arith.constant dense<0.000000e+00> : vector<16x128xf32>
    %180 = tpu.matmul %179, %178, %cst_64 {dimension_numbers = #tpu.dot_dimension_numbers<[1], [0], [0], [1], [0, 0, 1, 1], [], []>} : vector<16x512xbf16>, vector<512x128xbf16>, vector<16x128xf32> -> vector<16x128xf32>
    %181 = vector.extract_strided_slice %167 {offsets = [0, 0], sizes = [1, 128], strides = [1, 1]} : vector<12x128xf32> to vector<1x128xf32>
    %182 = vector.broadcast %181 : vector<1x128xf32> to vector<16x128xf32>
    %183 = arith.addf %180, %182 : vector<16x128xf32>
    %184 = arith.addf %183, %163 : vector<16x128xf32>
    %185 = vector.extract_strided_slice %167 {offsets = [1, 0], sizes = [1, 128], strides = [1, 1]} : vector<12x128xf32> to vector<1x128xf32>
    %186 = vector.broadcast %185 : vector<1x128xf32> to vector<16x128xf32>
    %187 = arith.mulf %184, %186 : vector<16x128xf32>
    %188 = vector.extract_strided_slice %167 {offsets = [2, 0], sizes = [1, 128], strides = [1, 1]} : vector<12x128xf32> to vector<1x128xf32>
    %189 = vector.broadcast %188 : vector<1x128xf32> to vector<16x128xf32>
    %190 = arith.addf %187, %189 : vector<16x128xf32>
    %c0_65 = arith.constant 0 : index
    %c128 = arith.constant 128 : index
    %c0_66 = arith.constant 0 : index
    %191 = vector.load %arg13[%c0_65, %c128, %c0_66] : memref<1x512x512xbf16, #tpu.memory_space<vmem>>, vector<1x128x512xbf16>
    %192 = vector.shape_cast %191 : vector<1x128x512xbf16> to vector<128x512xbf16>
    %193 = arith.truncf %190 : vector<16x128xf32> to vector<16x128xbf16>
    %cst_67 = arith.constant dense<0.000000e+00> : vector<16x512xf32>
    %194 = tpu.matmul %193, %192, %cst_67 {dimension_numbers = #tpu.dot_dimension_numbers<[1], [0], [0], [1], [0, 0, 1, 1], [], []>} : vector<16x128xbf16>, vector<128x512xbf16>, vector<16x512xf32> -> vector<16x512xf32>
    %195 = vector.extract_strided_slice %165 {offsets = [1, 0], sizes = [1, 512], strides = [1, 1]} : vector<4x512xf32> to vector<1x512xf32>
    %196 = vector.broadcast %195 : vector<1x512xf32> to vector<16x512xf32>
    %197 = arith.addf %194, %196 : vector<16x512xf32>
    %cst_68 = arith.constant 0.000000e+00 : f32
    %198 = vector.broadcast %cst_68 : f32 to vector<16x512xf32>
    %199 = arith.maximumf %197, %198 : vector<16x512xf32>
    %c0_69 = arith.constant 0 : index
    %c512 = arith.constant 512 : index
    %c0_70 = arith.constant 0 : index
    %200 = vector.load %arg15[%c0_69, %c512, %c0_70] : memref<1x2048x128xbf16, #tpu.memory_space<vmem>>, vector<1x512x128xbf16>
    %201 = vector.shape_cast %200 : vector<1x512x128xbf16> to vector<512x128xbf16>
    %202 = arith.truncf %199 : vector<16x512xf32> to vector<16x512xbf16>
    %cst_71 = arith.constant dense<0.000000e+00> : vector<16x128xf32>
    %203 = tpu.matmul %202, %201, %cst_71 {dimension_numbers = #tpu.dot_dimension_numbers<[1], [0], [0], [1], [0, 0, 1, 1], [], []>} : vector<16x512xbf16>, vector<512x128xbf16>, vector<16x128xf32> -> vector<16x128xf32>
    %204 = vector.extract_strided_slice %167 {offsets = [3, 0], sizes = [1, 128], strides = [1, 1]} : vector<12x128xf32> to vector<1x128xf32>
    %205 = vector.broadcast %204 : vector<1x128xf32> to vector<16x128xf32>
    %206 = arith.addf %203, %205 : vector<16x128xf32>
    %207 = arith.addf %206, %190 : vector<16x128xf32>
    %208 = vector.extract_strided_slice %167 {offsets = [4, 0], sizes = [1, 128], strides = [1, 1]} : vector<12x128xf32> to vector<1x128xf32>
    %209 = vector.broadcast %208 : vector<1x128xf32> to vector<16x128xf32>
    %210 = arith.mulf %207, %209 : vector<16x128xf32>
    %211 = vector.extract_strided_slice %167 {offsets = [5, 0], sizes = [1, 128], strides = [1, 1]} : vector<12x128xf32> to vector<1x128xf32>
    %212 = vector.broadcast %211 : vector<1x128xf32> to vector<16x128xf32>
    %213 = arith.addf %210, %212 : vector<16x128xf32>
    %c0_72 = arith.constant 0 : index
    %c256 = arith.constant 256 : index
    %c0_73 = arith.constant 0 : index
    %214 = vector.load %arg13[%c0_72, %c256, %c0_73] : memref<1x512x512xbf16, #tpu.memory_space<vmem>>, vector<1x128x512xbf16>
    %215 = vector.shape_cast %214 : vector<1x128x512xbf16> to vector<128x512xbf16>
    %216 = arith.truncf %213 : vector<16x128xf32> to vector<16x128xbf16>
    %cst_74 = arith.constant dense<0.000000e+00> : vector<16x512xf32>
    %217 = tpu.matmul %216, %215, %cst_74 {dimension_numbers = #tpu.dot_dimension_numbers<[1], [0], [0], [1], [0, 0, 1, 1], [], []>} : vector<16x128xbf16>, vector<128x512xbf16>, vector<16x512xf32> -> vector<16x512xf32>
    %218 = vector.extract_strided_slice %165 {offsets = [2, 0], sizes = [1, 512], strides = [1, 1]} : vector<4x512xf32> to vector<1x512xf32>
    %219 = vector.broadcast %218 : vector<1x512xf32> to vector<16x512xf32>
    %220 = arith.addf %217, %219 : vector<16x512xf32>
    %cst_75 = arith.constant 0.000000e+00 : f32
    %221 = vector.broadcast %cst_75 : f32 to vector<16x512xf32>
    %222 = arith.maximumf %220, %221 : vector<16x512xf32>
    %c0_76 = arith.constant 0 : index
    %c1024 = arith.constant 1024 : index
    %c0_77 = arith.constant 0 : index
    %223 = vector.load %arg15[%c0_76, %c1024, %c0_77] : memref<1x2048x128xbf16, #tpu.memory_space<vmem>>, vector<1x512x128xbf16>
    %224 = vector.shape_cast %223 : vector<1x512x128xbf16> to vector<512x128xbf16>
    %225 = arith.truncf %222 : vector<16x512xf32> to vector<16x512xbf16>
    %cst_78 = arith.constant dense<0.000000e+00> : vector<16x128xf32>
    %226 = tpu.matmul %225, %224, %cst_78 {dimension_numbers = #tpu.dot_dimension_numbers<[1], [0], [0], [1], [0, 0, 1, 1], [], []>} : vector<16x512xbf16>, vector<512x128xbf16>, vector<16x128xf32> -> vector<16x128xf32>
    %227 = vector.extract_strided_slice %167 {offsets = [6, 0], sizes = [1, 128], strides = [1, 1]} : vector<12x128xf32> to vector<1x128xf32>
    %228 = vector.broadcast %227 : vector<1x128xf32> to vector<16x128xf32>
    %229 = arith.addf %226, %228 : vector<16x128xf32>
    %230 = arith.addf %229, %213 : vector<16x128xf32>
    %231 = vector.extract_strided_slice %167 {offsets = [7, 0], sizes = [1, 128], strides = [1, 1]} : vector<12x128xf32> to vector<1x128xf32>
    %232 = vector.broadcast %231 : vector<1x128xf32> to vector<16x128xf32>
    %233 = arith.mulf %230, %232 : vector<16x128xf32>
    %234 = vector.extract_strided_slice %167 {offsets = [8, 0], sizes = [1, 128], strides = [1, 1]} : vector<12x128xf32> to vector<1x128xf32>
    %235 = vector.broadcast %234 : vector<1x128xf32> to vector<16x128xf32>
    %236 = arith.addf %233, %235 : vector<16x128xf32>
    %c0_79 = arith.constant 0 : index
    %c384 = arith.constant 384 : index
    %c0_80 = arith.constant 0 : index
    %237 = vector.load %arg13[%c0_79, %c384, %c0_80] : memref<1x512x512xbf16, #tpu.memory_space<vmem>>, vector<1x128x512xbf16>
    %238 = vector.shape_cast %237 : vector<1x128x512xbf16> to vector<128x512xbf16>
    %239 = arith.truncf %236 : vector<16x128xf32> to vector<16x128xbf16>
    %cst_81 = arith.constant dense<0.000000e+00> : vector<16x512xf32>
    %240 = tpu.matmul %239, %238, %cst_81 {dimension_numbers = #tpu.dot_dimension_numbers<[1], [0], [0], [1], [0, 0, 1, 1], [], []>} : vector<16x128xbf16>, vector<128x512xbf16>, vector<16x512xf32> -> vector<16x512xf32>
    %241 = vector.extract_strided_slice %165 {offsets = [3, 0], sizes = [1, 512], strides = [1, 1]} : vector<4x512xf32> to vector<1x512xf32>
    %242 = vector.broadcast %241 : vector<1x512xf32> to vector<16x512xf32>
    %243 = arith.addf %240, %242 : vector<16x512xf32>
    %cst_82 = arith.constant 0.000000e+00 : f32
    %244 = vector.broadcast %cst_82 : f32 to vector<16x512xf32>
    %245 = arith.maximumf %243, %244 : vector<16x512xf32>
    %c0_83 = arith.constant 0 : index
    %c1536 = arith.constant 1536 : index
    %c0_84 = arith.constant 0 : index
    %246 = vector.load %arg15[%c0_83, %c1536, %c0_84] : memref<1x2048x128xbf16, #tpu.memory_space<vmem>>, vector<1x512x128xbf16>
    %247 = vector.shape_cast %246 : vector<1x512x128xbf16> to vector<512x128xbf16>
    %248 = arith.truncf %245 : vector<16x512xf32> to vector<16x512xbf16>
    %cst_85 = arith.constant dense<0.000000e+00> : vector<16x128xf32>
    %249 = tpu.matmul %248, %247, %cst_85 {dimension_numbers = #tpu.dot_dimension_numbers<[1], [0], [0], [1], [0, 0, 1, 1], [], []>} : vector<16x512xbf16>, vector<512x128xbf16>, vector<16x128xf32> -> vector<16x128xf32>
    %250 = vector.extract_strided_slice %167 {offsets = [9, 0], sizes = [1, 128], strides = [1, 1]} : vector<12x128xf32> to vector<1x128xf32>
    %251 = vector.broadcast %250 : vector<1x128xf32> to vector<16x128xf32>
    %252 = arith.addf %249, %251 : vector<16x128xf32>
    %253 = arith.addf %252, %236 : vector<16x128xf32>
    %254 = vector.extract_strided_slice %167 {offsets = [10, 0], sizes = [1, 128], strides = [1, 1]} : vector<12x128xf32> to vector<1x128xf32>
    %255 = vector.broadcast %254 : vector<1x128xf32> to vector<16x128xf32>
    %256 = arith.mulf %253, %255 : vector<16x128xf32>
    %257 = vector.extract_strided_slice %167 {offsets = [11, 0], sizes = [1, 128], strides = [1, 1]} : vector<12x128xf32> to vector<1x128xf32>
    %258 = vector.broadcast %257 : vector<1x128xf32> to vector<16x128xf32>
    %259 = arith.addf %256, %258 : vector<16x128xf32>
    %260 = arith.truncf %259 : vector<16x128xf32> to vector<16x128xbf16>
    %c0_86 = arith.constant 0 : index
    %c0_87 = arith.constant 0 : index
    %c0_88 = arith.constant 0 : index
    %261 = vector.load %arg17[%c0_86, %c0_87, %c0_88] : memref<1x128x512xbf16, #tpu.memory_space<vmem>>, vector<1x128x512xbf16>
    %262 = vector.shape_cast %261 : vector<1x128x512xbf16> to vector<128x512xbf16>
    %cst_89 = arith.constant dense<0.000000e+00> : vector<16x512xf32>
    %263 = tpu.matmul %260, %262, %cst_89 {dimension_numbers = #tpu.dot_dimension_numbers<[1], [0], [0], [1], [0, 0, 1, 1], [], []>} : vector<16x128xbf16>, vector<128x512xbf16>, vector<16x512xf32> -> vector<16x512xf32>
    %c0_90 = arith.constant 0 : index
    %c0_91 = arith.constant 0 : index
    %c0_92 = arith.constant 0 : index
    %264 = vector.load %arg18[%c0_90, %c0_91, %c0_92] : memref<1x3x512xf32, #tpu.memory_space<vmem>>, vector<1x3x512xf32>
    %265 = vector.shape_cast %264 : vector<1x3x512xf32> to vector<3x512xf32>
    %266 = vector.extract_strided_slice %265 {offsets = [0, 0], sizes = [1, 512], strides = [1, 1]} : vector<3x512xf32> to vector<1x512xf32>
    %267 = vector.broadcast %266 : vector<1x512xf32> to vector<16x512xf32>
    %268 = arith.addf %263, %267 : vector<16x512xf32>
    %269 = arith.addf %268, %4 : vector<16x512xf32>
    %270 = vector.extract_strided_slice %265 {offsets = [1, 0], sizes = [1, 512], strides = [1, 1]} : vector<3x512xf32> to vector<1x512xf32>
    %271 = vector.broadcast %270 : vector<1x512xf32> to vector<16x512xf32>
    %272 = arith.mulf %269, %271 : vector<16x512xf32>
    %273 = vector.extract_strided_slice %265 {offsets = [2, 0], sizes = [1, 512], strides = [1, 1]} : vector<3x512xf32> to vector<1x512xf32>
    %274 = vector.broadcast %273 : vector<1x512xf32> to vector<16x512xf32>
    %275 = arith.addf %272, %274 : vector<16x512xf32>
    %276 = vector.shape_cast %275 : vector<16x512xf32> to vector<2x8x512xf32>
    %c0_93 = arith.constant 0 : index
    %c0_94 = arith.constant 0 : index
    %c0_95 = arith.constant 0 : index
    %277 = vector.load %arg22[%c0_93, %c0_94, %c0_95] : memref<2x8x512xf32, #tpu.memory_space<vmem>>, vector<2x8x512xf32>
    tpu.vector_store %arg22[%c0_93, %c0_94, %c0_95], %276 {strides = array<i32>} : memref<2x8x512xf32, #tpu.memory_space<vmem>>, vector<2x8x512xf32>,
    %c1_i32 = arith.constant 1 : i32
    %278 = arith.cmpi eq, %arg1, %c1_i32 : i32
    %279 = arith.extui %278 : i1 to i32
    %c0_i32_96 = arith.constant 0 : i32
    %280 = arith.cmpi ne, %279, %c0_i32_96 : i32
    scf.if %280 {
      %c0_97 = arith.constant 0 : index
      %c0_98 = arith.constant 0 : index
      %281 = vector.load %arg20[%c0_97, %c0_98] : memref<3x512xf32, #tpu.memory_space<vmem>>, vector<3x512xf32>
      %c0_99 = arith.constant 0 : index
      %c0_100 = arith.constant 0 : index
      %c0_101 = arith.constant 0 : index
      %282 = vector.load %arg22[%c0_99, %c0_100, %c0_101] : memref<2x8x512xf32, #tpu.memory_space<vmem>>, vector<2x8x512xf32>
      %283 = vector.extract_strided_slice %282 {offsets = [0, 0, 0], sizes = [2, 1, 512], strides = [1, 1, 1]} : vector<2x8x512xf32> to vector<2x1x512xf32>
      %284 = vector.shape_cast %283 : vector<2x1x512xf32> to vector<2x512xf32>
      %285 = arith.truncf %284 : vector<2x512xf32> to vector<2x512xbf16>
      %c0_102 = arith.constant 0 : index
      %c0_103 = arith.constant 0 : index
      %286 = vector.load %arg19[%c0_102, %c0_103] : memref<512x512xbf16, #tpu.memory_space<vmem>>, vector<512x512xbf16>
      %cst_104 = arith.constant dense<0.000000e+00> : vector<2x512xf32>
      %287 = tpu.matmul %285, %286, %cst_104 {dimension_numbers = #tpu.dot_dimension_numbers<[1], [0], [0], [1], [0, 0, 1, 1], [], []>} : vector<2x512xbf16>, vector<512x512xbf16>, vector<2x512xf32> -> vector<2x512xf32>
      %288 = vector.extract_strided_slice %281 {offsets = [0, 0], sizes = [1, 512], strides = [1, 1]} : vector<3x512xf32> to vector<1x512xf32>
      %289 = vector.broadcast %288 : vector<1x512xf32> to vector<2x512xf32>
      %290 = arith.addf %287, %289 : vector<2x512xf32>
      %291 = math.tanh %290 : vector<2x512xf32>
      %292 = vector.extract_strided_slice %281 {offsets = [1, 0], sizes = [1, 512], strides = [1, 1]} : vector<3x512xf32> to vector<1x512xf32>
      %293 = vector.broadcast %292 : vector<1x512xf32> to vector<2x512xf32>
      %294 = arith.mulf %291, %293 : vector<2x512xf32>
      %cst_105 = arith.constant dense<0.000000e+00> : vector<2xf32>
      %295 = vector.multi_reduction <add>, %294, %cst_105 [1] : vector<2x512xf32> to vector<2xf32>
      %296 = vector.shape_cast %295 : vector<2xf32> to vector<2x1xf32>
      %297 = vector.extract_strided_slice %281 {offsets = [2, 0], sizes = [1, 1], strides = [1, 1]} : vector<3x512xf32> to vector<1x1xf32>
      %298 = vector.broadcast %297 : vector<1x1xf32> to vector<2x1xf32>
      %299 = arith.addf %296, %298 : vector<2x1xf32>
      %300 = vector.shape_cast %299 : vector<2x1xf32> to vector<2x1xf32>
      %301 = vector.broadcast %300 : vector<2x1xf32> to vector<2x128xf32>
      %c0_106 = arith.constant 0 : index
      %c0_107 = arith.constant 0 : index
      %302 = vector.load %arg21[%c0_106, %c0_107] : memref<2x128xf32, #tpu.memory_space<vmem>>, vector<2x128xf32>
      tpu.vector_store %arg21[%c0_106, %c0_107], %301 {strides = array<i32>} : memref<2x128xf32, #tpu.memory_space<vmem>>, vector<2x128xf32>,
    } else {
    }
    return
  }
  func.func @transform_0(%arg0: i32, %arg1: i32) -> (i32, i32, i32) {
    %c0_i32 = arith.constant 0 : i32
    %c0_i32_0 = arith.constant 0 : i32
    %c0_i32_1 = arith.constant 0 : i32
    return %arg0, %c0_i32, %c0_i32_0 : i32, i32, i32
  }
  func.func @transform_1(%arg0: i32, %arg1: i32) -> (i32, i32, i32) {
    %c0_i32 = arith.constant 0 : i32
    %c0_i32_0 = arith.constant 0 : i32
    %c0_i32_1 = arith.constant 0 : i32
    return %arg0, %c0_i32, %c0_i32_0 : i32, i32, i32
  }
  func.func @transform_2(%arg0: i32, %arg1: i32) -> (i32, i32) {
    %c0_i32 = arith.constant 0 : i32
    %c0_i32_0 = arith.constant 0 : i32
    %c0_i32_1 = arith.constant 0 : i32
    return %c0_i32, %c0_i32_0 : i32, i32
  }
  func.func @transform_3(%arg0: i32, %arg1: i32) -> (i32, i32) {
    %c0_i32 = arith.constant 0 : i32
    %c0_i32_0 = arith.constant 0 : i32
    %c0_i32_1 = arith.constant 0 : i32
    return %c0_i32, %c0_i32_0 : i32, i32
  }
  func.func @transform_4(%arg0: i32, %arg1: i32) -> (i32, i32) {
    %c0_i32 = arith.constant 0 : i32
    %c0_i32_0 = arith.constant 0 : i32
    %c0_i32_1 = arith.constant 0 : i32
    return %c0_i32, %c0_i32_0 : i32, i32
  }
  func.func @transform_5(%arg0: i32, %arg1: i32) -> (i32, i32, i32) {
    %c0_i32 = arith.constant 0 : i32
    %c0_i32_0 = arith.constant 0 : i32
    %c0_i32_1 = arith.constant 0 : i32
    return %arg1, %c0_i32, %c0_i32_0 : i32, i32, i32
  }
  func.func @transform_6(%arg0: i32, %arg1: i32) -> (i32, i32, i32) {
    %c0_i32 = arith.constant 0 : i32
    %c0_i32_0 = arith.constant 0 : i32
    %c0_i32_1 = arith.constant 0 : i32
    return %arg1, %c0_i32, %c0_i32_0 : i32, i32, i32
  }
  func.func @transform_7(%arg0: i32, %arg1: i32) -> (i32, i32, i32) {
    %c0_i32 = arith.constant 0 : i32
    %c0_i32_0 = arith.constant 0 : i32
    %c0_i32_1 = arith.constant 0 : i32
    return %arg1, %c0_i32, %c0_i32_0 : i32, i32, i32
  }
  func.func @transform_8(%arg0: i32, %arg1: i32) -> (i32, i32, i32) {
    %c0_i32 = arith.constant 0 : i32
    %c0_i32_0 = arith.constant 0 : i32
    %c0_i32_1 = arith.constant 0 : i32
    return %arg1, %c0_i32, %c0_i32_0 : i32, i32, i32
  }
  func.func @transform_9(%arg0: i32, %arg1: i32) -> (i32, i32, i32) {
    %c0_i32 = arith.constant 0 : i32
    %c0_i32_0 = arith.constant 0 : i32
    %c0_i32_1 = arith.constant 0 : i32
    return %arg1, %c0_i32, %c0_i32_0 : i32, i32, i32
  }
  func.func @transform_10(%arg0: i32, %arg1: i32) -> (i32, i32, i32) {
    %c0_i32 = arith.constant 0 : i32
    %c0_i32_0 = arith.constant 0 : i32
    %c0_i32_1 = arith.constant 0 : i32
    return %arg1, %c0_i32, %c0_i32_0 : i32, i32, i32
  }
  func.func @transform_11(%arg0: i32, %arg1: i32) -> (i32, i32, i32) {
    %c0_i32 = arith.constant 0 : i32
    %c0_i32_0 = arith.constant 0 : i32
    %c0_i32_1 = arith.constant 0 : i32
    return %arg1, %c0_i32, %c0_i32_0 : i32, i32, i32
  }
  func.func @transform_12(%arg0: i32, %arg1: i32) -> (i32, i32, i32) {
    %c0_i32 = arith.constant 0 : i32
    %c0_i32_0 = arith.constant 0 : i32
    %c0_i32_1 = arith.constant 0 : i32
    return %arg1, %c0_i32, %c0_i32_0 : i32, i32, i32
  }
  func.func @transform_13(%arg0: i32, %arg1: i32) -> (i32, i32, i32) {
    %c0_i32 = arith.constant 0 : i32
    %c0_i32_0 = arith.constant 0 : i32
    %c0_i32_1 = arith.constant 0 : i32
    return %arg1, %c0_i32, %c0_i32_0 : i32, i32, i32
  }
  func.func @transform_14(%arg0: i32, %arg1: i32) -> (i32, i32, i32) {
    %c0_i32 = arith.constant 0 : i32
    %c0_i32_0 = arith.constant 0 : i32
    %c0_i32_1 = arith.constant 0 : i32
    return %arg1, %c0_i32, %c0_i32_0 : i32, i32, i32
  }
  func.func @transform_15(%arg0: i32, %arg1: i32) -> (i32, i32, i32) {
    %c0_i32 = arith.constant 0 : i32
    %c0_i32_0 = arith.constant 0 : i32
    %c0_i32_1 = arith.constant 0 : i32
    return %arg1, %c0_i32, %c0_i32_0 : i32, i32, i32
  }
  func.func @transform_16(%arg0: i32, %arg1: i32) -> (i32, i32, i32) {
    %c0_i32 = arith.constant 0 : i32
    %c0_i32_0 = arith.constant 0 : i32
    %c0_i32_1 = arith.constant 0 : i32
    return %arg1, %c0_i32, %c0_i32_0 : i32, i32, i32
  }
  func.func @transform_17(%arg0: i32, %arg1: i32) -> (i32, i32) {
    %c0_i32 = arith.constant 0 : i32
    %c0_i32_0 = arith.constant 0 : i32
    %c0_i32_1 = arith.constant 0 : i32
    return %c0_i32, %c0_i32_0 : i32, i32
  }
  func.func @transform_18(%arg0: i32, %arg1: i32) -> (i32, i32) {
    %c0_i32 = arith.constant 0 : i32
    %c0_i32_0 = arith.constant 0 : i32
    %c0_i32_1 = arith.constant 0 : i32
    return %c0_i32, %c0_i32_0 : i32, i32
  }
  func.func @transform_19(%arg0: i32, %arg1: i32) -> (i32, i32) {
    %c0_i32 = arith.constant 0 : i32
    %c0_i32_0 = arith.constant 0 : i32
    return %arg0, %c0_i32 : i32, i32
  }
}

</mosaic_0001>

<llo_original>
// kernel: mobilebert_classifier_forward.1
$region0: #{mobilebert_classifier_forward.1}
  #allocation0 [shape = 'u32[]', space=smem, size = 0x4, offset = 0x4, fixed_abs, tag = 'smem constant byte address 0x4 - core index']
  #allocation1 [shape = 'u32[144,128]{1,0:T(1,128)}', space=vmem, size = 0x12000, scoped, tag = 'internal scratch']
  #allocation2 [shape = 'f32[2,8,512]{2,1,0:T(8,128)}', space=vmem, size = 0x8000, scoped, tag = 'scratch operand']
  %s0 = inlined_call_operand.vmem [shape: f32[2,1,8], index: 0, kind: input, shape index: {}]
  %s1 = inlined_call_operand.vmem [shape: bf16[2,8,384], index: 1, kind: input, shape index: {}]
  %s2 = inlined_call_operand.vmem [shape: f32[8,512], index: 2, kind: input, shape index: {}]
  %s3 = inlined_call_operand.hbm [shape: bf16[384,512], index: 3, kind: input, shape index: {}]
  %s4 = inlined_call_operand.hbm [shape: f32[3,512], index: 4, kind: input, shape index: {}]
  %s5 = inlined_call_operand.hbm [shape: bf16[2,512,384], index: 5, kind: input, shape index: {}]
  %s6 = inlined_call_operand.vmem [shape: f32[2,3,384], index: 6, kind: input, shape index: {}]
  %s7 = inlined_call_operand.vmem [shape: bf16[2,128,256], index: 7, kind: input, shape index: {}]
  %s8 = inlined_call_operand.vmem [shape: f32[2,1,256], index: 8, kind: input, shape index: {}]
  %s9 = inlined_call_operand.vmem [shape: bf16[2,128,128], index: 9, kind: input, shape index: {}]
  %s10 = inlined_call_operand.vmem [shape: f32[2,3,128], index: 10, kind: input, shape index: {}]
  %s11 = inlined_call_operand.hbm [shape: bf16[2,512,512], index: 11, kind: input, shape index: {}]
  %s12 = inlined_call_operand.vmem [shape: f32[2,4,512], index: 12, kind: input, shape index: {}]
  %s13 = inlined_call_operand.hbm [shape: bf16[2,2048,128], index: 13, kind: input, shape index: {}]
  %s14 = inlined_call_operand.vmem [shape: f32[2,12,128], index: 14, kind: input, shape index: {}]
  %s15 = inlined_call_operand.hbm [shape: bf16[2,128,512], index: 15, kind: input, shape index: {}]
  %s16 = inlined_call_operand.vmem [shape: f32[2,3,512], index: 16, kind: input, shape index: {}]
  %s17 = inlined_call_operand.hbm [shape: bf16[512,512], index: 17, kind: input, shape index: {}]
  %s18 = inlined_call_operand.hbm [shape: f32[3,512], index: 18, kind: input, shape index: {}]
  %s19 = inlined_call_operand.vmem [shape: f32[2,128], index: 19, kind: output, shape index: {}]
  %s20 = sld [smem:[#allocation0]]
  $region149: #{mobilebert_classifier_forward.1} parent=0
    _
  %s22 = ssub.s32 1, %s20
  %s23 = scalar_select 0, %s22, %s20
  $region1: #{mobilebert_classifier_forward.1} parent=0
    #allocation3 [shape = 'u8[393216]{0}', space=vmem, size = 0x60000, scoped, tag = 'input window, operand 3, single buffered']
    #allocation4 [shape = 's32[2]{0}', space=sflag, size = 0x8, scoped, tag = 'scoped memory for mobilebert_classifier_forward.1']
    #allocation5 [shape = 'u8[8192]{0}', space=vmem, size = 0x2000, scoped, tag = 'input window, operand 4, single buffered']
    #allocation6 [shape = 's32[1]{0}', space=sflag, size = 0x4, scoped, tag = 'scoped memory for mobilebert_classifier_forward.1']
    #allocation7 [shape = 'u8[786432]{0}', space=vmem, size = 0xc0000, scoped, tag = 'input window, operand 5']
    #allocation8 [shape = 'u8[1048576]{0}', space=vmem, size = 0x100000, scoped, tag = 'input window, operand 11']
    #allocation9 [shape = 'u8[1048576]{0}', space=vmem, size = 0x100000, scoped, tag = 'input window, operand 13']
    #allocation10 [shape = 'u8[262144]{0}', space=vmem, size = 0x40000, scoped, tag = 'input window, operand 15']
    #allocation11 [shape = 'u8[524288]{0}', space=vmem, size = 0x80000, scoped, tag = 'input window, operand 17, single buffered']
    #allocation12 [shape = 'u8[8192]{0}', space=vmem, size = 0x2000, scoped, tag = 'input window, operand 18, single buffered']
    #allocation13 [shape = 's32[1]{0}', space=sflag, size = 0x4, scoped, tag = 'scoped memory for mobilebert_classifier_forward.1']
    %24 = vsyncpa [#allocation4], 0
    %25 = vsyncpa [#allocation6], 0
    %26 = vsyncpa [#allocation13], 0
    loop: start=0, step=1, limit=4
    $region2: #{mobilebert_classifier_forward.1} parent=1 // loop_pre_header
      _
    $region3: #{mobilebert_classifier_forward.1} parent=1 // loop_header
      %s28 = sphi 0, %s32
      %p29 = scmp.ge.s32.totalorder %s28, 4
      %s35 = sphi 0, %s47
      %s36 = sphi 0, %s43
      %s37 = sphi 0, %s35
      %s38 = sphi 0, %s36
      %s39 = sphi 0, %s37
      %s40 = sphi 0, %s38
      %s50 = sphi 0, %s52
      %s53 = sphi 0, %s50
      %s54 = sphi 0, %s53
      %s70 = sphi 0, %s54
      %s76 = sphi 0, %s78
      %s79 = sphi 0, %s76
      %s80 = sphi 0, %s79
      %s96 = sphi 0, %s80
      %s100 = sphi 0, %s100
      %s102 = sphi 0, %s100
      %s103 = sphi 0, %s102
      %s117 = sphi 0, %s103
      %s121 = sphi 0, %s121
      %s123 = sphi 0, %s121
      %s124 = sphi 0, %s123
      %s138 = sphi 0, %s124
      %s142 = sphi 0, %s142
      %s144 = sphi 0, %s142
      %s145 = sphi 0, %s144
      %s159 = sphi 0, %s145
      %s165 = sphi 0, %s167
      %s168 = sphi 0, %s165
      %s169 = sphi 0, %s168
      %s185 = sphi 0, %s169
      %s191 = sphi 0, %s193
      %s194 = sphi 0, %s191
      %s195 = sphi 0, %s194
      %s211 = sphi 0, %s195
      %s217 = sphi 0, %s219
      %s220 = sphi 0, %s217
      %s221 = sphi 0, %s220
      %s237 = sphi 0, %s221
      %s243 = sphi 0, %s245
      %s246 = sphi 0, %s243
      %s247 = sphi 0, %s246
      %s263 = sphi 0, %s247
      %s269 = sphi 0, %s271
      %s272 = sphi 0, %s269
      %s273 = sphi 0, %s272
      %s289 = sphi 0, %s273
      %s295 = sphi 0, %s297
      %s298 = sphi 0, %s295
      %s299 = sphi 0, %s298
      %s315 = sphi 0, %s299
      %s321 = sphi 0, %s323
      %s324 = sphi 0, %s321
      %s325 = sphi 0, %s324
      %s341 = sphi 0, %s325
      %s347 = sphi 0, %s349
      %s350 = sphi 0, %s347
      %s351 = sphi 0, %s350
      %s367 = sphi 0, %s351
      %s373 = sphi 0, %s375
      %s376 = sphi 0, %s373
      %s377 = sphi 0, %s376
      %s393 = sphi 0, %s377
      %s399 = sphi 0, %s401
      %s402 = sphi 0, %s399
      %s403 = sphi 0, %s402
      %s419 = sphi 0, %s403
      %s425 = sphi 0, %s427
      %s428 = sphi 0, %s425
      %s429 = sphi 0, %s428
      %s445 = sphi 0, %s429
      %s451 = sphi 0, %s453
      %s454 = sphi 0, %s451
      %s455 = sphi 0, %s454
      %s471 = sphi 0, %s455
      %s475 = sphi 0, %s475
      %s477 = sphi 0, %s475
      %s478 = sphi 0, %s477
      %s492 = sphi 0, %s478
      %s496 = sphi 0, %s496
      %s498 = sphi 0, %s496
      %s499 = sphi 0, %s498
      %s513 = sphi 0, %s499
      %s519 = sphi 0, %s521
      %s522 = sphi 0, %s519
      %s523 = sphi 0, %s522
      %s539 = sphi 0, %s523
    $region4: #{mobilebert_classifier_forward.1} parent=1 // loop_header_branch
      %31 = sbr.rel (%p29) target = $region8
    $region5: #{mobilebert_classifier_forward.1} parent=1 // loop_body
      %s33 = ssub.s32 %s28, 1
      %s34 = ssub.s32 %s28, 2
      %s41 = sadd.s32 1, %s36
      %p42 = scmp.ge.s32.totalorder %s41, 2
      %s43 = scalar_select %p42, 0, %s41
      %s44 = sadd.s32 1, %s35
      %s45 = scalar_select %p42, %s44, %s35
      %p46 = scmp.ge.s32.totalorder %s45, 1
      %s47 = scalar_select %p46, 0, %s45
      %s48 = ssub.s32 %s35, %s47
      %p49 = scmp.eq.s32.totalorder %s48, 0
      %s51 = sadd.s32 %s50, 1
      %s52 = scalar_select %p49, %s50, %s51
      %p55 = pneg %p49
      %p56 = scmp.eq.s32.totalorder %s28, 1
      %p57 = por %p55, %p56
      %p58 = scmp.ne.s32.totalorder %s50, %s53
      %p59 = scmp.eq.s32.totalorder %s28, 0
      %p60 = por %p58, %p59
      %p61 = scmp.ne.s32.totalorder %s50, %s53
      %p62 = scmp.eq.s32.totalorder %s33, 1
      %p63 = por %p61, %p62
      %p64 = scmp.ne.s32.totalorder %s53, %s54
      %p65 = scmp.eq.s32.totalorder %s33, 0
      %p66 = por %p64, %p65
      %p67 = scmp.ne.s32.totalorder %s53, %s54
      %p68 = scmp.eq.s32.totalorder %s34, 1
      %p69 = por %p67, %p68
      %p71 = scmp.ne.s32.totalorder %s54, %s70
      %p72 = scmp.eq.s32.totalorder %s34, 0
      %p73 = por %p71, %p72
      %s74 = ssub.s32 %s35, %s47
      %p75 = scmp.eq.s32.totalorder %s74, 0
      %s77 = sadd.s32 %s76, 1
      %s78 = scalar_select %p75, %s76, %s77
      %p81 = pneg %p75
      %p82 = scmp.eq.s32.totalorder %s28, 1
      %p83 = por %p81, %p82
      %p84 = scmp.ne.s32.totalorder %s76, %s79
      %p85 = scmp.eq.s32.totalorder %s28, 0
      %p86 = por %p84, %p85
      %p87 = scmp.ne.s32.totalorder %s76, %s79
      %p88 = scmp.eq.s32.totalorder %s33, 1
      %p89 = por %p87, %p88
      %p90 = scmp.ne.s32.totalorder %s79, %s80
      %p91 = scmp.eq.s32.totalorder %s33, 0
      %p92 = por %p90, %p91
      %p93 = scmp.ne.s32.totalorder %s79, %s80
      %p94 = scmp.eq.s32.totalorder %s34, 1
      %p95 = por %p93, %p94
      %p97 = scmp.ne.s32.totalorder %s80, %s96
      %p98 = scmp.eq.s32.totalorder %s34, 0
      %p99 = por %p97, %p98
      %s101 = sadd.s32 %s100, 1
      %p104 = scmp.eq.s32.totalorder %s28, 1
      %p105 = scmp.ne.s32.totalorder %s100, %s102
      %p106 = scmp.eq.s32.totalorder %s28, 0
      %p107 = por %p105, %p106
      %p108 = scmp.ne.s32.totalorder %s100, %s102
      %p109 = scmp.eq.s32.totalorder %s33, 1
      %p110 = por %p108, %p109
      %p111 = scmp.ne.s32.totalorder %s102, %s103
      %p112 = scmp.eq.s32.totalorder %s33, 0
      %p113 = por %p111, %p112
      %p114 = scmp.ne.s32.totalorder %s102, %s103
      %p115 = scmp.eq.s32.totalorder %s34, 1
      %p116 = por %p114, %p115
      %p118 = scmp.ne.s32.totalorder %s103, %s117
      %p119 = scmp.eq.s32.totalorder %s34, 0
      %p120 = por %p118, %p119
      %s122 = sadd.s32 %s121, 1
      %p125 = scmp.eq.s32.totalorder %s28, 1
      %p126 = scmp.ne.s32.totalorder %s121, %s123
      %p127 = scmp.eq.s32.totalorder %s28, 0
      %p128 = por %p126, %p127
      %p129 = scmp.ne.s32.totalorder %s121, %s123
      %p130 = scmp.eq.s32.totalorder %s33, 1
      %p131 = por %p129, %p130
      %p132 = scmp.ne.s32.totalorder %s123, %s124
      %p133 = scmp.eq.s32.totalorder %s33, 0
      %p134 = por %p132, %p133
      %p135 = scmp.ne.s32.totalorder %s123, %s124
      %p136 = scmp.eq.s32.totalorder %s34, 1
      %p137 = por %p135, %p136
      %p139 = scmp.ne.s32.totalorder %s124, %s138
      %p140 = scmp.eq.s32.totalorder %s34, 0
      %p141 = por %p139, %p140
      %s143 = sadd.s32 %s142, 1
      %p146 = scmp.eq.s32.totalorder %s28, 1
      %p147 = scmp.ne.s32.totalorder %s142, %s144
      %p148 = scmp.eq.s32.totalorder %s28, 0
      %p149 = por %p147, %p148
      %p150 = scmp.ne.s32.totalorder %s142, %s144
      %p151 = scmp.eq.s32.totalorder %s33, 1
      %p152 = por %p150, %p151
      %p153 = scmp.ne.s32.totalorder %s144, %s145
      %p154 = scmp.eq.s32.totalorder %s33, 0
      %p155 = por %p153, %p154
      %p156 = scmp.ne.s32.totalorder %s144, %s145
      %p157 = scmp.eq.s32.totalorder %s34, 1
      %p158 = por %p156, %p157
      %p160 = scmp.ne.s32.totalorder %s145, %s159
      %p161 = scmp.eq.s32.totalorder %s34, 0
      %p162 = por %p160, %p161
      %s163 = ssub.s32 %s36, %s43
      %p164 = scmp.eq.s32.totalorder %s163, 0
      %s166 = sadd.s32 %s165, 1
      %s167 = scalar_select %p164, %s165, %s166
      %p170 = pneg %p164
      %p171 = scmp.eq.s32.totalorder %s28, 1
      %p172 = por %p170, %p171
      %p173 = scmp.ne.s32.totalorder %s165, %s168
      %p174 = scmp.eq.s32.totalorder %s28, 0
      %p175 = por %p173, %p174
      %p176 = scmp.ne.s32.totalorder %s165, %s168
      %p177 = scmp.eq.s32.totalorder %s33, 1
      %p178 = por %p176, %p177
      %p179 = scmp.ne.s32.totalorder %s168, %s169
      %p180 = scmp.eq.s32.totalorder %s33, 0
      %p181 = por %p179, %p180
      %p182 = scmp.ne.s32.totalorder %s168, %s169
      %p183 = scmp.eq.s32.totalorder %s34, 1
      %p184 = por %p182, %p183
      %p186 = scmp.ne.s32.totalorder %s169, %s185
      %p187 = scmp.eq.s32.totalorder %s34, 0
      %p188 = por %p186, %p187
      %s189 = ssub.s32 %s36, %s43
      %p190 = scmp.eq.s32.totalorder %s189, 0
      %s192 = sadd.s32 %s191, 1
      %s193 = scalar_select %p190, %s191, %s192
      %p196 = pneg %p190
      %p197 = scmp.eq.s32.totalorder %s28, 1
      %p198 = por %p196, %p197
      %p199 = scmp.ne.s32.totalorder %s191, %s194
      %p200 = scmp.eq.s32.totalorder %s28, 0
      %p201 = por %p199, %p200
      %p202 = scmp.ne.s32.totalorder %s191, %s194
      %p203 = scmp.eq.s32.totalorder %s33, 1
      %p204 = por %p202, %p203
      %p205 = scmp.ne.s32.totalorder %s194, %s195
      %p206 = scmp.eq.s32.totalorder %s33, 0
      %p207 = por %p205, %p206
      %p208 = scmp.ne.s32.totalorder %s194, %s195
      %p209 = scmp.eq.s32.totalorder %s34, 1
      %p210 = por %p208, %p209
      %p212 = scmp.ne.s32.totalorder %s195, %s211
      %p213 = scmp.eq.s32.totalorder %s34, 0
      %p214 = por %p212, %p213
      %s215 = ssub.s32 %s36, %s43
      %p216 = scmp.eq.s32.totalorder %s215, 0
      %s218 = sadd.s32 %s217, 1
      %s219 = scalar_select %p216, %s217, %s218
      %p222 = pneg %p216
      %p223 = scmp.eq.s32.totalorder %s28, 1
      %p224 = por %p222, %p223
      %p225 = scmp.ne.s32.totalorder %s217, %s220
      %p226 = scmp.eq.s32.totalorder %s28, 0
      %p227 = por %p225, %p226
      %p228 = scmp.ne.s32.totalorder %s217, %s220
      %p229 = scmp.eq.s32.totalorder %s33, 1
      %p230 = por %p228, %p229
      %p231 = scmp.ne.s32.totalorder %s220, %s221
      %p232 = scmp.eq.s32.totalorder %s33, 0
      %p233 = por %p231, %p232
      %p234 = scmp.ne.s32.totalorder %s220, %s221
      %p235 = scmp.eq.s32.totalorder %s34, 1
      %p236 = por %p234, %p235
      %p238 = scmp.ne.s32.totalorder %s221, %s237
      %p239 = scmp.eq.s32.totalorder %s34, 0
      %p240 = por %p238, %p239
      %s241 = ssub.s32 %s36, %s43
      %p242 = scmp.eq.s32.totalorder %s241, 0
      %s244 = sadd.s32 %s243, 1
      %s245 = scalar_select %p242, %s243, %s244
      %p248 = pneg %p242
      %p249 = scmp.eq.s32.totalorder %s28, 1
      %p250 = por %p248, %p249
      %p251 = scmp.ne.s32.totalorder %s243, %s246
      %p252 = scmp.eq.s32.totalorder %s28, 0
      %p253 = por %p251, %p252
      %p254 = scmp.ne.s32.totalorder %s243, %s246
      %p255 = scmp.eq.s32.totalorder %s33, 1
      %p256 = por %p254, %p255
      %p257 = scmp.ne.s32.totalorder %s246, %s247
      %p258 = scmp.eq.s32.totalorder %s33, 0
      %p259 = por %p257, %p258
      %p260 = scmp.ne.s32.totalorder %s246, %s247
      %p261 = scmp.eq.s32.totalorder %s34, 1
      %p262 = por %p260, %p261
      %p264 = scmp.ne.s32.totalorder %s247, %s263
      %p265 = scmp.eq.s32.totalorder %s34, 0
      %p266 = por %p264, %p265
      %s267 = ssub.s32 %s36, %s43
      %p268 = scmp.eq.s32.totalorder %s267, 0
      %s270 = sadd.s32 %s269, 1
      %s271 = scalar_select %p268, %s269, %s270
      %p274 = pneg %p268
      %p275 = scmp.eq.s32.totalorder %s28, 1
      %p276 = por %p274, %p275
      %p277 = scmp.ne.s32.totalorder %s269, %s272
      %p278 = scmp.eq.s32.totalorder %s28, 0
      %p279 = por %p277, %p278
      %p280 = scmp.ne.s32.totalorder %s269, %s272
      %p281 = scmp.eq.s32.totalorder %s33, 1
      %p282 = por %p280, %p281
      %p283 = scmp.ne.s32.totalorder %s272, %s273
      %p284 = scmp.eq.s32.totalorder %s33, 0
      %p285 = por %p283, %p284
      %p286 = scmp.ne.s32.totalorder %s272, %s273
      %p287 = scmp.eq.s32.totalorder %s34, 1
      %p288 = por %p286, %p287
      %p290 = scmp.ne.s32.totalorder %s273, %s289
      %p291 = scmp.eq.s32.totalorder %s34, 0
      %p292 = por %p290, %p291
      %s293 = ssub.s32 %s36, %s43
      %p294 = scmp.eq.s32.totalorder %s293, 0
      %s296 = sadd.s32 %s295, 1
      %s297 = scalar_select %p294, %s295, %s296
      %p300 = pneg %p294
      %p301 = scmp.eq.s32.totalorder %s28, 1
      %p302 = por %p300, %p301
      %p303 = scmp.ne.s32.totalorder %s295, %s298
      %p304 = scmp.eq.s32.totalorder %s28, 0
      %p305 = por %p303, %p304
      %p306 = scmp.ne.s32.totalorder %s295, %s298
      %p307 = scmp.eq.s32.totalorder %s33, 1
      %p308 = por %p306, %p307
      %p309 = scmp.ne.s32.totalorder %s298, %s299
      %p310 = scmp.eq.s32.totalorder %s33, 0
      %p311 = por %p309, %p310
      %p312 = scmp.ne.s32.totalorder %s298, %s299
      %p313 = scmp.eq.s32.totalorder %s34, 1
      %p314 = por %p312, %p313
      %p316 = scmp.ne.s32.totalorder %s299, %s315
      %p317 = scmp.eq.s32.totalorder %s34, 0
      %p318 = por %p316, %p317
      %s319 = ssub.s32 %s36, %s43
      %p320 = scmp.eq.s32.totalorder %s319, 0
      %s322 = sadd.s32 %s321, 1
      %s323 = scalar_select %p320, %s321, %s322
      %p326 = pneg %p320
      %p327 = scmp.eq.s32.totalorder %s28, 1
      %p328 = por %p326, %p327
      %p329 = scmp.ne.s32.totalorder %s321, %s324
      %p330 = scmp.eq.s32.totalorder %s28, 0
      %p331 = por %p329, %p330
      %p332 = scmp.ne.s32.totalorder %s321, %s324
      %p333 = scmp.eq.s32.totalorder %s33, 1
      %p334 = por %p332, %p333
      %p335 = scmp.ne.s32.totalorder %s324, %s325
      %p336 = scmp.eq.s32.totalorder %s33, 0
      %p337 = por %p335, %p336
      %p338 = scmp.ne.s32.totalorder %s324, %s325
      %p339 = scmp.eq.s32.totalorder %s34, 1
      %p340 = por %p338, %p339
      %p342 = scmp.ne.s32.totalorder %s325, %s341
      %p343 = scmp.eq.s32.totalorder %s34, 0
      %p344 = por %p342, %p343
      %s345 = ssub.s32 %s36, %s43
      %p346 = scmp.eq.s32.totalorder %s345, 0
      %s348 = sadd.s32 %s347, 1
      %s349 = scalar_select %p346, %s347, %s348
      %p352 = pneg %p346
      %p353 = scmp.eq.s32.totalorder %s28, 1
      %p354 = por %p352, %p353
      %p355 = scmp.ne.s32.totalorder %s347, %s350
      %p356 = scmp.eq.s32.totalorder %s28, 0
      %p357 = por %p355, %p356
      %p358 = scmp.ne.s32.totalorder %s347, %s350
      %p359 = scmp.eq.s32.totalorder %s33, 1
      %p360 = por %p358, %p359
      %p361 = scmp.ne.s32.totalorder %s350, %s351
      %p362 = scmp.eq.s32.totalorder %s33, 0
      %p363 = por %p361, %p362
      %p364 = scmp.ne.s32.totalorder %s350, %s351
      %p365 = scmp.eq.s32.totalorder %s34, 1
      %p366 = por %p364, %p365
      %p368 = scmp.ne.s32.totalorder %s351, %s367
      %p369 = scmp.eq.s32.totalorder %s34, 0
      %p370 = por %p368, %p369
      %s371 = ssub.s32 %s36, %s43
      %p372 = scmp.eq.s32.totalorder %s371, 0
      %s374 = sadd.s32 %s373, 1
      %s375 = scalar_select %p372, %s373, %s374
      %p378 = pneg %p372
      %p379 = scmp.eq.s32.totalorder %s28, 1
      %p380 = por %p378, %p379
      %p381 = scmp.ne.s32.totalorder %s373, %s376
      %p382 = scmp.eq.s32.totalorder %s28, 0
      %p383 = por %p381, %p382
      %p384 = scmp.ne.s32.totalorder %s373, %s376
      %p385 = scmp.eq.s32.totalorder %s33, 1
      %p386 = por %p384, %p385
      %p387 = scmp.ne.s32.totalorder %s376, %s377
      %p388 = scmp.eq.s32.totalorder %s33, 0
      %p389 = por %p387, %p388
      %p390 = scmp.ne.s32.totalorder %s376, %s377
      %p391 = scmp.eq.s32.totalorder %s34, 1
      %p392 = por %p390, %p391
      %p394 = scmp.ne.s32.totalorder %s377, %s393
      %p395 = scmp.eq.s32.totalorder %s34, 0
      %p396 = por %p394, %p395
      %s397 = ssub.s32 %s36, %s43
      %p398 = scmp.eq.s32.totalorder %s397, 0
      %s400 = sadd.s32 %s399, 1
      %s401 = scalar_select %p398, %s399, %s400
      %p404 = pneg %p398
      %p405 = scmp.eq.s32.totalorder %s28, 1
      %p406 = por %p404, %p405
      %p407 = scmp.ne.s32.totalorder %s399, %s402
      %p408 = scmp.eq.s32.totalorder %s28, 0
      %p409 = por %p407, %p408
      %p410 = scmp.ne.s32.totalorder %s399, %s402
      %p411 = scmp.eq.s32.totalorder %s33, 1
      %p412 = por %p410, %p411
      %p413 = scmp.ne.s32.totalorder %s402, %s403
      %p414 = scmp.eq.s32.totalorder %s33, 0
      %p415 = por %p413, %p414
      %p416 = scmp.ne.s32.totalorder %s402, %s403
      %p417 = scmp.eq.s32.totalorder %s34, 1
      %p418 = por %p416, %p417
      %p420 = scmp.ne.s32.totalorder %s403, %s419
      %p421 = scmp.eq.s32.totalorder %s34, 0
      %p422 = por %p420, %p421
      %s423 = ssub.s32 %s36, %s43
      %p424 = scmp.eq.s32.totalorder %s423, 0
      %s426 = sadd.s32 %s425, 1
      %s427 = scalar_select %p424, %s425, %s426
      %p430 = pneg %p424
      %p431 = scmp.eq.s32.totalorder %s28, 1
      %p432 = por %p430, %p431
      %p433 = scmp.ne.s32.totalorder %s425, %s428
      %p434 = scmp.eq.s32.totalorder %s28, 0
      %p435 = por %p433, %p434
      %p436 = scmp.ne.s32.totalorder %s425, %s428
      %p437 = scmp.eq.s32.totalorder %s33, 1
      %p438 = por %p436, %p437
      %p439 = scmp.ne.s32.totalorder %s428, %s429
      %p440 = scmp.eq.s32.totalorder %s33, 0
      %p441 = por %p439, %p440
      %p442 = scmp.ne.s32.totalorder %s428, %s429
      %p443 = scmp.eq.s32.totalorder %s34, 1
      %p444 = por %p442, %p443
      %p446 = scmp.ne.s32.totalorder %s429, %s445
      %p447 = scmp.eq.s32.totalorder %s34, 0
      %p448 = por %p446, %p447
      %s449 = ssub.s32 %s36, %s43
      %p450 = scmp.eq.s32.totalorder %s449, 0
      %s452 = sadd.s32 %s451, 1
      %s453 = scalar_select %p450, %s451, %s452
      %p456 = pneg %p450
      %p457 = scmp.eq.s32.totalorder %s28, 1
      %p458 = por %p456, %p457
      %p459 = scmp.ne.s32.totalorder %s451, %s454
      %p460 = scmp.eq.s32.totalorder %s28, 0
      %p461 = por %p459, %p460
      %p462 = scmp.ne.s32.totalorder %s451, %s454
      %p463 = scmp.eq.s32.totalorder %s33, 1
      %p464 = por %p462, %p463
      %p465 = scmp.ne.s32.totalorder %s454, %s455
      %p466 = scmp.eq.s32.totalorder %s33, 0
      %p467 = por %p465, %p466
      %p468 = scmp.ne.s32.totalorder %s454, %s455
      %p469 = scmp.eq.s32.totalorder %s34, 1
      %p470 = por %p468, %p469
      %p472 = scmp.ne.s32.totalorder %s455, %s471
      %p473 = scmp.eq.s32.totalorder %s34, 0
      %p474 = por %p472, %p473
      %s476 = sadd.s32 %s475, 1
      %p479 = scmp.eq.s32.totalorder %s28, 1
      %p480 = scmp.ne.s32.totalorder %s475, %s477
      %p481 = scmp.eq.s32.totalorder %s28, 0
      %p482 = por %p480, %p481
      %p483 = scmp.ne.s32.totalorder %s475, %s477
      %p484 = scmp.eq.s32.totalorder %s33, 1
      %p485 = por %p483, %p484
      %p486 = scmp.ne.s32.totalorder %s477, %s478
      %p487 = scmp.eq.s32.totalorder %s33, 0
      %p488 = por %p486, %p487
      %p489 = scmp.ne.s32.totalorder %s477, %s478
      %p490 = scmp.eq.s32.totalorder %s34, 1
      %p491 = por %p489, %p490
      %p493 = scmp.ne.s32.totalorder %s478, %s492
      %p494 = scmp.eq.s32.totalorder %s34, 0
      %p495 = por %p493, %p494
      %s497 = sadd.s32 %s496, 1
      %p500 = scmp.eq.s32.totalorder %s28, 1
      %p501 = scmp.ne.s32.totalorder %s496, %s498
      %p502 = scmp.eq.s32.totalorder %s28, 0
      %p503 = por %p501, %p502
      %p504 = scmp.ne.s32.totalorder %s496, %s498
      %p505 = scmp.eq.s32.totalorder %s33, 1
      %p506 = por %p504, %p505
      %p507 = scmp.ne.s32.totalorder %s498, %s499
      %p508 = scmp.eq.s32.totalorder %s33, 0
      %p509 = por %p507, %p508
      %p510 = scmp.ne.s32.totalorder %s498, %s499
      %p511 = scmp.eq.s32.totalorder %s34, 1
      %p512 = por %p510, %p511
      %p514 = scmp.ne.s32.totalorder %s499, %s513
      %p515 = scmp.eq.s32.totalorder %s34, 0
      %p516 = por %p514, %p515
      %s517 = ssub.s32 %s35, %s47
      %p518 = scmp.eq.s32.totalorder %s517, 0
      %s520 = sadd.s32 %s519, 1
      %s521 = scalar_select %p518, %s519, %s520
      %p524 = pneg %p518
      %p525 = scmp.eq.s32.totalorder %s28, 1
      %p526 = por %p524, %p525
      %p527 = scmp.ne.s32.totalorder %s519, %s522
      %p528 = scmp.eq.s32.totalorder %s28, 0
      %p529 = por %p527, %p528
      %p530 = scmp.ne.s32.totalorder %s519, %s522
      %p531 = scmp.eq.s32.totalorder %s33, 1
      %p532 = por %p530, %p531
      %p533 = scmp.ne.s32.totalorder %s522, %s523
      %p534 = scmp.eq.s32.totalorder %s33, 0
      %p535 = por %p533, %p534
      %p536 = scmp.ne.s32.totalorder %s522, %s523
      %p537 = scmp.eq.s32.totalorder %s34, 1
      %p538 = por %p536, %p537
      %p540 = scmp.ne.s32.totalorder %s523, %s539
      %p541 = scmp.eq.s32.totalorder %s34, 0
      %p542 = por %p540, %p541
      %p543 = scmp.le.s32.totalorder 1, %s28
      %p544 = scmp.lt.s32.totalorder %s28, 3
      %p545 = pnand %p543, %p544
      %p546 = pneg %p545
      // Predicated region
      $region9: #{mobilebert_classifier_forward.1} parent=5 // pred_check
        _
      $region10: #{mobilebert_classifier_forward.1} parent=5 // pred_check_branch
        %548 = sbr.rel (%p545) target = $region12
      $region11: #{mobilebert_classifier_forward.1} parent=5 // pred_region
        %s549 = ssub.s32 %s28, 1
        // Predicated region
        $region13: #{mobilebert_classifier_forward.1} parent=11 // pred_check
          %p550 = pneg %p66
        $region14: #{mobilebert_classifier_forward.1} parent=11 // pred_check_branch
          %552 = sbr.rel (%p550) target = $region16
        $region15: #{mobilebert_classifier_forward.1} parent=11 // pred_region
          %s553 = smul.u32 2, %s37
          %p554 = scmp.lt.s32.totalorder %s553, 1
          %s555 = scalar_select %p554, %s553, 1
          %s556 = scalar_lea.vmem %s0, %s555
          %s557 = smul.u32 2, %s37
        $region16: #{mobilebert_classifier_forward.1} parent=11 // pred_fallthru
          _
        // Predicated region
        $region17: #{mobilebert_classifier_forward.1} parent=11 // pred_check
          %p558 = pneg %p92
        $region18: #{mobilebert_classifier_forward.1} parent=11 // pred_check_branch
          %560 = sbr.rel (%p558) target = $region20
        $region19: #{mobilebert_classifier_forward.1} parent=11 // pred_region
          %s561 = smul.u32 2, %s37
          %p562 = scmp.lt.s32.totalorder %s561, 1
          %s563 = scalar_select %p562, %s561, 1
          %s564 = smul.addr %s563, 3
          %s565 = smul.addr %s564, 4
          %s566 = scalar_lea.vmem %s1, %s565
          %s567 = smul.u32 2, %s37
        $region20: #{mobilebert_classifier_forward.1} parent=11 // pred_fallthru
          _
        // Predicated region
        $region21: #{mobilebert_classifier_forward.1} parent=11 // pred_check
          %p568 = pneg %p113
        $region22: #{mobilebert_classifier_forward.1} parent=11 // pred_check_branch
          %570 = sbr.rel (%p568) target = $region24
        $region23: #{mobilebert_classifier_forward.1} parent=11 // pred_region
          _
        $region24: #{mobilebert_classifier_forward.1} parent=11 // pred_fallthru
          _
        // Predicated region
        $region25: #{mobilebert_classifier_forward.1} parent=11 // pred_check
          %p571 = pneg %p134
        $region26: #{mobilebert_classifier_forward.1} parent=11 // pred_check_branch
          %573 = sbr.rel (%p571) target = $region28
        $region27: #{mobilebert_classifier_forward.1} parent=11 // pred_region
          %s575 = ssub.s32 12288, 12288
          %576 = vsyncadd [#allocation4], %s575
          %s577 = sshll.u32 [#allocation3], 4
          %s578 = int_to_ptr.vmem [resolvable:$true] %s577
          %583 = dma.hbm_to_vmem [thread:$0]  %s3, 12288, %s578, [#allocation4], 256, 256, 16
        $region28: #{mobilebert_classifier_forward.1} parent=11 // pred_fallthru
          _
        // Predicated region
        $region29: #{mobilebert_classifier_forward.1} parent=11 // pred_check
          %p584 = pneg %p155
        $region30: #{mobilebert_classifier_forward.1} parent=11 // pred_check_branch
          %586 = sbr.rel (%p584) target = $region32
        $region31: #{mobilebert_classifier_forward.1} parent=11 // pred_region
          %s588 = ssub.s32 256, 256
          %589 = vsyncadd [#allocation6], %s588
          %s591 = sshll.u32 [#allocation5], 4
          %s592 = int_to_ptr.vmem [resolvable:$true] %s591
          %594 = dma.hbm_to_vmem [thread:$0]  %s4, 256, %s592, [#allocation6]
        $region32: #{mobilebert_classifier_forward.1} parent=11 // pred_fallthru
          _
        // Predicated region
        $region33: #{mobilebert_classifier_forward.1} parent=11 // pred_check
          %p595 = pneg %p488
        $region34: #{mobilebert_classifier_forward.1} parent=11 // pred_check_branch
          %597 = sbr.rel (%p595) target = $region36
        $region35: #{mobilebert_classifier_forward.1} parent=11 // pred_region
          %s599 = ssub.s32 16384, 16384
          %600 = vsyncadd [#allocation6], %s599
          %s601 = sshll.u32 [#allocation11], 4
          %s602 = int_to_ptr.vmem [resolvable:$true] %s601
          %607 = dma.hbm_to_vmem [thread:$0]  %s17, 16384, %s602, [#allocation6], 256, 256, 16
        $region36: #{mobilebert_classifier_forward.1} parent=11 // pred_fallthru
          _
        // Predicated region
        $region37: #{mobilebert_classifier_forward.1} parent=11 // pred_check
          %p608 = pneg %p509
        $region38: #{mobilebert_classifier_forward.1} parent=11 // pred_check_branch
          %610 = sbr.rel (%p608) target = $region40
        $region39: #{mobilebert_classifier_forward.1} parent=11 // pred_region
          %s612 = ssub.s32 256, 256
          %613 = vsyncadd [#allocation13], %s612
          %s615 = sshll.u32 [#allocation12], 4
          %s616 = int_to_ptr.vmem [resolvable:$true] %s615
          %618 = dma.hbm_to_vmem [thread:$0]  %s18, 256, %s616, [#allocation13]
        $region40: #{mobilebert_classifier_forward.1} parent=11 // pred_fallthru
          _
      $region12: #{mobilebert_classifier_forward.1} parent=5 // pred_fallthru
        _
      %p619 = scmp.lt.s32.totalorder %s28, 2
      // Predicated region
      $region41: #{mobilebert_classifier_forward.1} parent=5 // pred_check
        %p620 = pneg %p619
      $region42: #{mobilebert_classifier_forward.1} parent=5 // pred_check_branch
        %622 = sbr.rel (%p620) target = $region44
      $region43: #{mobilebert_classifier_forward.1} parent=5 // pred_region
        // Predicated region
        $region45: #{mobilebert_classifier_forward.1} parent=43 // pred_check
          %p623 = pneg %p175
        $region46: #{mobilebert_classifier_forward.1} parent=43 // pred_check_branch
          %625 = sbr.rel (%p623) target = $region48
        $region47: #{mobilebert_classifier_forward.1} parent=43 // pred_region
          %s626 = sand.u32 %s28, 1
          %s627 = scalar_lea.sflag [#allocation4], %s626
          %s628 = sand.u32 %s165, 1
          %s629 = smul.addr %s628, 768
          %s630 = scalar_lea.vmem [#allocation7], %s629
          %s632 = ssub.s32 12288, 12288
          %633 = vsyncadd %s627, %s632
          %s634 = smul.addr %s36, 192
          %s635 = smul.addr %s634, 64
          %s636 = scalar_lea.hbm %s5, %s635
          %s637 = sshll.u32 %s630, 4
          %s638 = int_to_ptr.vmem [resolvable:$true] %s637
          %643 = dma.hbm_to_vmem [thread:$0]  %s636, 12288, %s638, %s627, 192, 192, 12
        $region48: #{mobilebert_classifier_forward.1} parent=43 // pred_fallthru
          _
        // Predicated region
        $region49: #{mobilebert_classifier_forward.1} parent=43 // pred_check
          %p644 = pneg %p201
        $region50: #{mobilebert_classifier_forward.1} parent=43 // pred_check_branch
          %646 = sbr.rel (%p644) target = $region52
        $region51: #{mobilebert_classifier_forward.1} parent=43 // pred_region
          %p647 = scmp.lt.s32.totalorder %s36, 1
          %s648 = scalar_select %p647, %s36, 1
          %s649 = smul.addr %s648, 3
          %s650 = smul.addr %s649, 4
          %s651 = scalar_lea.vmem %s6, %s650
        $region52: #{mobilebert_classifier_forward.1} parent=43 // pred_fallthru
          _
        // Predicated region
        $region53: #{mobilebert_classifier_forward.1} parent=43 // pred_check
          %p652 = pneg %p227
        $region54: #{mobilebert_classifier_forward.1} parent=43 // pred_check_branch
          %654 = sbr.rel (%p652) target = $region56
        $region55: #{mobilebert_classifier_forward.1} parent=43 // pred_region
          %p655 = scmp.lt.s32.totalorder %s36, 1
          %s656 = scalar_select %p655, %s36, 1
          %s657 = smul.addr %s656, 32
          %s658 = smul.addr %s657, 4
          %s659 = scalar_lea.vmem %s7, %s658
        $region56: #{mobilebert_classifier_forward.1} parent=43 // pred_fallthru
          _
        // Predicated region
        $region57: #{mobilebert_classifier_forward.1} parent=43 // pred_check
          %p660 = pneg %p253
        $region58: #{mobilebert_classifier_forward.1} parent=43 // pred_check_branch
          %662 = sbr.rel (%p660) target = $region60
        $region59: #{mobilebert_classifier_forward.1} parent=43 // pred_region
          %p663 = scmp.lt.s32.totalorder %s36, 1
          %s664 = scalar_select %p663, %s36, 1
          %s665 = smul.addr %s664, 2
          %s666 = scalar_lea.vmem %s8, %s665
        $region60: #{mobilebert_classifier_forward.1} parent=43 // pred_fallthru
          _
        // Predicated region
        $region61: #{mobilebert_classifier_forward.1} parent=43 // pred_check
          %p667 = pneg %p279
        $region62: #{mobilebert_classifier_forward.1} parent=43 // pred_check_branch
          %669 = sbr.rel (%p667) target = $region64
        $region63: #{mobilebert_classifier_forward.1} parent=43 // pred_region
          %p670 = scmp.lt.s32.totalorder %s36, 1
          %s671 = scalar_select %p670, %s36, 1
          %s672 = smul.addr %s671, 16
          %s673 = smul.addr %s672, 4
          %s674 = scalar_lea.vmem %s9, %s673
        $region64: #{mobilebert_classifier_forward.1} parent=43 // pred_fallthru
          _
        // Predicated region
        $region65: #{mobilebert_classifier_forward.1} parent=43 // pred_check
          %p675 = pneg %p305
        $region66: #{mobilebert_classifier_forward.1} parent=43 // pred_check_branch
          %677 = sbr.rel (%p675) target = $region68
        $region67: #{mobilebert_classifier_forward.1} parent=43 // pred_region
          %p678 = scmp.lt.s32.totalorder %s36, 1
          %s679 = scalar_select %p678, %s36, 1
          %s680 = smul.addr %s679, 4
          %s681 = scalar_lea.vmem %s10, %s680
        $region68: #{mobilebert_classifier_forward.1} parent=43 // pred_fallthru
          _
        // Predicated region
        $region69: #{mobilebert_classifier_forward.1} parent=43 // pred_check
          %p682 = pneg %p331
        $region70: #{mobilebert_classifier_forward.1} parent=43 // pred_check_branch
          %684 = sbr.rel (%p682) target = $region72
        $region71: #{mobilebert_classifier_forward.1} parent=43 // pred_region
          %s685 = sand.u32 %s28, 1
          %s686 = scalar_lea.sflag [#allocation4], %s685
          %s687 = sand.u32 %s321, 1
          %s688 = smul.addr %s687, 1024
          %s689 = scalar_lea.vmem [#allocation8], %s688
          %s691 = ssub.s32 16384, 16384
          %692 = vsyncadd %s686, %s691
          %s693 = smul.addr %s36, 256
          %s694 = smul.addr %s693, 64
          %s695 = scalar_lea.hbm %s11, %s694
          %s696 = sshll.u32 %s689, 4
          %s697 = int_to_ptr.vmem [resolvable:$true] %s696
          %702 = dma.hbm_to_vmem [thread:$0]  %s695, 16384, %s697, %s686, 256, 256, 16
        $region72: #{mobilebert_classifier_forward.1} parent=43 // pred_fallthru
          _
        // Predicated region
        $region73: #{mobilebert_classifier_forward.1} parent=43 // pred_check
          %p703 = pneg %p357
        $region74: #{mobilebert_classifier_forward.1} parent=43 // pred_check_branch
          %705 = sbr.rel (%p703) target = $region76
        $region75: #{mobilebert_classifier_forward.1} parent=43 // pred_region
          %p706 = scmp.lt.s32.totalorder %s36, 1
          %s707 = scalar_select %p706, %s36, 1
          %s708 = smul.addr %s707, 4
          %s709 = smul.addr %s708, 4
          %s710 = scalar_lea.vmem %s12, %s709
        $region76: #{mobilebert_classifier_forward.1} parent=43 // pred_fallthru
          _
        // Predicated region
        $region77: #{mobilebert_classifier_forward.1} parent=43 // pred_check
          %p711 = pneg %p383
        $region78: #{mobilebert_classifier_forward.1} parent=43 // pred_check_branch
          %713 = sbr.rel (%p711) target = $region80
        $region79: #{mobilebert_classifier_forward.1} parent=43 // pred_region
          %s714 = sand.u32 %s28, 1
          %s715 = scalar_lea.sflag [#allocation4], %s714
          %s716 = sand.u32 %s373, 1
          %s717 = smul.addr %s716, 1024
          %s718 = scalar_lea.vmem [#allocation9], %s717
          %s720 = ssub.s32 16384, 16384
          %721 = vsyncadd %s715, %s720
          %s722 = smul.addr %s36, 256
          %s723 = smul.addr %s722, 64
          %s724 = scalar_lea.hbm %s13, %s723
          %s725 = sshll.u32 %s718, 4
          %s726 = int_to_ptr.vmem [resolvable:$true] %s725
          %731 = dma.hbm_to_vmem [thread:$0]  %s724, 16384, %s726, %s715, 64, 64, 4
        $region80: #{mobilebert_classifier_forward.1} parent=43 // pred_fallthru
          _
        // Predicated region
        $region81: #{mobilebert_classifier_forward.1} parent=43 // pred_check
          %p732 = pneg %p409
        $region82: #{mobilebert_classifier_forward.1} parent=43 // pred_check_branch
          %734 = sbr.rel (%p732) target = $region84
        $region83: #{mobilebert_classifier_forward.1} parent=43 // pred_region
          %p735 = scmp.lt.s32.totalorder %s36, 1
          %s736 = scalar_select %p735, %s36, 1
          %s737 = smul.addr %s736, 2
          %s738 = smul.addr %s737, 8
          %s739 = scalar_lea.vmem %s14, %s738
        $region84: #{mobilebert_classifier_forward.1} parent=43 // pred_fallthru
          _
        // Predicated region
        $region85: #{mobilebert_classifier_forward.1} parent=43 // pred_check
          %p740 = pneg %p435
        $region86: #{mobilebert_classifier_forward.1} parent=43 // pred_check_branch
          %742 = sbr.rel (%p740) target = $region88
        $region87: #{mobilebert_classifier_forward.1} parent=43 // pred_region
          %s743 = sand.u32 %s28, 1
          %s744 = scalar_lea.sflag [#allocation4], %s743
          %s745 = sand.u32 %s425, 1
          %s746 = smul.addr %s745, 256
          %s747 = scalar_lea.vmem [#allocation10], %s746
          %s749 = ssub.s32 4096, 4096
          %750 = vsyncadd %s744, %s749
          %s751 = smul.addr %s36, 64
          %s752 = smul.addr %s751, 64
          %s753 = scalar_lea.hbm %s15, %s752
          %s754 = sshll.u32 %s747, 4
          %s755 = int_to_ptr.vmem [resolvable:$true] %s754
          %760 = dma.hbm_to_vmem [thread:$0]  %s753, 4096, %s755, %s744, 256, 256, 16
        $region88: #{mobilebert_classifier_forward.1} parent=43 // pred_fallthru
          _
        // Predicated region
        $region89: #{mobilebert_classifier_forward.1} parent=43 // pred_check
          %p761 = pneg %p461
        $region90: #{mobilebert_classifier_forward.1} parent=43 // pred_check_branch
          %763 = sbr.rel (%p761) target = $region92
        $region91: #{mobilebert_classifier_forward.1} parent=43 // pred_region
          %p764 = scmp.lt.s32.totalorder %s36, 1
          %s765 = scalar_select %p764, %s36, 1
          %s766 = smul.addr %s765, 4
          %s767 = smul.addr %s766, 4
          %s768 = scalar_lea.vmem %s16, %s767
        $region92: #{mobilebert_classifier_forward.1} parent=43 // pred_fallthru
          _
      $region44: #{mobilebert_classifier_forward.1} parent=5 // pred_fallthru
        _
      %p769 = scmp.le.s32.totalorder 1, %s28
      %p770 = scmp.lt.s32.totalorder %s28, 3
      %p771 = pnand %p769, %p770
      %p772 = pneg %p771
      // Predicated region
      $region93: #{mobilebert_classifier_forward.1} parent=5 // pred_check
        _
      $region94: #{mobilebert_classifier_forward.1} parent=5 // pred_check_branch
        %774 = sbr.rel (%p771) target = $region96
      $region95: #{mobilebert_classifier_forward.1} parent=5 // pred_region
        %s775 = ssub.s32 %s28, 1
        // Predicated region
        $region97: #{mobilebert_classifier_forward.1} parent=95 // pred_check
          %p776 = pneg %p134
        $region98: #{mobilebert_classifier_forward.1} parent=95 // pred_check_branch
          %778 = sbr.rel (%p776) target = $region100
        $region99: #{mobilebert_classifier_forward.1} parent=95 // pred_region
          %779 = dma.done [#allocation4], 12288
        $region100: #{mobilebert_classifier_forward.1} parent=95 // pred_fallthru
          _
        // Predicated region
        $region101: #{mobilebert_classifier_forward.1} parent=95 // pred_check
          %p780 = pneg %p155
        $region102: #{mobilebert_classifier_forward.1} parent=95 // pred_check_branch
          %782 = sbr.rel (%p780) target = $region104
        $region103: #{mobilebert_classifier_forward.1} parent=95 // pred_region
          %783 = dma.done [#allocation6], 256
        $region104: #{mobilebert_classifier_forward.1} parent=95 // pred_fallthru
          _
        %s784 = sand.u32 %s33, 1
        %s785 = scalar_lea.sflag [#allocation4], %s784
        %s786 = sand.u32 %s168, 1
        %s787 = smul.addr %s786, 768
        %s788 = scalar_lea.vmem [#allocation7], %s787
        // Predicated region
        $region105: #{mobilebert_classifier_forward.1} parent=95 // pred_check
          %p789 = pneg %p181
        $region106: #{mobilebert_classifier_forward.1} parent=95 // pred_check_branch
          %791 = sbr.rel (%p789) target = $region108
        $region107: #{mobilebert_classifier_forward.1} parent=95 // pred_region
          %792 = dma.done %s785, 12288
        $region108: #{mobilebert_classifier_forward.1} parent=95 // pred_fallthru
          _
        %s793 = sand.u32 %s33, 1
        %s794 = scalar_lea.sflag [#allocation4], %s793
        %s795 = sand.u32 %s324, 1
        %s796 = smul.addr %s795, 1024
        %s797 = scalar_lea.vmem [#allocation8], %s796
        // Predicated region
        $region109: #{mobilebert_classifier_forward.1} parent=95 // pred_check
          %p798 = pneg %p337
        $region110: #{mobilebert_classifier_forward.1} parent=95 // pred_check_branch
          %800 = sbr.rel (%p798) target = $region112
        $region111: #{mobilebert_classifier_forward.1} parent=95 // pred_region
          %801 = dma.done %s794, 16384
        $region112: #{mobilebert_classifier_forward.1} parent=95 // pred_fallthru
          _
        %s802 = sand.u32 %s33, 1
        %s803 = scalar_lea.sflag [#allocation4], %s802
        %s804 = sand.u32 %s376, 1
        %s805 = smul.addr %s804, 1024
        %s806 = scalar_lea.vmem [#allocation9], %s805
        // Predicated region
        $region113: #{mobilebert_classifier_forward.1} parent=95 // pred_check
          %p807 = pneg %p389
        $region114: #{mobilebert_classifier_forward.1} parent=95 // pred_check_branch
          %809 = sbr.rel (%p807) target = $region116
        $region115: #{mobilebert_classifier_forward.1} parent=95 // pred_region
          %810 = dma.done %s803, 16384
        $region116: #{mobilebert_classifier_forward.1} parent=95 // pred_fallthru
          _
        %s811 = sand.u32 %s33, 1
        %s812 = scalar_lea.sflag [#allocation4], %s811
        %s813 = sand.u32 %s428, 1
        %s814 = smul.addr %s813, 256
        %s815 = scalar_lea.vmem [#allocation10], %s814
        // Predicated region
        $region117: #{mobilebert_classifier_forward.1} parent=95 // pred_check
          %p816 = pneg %p441
        $region118: #{mobilebert_classifier_forward.1} parent=95 // pred_check_branch
          %818 = sbr.rel (%p816) target = $region120
        $region119: #{mobilebert_classifier_forward.1} parent=95 // pred_region
          %819 = dma.done %s812, 4096
        $region120: #{mobilebert_classifier_forward.1} parent=95 // pred_fallthru
          _
        // Predicated region
        $region121: #{mobilebert_classifier_forward.1} parent=95 // pred_check
          %p820 = pneg %p488
        $region122: #{mobilebert_classifier_forward.1} parent=95 // pred_check_branch
          %822 = sbr.rel (%p820) target = $region124
        $region123: #{mobilebert_classifier_forward.1} parent=95 // pred_region
          %823 = dma.done [#allocation6], 16384
        $region124: #{mobilebert_classifier_forward.1} parent=95 // pred_fallthru
          _
        // Predicated region
        $region125: #{mobilebert_classifier_forward.1} parent=95 // pred_check
          %p824 = pneg %p509
        $region126: #{mobilebert_classifier_forward.1} parent=95 // pred_check_branch
          %826 = sbr.rel (%p824) target = $region128
        $region127: #{mobilebert_classifier_forward.1} parent=95 // pred_region
          %827 = dma.done [#allocation13], 256
        $region128: #{mobilebert_classifier_forward.1} parent=95 // pred_fallthru
          _
        %s828 = smul.u32 2, %s37
        %p829 = scmp.lt.s32.totalorder %s828, 1
        %s830 = scalar_select %p829, %s828, 1
        %s831 = scalar_lea.vmem %s0, %s830
        %p832 = pneg %p66
        %p833 = pneg %p63
        %s834 = smul.u32 2, %s37
        %p835 = scmp.lt.s32.totalorder %s834, 1
        %s836 = scalar_select %p835, %s834, 1
        %s837 = smul.addr %s836, 3
        %s838 = smul.addr %s837, 4
        %s839 = scalar_lea.vmem %s1, %s838
        %p840 = pneg %p92
        %p841 = pneg %p89
        %p842 = pneg %p113
        %p843 = pneg %p110
        %p844 = pneg %p134
        %p845 = pneg %p131
        %p846 = pneg %p155
        %p847 = pneg %p152
        %s848 = sand.u32 %s33, 1
        %s849 = scalar_lea.sflag [#allocation4], %s848
        %s850 = sand.u32 %s168, 1
        %s851 = smul.addr %s850, 768
        %s852 = scalar_lea.vmem [#allocation7], %s851
        %p853 = pneg %p181
        %p854 = pneg %p178
        %p855 = scmp.lt.s32.totalorder %s38, 1
        %s856 = scalar_select %p855, %s38, 1
        %s857 = smul.addr %s856, 3
        %s858 = smul.addr %s857, 4
        %s859 = scalar_lea.vmem %s6, %s858
        %p860 = pneg %p207
        %p861 = pneg %p204
        %p862 = scmp.lt.s32.totalorder %s38, 1
        %s863 = scalar_select %p862, %s38, 1
        %s864 = smul.addr %s863, 32
        %s865 = smul.addr %s864, 4
        %s866 = scalar_lea.vmem %s7, %s865
        %p867 = pneg %p233
        %p868 = pneg %p230
        %p869 = scmp.lt.s32.totalorder %s38, 1
        %s870 = scalar_select %p869, %s38, 1
        %s871 = smul.addr %s870, 2
        %s872 = scalar_lea.vmem %s8, %s871
        %p873 = pneg %p259
        %p874 = pneg %p256
        %p875 = scmp.lt.s32.totalorder %s38, 1
        %s876 = scalar_select %p875, %s38, 1
        %s877 = smul.addr %s876, 16
        %s878 = smul.addr %s877, 4
        %s879 = scalar_lea.vmem %s9, %s878
        %p880 = pneg %p285
        %p881 = pneg %p282
        %p882 = scmp.lt.s32.totalorder %s38, 1
        %s883 = scalar_select %p882, %s38, 1
        %s884 = smul.addr %s883, 4
        %s885 = scalar_lea.vmem %s10, %s884
        %p886 = pneg %p311
        %p887 = pneg %p308
        %s888 = sand.u32 %s33, 1
        %s889 = scalar_lea.sflag [#allocation4], %s888
        %s890 = sand.u32 %s324, 1
        %s891 = smul.addr %s890, 1024
        %s892 = scalar_lea.vmem [#allocation8], %s891
        %p893 = pneg %p337
        %p894 = pneg %p334
        %p895 = scmp.lt.s32.totalorder %s38, 1
        %s896 = scalar_select %p895, %s38, 1
        %s897 = smul.addr %s896, 4
        %s898 = smul.addr %s897, 4
        %s899 = scalar_lea.vmem %s12, %s898
        %p900 = pneg %p363
        %p901 = pneg %p360
        %s902 = sand.u32 %s33, 1
        %s903 = scalar_lea.sflag [#allocation4], %s902
        %s904 = sand.u32 %s376, 1
        %s905 = smul.addr %s904, 1024
        %s906 = scalar_lea.vmem [#allocation9], %s905
        %p907 = pneg %p389
        %p908 = pneg %p386
        %p909 = scmp.lt.s32.totalorder %s38, 1
        %s910 = scalar_select %p909, %s38, 1
        %s911 = smul.addr %s910, 2
        %s912 = smul.addr %s911, 8
        %s913 = scalar_lea.vmem %s14, %s912
        %p914 = pneg %p415
        %p915 = pneg %p412
        %s916 = sand.u32 %s33, 1
        %s917 = scalar_lea.sflag [#allocation4], %s916
        %s918 = sand.u32 %s428, 1
        %s919 = smul.addr %s918, 256
        %s920 = scalar_lea.vmem [#allocation10], %s919
        %p921 = pneg %p441
        %p922 = pneg %p438
        %p923 = scmp.lt.s32.totalorder %s38, 1
        %s924 = scalar_select %p923, %s38, 1
        %s925 = smul.addr %s924, 4
        %s926 = smul.addr %s925, 4
        %s927 = scalar_lea.vmem %s16, %s926
        %p928 = pneg %p467
        %p929 = pneg %p464
        %p930 = pneg %p488
        %p931 = pneg %p485
        %p932 = pneg %p509
        %p933 = pneg %p506
        %p934 = pneg %p535
        %p935 = pneg %p532
        %p936 = scmp.lt.s32.totalorder %s37, 0
        %s937 = scalar_select %p936, %s37, 0
        %s938 = smul.addr %s937, 2
        %s939 = scalar_lea.vmem %s19, %s938
        %s940 = smul.u32 2, %s37
        %p941 = scmp.lt.s32.totalorder %s940, 1
        %s942 = scalar_select %p941, %s940, 1
        %s943 = scalar_lea.vmem %s0, %s942
        %s944 = smul.u32 2, %s37
        %s945 = smul.u32 2, %s37
        %p946 = scmp.lt.s32.totalorder %s945, 1
        %s947 = scalar_select %p946, %s945, 1
        %s948 = smul.addr %s947, 3
        %s949 = smul.addr %s948, 4
        %s950 = scalar_lea.vmem %s1, %s949
        %s951 = smul.u32 2, %s37
        %p952 = scmp.lt.s32.totalorder %s38, 1
        %s953 = scalar_select %p952, %s38, 1
        %s954 = smul.addr %s953, 3
        %s955 = smul.addr %s954, 4
        %s956 = scalar_lea.vmem %s6, %s955
        %p957 = scmp.lt.s32.totalorder %s38, 1
        %s958 = scalar_select %p957, %s38, 1
        %s959 = smul.addr %s958, 32
        %s960 = smul.addr %s959, 4
        %s961 = scalar_lea.vmem %s7, %s960
        %p962 = scmp.lt.s32.totalorder %s38, 1
        %s963 = scalar_select %p962, %s38, 1
        %s964 = smul.addr %s963, 2
        %s965 = scalar_lea.vmem %s8, %s964
        %p966 = scmp.lt.s32.totalorder %s38, 1
        %s967 = scalar_select %p966, %s38, 1
        %s968 = smul.addr %s967, 16
        %s969 = smul.addr %s968, 4
        %s970 = scalar_lea.vmem %s9, %s969
        %p971 = scmp.lt.s32.totalorder %s38, 1
        %s972 = scalar_select %p971, %s38, 1
        %s973 = smul.addr %s972, 4
        %s974 = scalar_lea.vmem %s10, %s973
        %p975 = scmp.lt.s32.totalorder %s38, 1
        %s976 = scalar_select %p975, %s38, 1
        %s977 = smul.addr %s976, 4
        %s978 = smul.addr %s977, 4
        %s979 = scalar_lea.vmem %s12, %s978
        %p980 = scmp.lt.s32.totalorder %s38, 1
        %s981 = scalar_select %p980, %s38, 1
        %s982 = smul.addr %s981, 2
        %s983 = smul.addr %s982, 8
        %s984 = scalar_lea.vmem %s14, %s983
        %p985 = scmp.lt.s32.totalorder %s38, 1
        %s986 = scalar_select %p985, %s38, 1
        %s987 = smul.addr %s986, 4
        %s988 = smul.addr %s987, 4
        %s989 = scalar_lea.vmem %s16, %s988
        %p990 = scmp.lt.s32.totalorder %s37, 0
        %s991 = scalar_select %p990, %s37, 0
        %s992 = smul.addr %s991, 2
        %s993 = scalar_lea.vmem %s19, %s992
        %p995 = scmp.eq.s32.totalorder %s38, 0
        // Predicated region
        $region129: #{mobilebert_classifier_forward.1} parent=95 // pred_check
          %p996 = pneg %p995
        $region130: #{mobilebert_classifier_forward.1} parent=95 // pred_check_branch
          %998 = sbr.rel (%p996) target = $region132
        $region131: #{mobilebert_classifier_forward.1} parent=95 // pred_region
          %v999 = vld [vmem:[#allocation5] sm:$0x77]
          %v1000 = vld [vmem:[#allocation5 + $0x8] sm:$0x77]
          %v1001 = vld [vmem:[%s950] sm:$0xff]
          %v1002 = vld [vmem:[%s950 + $0x8] sm:$0xf]
          %v1003 = vld [vmem:[%s950 + $0xc] sm:$0xff]
          %v1004 = vld [vmem:[%s950 + $0x14] sm:$0xf]
          %v1005 = vld [vmem:[#allocation3] sm:$0xff]
          %v1006 = vld [vmem:[#allocation3 + $0x8] sm:$0xff]
          %v1007 = vld [vmem:[#allocation3 + $0x10] sm:$0xff]
          %v1008 = vld [vmem:[#allocation3 + $0x18] sm:$0xff]
          %v1009 = vld [vmem:[#allocation3 + $0x20] sm:$0xff]
          %v1010 = vld [vmem:[#allocation3 + $0x28] sm:$0xff]
          %v1011 = vld [vmem:[#allocation3 + $0x30] sm:$0xff]
          %v1012 = vld [vmem:[#allocation3 + $0x38] sm:$0xff]
          %v1013 = vld [vmem:[#allocation3 + $0x40] sm:$0xff]
          %v1014 = vld [vmem:[#allocation3 + $0x48] sm:$0xff]
          %v1015 = vld [vmem:[#allocation3 + $0x50] sm:$0xff]
          %v1016 = vld [vmem:[#allocation3 + $0x58] sm:$0xff]
          %v1017 = vld [vmem:[#allocation3 + $0x60] sm:$0xff]
          %v1018 = vld [vmem:[#allocation3 + $0x68] sm:$0xff]
          %v1019 = vld [vmem:[#allocation3 + $0x70] sm:$0xff]
          %v1020 = vld [vmem:[#allocation3 + $0x78] sm:$0xff]
          %v1021 = vld [vmem:[#allocation3 + $0x80] sm:$0xff]
          %v1022 = vld [vmem:[#allocation3 + $0x88] sm:$0xff]
          %v1023 = vld [vmem:[#allocation3 + $0x90] sm:$0xff]
          %v1024 = vld [vmem:[#allocation3 + $0x98] sm:$0xff]
          %v1025 = vld [vmem:[#allocation3 + $0xa0] sm:$0xff]
          %v1026 = vld [vmem:[#allocation3 + $0xa8] sm:$0xff]
          %v1027 = vld [vmem:[#allocation3 + $0xb0] sm:$0xff]
          %v1028 = vld [vmem:[#allocation3 + $0xb8] sm:$0xff]
          %v1029 = vld [vmem:[#allocation3 + $0xc0] sm:$0xff]
          %v1030 = vld [vmem:[#allocation3 + $0xc8] sm:$0xff]
          %v1031 = vld [vmem:[#allocation3 + $0xd0] sm:$0xff]
          %v1032 = vld [vmem:[#allocation3 + $0xd8] sm:$0xff]
          %v1033 = vld [vmem:[#allocation3 + $0xe0] sm:$0xff]
          %v1034 = vld [vmem:[#allocation3 + $0xe8] sm:$0xff]
          %v1035 = vld [vmem:[#allocation3 + $0xf0] sm:$0xff]
          %v1036 = vld [vmem:[#allocation3 + $0xf8] sm:$0xff]
          %v1037 = vld [vmem:[#allocation3 + $0x100] sm:$0xff]
          %v1038 = vld [vmem:[#allocation3 + $0x108] sm:$0xff]
          %v1039 = vld [vmem:[#allocation3 + $0x110] sm:$0xff]
          %v1040 = vld [vmem:[#allocation3 + $0x118] sm:$0xff]
          %v1041 = vld [vmem:[#allocation3 + $0x120] sm:$0xff]
          %v1042 = vld [vmem:[#allocation3 + $0x128] sm:$0xff]
          %v1043 = vld [vmem:[#allocation3 + $0x130] sm:$0xff]
          %v1044 = vld [vmem:[#allocation3 + $0x138] sm:$0xff]
          %v1045 = vld [vmem:[#allocation3 + $0x140] sm:$0xff]
          %v1046 = vld [vmem:[#allocation3 + $0x148] sm:$0xff]
          %v1047 = vld [vmem:[#allocation3 + $0x150] sm:$0xff]
          %v1048 = vld [vmem:[#allocation3 + $0x158] sm:$0xff]
          %v1049 = vld [vmem:[#allocation3 + $0x160] sm:$0xff]
          %v1050 = vld [vmem:[#allocation3 + $0x168] sm:$0xff]
          %v1051 = vld [vmem:[#allocation3 + $0x170] sm:$0xff]
          %v1052 = vld [vmem:[#allocation3 + $0x178] sm:$0xff]
          %v1053 = vld [vmem:[#allocation3 + $0x180] sm:$0xff]
          %v1054 = vld [vmem:[#allocation3 + $0x188] sm:$0xff]
          %v1055 = vld [vmem:[#allocation3 + $0x190] sm:$0xff]
          %v1056 = vld [vmem:[#allocation3 + $0x198] sm:$0xff]
          %v1057 = vld [vmem:[#allocation3 + $0x1a0] sm:$0xff]
          %v1058 = vld [vmem:[#allocation3 + $0x1a8] sm:$0xff]
          %v1059 = vld [vmem:[#allocation3 + $0x1b0] sm:$0xff]
          %v1060 = vld [vmem:[#allocation3 + $0x1b8] sm:$0xff]
          %v1061 = vld [vmem:[#allocation3 + $0x1c0] sm:$0xff]
          %v1062 = vld [vmem:[#allocation3 + $0x1c8] sm:$0xff]
          %v1063 = vld [vmem:[#allocation3 + $0x1d0] sm:$0xff]
          %v1064 = vld [vmem:[#allocation3 + $0x1d8] sm:$0xff]
          %v1065 = vld [vmem:[#allocation3 + $0x1e0] sm:$0xff]
          %v1066 = vld [vmem:[#allocation3 + $0x1e8] sm:$0xff]
          %v1067 = vld [vmem:[#allocation3 + $0x1f0] sm:$0xff]
          %v1068 = vld [vmem:[#allocation3 + $0x1f8] sm:$0xff]
          %v1069 = vld [vmem:[#allocation3 + $0x200] sm:$0xff]
          %v1070 = vld [vmem:[#allocation3 + $0x208] sm:$0xff]
          %v1071 = vld [vmem:[#allocation3 + $0x210] sm:$0xff]
          %v1072 = vld [vmem:[#allocation3 + $0x218] sm:$0xff]
          %v1073 = vld [vmem:[#allocation3 + $0x220] sm:$0xff]
          %v1074 = vld [vmem:[#allocation3 + $0x228] sm:$0xff]
          %v1075 = vld [vmem:[#allocation3 + $0x230] sm:$0xff]
          %v1076 = vld [vmem:[#allocation3 + $0x238] sm:$0xff]
          %v1077 = vld [vmem:[#allocation3 + $0x240] sm:$0xff]
          %v1078 = vld [vmem:[#allocation3 + $0x248] sm:$0xff]
          %v1079 = vld [vmem:[#allocation3 + $0x250] sm:$0xff]
          %v1080 = vld [vmem:[#allocation3 + $0x258] sm:$0xff]
          %v1081 = vld [vmem:[#allocation3 + $0x260] sm:$0xff]
          %v1082 = vld [vmem:[#allocation3 + $0x268] sm:$0xff]
          %v1083 = vld [vmem:[#allocation3 + $0x270] sm:$0xff]
          %v1084 = vld [vmem:[#allocation3 + $0x278] sm:$0xff]
          %v1085 = vld [vmem:[#allocation3 + $0x280] sm:$0xff]
          %v1086 = vld [vmem:[#allocation3 + $0x288] sm:$0xff]
          %v1087 = vld [vmem:[#allocation3 + $0x290] sm:$0xff]
          %v1088 = vld [vmem:[#allocation3 + $0x298] sm:$0xff]
          %v1089 = vld [vmem:[#allocation3 + $0x2a0] sm:$0xff]
          %v1090 = vld [vmem:[#allocation3 + $0x2a8] sm:$0xff]
          %v1091 = vld [vmem:[#allocation3 + $0x2b0] sm:$0xff]
          %v1092 = vld [vmem:[#allocation3 + $0x2b8] sm:$0xff]
          %v1093 = vld [vmem:[#allocation3 + $0x2c0] sm:$0xff]
          %v1094 = vld [vmem:[#allocation3 + $0x2c8] sm:$0xff]
          %v1095 = vld [vmem:[#allocation3 + $0x2d0] sm:$0xff]
          %v1096 = vld [vmem:[#allocation3 + $0x2d8] sm:$0xff]
          %v1097 = vld [vmem:[#allocation3 + $0x2e0] sm:$0xff]
          %v1098 = vld [vmem:[#allocation3 + $0x2e8] sm:$0xff]
          %v1099 = vld [vmem:[#allocation3 + $0x2f0] sm:$0xff]
          %v1100 = vld [vmem:[#allocation3 + $0x2f8] sm:$0xff]
          %v1103 = vlaneseq
          %v1104 = vshrl.u32 %v1103, 7
          %v1105 = vsub.s32 0, %v1104
          %v1106 = vrot.slane %v999, %v1105
          %v1107 = vlaneseq
          %v1108 = vshrl.u32 %v1107, 7
          %v1109 = vsub.s32 4, %v1108
          %v1110 = vrot.slane %v999, %v1109
          %v1111 = vlaneseq
          %v1112 = vshrl.u32 %v1111, 7
          %v1113 = vsub.s32 0, %v1112
          %v1114 = vrot.slane %v1000, %v1113
          %v1115 = vlaneseq
          %v1116 = vshrl.u32 %v1115, 7
          %v1117 = vsub.s32 4, %v1116
          %v1118 = vrot.slane %v1000, %v1117
          %v1123 = vlaneseq
          %v1124 = vshrl.u32 %v1123, 7
          %v1125 = vsub.s32 0, %v1124
          %v1126 = vrot.slane %v1106, %v1125
          %v1127 = vlaneseq
          %v1128 = vshrl.u32 %v1127, 7
          %v1129 = vsub.s32 0, %v1128
          %v1130 = vrot.slane %v1110, %v1129
          %v1131 = vlaneseq
          %v1132 = vshrl.u32 %v1131, 7
          %v1133 = vsub.s32 0, %v1132
          %v1134 = vrot.slane %v1114, %v1133
          %v1135 = vlaneseq
          %v1136 = vshrl.u32 %v1135, 7
          %v1137 = vsub.s32 0, %v1136
          %v1138 = vrot.slane %v1118, %v1137
          %v1143 = vunpack.c.l.b16 %v1001
          %v1144 = vunpack.c.h.b16 %v1001
          %v1145 = vunpack.c.l.b16 %v1002
          %v1146 = vunpack.c.l.b16 %v1003
          %v1147 = vunpack.c.h.b16 %v1003
          %v1148 = vunpack.c.l.b16 %v1004
          %v1149 = vpack.c.b16 %v1146, %v1143
          %v1150 = vpack.c.b16 %v1147, %v1144
          %v1151 = vpack.c.b16 %v1148, %v1145
          %v1251 = vunpack.c.l.b16 %v1005
          %v1252 = vunpack.c.h.b16 %v1005
          %v1253 = vunpack.c.l.b16 %v1006
          %v1254 = vunpack.c.h.b16 %v1006
          %v1255 = vunpack.c.l.b16 %v1007
          %v1256 = vunpack.c.h.b16 %v1007
          %v1257 = vunpack.c.l.b16 %v1008
          %v1258 = vunpack.c.h.b16 %v1008
          %v1259 = vunpack.c.l.b16 %v1009
          %v1260 = vunpack.c.h.b16 %v1009
          %v1261 = vunpack.c.l.b16 %v1010
          %v1262 = vunpack.c.h.b16 %v1010
          %v1263 = vunpack.c.l.b16 %v1011
          %v1264 = vunpack.c.h.b16 %v1011
          %v1265 = vunpack.c.l.b16 %v1012
          %v1266 = vunpack.c.h.b16 %v1012
          %v1267 = vunpack.c.l.b16 %v1013
          %v1268 = vunpack.c.h.b16 %v1013
          %v1269 = vunpack.c.l.b16 %v1014
          %v1270 = vunpack.c.h.b16 %v1014
          %v1271 = vunpack.c.l.b16 %v1015
          %v1272 = vunpack.c.h.b16 %v1015
          %v1273 = vunpack.c.l.b16 %v1016
          %v1274 = vunpack.c.h.b16 %v1016
          %v1275 = vunpack.c.l.b16 %v1017
          %v1276 = vunpack.c.h.b16 %v1017
          %v1277 = vunpack.c.l.b16 %v1018
          %v1278 = vunpack.c.h.b16 %v1018
          %v1279 = vunpack.c.l.b16 %v1019
          %v1280 = vunpack.c.h.b16 %v1019
          %v1281 = vunpack.c.l.b16 %v1020
          %v1282 = vunpack.c.h.b16 %v1020
          %v1283 = vunpack.c.l.b16 %v1021
          %v1284 = vunpack.c.h.b16 %v1021
          %v1285 = vunpack.c.l.b16 %v1022
          %v1286 = vunpack.c.h.b16 %v1022
          %v1287 = vunpack.c.l.b16 %v1023
          %v1288 = vunpack.c.h.b16 %v1023
          %v1289 = vunpack.c.l.b16 %v1024
          %v1290 = vunpack.c.h.b16 %v1024
          %v1291 = vunpack.c.l.b16 %v1025
          %v1292 = vunpack.c.h.b16 %v1025
          %v1293 = vunpack.c.l.b16 %v1026
          %v1294 = vunpack.c.h.b16 %v1026
          %v1295 = vunpack.c.l.b16 %v1027
          %v1296 = vunpack.c.h.b16 %v1027
          %v1297 = vunpack.c.l.b16 %v1028
          %v1298 = vunpack.c.h.b16 %v1028
          %v1299 = vunpack.c.l.b16 %v1029
          %v1300 = vunpack.c.h.b16 %v1029
          %v1301 = vunpack.c.l.b16 %v1030
          %v1302 = vunpack.c.h.b16 %v1030
          %v1303 = vunpack.c.l.b16 %v1031
          %v1304 = vunpack.c.h.b16 %v1031
          %v1305 = vunpack.c.l.b16 %v1032
          %v1306 = vunpack.c.h.b16 %v1032
          %v1307 = vunpack.c.l.b16 %v1033
          %v1308 = vunpack.c.h.b16 %v1033
          %v1309 = vunpack.c.l.b16 %v1034
          %v1310 = vunpack.c.h.b16 %v1034
          %v1311 = vunpack.c.l.b16 %v1035
          %v1312 = vunpack.c.h.b16 %v1035
          %v1313 = vunpack.c.l.b16 %v1036
          %v1314 = vunpack.c.h.b16 %v1036
          %v1315 = vunpack.c.l.b16 %v1037
          %v1316 = vunpack.c.h.b16 %v1037
          %v1317 = vunpack.c.l.b16 %v1038
          %v1318 = vunpack.c.h.b16 %v1038
          %v1319 = vunpack.c.l.b16 %v1039
          %v1320 = vunpack.c.h.b16 %v1039
          %v1321 = vunpack.c.l.b16 %v1040
          %v1322 = vunpack.c.h.b16 %v1040
          %v1323 = vunpack.c.l.b16 %v1041
          %v1324 = vunpack.c.h.b16 %v1041
          %v1325 = vunpack.c.l.b16 %v1042
          %v1326 = vunpack.c.h.b16 %v1042
          %v1327 = vunpack.c.l.b16 %v1043
          %v1328 = vunpack.c.h.b16 %v1043
          %v1329 = vunpack.c.l.b16 %v1044
          %v1330 = vunpack.c.h.b16 %v1044
          %v1331 = vunpack.c.l.b16 %v1045
          %v1332 = vunpack.c.h.b16 %v1045
          %v1333 = vunpack.c.l.b16 %v1046
          %v1334 = vunpack.c.h.b16 %v1046
          %v1335 = vunpack.c.l.b16 %v1047
          %v1336 = vunpack.c.h.b16 %v1047
          %v1337 = vunpack.c.l.b16 %v1048
          %v1338 = vunpack.c.h.b16 %v1048
          %v1339 = vunpack.c.l.b16 %v1049
          %v1340 = vunpack.c.h.b16 %v1049
          %v1341 = vunpack.c.l.b16 %v1050
          %v1342 = vunpack.c.h.b16 %v1050
          %v1343 = vunpack.c.l.b16 %v1051
          %v1344 = vunpack.c.h.b16 %v1051
          %v1345 = vunpack.c.l.b16 %v1052
          %v1346 = vunpack.c.h.b16 %v1052
          %v1347 = vunpack.c.l.b16 %v1053
          %v1348 = vunpack.c.h.b16 %v1053
          %v1349 = vunpack.c.l.b16 %v1054
          %v1350 = vunpack.c.h.b16 %v1054
          %v1351 = vunpack.c.l.b16 %v1055
          %v1352 = vunpack.c.h.b16 %v1055
          %v1353 = vunpack.c.l.b16 %v1056
          %v1354 = vunpack.c.h.b16 %v1056
          %v1355 = vunpack.c.l.b16 %v1057
          %v1356 = vunpack.c.h.b16 %v1057
          %v1357 = vunpack.c.l.b16 %v1058
          %v1358 = vunpack.c.h.b16 %v1058
          %v1359 = vunpack.c.l.b16 %v1059
          %v1360 = vunpack.c.h.b16 %v1059
          %v1361 = vunpack.c.l.b16 %v1060
          %v1362 = vunpack.c.h.b16 %v1060
          %v1363 = vunpack.c.l.b16 %v1061
          %v1364 = vunpack.c.h.b16 %v1061
          %v1365 = vunpack.c.l.b16 %v1062
          %v1366 = vunpack.c.h.b16 %v1062
          %v1367 = vunpack.c.l.b16 %v1063
          %v1368 = vunpack.c.h.b16 %v1063
          %v1369 = vunpack.c.l.b16 %v1064
          %v1370 = vunpack.c.h.b16 %v1064
          %v1371 = vunpack.c.l.b16 %v1065
          %v1372 = vunpack.c.h.b16 %v1065
          %v1373 = vunpack.c.l.b16 %v1066
          %v1374 = vunpack.c.h.b16 %v1066
          %v1375 = vunpack.c.l.b16 %v1067
          %v1376 = vunpack.c.h.b16 %v1067
          %v1377 = vunpack.c.l.b16 %v1068
          %v1378 = vunpack.c.h.b16 %v1068
          %v1379 = vunpack.c.l.b16 %v1069
          %v1380 = vunpack.c.h.b16 %v1069
          %v1381 = vunpack.c.l.b16 %v1070
          %v1382 = vunpack.c.h.b16 %v1070
          %v1383 = vunpack.c.l.b16 %v1071
          %v1384 = vunpack.c.h.b16 %v1071
          %v1385 = vunpack.c.l.b16 %v1072
          %v1386 = vunpack.c.h.b16 %v1072
          %v1387 = vunpack.c.l.b16 %v1073
          %v1388 = vunpack.c.h.b16 %v1073
          %v1389 = vunpack.c.l.b16 %v1074
          %v1390 = vunpack.c.h.b16 %v1074
          %v1391 = vunpack.c.l.b16 %v1075
          %v1392 = vunpack.c.h.b16 %v1075
          %v1393 = vunpack.c.l.b16 %v1076
          %v1394 = vunpack.c.h.b16 %v1076
          %v1395 = vunpack.c.l.b16 %v1077
          %v1396 = vunpack.c.h.b16 %v1077
          %v1397 = vunpack.c.l.b16 %v1078
          %v1398 = vunpack.c.h.b16 %v1078
          %v1399 = vunpack.c.l.b16 %v1079
          %v1400 = vunpack.c.h.b16 %v1079
          %v1401 = vunpack.c.l.b16 %v1080
          %v1402 = vunpack.c.h.b16 %v1080
          %v1403 = vunpack.c.l.b16 %v1081
          %v1404 = vunpack.c.h.b16 %v1081
          %v1405 = vunpack.c.l.b16 %v1082
          %v1406 = vunpack.c.h.b16 %v1082
          %v1407 = vunpack.c.l.b16 %v1083
          %v1408 = vunpack.c.h.b16 %v1083
          %v1409 = vunpack.c.l.b16 %v1084
          %v1410 = vunpack.c.h.b16 %v1084
          %v1411 = vunpack.c.l.b16 %v1085
          %v1412 = vunpack.c.h.b16 %v1085
          %v1413 = vunpack.c.l.b16 %v1086
          %v1414 = vunpack.c.h.b16 %v1086
          %v1415 = vunpack.c.l.b16 %v1087
          %v1416 = vunpack.c.h.b16 %v1087
          %v1417 = vunpack.c.l.b16 %v1088
          %v1418 = vunpack.c.h.b16 %v1088
          %v1419 = vunpack.c.l.b16 %v1089
          %v1420 = vunpack.c.h.b16 %v1089
          %v1421 = vunpack.c.l.b16 %v1090
          %v1422 = vunpack.c.h.b16 %v1090
          %v1423 = vunpack.c.l.b16 %v1091
          %v1424 = vunpack.c.h.b16 %v1091
          %v1425 = vunpack.c.l.b16 %v1092
          %v1426 = vunpack.c.h.b16 %v1092
          %v1427 = vunpack.c.l.b16 %v1093
          %v1428 = vunpack.c.h.b16 %v1093
          %v1429 = vunpack.c.l.b16 %v1094
          %v1430 = vunpack.c.h.b16 %v1094
          %v1431 = vunpack.c.l.b16 %v1095
          %v1432 = vunpack.c.h.b16 %v1095
          %v1433 = vunpack.c.l.b16 %v1096
          %v1434 = vunpack.c.h.b16 %v1096
          %v1435 = vunpack.c.l.b16 %v1097
          %v1436 = vunpack.c.h.b16 %v1097
          %v1437 = vunpack.c.l.b16 %v1098
          %v1438 = vunpack.c.h.b16 %v1098
          %v1439 = vunpack.c.l.b16 %v1099
          %v1440 = vunpack.c.h.b16 %v1099
          %v1441 = vunpack.c.l.b16 %v1100
          %v1442 = vunpack.c.h.b16 %v1100
          %v1443 = vpack.c.b16 %v1255, %v1251
          %v1444 = vpack.c.b16 %v1256, %v1252
          %v1445 = vpack.c.b16 %v1257, %v1253
          %v1446 = vpack.c.b16 %v1258, %v1254
          %v1447 = vpack.c.b16 %v1263, %v1259
          %v1448 = vpack.c.b16 %v1264, %v1260
          %v1449 = vpack.c.b16 %v1265, %v1261
          %v1450 = vpack.c.b16 %v1266, %v1262
          %v1451 = vpack.c.b16 %v1271, %v1267
          %v1452 = vpack.c.b16 %v1272, %v1268
          %v1453 = vpack.c.b16 %v1273, %v1269
          %v1454 = vpack.c.b16 %v1274, %v1270
          %v1455 = vpack.c.b16 %v1279, %v1275
          %v1456 = vpack.c.b16 %v1280, %v1276
          %v1457 = vpack.c.b16 %v1281, %v1277
          %v1458 = vpack.c.b16 %v1282, %v1278
          %v1459 = vpack.c.b16 %v1287, %v1283
          %v1460 = vpack.c.b16 %v1288, %v1284
          %v1461 = vpack.c.b16 %v1289, %v1285
          %v1462 = vpack.c.b16 %v1290, %v1286
          %v1463 = vpack.c.b16 %v1295, %v1291
          %v1464 = vpack.c.b16 %v1296, %v1292
          %v1465 = vpack.c.b16 %v1297, %v1293
          %v1466 = vpack.c.b16 %v1298, %v1294
          %v1467 = vpack.c.b16 %v1303, %v1299
          %v1468 = vpack.c.b16 %v1304, %v1300
          %v1469 = vpack.c.b16 %v1305, %v1301
          %v1470 = vpack.c.b16 %v1306, %v1302
          %v1471 = vpack.c.b16 %v1311, %v1307
          %v1472 = vpack.c.b16 %v1312, %v1308
          %v1473 = vpack.c.b16 %v1313, %v1309
          %v1474 = vpack.c.b16 %v1314, %v1310
          %v1475 = vpack.c.b16 %v1319, %v1315
          %v1476 = vpack.c.b16 %v1320, %v1316
          %v1477 = vpack.c.b16 %v1321, %v1317
          %v1478 = vpack.c.b16 %v1322, %v1318
          %v1479 = vpack.c.b16 %v1327, %v1323
          %v1480 = vpack.c.b16 %v1328, %v1324
          %v1481 = vpack.c.b16 %v1329, %v1325
          %v1482 = vpack.c.b16 %v1330, %v1326
          %v1483 = vpack.c.b16 %v1335, %v1331
          %v1484 = vpack.c.b16 %v1336, %v1332
          %v1485 = vpack.c.b16 %v1337, %v1333
          %v1486 = vpack.c.b16 %v1338, %v1334
          %v1487 = vpack.c.b16 %v1343, %v1339
          %v1488 = vpack.c.b16 %v1344, %v1340
          %v1489 = vpack.c.b16 %v1345, %v1341
          %v1490 = vpack.c.b16 %v1346, %v1342
          %v1491 = vpack.c.b16 %v1351, %v1347
          %v1492 = vpack.c.b16 %v1352, %v1348
          %v1493 = vpack.c.b16 %v1353, %v1349
          %v1494 = vpack.c.b16 %v1354, %v1350
          %v1495 = vpack.c.b16 %v1359, %v1355
          %v1496 = vpack.c.b16 %v1360, %v1356
          %v1497 = vpack.c.b16 %v1361, %v1357
          %v1498 = vpack.c.b16 %v1362, %v1358
          %v1499 = vpack.c.b16 %v1367, %v1363
          %v1500 = vpack.c.b16 %v1368, %v1364
          %v1501 = vpack.c.b16 %v1369, %v1365
          %v1502 = vpack.c.b16 %v1370, %v1366
          %v1503 = vpack.c.b16 %v1375, %v1371
          %v1504 = vpack.c.b16 %v1376, %v1372
          %v1505 = vpack.c.b16 %v1377, %v1373
          %v1506 = vpack.c.b16 %v1378, %v1374
          %v1507 = vpack.c.b16 %v1383, %v1379
          %v1508 = vpack.c.b16 %v1384, %v1380
          %v1509 = vpack.c.b16 %v1385, %v1381
          %v1510 = vpack.c.b16 %v1386, %v1382
          %v1511 = vpack.c.b16 %v1391, %v1387
          %v1512 = vpack.c.b16 %v1392, %v1388
          %v1513 = vpack.c.b16 %v1393, %v1389
          %v1514 = vpack.c.b16 %v1394, %v1390
          %v1515 = vpack.c.b16 %v1399, %v1395
          %v1516 = vpack.c.b16 %v1400, %v1396
          %v1517 = vpack.c.b16 %v1401, %v1397
          %v1518 = vpack.c.b16 %v1402, %v1398
          %v1519 = vpack.c.b16 %v1407, %v1403
          %v1520 = vpack.c.b16 %v1408, %v1404
          %v1521 = vpack.c.b16 %v1409, %v1405
          %v1522 = vpack.c.b16 %v1410, %v1406
          %v1523 = vpack.c.b16 %v1415, %v1411
          %v1524 = vpack.c.b16 %v1416, %v1412
          %v1525 = vpack.c.b16 %v1417, %v1413
          %v1526 = vpack.c.b16 %v1418, %v1414
          %v1527 = vpack.c.b16 %v1423, %v1419
          %v1528 = vpack.c.b16 %v1424, %v1420
          %v1529 = vpack.c.b16 %v1425, %v1421
          %v1530 = vpack.c.b16 %v1426, %v1422
          %v1531 = vpack.c.b16 %v1431, %v1427
          %v1532 = vpack.c.b16 %v1432, %v1428
          %v1533 = vpack.c.b16 %v1433, %v1429
          %v1534 = vpack.c.b16 %v1434, %v1430
          %v1535 = vpack.c.b16 %v1439, %v1435
          %v1536 = vpack.c.b16 %v1440, %v1436
          %v1537 = vpack.c.b16 %v1441, %v1437
          %v1538 = vpack.c.b16 %v1442, %v1438
          %1635 = vmatprep.subr.bf16.mxu0 %v1472
          %1636 = vmatpush1.bf16.msra.mxu0 %v1471
          %1637 = vmatprep.subr.bf16.mxu0 %v1468
          %1638 = vmatpush1.bf16.msra.mxu0 %v1467
          %1639 = vmatprep.subr.bf16.mxu0 %v1464
          %1640 = vmatpush1.bf16.msra.mxu0 %v1463
          %1641 = vmatprep.subr.bf16.mxu0 %v1460
          %1642 = vmatpush1.bf16.msra.mxu0 %v1459
          %1643 = vmatprep.subr.bf16.mxu0 %v1456
          %1644 = vmatpush1.bf16.msra.mxu0 %v1455
          %1645 = vmatprep.subr.bf16.mxu0 %v1452
          %1646 = vmatpush1.bf16.msra.mxu0 %v1451
          %1647 = vmatprep.subr.bf16.mxu0 %v1448
          %1648 = vmatpush1.bf16.msra.mxu0 %v1447
          %1649 = vmatprep.subr.bf16.mxu0 %v1444
          %1650 = vmatpush1.bf16.msra.mxu0 %v1443
          %1651 = vmatprep.subr.bf16.mxu0 %v1504
          %1652 = vmatpush2.bf16.msra.mxu0 %v1503
          %1653 = vmatprep.subr.bf16.mxu0 %v1500
          %1654 = vmatpush2.bf16.msra.mxu0 %v1499
          %1655 = vmatprep.subr.bf16.mxu0 %v1496
          %1656 = vmatpush2.bf16.msra.mxu0 %v1495
          %1657 = vmatprep.subr.bf16.mxu0 %v1492
          %1658 = vmatpush2.bf16.msra.mxu0 %v1491
          %1659 = vmatprep.subr.bf16.mxu0 %v1488
          %1660 = vmatpush2.bf16.msra.mxu0 %v1487
          %1661 = vmatprep.subr.bf16.mxu0 %v1484
          %1662 = vmatpush2.bf16.msra.mxu0 %v1483
          %1663 = vmatprep.subr.bf16.mxu0 %v1480
          %1664 = vmatpush2.bf16.msra.mxu0 %v1479
          %1665 = vmatprep.subr.bf16.mxu0 %v1476
          %1666 = vmatpush2.bf16.msra.mxu0 %v1475
          %1667 = vmatprep.mubr.bf16.mxu0 %v1150
          %1668 = vmatmul.mubr.bf16.gmra.mxu0 %v1149
          %v1669 = vpop.f32.mrf.mxu0
          %v1670 = vadd.f32 %v1126, %v1669
          %v1671 = vpop.f32.mrf.mxu0
          %v1672 = vadd.f32 %v1130, %v1671
          %v1673 = vpop.f32.mrf.mxu0
          %v1674 = vadd.f32 %v1126, %v1673
          %v1675 = vpop.f32.mrf.mxu0
          %v1676 = vadd.f32 %v1130, %v1675
          %1677 = vdwg.mxu0
          %1678 = vmatprep.subr.bf16.mxu0 %v1536
          %1679 = vmatpush1.bf16.msra.mxu0 %v1535
          %1680 = vmatprep.subr.bf16.mxu0 %v1532
          %1681 = vmatpush1.bf16.msra.mxu0 %v1531
          %1682 = vmatprep.subr.bf16.mxu0 %v1528
          %1683 = vmatpush1.bf16.msra.mxu0 %v1527
          %1684 = vmatprep.subr.bf16.mxu0 %v1524
          %1685 = vmatpush1.bf16.msra.mxu0 %v1523
          %1686 = vmatprep.subr.bf16.mxu0 %v1520
          %1687 = vmatpush1.bf16.msra.mxu0 %v1519
          %1688 = vmatprep.subr.bf16.mxu0 %v1516
          %1689 = vmatpush1.bf16.msra.mxu0 %v1515
          %1690 = vmatprep.subr.bf16.mxu0 %v1512
          %1691 = vmatpush1.bf16.msra.mxu0 %v1511
          %1692 = vmatprep.subr.bf16.mxu0 %v1508
          %1693 = vmatpush1.bf16.msra.mxu0 %v1507
          %1694 = vmatprep.subr.bf16.mxu0 0
          %1695 = vmatpush2.bf16.msra.mxu0 0
          %1696 = vmatprep.subr.bf16.mxu0 0
          %1697 = vmatpush2.bf16.msra.mxu0 0
          %1698 = vmatprep.subr.bf16.mxu0 0
          %1699 = vmatpush2.bf16.msra.mxu0 0
          %1700 = vmatprep.subr.bf16.mxu0 0
          %1701 = vmatpush2.bf16.msra.mxu0 0
          %1702 = vmatprep.subr.bf16.mxu0 0
          %1703 = vmatpush2.bf16.msra.mxu0 0
          %1704 = vmatprep.subr.bf16.mxu0 0
          %1705 = vmatpush2.bf16.msra.mxu0 0
          %1706 = vmatprep.subr.bf16.mxu0 0
          %1707 = vmatpush2.bf16.msra.mxu0 0
          %1708 = vmatprep.subr.bf16.mxu0 0
          %1709 = vmatpush2.bf16.msra.mxu0 0
          %1710 = vmatprep.mubr.bf16.mxu0 0
          %1711 = vmatmul.mubr.bf16.gmra.mxu0 %v1151
          %v1712 = vpop.f32.mrf.mxu0
          %v1713 = vadd.f32 %v1670, %v1712
          %v1714 = vpop.f32.mrf.mxu0
          %v1715 = vadd.f32 %v1672, %v1714
          %v1716 = vpop.f32.mrf.mxu0
          %v1717 = vadd.f32 %v1674, %v1716
          %v1718 = vpop.f32.mrf.mxu0
          %v1719 = vadd.f32 %v1676, %v1718
          %1720 = vdwg.mxu0
          %1721 = vmatprep.subr.bf16.mxu0 %v1474
          %1722 = vmatpush1.bf16.msra.mxu0 %v1473
          %1723 = vmatprep.subr.bf16.mxu0 %v1470
          %1724 = vmatpush1.bf16.msra.mxu0 %v1469
          %1725 = vmatprep.subr.bf16.mxu0 %v1466
          %1726 = vmatpush1.bf16.msra.mxu0 %v1465
          %1727 = vmatprep.subr.bf16.mxu0 %v1462
          %1728 = vmatpush1.bf16.msra.mxu0 %v1461
          %1729 = vmatprep.subr.bf16.mxu0 %v1458
          %1730 = vmatpush1.bf16.msra.mxu0 %v1457
          %1731 = vmatprep.subr.bf16.mxu0 %v1454
          %1732 = vmatpush1.bf16.msra.mxu0 %v1453
          %1733 = vmatprep.subr.bf16.mxu0 %v1450
          %1734 = vmatpush1.bf16.msra.mxu0 %v1449
          %1735 = vmatprep.subr.bf16.mxu0 %v1446
          %1736 = vmatpush1.bf16.msra.mxu0 %v1445
          %1737 = vmatprep.subr.bf16.mxu0 %v1506
          %1738 = vmatpush2.bf16.msra.mxu0 %v1505
          %1739 = vmatprep.subr.bf16.mxu0 %v1502
          %1740 = vmatpush2.bf16.msra.mxu0 %v1501
          %1741 = vmatprep.subr.bf16.mxu0 %v1498
          %1742 = vmatpush2.bf16.msra.mxu0 %v1497
          %1743 = vmatprep.subr.bf16.mxu0 %v1494
          %1744 = vmatpush2.bf16.msra.mxu0 %v1493
          %1745 = vmatprep.subr.bf16.mxu0 %v1490
          %1746 = vmatpush2.bf16.msra.mxu0 %v1489
          %1747 = vmatprep.subr.bf16.mxu0 %v1486
          %1748 = vmatpush2.bf16.msra.mxu0 %v1485
          %1749 = vmatprep.subr.bf16.mxu0 %v1482
          %1750 = vmatpush2.bf16.msra.mxu0 %v1481
          %1751 = vmatprep.subr.bf16.mxu0 %v1478
          %1752 = vmatpush2.bf16.msra.mxu0 %v1477
          %1753 = vmatprep.mubr.bf16.mxu0 %v1150
          %1754 = vmatmul.mubr.bf16.gmra.mxu0 %v1149
          %v1755 = vpop.f32.mrf.mxu0
          %v1756 = vadd.f32 %v1134, %v1755
          %v1757 = vpop.f32.mrf.mxu0
          %v1758 = vadd.f32 %v1138, %v1757
          %v1759 = vpop.f32.mrf.mxu0
          %v1760 = vadd.f32 %v1134, %v1759
          %v1761 = vpop.f32.mrf.mxu0
          %v1762 = vadd.f32 %v1138, %v1761
          %1763 = vdwg.mxu0
          %1764 = vmatprep.subr.bf16.mxu0 %v1538
          %1765 = vmatpush1.bf16.msra.mxu0 %v1537
          %1766 = vmatprep.subr.bf16.mxu0 %v1534
          %1767 = vmatpush1.bf16.msra.mxu0 %v1533
          %1768 = vmatprep.subr.bf16.mxu0 %v1530
          %1769 = vmatpush1.bf16.msra.mxu0 %v1529
          %1770 = vmatprep.subr.bf16.mxu0 %v1526
          %1771 = vmatpush1.bf16.msra.mxu0 %v1525
          %1772 = vmatprep.subr.bf16.mxu0 %v1522
          %1773 = vmatpush1.bf16.msra.mxu0 %v1521
          %1774 = vmatprep.subr.bf16.mxu0 %v1518
          %1775 = vmatpush1.bf16.msra.mxu0 %v1517
          %1776 = vmatprep.subr.bf16.mxu0 %v1514
          %1777 = vmatpush1.bf16.msra.mxu0 %v1513
          %1778 = vmatprep.subr.bf16.mxu0 %v1510
          %1779 = vmatpush1.bf16.msra.mxu0 %v1509
          %1780 = vmatprep.subr.bf16.mxu0 0
          %1781 = vmatpush2.bf16.msra.mxu0 0
          %1782 = vmatprep.subr.bf16.mxu0 0
          %1783 = vmatpush2.bf16.msra.mxu0 0
          %1784 = vmatprep.subr.bf16.mxu0 0
          %1785 = vmatpush2.bf16.msra.mxu0 0
          %1786 = vmatprep.subr.bf16.mxu0 0
          %1787 = vmatpush2.bf16.msra.mxu0 0
          %1788 = vmatprep.subr.bf16.mxu0 0
          %1789 = vmatpush2.bf16.msra.mxu0 0
          %1790 = vmatprep.subr.bf16.mxu0 0
          %1791 = vmatpush2.bf16.msra.mxu0 0
          %1792 = vmatprep.subr.bf16.mxu0 0
          %1793 = vmatpush2.bf16.msra.mxu0 0
          %1794 = vmatprep.subr.bf16.mxu0 0
          %1795 = vmatpush2.bf16.msra.mxu0 0
          %1796 = vmatprep.mubr.bf16.mxu0 0
          %1797 = vmatmul.mubr.bf16.gmra.mxu0 %v1151
          %v1798 = vpop.f32.mrf.mxu0
          %v1799 = vadd.f32 %v1756, %v1798
          %v1800 = vpop.f32.mrf.mxu0
          %v1801 = vadd.f32 %v1758, %v1800
          %v1802 = vpop.f32.mrf.mxu0
          %v1803 = vadd.f32 %v1760, %v1802
          %v1804 = vpop.f32.mrf.mxu0
          %v1805 = vadd.f32 %v1762, %v1804
          %1806 = vdwg.mxu0
          %v1807 = vld [vmem:[%s2] sm:$0xff]
          %v1808 = vld [vmem:[%s2 + $0x8] sm:$0xff]
          %v1809 = vld [vmem:[%s2 + $0x10] sm:$0xff]
          %v1810 = vld [vmem:[%s2 + $0x18] sm:$0xff]
          %v1811 = vadd.f32 %v1713, %v1807
          %v1812 = vadd.f32 %v1715, %v1808
          %v1813 = vadd.f32 %v1799, %v1809
          %v1814 = vadd.f32 %v1801, %v1810
          %v1815 = vadd.f32 %v1717, %v1807
          %v1816 = vadd.f32 %v1719, %v1808
          %v1817 = vadd.f32 %v1803, %v1809
          %v1818 = vadd.f32 %v1805, %v1810
          %v1819 = vlaneseq
          %v1820 = vshrl.u32 %v1819, 7
          %v1821 = vsub.s32 1, %v1820
          %v1822 = vrot.slane %v999, %v1821
          %v1823 = vlaneseq
          %v1824 = vshrl.u32 %v1823, 7
          %v1825 = vsub.s32 5, %v1824
          %v1826 = vrot.slane %v999, %v1825
          %v1827 = vlaneseq
          %v1828 = vshrl.u32 %v1827, 7
          %v1829 = vsub.s32 1, %v1828
          %v1830 = vrot.slane %v1000, %v1829
          %v1831 = vlaneseq
          %v1832 = vshrl.u32 %v1831, 7
          %v1833 = vsub.s32 5, %v1832
          %v1834 = vrot.slane %v1000, %v1833
          %v1839 = vlaneseq
          %v1840 = vshrl.u32 %v1839, 7
          %v1841 = vsub.s32 1, %v1840
          %v1842 = vrot.slane %v1822, %v1841
          %v1843 = vlaneseq
          %v1844 = vshrl.u32 %v1843, 7
          %v1845 = vsub.s32 1, %v1844
          %v1846 = vrot.slane %v1826, %v1845
          %v1847 = vlaneseq
          %v1848 = vshrl.u32 %v1847, 7
          %v1849 = vsub.s32 1, %v1848
          %v1850 = vrot.slane %v1830, %v1849
          %v1851 = vlaneseq
          %v1852 = vshrl.u32 %v1851, 7
          %v1853 = vsub.s32 1, %v1852
          %v1854 = vrot.slane %v1834, %v1853
          %v1855 = vmul.f32 %v1811, %v1842
          %v1856 = vmul.f32 %v1812, %v1846
          %v1857 = vmul.f32 %v1813, %v1850
          %v1858 = vmul.f32 %v1814, %v1854
          %v1859 = vmul.f32 %v1815, %v1842
          %v1860 = vmul.f32 %v1816, %v1846
          %v1861 = vmul.f32 %v1817, %v1850
          %v1862 = vmul.f32 %v1818, %v1854
          %v1863 = vlaneseq
          %v1864 = vshrl.u32 %v1863, 7
          %v1865 = vsub.s32 2, %v1864
          %v1866 = vrot.slane %v999, %v1865
          %v1867 = vlaneseq
          %v1868 = vshrl.u32 %v1867, 7
          %v1869 = vsub.s32 6, %v1868
          %v1870 = vrot.slane %v999, %v1869
          %v1871 = vlaneseq
          %v1872 = vshrl.u32 %v1871, 7
          %v1873 = vsub.s32 2, %v1872
          %v1874 = vrot.slane %v1000, %v1873
          %v1875 = vlaneseq
          %v1876 = vshrl.u32 %v1875, 7
          %v1877 = vsub.s32 6, %v1876
          %v1878 = vrot.slane %v1000, %v1877
          %v1883 = vlaneseq
          %v1884 = vshrl.u32 %v1883, 7
          %v1885 = vsub.s32 2, %v1884
          %v1886 = vrot.slane %v1866, %v1885
          %v1887 = vlaneseq
          %v1888 = vshrl.u32 %v1887, 7
          %v1889 = vsub.s32 2, %v1888
          %v1890 = vrot.slane %v1870, %v1889
          %v1891 = vlaneseq
          %v1892 = vshrl.u32 %v1891, 7
          %v1893 = vsub.s32 2, %v1892
          %v1894 = vrot.slane %v1874, %v1893
          %v1895 = vlaneseq
          %v1896 = vshrl.u32 %v1895, 7
          %v1897 = vsub.s32 2, %v1896
          %v1898 = vrot.slane %v1878, %v1897
          %v1899 = vadd.f32 %v1855, %v1886
          %v1900 = vadd.f32 %v1856, %v1890
          %v1901 = vadd.f32 %v1857, %v1894
          %v1902 = vadd.f32 %v1858, %v1898
          %v1903 = vadd.f32 %v1859, %v1886
          %v1904 = vadd.f32 %v1860, %v1890
          %v1905 = vadd.f32 %v1861, %v1894
          %v1906 = vadd.f32 %v1862, %v1898
          %1907 = vst [vmem:[#allocation2] sm:$0xff] %v1899
          %1908 = vst [vmem:[#allocation2 + $0x8] sm:$0xff] %v1900
          %1909 = vst [vmem:[#allocation2 + $0x10] sm:$0xff] %v1901
          %1910 = vst [vmem:[#allocation2 + $0x18] sm:$0xff] %v1902
          %1911 = vst [vmem:[#allocation2 + $0x20] sm:$0xff] %v1903
          %1912 = vst [vmem:[#allocation2 + $0x28] sm:$0xff] %v1904
          %1913 = vst [vmem:[#allocation2 + $0x30] sm:$0xff] %v1905
          %1914 = vst [vmem:[#allocation2 + $0x38] sm:$0xff] %v1906
        $region132: #{mobilebert_classifier_forward.1} parent=95 // pred_fallthru
          _
        %v1915 = vld [vmem:[#allocation2] sm:$0xff]
        %v1916 = vld [vmem:[#allocation2 + $0x8] sm:$0xff]
        %v1917 = vld [vmem:[#allocation2 + $0x10] sm:$0xff]
        %v1918 = vld [vmem:[#allocation2 + $0x18] sm:$0xff]
        %v1919 = vld [vmem:[#allocation2 + $0x20] sm:$0xff]
        %v1920 = vld [vmem:[#allocation2 + $0x28] sm:$0xff]
        %v1921 = vld [vmem:[#allocation2 + $0x30] sm:$0xff]
        %v1922 = vld [vmem:[#allocation2 + $0x38] sm:$0xff]
        %v1923 = vld [vmem:[%s956] sm:$0x77]
        %v1924 = vld [vmem:[%s956 + $0x8] sm:$0x7]
        %v1925 = vpack.c.bf16 %v1919, %v1915
        %v1926 = vpack.c.bf16 %v1920, %v1916
        %v1927 = vpack.c.bf16 %v1921, %v1917
        %v1928 = vpack.c.bf16 %v1922, %v1918
        %v1929 = vld [vmem:[%s788] sm:$0xff]
        %v1930 = vld [vmem:[%s788 + $0x8] sm:$0xf]
        %v1931 = vld [vmem:[%s788 + $0xc] sm:$0xff]
        %v1932 = vld [vmem:[%s788 + $0x14] sm:$0xf]
        %v1933 = vld [vmem:[%s788 + $0x18] sm:$0xff]
        %v1934 = vld [vmem:[%s788 + $0x20] sm:$0xf]
        %v1935 = vld [vmem:[%s788 + $0x24] sm:$0xff]
        %v1936 = vld [vmem:[%s788 + $0x2c] sm:$0xf]
        %v1937 = vld [vmem:[%s788 + $0x30] sm:$0xff]
        %v1938 = vld [vmem:[%s788 + $0x38] sm:$0xf]
        %v1939 = vld [vmem:[%s788 + $0x3c] sm:$0xff]
        %v1940 = vld [vmem:[%s788 + $0x44] sm:$0xf]
        %v1941 = vld [vmem:[%s788 + $0x48] sm:$0xff]
        %v1942 = vld [vmem:[%s788 + $0x50] sm:$0xf]
        %v1943 = vld [vmem:[%s788 + $0x54] sm:$0xff]
        %v1944 = vld [vmem:[%s788 + $0x5c] sm:$0xf]
        %v1945 = vld [vmem:[%s788 + $0x60] sm:$0xff]
        %v1946 = vld [vmem:[%s788 + $0x68] sm:$0xf]
        %v1947 = vld [vmem:[%s788 + $0x6c] sm:$0xff]
        %v1948 = vld [vmem:[%s788 + $0x74] sm:$0xf]
        %v1949 = vld [vmem:[%s788 + $0x78] sm:$0xff]
        %v1950 = vld [vmem:[%s788 + $0x80] sm:$0xf]
        %v1951 = vld [vmem:[%s788 + $0x84] sm:$0xff]
        %v1952 = vld [vmem:[%s788 + $0x8c] sm:$0xf]
        %v1953 = vld [vmem:[%s788 + $0x90] sm:$0xff]
        %v1954 = vld [vmem:[%s788 + $0x98] sm:$0xf]
        %v1955 = vld [vmem:[%s788 + $0x9c] sm:$0xff]
        %v1956 = vld [vmem:[%s788 + $0xa4] sm:$0xf]
        %v1957 = vld [vmem:[%s788 + $0xa8] sm:$0xff]
        %v1958 = vld [vmem:[%s788 + $0xb0] sm:$0xf]
        %v1959 = vld [vmem:[%s788 + $0xb4] sm:$0xff]
        %v1960 = vld [vmem:[%s788 + $0xbc] sm:$0xf]
        %v1961 = vld [vmem:[%s788 + $0xc0] sm:$0xff]
        %v1962 = vld [vmem:[%s788 + $0xc8] sm:$0xf]
        %v1963 = vld [vmem:[%s788 + $0xcc] sm:$0xff]
        %v1964 = vld [vmem:[%s788 + $0xd4] sm:$0xf]
        %v1965 = vld [vmem:[%s788 + $0xd8] sm:$0xff]
        %v1966 = vld [vmem:[%s788 + $0xe0] sm:$0xf]
        %v1967 = vld [vmem:[%s788 + $0xe4] sm:$0xff]
        %v1968 = vld [vmem:[%s788 + $0xec] sm:$0xf]
        %v1969 = vld [vmem:[%s788 + $0xf0] sm:$0xff]
        %v1970 = vld [vmem:[%s788 + $0xf8] sm:$0xf]
        %v1971 = vld [vmem:[%s788 + $0xfc] sm:$0xff]
        %v1972 = vld [vmem:[%s788 + $0x104] sm:$0xf]
        %v1973 = vld [vmem:[%s788 + $0x108] sm:$0xff]
        %v1974 = vld [vmem:[%s788 + $0x110] sm:$0xf]
        %v1975 = vld [vmem:[%s788 + $0x114] sm:$0xff]
        %v1976 = vld [vmem:[%s788 + $0x11c] sm:$0xf]
        %v1977 = vld [vmem:[%s788 + $0x120] sm:$0xff]
        %v1978 = vld [vmem:[%s788 + $0x128] sm:$0xf]
        %v1979 = vld [vmem:[%s788 + $0x12c] sm:$0xff]
        %v1980 = vld [vmem:[%s788 + $0x134] sm:$0xf]
        %v1981 = vld [vmem:[%s788 + $0x138] sm:$0xff]
        %v1982 = vld [vmem:[%s788 + $0x140] sm:$0xf]
        %v1983 = vld [vmem:[%s788 + $0x144] sm:$0xff]
        %v1984 = vld [vmem:[%s788 + $0x14c] sm:$0xf]
        %v1985 = vld [vmem:[%s788 + $0x150] sm:$0xff]
        %v1986 = vld [vmem:[%s788 + $0x158] sm:$0xf]
        %v1987 = vld [vmem:[%s788 + $0x15c] sm:$0xff]
        %v1988 = vld [vmem:[%s788 + $0x164] sm:$0xf]
        %v1989 = vld [vmem:[%s788 + $0x168] sm:$0xff]
        %v1990 = vld [vmem:[%s788 + $0x170] sm:$0xf]
        %v1991 = vld [vmem:[%s788 + $0x174] sm:$0xff]
        %v1992 = vld [vmem:[%s788 + $0x17c] sm:$0xf]
        %v1993 = vld [vmem:[%s788 + $0x180] sm:$0xff]
        %v1994 = vld [vmem:[%s788 + $0x188] sm:$0xf]
        %v1995 = vld [vmem:[%s788 + $0x18c] sm:$0xff]
        %v1996 = vld [vmem:[%s788 + $0x194] sm:$0xf]
        %v1997 = vld [vmem:[%s788 + $0x198] sm:$0xff]
        %v1998 = vld [vmem:[%s788 + $0x1a0] sm:$0xf]
        %v1999 = vld [vmem:[%s788 + $0x1a4] sm:$0xff]
        %v2000 = vld [vmem:[%s788 + $0x1ac] sm:$0xf]
        %v2001 = vld [vmem:[%s788 + $0x1b0] sm:$0xff]
        %v2002 = vld [vmem:[%s788 + $0x1b8] sm:$0xf]
        %v2003 = vld [vmem:[%s788 + $0x1bc] sm:$0xff]
        %v2004 = vld [vmem:[%s788 + $0x1c4] sm:$0xf]
        %v2005 = vld [vmem:[%s788 + $0x1c8] sm:$0xff]
        %v2006 = vld [vmem:[%s788 + $0x1d0] sm:$0xf]
        %v2007 = vld [vmem:[%s788 + $0x1d4] sm:$0xff]
        %v2008 = vld [vmem:[%s788 + $0x1dc] sm:$0xf]
        %v2009 = vld [vmem:[%s788 + $0x1e0] sm:$0xff]
        %v2010 = vld [vmem:[%s788 + $0x1e8] sm:$0xf]
        %v2011 = vld [vmem:[%s788 + $0x1ec] sm:$0xff]
        %v2012 = vld [vmem:[%s788 + $0x1f4] sm:$0xf]
        %v2013 = vld [vmem:[%s788 + $0x1f8] sm:$0xff]
        %v2014 = vld [vmem:[%s788 + $0x200] sm:$0xf]
        %v2015 = vld [vmem:[%s788 + $0x204] sm:$0xff]
        %v2016 = vld [vmem:[%s788 + $0x20c] sm:$0xf]
        %v2017 = vld [vmem:[%s788 + $0x210] sm:$0xff]
        %v2018 = vld [vmem:[%s788 + $0x218] sm:$0xf]
        %v2019 = vld [vmem:[%s788 + $0x21c] sm:$0xff]
        %v2020 = vld [vmem:[%s788 + $0x224] sm:$0xf]
        %v2021 = vld [vmem:[%s788 + $0x228] sm:$0xff]
        %v2022 = vld [vmem:[%s788 + $0x230] sm:$0xf]
        %v2023 = vld [vmem:[%s788 + $0x234] sm:$0xff]
        %v2024 = vld [vmem:[%s788 + $0x23c] sm:$0xf]
        %v2025 = vld [vmem:[%s788 + $0x240] sm:$0xff]
        %v2026 = vld [vmem:[%s788 + $0x248] sm:$0xf]
        %v2027 = vld [vmem:[%s788 + $0x24c] sm:$0xff]
        %v2028 = vld [vmem:[%s788 + $0x254] sm:$0xf]
        %v2029 = vld [vmem:[%s788 + $0x258] sm:$0xff]
        %v2030 = vld [vmem:[%s788 + $0x260] sm:$0xf]
        %v2031 = vld [vmem:[%s788 + $0x264] sm:$0xff]
        %v2032 = vld [vmem:[%s788 + $0x26c] sm:$0xf]
        %v2033 = vld [vmem:[%s788 + $0x270] sm:$0xff]
        %v2034 = vld [vmem:[%s788 + $0x278] sm:$0xf]
        %v2035 = vld [vmem:[%s788 + $0x27c] sm:$0xff]
        %v2036 = vld [vmem:[%s788 + $0x284] sm:$0xf]
        %v2037 = vld [vmem:[%s788 + $0x288] sm:$0xff]
        %v2038 = vld [vmem:[%s788 + $0x290] sm:$0xf]
        %v2039 = vld [vmem:[%s788 + $0x294] sm:$0xff]
        %v2040 = vld [vmem:[%s788 + $0x29c] sm:$0xf]
        %v2041 = vld [vmem:[%s788 + $0x2a0] sm:$0xff]
        %v2042 = vld [vmem:[%s788 + $0x2a8] sm:$0xf]
        %v2043 = vld [vmem:[%s788 + $0x2ac] sm:$0xff]
        %v2044 = vld [vmem:[%s788 + $0x2b4] sm:$0xf]
        %v2045 = vld [vmem:[%s788 + $0x2b8] sm:$0xff]
        %v2046 = vld [vmem:[%s788 + $0x2c0] sm:$0xf]
        %v2047 = vld [vmem:[%s788 + $0x2c4] sm:$0xff]
        %v2048 = vld [vmem:[%s788 + $0x2cc] sm:$0xf]
        %v2049 = vld [vmem:[%s788 + $0x2d0] sm:$0xff]
        %v2050 = vld [vmem:[%s788 + $0x2d8] sm:$0xf]
        %v2051 = vld [vmem:[%s788 + $0x2dc] sm:$0xff]
        %v2052 = vld [vmem:[%s788 + $0x2e4] sm:$0xf]
        %v2053 = vld [vmem:[%s788 + $0x2e8] sm:$0xff]
        %v2054 = vld [vmem:[%s788 + $0x2f0] sm:$0xf]
        %v2055 = vld [vmem:[%s788 + $0x2f4] sm:$0xff]
        %v2056 = vld [vmem:[%s788 + $0x2fc] sm:$0xf]
        %v2059 = vlaneseq
        %v2060 = vshrl.u32 %v2059, 7
        %v2061 = vsub.s32 0, %v2060
        %v2062 = vrot.slane %v1923, %v2061
        %v2063 = vlaneseq
        %v2064 = vshrl.u32 %v2063, 7
        %v2065 = vsub.s32 4, %v2064
        %v2066 = vrot.slane %v1923, %v2065
        %v2067 = vlaneseq
        %v2068 = vshrl.u32 %v2067, 7
        %v2069 = vsub.s32 0, %v2068
        %v2070 = vrot.slane %v1924, %v2069
        %v2074 = vlaneseq
        %v2075 = vshrl.u32 %v2074, 7
        %v2076 = vsub.s32 0, %v2075
        %v2077 = vrot.slane %v2062, %v2076
        %v2078 = vlaneseq
        %v2079 = vshrl.u32 %v2078, 7
        %v2080 = vsub.s32 0, %v2079
        %v2081 = vrot.slane %v2066, %v2080
        %v2082 = vlaneseq
        %v2083 = vshrl.u32 %v2082, 7
        %v2084 = vsub.s32 0, %v2083
        %v2085 = vrot.slane %v2070, %v2084
        %v2214 = vunpack.c.l.b16 %v1929
        %v2215 = vunpack.c.h.b16 %v1929
        %v2216 = vunpack.c.l.b16 %v1930
        %v2217 = vunpack.c.l.b16 %v1931
        %v2218 = vunpack.c.h.b16 %v1931
        %v2219 = vunpack.c.l.b16 %v1932
        %v2220 = vunpack.c.l.b16 %v1933
        %v2221 = vunpack.c.h.b16 %v1933
        %v2222 = vunpack.c.l.b16 %v1934
        %v2223 = vunpack.c.l.b16 %v1935
        %v2224 = vunpack.c.h.b16 %v1935
        %v2225 = vunpack.c.l.b16 %v1936
        %v2226 = vunpack.c.l.b16 %v1937
        %v2227 = vunpack.c.h.b16 %v1937
        %v2228 = vunpack.c.l.b16 %v1938
        %v2229 = vunpack.c.l.b16 %v1939
        %v2230 = vunpack.c.h.b16 %v1939
        %v2231 = vunpack.c.l.b16 %v1940
        %v2232 = vunpack.c.l.b16 %v1941
        %v2233 = vunpack.c.h.b16 %v1941
        %v2234 = vunpack.c.l.b16 %v1942
        %v2235 = vunpack.c.l.b16 %v1943
        %v2236 = vunpack.c.h.b16 %v1943
        %v2237 = vunpack.c.l.b16 %v1944
        %v2238 = vunpack.c.l.b16 %v1945
        %v2239 = vunpack.c.h.b16 %v1945
        %v2240 = vunpack.c.l.b16 %v1946
        %v2241 = vunpack.c.l.b16 %v1947
        %v2242 = vunpack.c.h.b16 %v1947
        %v2243 = vunpack.c.l.b16 %v1948
        %v2244 = vunpack.c.l.b16 %v1949
        %v2245 = vunpack.c.h.b16 %v1949
        %v2246 = vunpack.c.l.b16 %v1950
        %v2247 = vunpack.c.l.b16 %v1951
        %v2248 = vunpack.c.h.b16 %v1951
        %v2249 = vunpack.c.l.b16 %v1952
        %v2250 = vunpack.c.l.b16 %v1953
        %v2251 = vunpack.c.h.b16 %v1953
        %v2252 = vunpack.c.l.b16 %v1954
        %v2253 = vunpack.c.l.b16 %v1955
        %v2254 = vunpack.c.h.b16 %v1955
        %v2255 = vunpack.c.l.b16 %v1956
        %v2256 = vunpack.c.l.b16 %v1957
        %v2257 = vunpack.c.h.b16 %v1957
        %v2258 = vunpack.c.l.b16 %v1958
        %v2259 = vunpack.c.l.b16 %v1959
        %v2260 = vunpack.c.h.b16 %v1959
        %v2261 = vunpack.c.l.b16 %v1960
        %v2262 = vunpack.c.l.b16 %v1961
        %v2263 = vunpack.c.h.b16 %v1961
        %v2264 = vunpack.c.l.b16 %v1962
        %v2265 = vunpack.c.l.b16 %v1963
        %v2266 = vunpack.c.h.b16 %v1963
        %v2267 = vunpack.c.l.b16 %v1964
        %v2268 = vunpack.c.l.b16 %v1965
        %v2269 = vunpack.c.h.b16 %v1965
        %v2270 = vunpack.c.l.b16 %v1966
        %v2271 = vunpack.c.l.b16 %v1967
        %v2272 = vunpack.c.h.b16 %v1967
        %v2273 = vunpack.c.l.b16 %v1968
        %v2274 = vunpack.c.l.b16 %v1969
        %v2275 = vunpack.c.h.b16 %v1969
        %v2276 = vunpack.c.l.b16 %v1970
        %v2277 = vunpack.c.l.b16 %v1971
        %v2278 = vunpack.c.h.b16 %v1971
        %v2279 = vunpack.c.l.b16 %v1972
        %v2280 = vunpack.c.l.b16 %v1973
        %v2281 = vunpack.c.h.b16 %v1973
        %v2282 = vunpack.c.l.b16 %v1974
        %v2283 = vunpack.c.l.b16 %v1975
        %v2284 = vunpack.c.h.b16 %v1975
        %v2285 = vunpack.c.l.b16 %v1976
        %v2286 = vunpack.c.l.b16 %v1977
        %v2287 = vunpack.c.h.b16 %v1977
        %v2288 = vunpack.c.l.b16 %v1978
        %v2289 = vunpack.c.l.b16 %v1979
        %v2290 = vunpack.c.h.b16 %v1979
        %v2291 = vunpack.c.l.b16 %v1980
        %v2292 = vunpack.c.l.b16 %v1981
        %v2293 = vunpack.c.h.b16 %v1981
        %v2294 = vunpack.c.l.b16 %v1982
        %v2295 = vunpack.c.l.b16 %v1983
        %v2296 = vunpack.c.h.b16 %v1983
        %v2297 = vunpack.c.l.b16 %v1984
        %v2298 = vunpack.c.l.b16 %v1985
        %v2299 = vunpack.c.h.b16 %v1985
        %v2300 = vunpack.c.l.b16 %v1986
        %v2301 = vunpack.c.l.b16 %v1987
        %v2302 = vunpack.c.h.b16 %v1987
        %v2303 = vunpack.c.l.b16 %v1988
        %v2304 = vunpack.c.l.b16 %v1989
        %v2305 = vunpack.c.h.b16 %v1989
        %v2306 = vunpack.c.l.b16 %v1990
        %v2307 = vunpack.c.l.b16 %v1991
        %v2308 = vunpack.c.h.b16 %v1991
        %v2309 = vunpack.c.l.b16 %v1992
        %v2310 = vunpack.c.l.b16 %v1993
        %v2311 = vunpack.c.h.b16 %v1993
        %v2312 = vunpack.c.l.b16 %v1994
        %v2313 = vunpack.c.l.b16 %v1995
        %v2314 = vunpack.c.h.b16 %v1995
        %v2315 = vunpack.c.l.b16 %v1996
        %v2316 = vunpack.c.l.b16 %v1997
        %v2317 = vunpack.c.h.b16 %v1997
        %v2318 = vunpack.c.l.b16 %v1998
        %v2319 = vunpack.c.l.b16 %v1999
        %v2320 = vunpack.c.h.b16 %v1999
        %v2321 = vunpack.c.l.b16 %v2000
        %v2322 = vunpack.c.l.b16 %v2001
        %v2323 = vunpack.c.h.b16 %v2001
        %v2324 = vunpack.c.l.b16 %v2002
        %v2325 = vunpack.c.l.b16 %v2003
        %v2326 = vunpack.c.h.b16 %v2003
        %v2327 = vunpack.c.l.b16 %v2004
        %v2328 = vunpack.c.l.b16 %v2005
        %v2329 = vunpack.c.h.b16 %v2005
        %v2330 = vunpack.c.l.b16 %v2006
        %v2331 = vunpack.c.l.b16 %v2007
        %v2332 = vunpack.c.h.b16 %v2007
        %v2333 = vunpack.c.l.b16 %v2008
        %v2334 = vunpack.c.l.b16 %v2009
        %v2335 = vunpack.c.h.b16 %v2009
        %v2336 = vunpack.c.l.b16 %v2010
        %v2337 = vunpack.c.l.b16 %v2011
        %v2338 = vunpack.c.h.b16 %v2011
        %v2339 = vunpack.c.l.b16 %v2012
        %v2340 = vunpack.c.l.b16 %v2013
        %v2341 = vunpack.c.h.b16 %v2013
        %v2342 = vunpack.c.l.b16 %v2014
        %v2343 = vunpack.c.l.b16 %v2015
        %v2344 = vunpack.c.h.b16 %v2015
        %v2345 = vunpack.c.l.b16 %v2016
        %v2346 = vunpack.c.l.b16 %v2017
        %v2347 = vunpack.c.h.b16 %v2017
        %v2348 = vunpack.c.l.b16 %v2018
        %v2349 = vunpack.c.l.b16 %v2019
        %v2350 = vunpack.c.h.b16 %v2019
        %v2351 = vunpack.c.l.b16 %v2020
        %v2352 = vunpack.c.l.b16 %v2021
        %v2353 = vunpack.c.h.b16 %v2021
        %v2354 = vunpack.c.l.b16 %v2022
        %v2355 = vunpack.c.l.b16 %v2023
        %v2356 = vunpack.c.h.b16 %v2023
        %v2357 = vunpack.c.l.b16 %v2024
        %v2358 = vunpack.c.l.b16 %v2025
        %v2359 = vunpack.c.h.b16 %v2025
        %v2360 = vunpack.c.l.b16 %v2026
        %v2361 = vunpack.c.l.b16 %v2027
        %v2362 = vunpack.c.h.b16 %v2027
        %v2363 = vunpack.c.l.b16 %v2028
        %v2364 = vunpack.c.l.b16 %v2029
        %v2365 = vunpack.c.h.b16 %v2029
        %v2366 = vunpack.c.l.b16 %v2030
        %v2367 = vunpack.c.l.b16 %v2031
        %v2368 = vunpack.c.h.b16 %v2031
        %v2369 = vunpack.c.l.b16 %v2032
        %v2370 = vunpack.c.l.b16 %v2033
        %v2371 = vunpack.c.h.b16 %v2033
        %v2372 = vunpack.c.l.b16 %v2034
        %v2373 = vunpack.c.l.b16 %v2035
        %v2374 = vunpack.c.h.b16 %v2035
        %v2375 = vunpack.c.l.b16 %v2036
        %v2376 = vunpack.c.l.b16 %v2037
        %v2377 = vunpack.c.h.b16 %v2037
        %v2378 = vunpack.c.l.b16 %v2038
        %v2379 = vunpack.c.l.b16 %v2039
        %v2380 = vunpack.c.h.b16 %v2039
        %v2381 = vunpack.c.l.b16 %v2040
        %v2382 = vunpack.c.l.b16 %v2041
        %v2383 = vunpack.c.h.b16 %v2041
        %v2384 = vunpack.c.l.b16 %v2042
        %v2385 = vunpack.c.l.b16 %v2043
        %v2386 = vunpack.c.h.b16 %v2043
        %v2387 = vunpack.c.l.b16 %v2044
        %v2388 = vunpack.c.l.b16 %v2045
        %v2389 = vunpack.c.h.b16 %v2045
        %v2390 = vunpack.c.l.b16 %v2046
        %v2391 = vunpack.c.l.b16 %v2047
        %v2392 = vunpack.c.h.b16 %v2047
        %v2393 = vunpack.c.l.b16 %v2048
        %v2394 = vunpack.c.l.b16 %v2049
        %v2395 = vunpack.c.h.b16 %v2049
        %v2396 = vunpack.c.l.b16 %v2050
        %v2397 = vunpack.c.l.b16 %v2051
        %v2398 = vunpack.c.h.b16 %v2051
        %v2399 = vunpack.c.l.b16 %v2052
        %v2400 = vunpack.c.l.b16 %v2053
        %v2401 = vunpack.c.h.b16 %v2053
        %v2402 = vunpack.c.l.b16 %v2054
        %v2403 = vunpack.c.l.b16 %v2055
        %v2404 = vunpack.c.h.b16 %v2055
        %v2405 = vunpack.c.l.b16 %v2056
        %v2406 = vpack.c.b16 %v2217, %v2214
        %v2407 = vpack.c.b16 %v2218, %v2215
        %v2408 = vpack.c.b16 %v2219, %v2216
        %v2409 = vpack.c.b16 %v2223, %v2220
        %v2410 = vpack.c.b16 %v2224, %v2221
        %v2411 = vpack.c.b16 %v2225, %v2222
        %v2412 = vpack.c.b16 %v2229, %v2226
        %v2413 = vpack.c.b16 %v2230, %v2227
        %v2414 = vpack.c.b16 %v2231, %v2228
        %v2415 = vpack.c.b16 %v2235, %v2232
        %v2416 = vpack.c.b16 %v2236, %v2233
        %v2417 = vpack.c.b16 %v2237, %v2234
        %v2418 = vpack.c.b16 %v2241, %v2238
        %v2419 = vpack.c.b16 %v2242, %v2239
        %v2420 = vpack.c.b16 %v2243, %v2240
        %v2421 = vpack.c.b16 %v2247, %v2244
        %v2422 = vpack.c.b16 %v2248, %v2245
        %v2423 = vpack.c.b16 %v2249, %v2246
        %v2424 = vpack.c.b16 %v2253, %v2250
        %v2425 = vpack.c.b16 %v2254, %v2251
        %v2426 = vpack.c.b16 %v2255, %v2252
        %v2427 = vpack.c.b16 %v2259, %v2256
        %v2428 = vpack.c.b16 %v2260, %v2257
        %v2429 = vpack.c.b16 %v2261, %v2258
        %v2430 = vpack.c.b16 %v2265, %v2262
        %v2431 = vpack.c.b16 %v2266, %v2263
        %v2432 = vpack.c.b16 %v2267, %v2264
        %v2433 = vpack.c.b16 %v2271, %v2268
        %v2434 = vpack.c.b16 %v2272, %v2269
        %v2435 = vpack.c.b16 %v2273, %v2270
        %v2436 = vpack.c.b16 %v2277, %v2274
        %v2437 = vpack.c.b16 %v2278, %v2275
        %v2438 = vpack.c.b16 %v2279, %v2276
        %v2439 = vpack.c.b16 %v2283, %v2280
        %v2440 = vpack.c.b16 %v2284, %v2281
        %v2441 = vpack.c.b16 %v2285, %v2282
        %v2442 = vpack.c.b16 %v2289, %v2286
        %v2443 = vpack.c.b16 %v2290, %v2287
        %v2444 = vpack.c.b16 %v2291, %v2288
        %v2445 = vpack.c.b16 %v2295, %v2292
        %v2446 = vpack.c.b16 %v2296, %v2293
        %v2447 = vpack.c.b16 %v2297, %v2294
        %v2448 = vpack.c.b16 %v2301, %v2298
        %v2449 = vpack.c.b16 %v2302, %v2299
        %v2450 = vpack.c.b16 %v2303, %v2300
        %v2451 = vpack.c.b16 %v2307, %v2304
        %v2452 = vpack.c.b16 %v2308, %v2305
        %v2453 = vpack.c.b16 %v2309, %v2306
        %v2454 = vpack.c.b16 %v2313, %v2310
        %v2455 = vpack.c.b16 %v2314, %v2311
        %v2456 = vpack.c.b16 %v2315, %v2312
        %v2457 = vpack.c.b16 %v2319, %v2316
        %v2458 = vpack.c.b16 %v2320, %v2317
        %v2459 = vpack.c.b16 %v2321, %v2318
        %v2460 = vpack.c.b16 %v2325, %v2322
        %v2461 = vpack.c.b16 %v2326, %v2323
        %v2462 = vpack.c.b16 %v2327, %v2324
        %v2463 = vpack.c.b16 %v2331, %v2328
        %v2464 = vpack.c.b16 %v2332, %v2329
        %v2465 = vpack.c.b16 %v2333, %v2330
        %v2466 = vpack.c.b16 %v2337, %v2334
        %v2467 = vpack.c.b16 %v2338, %v2335
        %v2468 = vpack.c.b16 %v2339, %v2336
        %v2469 = vpack.c.b16 %v2343, %v2340
        %v2470 = vpack.c.b16 %v2344, %v2341
        %v2471 = vpack.c.b16 %v2345, %v2342
        %v2472 = vpack.c.b16 %v2349, %v2346
        %v2473 = vpack.c.b16 %v2350, %v2347
        %v2474 = vpack.c.b16 %v2351, %v2348
        %v2475 = vpack.c.b16 %v2355, %v2352
        %v2476 = vpack.c.b16 %v2356, %v2353
        %v2477 = vpack.c.b16 %v2357, %v2354
        %v2478 = vpack.c.b16 %v2361, %v2358
        %v2479 = vpack.c.b16 %v2362, %v2359
        %v2480 = vpack.c.b16 %v2363, %v2360
        %v2481 = vpack.c.b16 %v2367, %v2364
        %v2482 = vpack.c.b16 %v2368, %v2365
        %v2483 = vpack.c.b16 %v2369, %v2366
        %v2484 = vpack.c.b16 %v2373, %v2370
        %v2485 = vpack.c.b16 %v2374, %v2371
        %v2486 = vpack.c.b16 %v2375, %v2372
        %v2487 = vpack.c.b16 %v2379, %v2376
        %v2488 = vpack.c.b16 %v2380, %v2377
        %v2489 = vpack.c.b16 %v2381, %v2378
        %v2490 = vpack.c.b16 %v2385, %v2382
        %v2491 = vpack.c.b16 %v2386, %v2383
        %v2492 = vpack.c.b16 %v2387, %v2384
        %v2493 = vpack.c.b16 %v2391, %v2388
        %v2494 = vpack.c.b16 %v2392, %v2389
        %v2495 = vpack.c.b16 %v2393, %v2390
        %v2496 = vpack.c.b16 %v2397, %v2394
        %v2497 = vpack.c.b16 %v2398, %v2395
        %v2498 = vpack.c.b16 %v2399, %v2396
        %v2499 = vpack.c.b16 %v2403, %v2400
        %v2500 = vpack.c.b16 %v2404, %v2401
        %v2501 = vpack.c.b16 %v2405, %v2402
        %2598 = vmatprep.subr.bf16.mxu0 %v2428
        %2599 = vmatpush1.bf16.msra.mxu0 %v2427
        %2600 = vmatprep.subr.bf16.mxu0 %v2425
        %2601 = vmatpush1.bf16.msra.mxu0 %v2424
        %2602 = vmatprep.subr.bf16.mxu0 %v2422
        %2603 = vmatpush1.bf16.msra.mxu0 %v2421
        %2604 = vmatprep.subr.bf16.mxu0 %v2419
        %2605 = vmatpush1.bf16.msra.mxu0 %v2418
        %2606 = vmatprep.subr.bf16.mxu0 %v2416
        %2607 = vmatpush1.bf16.msra.mxu0 %v2415
        %2608 = vmatprep.subr.bf16.mxu0 %v2413
        %2609 = vmatpush1.bf16.msra.mxu0 %v2412
        %2610 = vmatprep.subr.bf16.mxu0 %v2410
        %2611 = vmatpush1.bf16.msra.mxu0 %v2409
        %2612 = vmatprep.subr.bf16.mxu0 %v2407
        %2613 = vmatpush1.bf16.msra.mxu0 %v2406
        %2614 = vmatprep.subr.bf16.mxu0 %v2452
        %2615 = vmatpush2.bf16.msra.mxu0 %v2451
        %2616 = vmatprep.subr.bf16.mxu0 %v2449
        %2617 = vmatpush2.bf16.msra.mxu0 %v2448
        %2618 = vmatprep.subr.bf16.mxu0 %v2446
        %2619 = vmatpush2.bf16.msra.mxu0 %v2445
        %2620 = vmatprep.subr.bf16.mxu0 %v2443
        %2621 = vmatpush2.bf16.msra.mxu0 %v2442
        %2622 = vmatprep.subr.bf16.mxu0 %v2440
        %2623 = vmatpush2.bf16.msra.mxu0 %v2439
        %2624 = vmatprep.subr.bf16.mxu0 %v2437
        %2625 = vmatpush2.bf16.msra.mxu0 %v2436
        %2626 = vmatprep.subr.bf16.mxu0 %v2434
        %2627 = vmatpush2.bf16.msra.mxu0 %v2433
        %2628 = vmatprep.subr.bf16.mxu0 %v2431
        %2629 = vmatpush2.bf16.msra.mxu0 %v2430
        %2630 = vmatprep.mubr.bf16.mxu0 %v1926
        %2631 = vmatmul.mubr.bf16.gmra.mxu0 %v1925
        %v2632 = vpop.f32.mrf.mxu0
        %v2633 = vadd.f32 %v2077, %v2632
        %v2634 = vpop.f32.mrf.mxu0
        %v2635 = vadd.f32 %v2081, %v2634
        %v2636 = vpop.f32.mrf.mxu0
        %v2637 = vadd.f32 %v2077, %v2636
        %v2638 = vpop.f32.mrf.mxu0
        %v2639 = vadd.f32 %v2081, %v2638
        %2640 = vdwg.mxu0
        %2641 = vmatprep.subr.bf16.mxu0 %v2476
        %2642 = vmatpush1.bf16.msra.mxu0 %v2475
        %2643 = vmatprep.subr.bf16.mxu0 %v2473
        %2644 = vmatpush1.bf16.msra.mxu0 %v2472
        %2645 = vmatprep.subr.bf16.mxu0 %v2470
        %2646 = vmatpush1.bf16.msra.mxu0 %v2469
        %2647 = vmatprep.subr.bf16.mxu0 %v2467
        %2648 = vmatpush1.bf16.msra.mxu0 %v2466
        %2649 = vmatprep.subr.bf16.mxu0 %v2464
        %2650 = vmatpush1.bf16.msra.mxu0 %v2463
        %2651 = vmatprep.subr.bf16.mxu0 %v2461
        %2652 = vmatpush1.bf16.msra.mxu0 %v2460
        %2653 = vmatprep.subr.bf16.mxu0 %v2458
        %2654 = vmatpush1.bf16.msra.mxu0 %v2457
        %2655 = vmatprep.subr.bf16.mxu0 %v2455
        %2656 = vmatpush1.bf16.msra.mxu0 %v2454
        %2657 = vmatprep.subr.bf16.mxu0 %v2500
        %2658 = vmatpush2.bf16.msra.mxu0 %v2499
        %2659 = vmatprep.subr.bf16.mxu0 %v2497
        %2660 = vmatpush2.bf16.msra.mxu0 %v2496
        %2661 = vmatprep.subr.bf16.mxu0 %v2494
        %2662 = vmatpush2.bf16.msra.mxu0 %v2493
        %2663 = vmatprep.subr.bf16.mxu0 %v2491
        %2664 = vmatpush2.bf16.msra.mxu0 %v2490
        %2665 = vmatprep.subr.bf16.mxu0 %v2488
        %2666 = vmatpush2.bf16.msra.mxu0 %v2487
        %2667 = vmatprep.subr.bf16.mxu0 %v2485
        %2668 = vmatpush2.bf16.msra.mxu0 %v2484
        %2669 = vmatprep.subr.bf16.mxu0 %v2482
        %2670 = vmatpush2.bf16.msra.mxu0 %v2481
        %2671 = vmatprep.subr.bf16.mxu0 %v2479
        %2672 = vmatpush2.bf16.msra.mxu0 %v2478
        %2673 = vmatprep.mubr.bf16.mxu0 %v1928
        %2674 = vmatmul.mubr.bf16.gmra.mxu0 %v1927
        %v2675 = vpop.f32.mrf.mxu0
        %v2676 = vadd.f32 %v2633, %v2675
        %v2677 = vpop.f32.mrf.mxu0
        %v2678 = vadd.f32 %v2635, %v2677
        %v2679 = vpop.f32.mrf.mxu0
        %v2680 = vadd.f32 %v2637, %v2679
        %v2681 = vpop.f32.mrf.mxu0
        %v2682 = vadd.f32 %v2639, %v2681
        %2683 = vdwg.mxu0
        %2684 = vmatprep.subr.bf16.mxu0 0
        %2685 = vmatpush1.bf16.msra.mxu0 %v2429
        %2686 = vmatprep.subr.bf16.mxu0 0
        %2687 = vmatpush1.bf16.msra.mxu0 %v2426
        %2688 = vmatprep.subr.bf16.mxu0 0
        %2689 = vmatpush1.bf16.msra.mxu0 %v2423
        %2690 = vmatprep.subr.bf16.mxu0 0
        %2691 = vmatpush1.bf16.msra.mxu0 %v2420
        %2692 = vmatprep.subr.bf16.mxu0 0
        %2693 = vmatpush1.bf16.msra.mxu0 %v2417
        %2694 = vmatprep.subr.bf16.mxu0 0
        %2695 = vmatpush1.bf16.msra.mxu0 %v2414
        %2696 = vmatprep.subr.bf16.mxu0 0
        %2697 = vmatpush1.bf16.msra.mxu0 %v2411
        %2698 = vmatprep.subr.bf16.mxu0 0
        %2699 = vmatpush1.bf16.msra.mxu0 %v2408
        %2700 = vmatprep.subr.bf16.mxu0 0
        %2701 = vmatpush2.bf16.msra.mxu0 %v2453
        %2702 = vmatprep.subr.bf16.mxu0 0
        %2703 = vmatpush2.bf16.msra.mxu0 %v2450
        %2704 = vmatprep.subr.bf16.mxu0 0
        %2705 = vmatpush2.bf16.msra.mxu0 %v2447
        %2706 = vmatprep.subr.bf16.mxu0 0
        %2707 = vmatpush2.bf16.msra.mxu0 %v2444
        %2708 = vmatprep.subr.bf16.mxu0 0
        %2709 = vmatpush2.bf16.msra.mxu0 %v2441
        %2710 = vmatprep.subr.bf16.mxu0 0
        %2711 = vmatpush2.bf16.msra.mxu0 %v2438
        %2712 = vmatprep.subr.bf16.mxu0 0
        %2713 = vmatpush2.bf16.msra.mxu0 %v2435
        %2714 = vmatprep.subr.bf16.mxu0 0
        %2715 = vmatpush2.bf16.msra.mxu0 %v2432
        %2716 = vmatprep.mubr.bf16.mxu0 %v1926
        %2717 = vmatmul.mubr.bf16.gmra.mxu0 %v1925
        %v2718 = vpop.f32.mrf.mxu0
        %v2719 = vadd.f32 %v2085, %v2718
        %v2720 = vpop.f32.mrf.mxu0
        %v2721 = vpop.f32.mrf.mxu0
        %v2722 = vadd.f32 %v2085, %v2721
        %v2723 = vpop.f32.mrf.mxu0
        %2724 = vdwg.mxu0
        %2725 = vmatprep.subr.bf16.mxu0 0
        %2726 = vmatpush1.bf16.msra.mxu0 %v2477
        %2727 = vmatprep.subr.bf16.mxu0 0
        %2728 = vmatpush1.bf16.msra.mxu0 %v2474
        %2729 = vmatprep.subr.bf16.mxu0 0
        %2730 = vmatpush1.bf16.msra.mxu0 %v2471
        %2731 = vmatprep.subr.bf16.mxu0 0
        %2732 = vmatpush1.bf16.msra.mxu0 %v2468
        %2733 = vmatprep.subr.bf16.mxu0 0
        %2734 = vmatpush1.bf16.msra.mxu0 %v2465
        %2735 = vmatprep.subr.bf16.mxu0 0
        %2736 = vmatpush1.bf16.msra.mxu0 %v2462
        %2737 = vmatprep.subr.bf16.mxu0 0
        %2738 = vmatpush1.bf16.msra.mxu0 %v2459
        %2739 = vmatprep.subr.bf16.mxu0 0
        %2740 = vmatpush1.bf16.msra.mxu0 %v2456
        %2741 = vmatprep.subr.bf16.mxu0 0
        %2742 = vmatpush2.bf16.msra.mxu0 %v2501
        %2743 = vmatprep.subr.bf16.mxu0 0
        %2744 = vmatpush2.bf16.msra.mxu0 %v2498
        %2745 = vmatprep.subr.bf16.mxu0 0
        %2746 = vmatpush2.bf16.msra.mxu0 %v2495
        %2747 = vmatprep.subr.bf16.mxu0 0
        %2748 = vmatpush2.bf16.msra.mxu0 %v2492
        %2749 = vmatprep.subr.bf16.mxu0 0
        %2750 = vmatpush2.bf16.msra.mxu0 %v2489
        %2751 = vmatprep.subr.bf16.mxu0 0
        %2752 = vmatpush2.bf16.msra.mxu0 %v2486
        %2753 = vmatprep.subr.bf16.mxu0 0
        %2754 = vmatpush2.bf16.msra.mxu0 %v2483
        %2755 = vmatprep.subr.bf16.mxu0 0
        %2756 = vmatpush2.bf16.msra.mxu0 %v2480
        %2757 = vmatprep.mubr.bf16.mxu0 %v1928
        %2758 = vmatmul.mubr.bf16.gmra.mxu0 %v1927
        %v2759 = vpop.f32.mrf.mxu0
        %v2760 = vadd.f32 %v2719, %v2759
        %v2761 = vpop.f32.mrf.mxu0
        %v2762 = vpop.f32.mrf.mxu0
        %v2763 = vadd.f32 %v2722, %v2762
        %v2764 = vpop.f32.mrf.mxu0
        %2765 = vdwg.mxu0
        %v2766 = vlaneseq
        %v2767 = vshrl.u32 %v2766, 7
        %v2768 = vsub.s32 1, %v2767
        %v2769 = vrot.slane %v1923, %v2768
        %v2770 = vlaneseq
        %v2771 = vshrl.u32 %v2770, 7
        %v2772 = vsub.s32 5, %v2771
        %v2773 = vrot.slane %v1923, %v2772
        %v2774 = vlaneseq
        %v2775 = vshrl.u32 %v2774, 7
        %v2776 = vsub.s32 1, %v2775
        %v2777 = vrot.slane %v1924, %v2776
        %v2781 = vlaneseq
        %v2782 = vshrl.u32 %v2781, 7
        %v2783 = vsub.s32 1, %v2782
        %v2784 = vrot.slane %v2769, %v2783
        %v2785 = vlaneseq
        %v2786 = vshrl.u32 %v2785, 7
        %v2787 = vsub.s32 1, %v2786
        %v2788 = vrot.slane %v2773, %v2787
        %v2789 = vlaneseq
        %v2790 = vshrl.u32 %v2789, 7
        %v2791 = vsub.s32 1, %v2790
        %v2792 = vrot.slane %v2777, %v2791
        %v2793 = vmul.f32 %v2676, %v2784
        %v2794 = vmul.f32 %v2678, %v2788
        %v2795 = vmul.f32 %v2760, %v2792
        %v2796 = vmul.f32 %v2680, %v2784
        %v2797 = vmul.f32 %v2682, %v2788
        %v2798 = vmul.f32 %v2763, %v2792
        %v2799 = vlaneseq
        %v2800 = vshrl.u32 %v2799, 7
        %v2801 = vsub.s32 2, %v2800
        %v2802 = vrot.slane %v1923, %v2801
        %v2803 = vlaneseq
        %v2804 = vshrl.u32 %v2803, 7
        %v2805 = vsub.s32 6, %v2804
        %v2806 = vrot.slane %v1923, %v2805
        %v2807 = vlaneseq
        %v2808 = vshrl.u32 %v2807, 7
        %v2809 = vsub.s32 2, %v2808
        %v2810 = vrot.slane %v1924, %v2809
        %v2814 = vlaneseq
        %v2815 = vshrl.u32 %v2814, 7
        %v2816 = vsub.s32 2, %v2815
        %v2817 = vrot.slane %v2802, %v2816
        %v2818 = vlaneseq
        %v2819 = vshrl.u32 %v2818, 7
        %v2820 = vsub.s32 2, %v2819
        %v2821 = vrot.slane %v2806, %v2820
        %v2822 = vlaneseq
        %v2823 = vshrl.u32 %v2822, 7
        %v2824 = vsub.s32 2, %v2823
        %v2825 = vrot.slane %v2810, %v2824
        %v2826 = vadd.f32 %v2793, %v2817
        %v2827 = vadd.f32 %v2794, %v2821
        %v2828 = vadd.f32 %v2795, %v2825
        %v2829 = vadd.f32 %v2796, %v2817
        %v2830 = vadd.f32 %v2797, %v2821
        %v2831 = vadd.f32 %v2798, %v2825
        %v2832 = vpack.c.bf16 %v2830, %v2827
        %v2833 = vld [vmem:[%s961] sm:$0xff]
        %v2834 = vld [vmem:[%s961 + $0x8] sm:$0xff]
        %v2835 = vld [vmem:[%s961 + $0x10] sm:$0xff]
        %v2836 = vld [vmem:[%s961 + $0x18] sm:$0xff]
        %v2837 = vld [vmem:[%s961 + $0x20] sm:$0xff]
        %v2838 = vld [vmem:[%s961 + $0x28] sm:$0xff]
        %v2839 = vld [vmem:[%s961 + $0x30] sm:$0xff]
        %v2840 = vld [vmem:[%s961 + $0x38] sm:$0xff]
        %v2841 = vld [vmem:[%s961 + $0x40] sm:$0xff]
        %v2842 = vld [vmem:[%s961 + $0x48] sm:$0xff]
        %v2843 = vld [vmem:[%s961 + $0x50] sm:$0xff]
        %v2844 = vld [vmem:[%s961 + $0x58] sm:$0xff]
        %v2845 = vld [vmem:[%s961 + $0x60] sm:$0xff]
        %v2846 = vld [vmem:[%s961 + $0x68] sm:$0xff]
        %v2847 = vld [vmem:[%s961 + $0x70] sm:$0xff]
        %v2848 = vld [vmem:[%s961 + $0x78] sm:$0xff]
        %v2849 = vld [vmem:[%s965] sm:$0x3]
        %v2851 = vlaneseq
        %v2852 = vshrl.u32 %v2851, 7
        %v2853 = vsub.s32 0, %v2852
        %v2854 = vrot.slane %v2849, %v2853
        %v2855 = vlaneseq
        %v2856 = vshrl.u32 %v2855, 7
        %v2857 = vsub.s32 1, %v2856
        %v2858 = vrot.slane %v2849, %v2857
        %v2877 = vunpack.c.l.b16 %v2833
        %v2878 = vunpack.c.h.b16 %v2833
        %v2879 = vunpack.c.l.b16 %v2834
        %v2880 = vunpack.c.h.b16 %v2834
        %v2881 = vunpack.c.l.b16 %v2835
        %v2882 = vunpack.c.h.b16 %v2835
        %v2883 = vunpack.c.l.b16 %v2836
        %v2884 = vunpack.c.h.b16 %v2836
        %v2885 = vunpack.c.l.b16 %v2837
        %v2886 = vunpack.c.h.b16 %v2837
        %v2887 = vunpack.c.l.b16 %v2838
        %v2888 = vunpack.c.h.b16 %v2838
        %v2889 = vunpack.c.l.b16 %v2839
        %v2890 = vunpack.c.h.b16 %v2839
        %v2891 = vunpack.c.l.b16 %v2840
        %v2892 = vunpack.c.h.b16 %v2840
        %v2893 = vunpack.c.l.b16 %v2841
        %v2894 = vunpack.c.h.b16 %v2841
        %v2895 = vunpack.c.l.b16 %v2842
        %v2896 = vunpack.c.h.b16 %v2842
        %v2897 = vunpack.c.l.b16 %v2843
        %v2898 = vunpack.c.h.b16 %v2843
        %v2899 = vunpack.c.l.b16 %v2844
        %v2900 = vunpack.c.h.b16 %v2844
        %v2901 = vunpack.c.l.b16 %v2845
        %v2902 = vunpack.c.h.b16 %v2845
        %v2903 = vunpack.c.l.b16 %v2846
        %v2904 = vunpack.c.h.b16 %v2846
        %v2905 = vunpack.c.l.b16 %v2847
        %v2906 = vunpack.c.h.b16 %v2847
        %v2907 = vunpack.c.l.b16 %v2848
        %v2908 = vunpack.c.h.b16 %v2848
        %v2909 = vpack.c.b16 %v2879, %v2877
        %v2910 = vpack.c.b16 %v2880, %v2878
        %v2911 = vpack.c.b16 %v2883, %v2881
        %v2912 = vpack.c.b16 %v2884, %v2882
        %v2913 = vpack.c.b16 %v2887, %v2885
        %v2914 = vpack.c.b16 %v2888, %v2886
        %v2915 = vpack.c.b16 %v2891, %v2889
        %v2916 = vpack.c.b16 %v2892, %v2890
        %v2917 = vpack.c.b16 %v2895, %v2893
        %v2918 = vpack.c.b16 %v2896, %v2894
        %v2919 = vpack.c.b16 %v2899, %v2897
        %v2920 = vpack.c.b16 %v2900, %v2898
        %v2921 = vpack.c.b16 %v2903, %v2901
        %v2922 = vpack.c.b16 %v2904, %v2902
        %v2923 = vpack.c.b16 %v2907, %v2905
        %v2924 = vpack.c.b16 %v2908, %v2906
        %2941 = vmatprep.subr.bf16.mxu0 %v2924
        %2942 = vmatpush1.bf16.msra.mxu0 %v2923
        %2943 = vmatprep.subr.bf16.mxu0 %v2922
        %2944 = vmatpush1.bf16.msra.mxu0 %v2921
        %2945 = vmatprep.subr.bf16.mxu0 %v2920
        %2946 = vmatpush1.bf16.msra.mxu0 %v2919
        %2947 = vmatprep.subr.bf16.mxu0 %v2918
        %2948 = vmatpush1.bf16.msra.mxu0 %v2917
        %2949 = vmatprep.subr.bf16.mxu0 %v2916
        %2950 = vmatpush1.bf16.msra.mxu0 %v2915
        %2951 = vmatprep.subr.bf16.mxu0 %v2914
        %2952 = vmatpush1.bf16.msra.mxu0 %v2913
        %2953 = vmatprep.subr.bf16.mxu0 %v2912
        %2954 = vmatpush1.bf16.msra.mxu0 %v2911
        %2955 = vmatprep.subr.bf16.mxu0 %v2910
        %2956 = vmatpush1.bf16.msra.mxu0 %v2909
        %2957 = vmatprep.subr.bf16.mxu0 0
        %2958 = vmatpush2.bf16.msra.mxu0 0
        %2959 = vmatprep.subr.bf16.mxu0 0
        %2960 = vmatpush2.bf16.msra.mxu0 0
        %2961 = vmatprep.subr.bf16.mxu0 0
        %2962 = vmatpush2.bf16.msra.mxu0 0
        %2963 = vmatprep.subr.bf16.mxu0 0
        %2964 = vmatpush2.bf16.msra.mxu0 0
        %2965 = vmatprep.subr.bf16.mxu0 0
        %2966 = vmatpush2.bf16.msra.mxu0 0
        %2967 = vmatprep.subr.bf16.mxu0 0
        %2968 = vmatpush2.bf16.msra.mxu0 0
        %2969 = vmatprep.subr.bf16.mxu0 0
        %2970 = vmatpush2.bf16.msra.mxu0 0
        %2971 = vmatprep.subr.bf16.mxu0 0
        %2972 = vmatpush2.bf16.msra.mxu0 0
        %2973 = vmatprep.mubr.bf16.mxu0 0
        %2974 = vmatmul.mubr.bf16.gmra.mxu0 %v2832
        %v2975 = vpop.f32.mrf.mxu0
        %v2976 = vadd.f32 %v2854, %v2975
        %v2977 = vpop.f32.mrf.mxu0
        %v2978 = vadd.f32 %v2858, %v2977
        %v2979 = vpop.f32.mrf.mxu0
        %v2980 = vadd.f32 %v2854, %v2979
        %v2981 = vpop.f32.mrf.mxu0
        %v2982 = vadd.f32 %v2858, %v2981
        %2983 = vdwg.mxu0
        %v2984 = vld [vmem:[%s943] sm:$0x1]
        %v2985 = vld [vmem:[%s943 + $0x1] sm:$0x1]
        %v2986 = vpack.c.bf16 %v2976, %v2976
        %v2987 = vpack.c.bf16 %v2980, %v2980
        %v2988 = vpack.c.bf16 %v2978, %v2978
        %v2989 = vpack.c.bf16 %v2982, %v2982
        %v2990 = vpack.c.bf16 %v2828, %v2828
        %v2991 = vpack.c.bf16 %v2831, %v2831
        %vm2992 = vcmask 261120
        %v2994 = vsel %vm2992, %v2986, 0
        %v2997 = vsel %vm2992, %v2988, 0
        %2999 = vmatprep.subr.bf16.mxu0 0
        %3000 = vmatpush1.bf16.xpose.msra.mxu0 0
        %3001 = vmatprep.subr.bf16.mxu0 0
        %3002 = vmatpush1.bf16.xpose.msra.mxu0 0
        %3003 = vmatprep.subr.bf16.mxu0 0
        %3004 = vmatpush1.bf16.xpose.msra.mxu0 0
        %3005 = vmatprep.subr.bf16.mxu0 0
        %3006 = vmatpush1.bf16.xpose.msra.mxu0 0
        %3007 = vmatprep.subr.bf16.mxu0 0
        %3008 = vmatpush1.bf16.xpose.msra.mxu0 0
        %3009 = vmatprep.subr.bf16.mxu0 0
        %3010 = vmatpush1.bf16.xpose.msra.mxu0 0
        %3011 = vmatprep.subr.bf16.mxu0 0
        %3012 = vmatpush1.bf16.xpose.msra.mxu0 0
        %3013 = vmatprep.subr.bf16.mxu0 0
        %3014 = vmatpush1.bf16.xpose.msra.mxu0 %v2997
        %3015 = vmatprep.subr.bf16.mxu0 0
        %3016 = vmatpush2.bf16.xpose.msra.mxu0 0
        %3017 = vmatprep.subr.bf16.mxu0 0
        %3018 = vmatpush2.bf16.xpose.msra.mxu0 0
        %3019 = vmatprep.subr.bf16.mxu0 0
        %3020 = vmatpush2.bf16.xpose.msra.mxu0 0
        %3021 = vmatprep.subr.bf16.mxu0 0
        %3022 = vmatpush2.bf16.xpose.msra.mxu0 0
        %3023 = vmatprep.subr.bf16.mxu0 0
        %3024 = vmatpush2.bf16.xpose.msra.mxu0 0
        %3025 = vmatprep.subr.bf16.mxu0 0
        %3026 = vmatpush2.bf16.xpose.msra.mxu0 0
        %3027 = vmatprep.subr.bf16.mxu0 0
        %3028 = vmatpush2.bf16.xpose.msra.mxu0 0
        %3029 = vmatprep.subr.bf16.mxu0 0
        %3030 = vmatpush2.bf16.xpose.msra.mxu0 0
        %3031 = vmatprep.mubr.bf16.mxu0 0
        %3032 = vmatmul.mubr.bf16.gmra.mxu0 %v2994
        %v3033 = vpop.f32.mrf.mxu0
        %v3034 = vadd.f32 0.0, %v3033
        %v3035 = vpop.f32.mrf.mxu0
        %v3036 = vpop.f32.mrf.mxu0
        %v3037 = vpop.f32.mrf.mxu0
        %3038 = vdwg.mxu0
        %v3040 = vsel %vm2992, %v2987, 0
        %v3043 = vsel %vm2992, %v2989, 0
        %3045 = vmatprep.subr.bf16.mxu0 0
        %3046 = vmatpush1.bf16.xpose.msra.mxu0 0
        %3047 = vmatprep.subr.bf16.mxu0 0
        %3048 = vmatpush1.bf16.xpose.msra.mxu0 0
        %3049 = vmatprep.subr.bf16.mxu0 0
        %3050 = vmatpush1.bf16.xpose.msra.mxu0 0
        %3051 = vmatprep.subr.bf16.mxu0 0
        %3052 = vmatpush1.bf16.xpose.msra.mxu0 0
        %3053 = vmatprep.subr.bf16.mxu0 0
        %3054 = vmatpush1.bf16.xpose.msra.mxu0 0
        %3055 = vmatprep.subr.bf16.mxu0 0
        %3056 = vmatpush1.bf16.xpose.msra.mxu0 0
        %3057 = vmatprep.subr.bf16.mxu0 0
        %3058 = vmatpush1.bf16.xpose.msra.mxu0 0
        %3059 = vmatprep.subr.bf16.mxu0 0
        %3060 = vmatpush1.bf16.xpose.msra.mxu0 %v3043
        %3061 = vmatprep.subr.bf16.mxu0 0
        %3062 = vmatpush2.bf16.xpose.msra.mxu0 0
        %3063 = vmatprep.subr.bf16.mxu0 0
        %3064 = vmatpush2.bf16.xpose.msra.mxu0 0
        %3065 = vmatprep.subr.bf16.mxu0 0
        %3066 = vmatpush2.bf16.xpose.msra.mxu0 0
        %3067 = vmatprep.subr.bf16.mxu0 0
        %3068 = vmatpush2.bf16.xpose.msra.mxu0 0
        %3069 = vmatprep.subr.bf16.mxu0 0
        %3070 = vmatpush2.bf16.xpose.msra.mxu0 0
        %3071 = vmatprep.subr.bf16.mxu0 0
        %3072 = vmatpush2.bf16.xpose.msra.mxu0 0
        %3073 = vmatprep.subr.bf16.mxu0 0
        %3074 = vmatpush2.bf16.xpose.msra.mxu0 0
        %3075 = vmatprep.subr.bf16.mxu0 0
        %3076 = vmatpush2.bf16.xpose.msra.mxu0 0
        %3077 = vmatprep.mubr.bf16.mxu0 0
        %3078 = vmatmul.mubr.bf16.gmra.mxu0 %v3040
        %v3079 = vpop.f32.mrf.mxu0
        %v3080 = vadd.f32 0.0, %v3079
        %v3081 = vpop.f32.mrf.mxu0
        %v3082 = vpop.f32.mrf.mxu0
        %v3083 = vpop.f32.mrf.mxu0
        %3084 = vdwg.mxu0
        %v3085 = vmul.f32 %v3034, 0.17677669
        %v3086 = vmul.f32 %v3080, 0.17677669
        %v3089 = vlaneseq
        %v3090 = vshrl.u32 %v3089, 7
        %v3091 = vsub.s32 0, %v3090
        %v3092 = vrot.slane %v2984, %v3091
        %v3093 = vlaneseq
        %v3094 = vshrl.u32 %v3093, 7
        %v3095 = vsub.s32 0, %v3094
        %v3096 = vrot.slane %v2985, %v3095
        %v3099 = vadd.f32 %v3085, %v3092
        %v3100 = vadd.f32 %v3086, %v3096
        %vm3101 = vcmask 64512
        %v3102 = vsel %vm3101, %v3099, -inf
        %3103 = vmax.xlane.f32.xlu0 %v3102
        %v3104 = vpop.xlane.xlu0 %3103
        %v3105 = vsel %vm3101, %v3100, -inf
        %3106 = vmax.xlane.f32.xlu0 %v3105
        %v3107 = vpop.xlane.xlu0 %3106
        %v3108 = vsub.f32 %v3099, %v3104
        %v3109 = vsub.f32 %v3100, %v3107
        %v3110 = vmul.f32 %v3108, 1.442695
        %v3111 = vpow.pop %v3110
        %v3112 = vmul.f32 %v3109, 1.442695
        %v3113 = vpow.pop %v3112
        %v3114 = vsel %vm3101, %v3111, 0.0
        %3115 = vadd.xlane.f32.xlu0 %v3114
        %v3116 = vpop.xlane.xlu0 %3115
        %v3117 = vsel %vm3101, %v3113, 0.0
        %3118 = vadd.xlane.f32.xlu0 %v3117
        %v3119 = vpop.xlane.xlu0 %3118
        %v3120 = vpack.c.bf16 %v3111, %v3111
        %v3121 = vpack.c.bf16 %v3113, %v3113
        %v3123 = vsel %vm3101, %v3120, 0
        %vm3125 = vcmask 1043456
        %v3127 = vsel %vm3125, %v2990, 0
        %3129 = vmatprep.subr.bf16.mxu0 0
        %3130 = vmatpush1.bf16.msra.mxu0 0
        %3131 = vmatprep.subr.bf16.mxu0 0
        %3132 = vmatpush1.bf16.msra.mxu0 0
        %3133 = vmatprep.subr.bf16.mxu0 0
        %3134 = vmatpush1.bf16.msra.mxu0 0
        %3135 = vmatprep.subr.bf16.mxu0 0
        %3136 = vmatpush1.bf16.msra.mxu0 0
        %3137 = vmatprep.subr.bf16.mxu0 0
        %3138 = vmatpush1.bf16.msra.mxu0 0
        %3139 = vmatprep.subr.bf16.mxu0 0
        %3140 = vmatpush1.bf16.msra.mxu0 0
        %3141 = vmatprep.subr.bf16.mxu0 0
        %3142 = vmatpush1.bf16.msra.mxu0 0
        %3143 = vmatprep.subr.bf16.mxu0 0
        %3144 = vmatpush1.bf16.msra.mxu0 %v3127
        %3145 = vmatprep.subr.bf16.mxu0 0
        %3146 = vmatpush2.bf16.msra.mxu0 0
        %3147 = vmatprep.subr.bf16.mxu0 0
        %3148 = vmatpush2.bf16.msra.mxu0 0
        %3149 = vmatprep.subr.bf16.mxu0 0
        %3150 = vmatpush2.bf16.msra.mxu0 0
        %3151 = vmatprep.subr.bf16.mxu0 0
        %3152 = vmatpush2.bf16.msra.mxu0 0
        %3153 = vmatprep.subr.bf16.mxu0 0
        %3154 = vmatpush2.bf16.msra.mxu0 0
        %3155 = vmatprep.subr.bf16.mxu0 0
        %3156 = vmatpush2.bf16.msra.mxu0 0
        %3157 = vmatprep.subr.bf16.mxu0 0
        %3158 = vmatpush2.bf16.msra.mxu0 0
        %3159 = vmatprep.subr.bf16.mxu0 0
        %3160 = vmatpush2.bf16.msra.mxu0 0
        %3161 = vmatprep.mubr.bf16.mxu0 0
        %3162 = vmatmul.mubr.bf16.gmra.mxu0 %v3123
        %v3163 = vpop.f32.mrf.mxu0
        %v3164 = vadd.f32 0.0, %v3163
        %v3165 = vpop.f32.mrf.mxu0
        %v3166 = vpop.f32.mrf.mxu0
        %v3167 = vpop.f32.mrf.mxu0
        %3168 = vdwg.mxu0
        %v3170 = vsel %vm3101, %v3121, 0
        %v3173 = vsel %vm3125, %v2991, 0
        %3175 = vmatprep.subr.bf16.mxu0 0
        %3176 = vmatpush1.bf16.msra.mxu0 0
        %3177 = vmatprep.subr.bf16.mxu0 0
        %3178 = vmatpush1.bf16.msra.mxu0 0
        %3179 = vmatprep.subr.bf16.mxu0 0
        %3180 = vmatpush1.bf16.msra.mxu0 0
        %3181 = vmatprep.subr.bf16.mxu0 0
        %3182 = vmatpush1.bf16.msra.mxu0 0
        %3183 = vmatprep.subr.bf16.mxu0 0
        %3184 = vmatpush1.bf16.msra.mxu0 0
        %3185 = vmatprep.subr.bf16.mxu0 0
        %3186 = vmatpush1.bf16.msra.mxu0 0
        %3187 = vmatprep.subr.bf16.mxu0 0
        %3188 = vmatpush1.bf16.msra.mxu0 0
        %3189 = vmatprep.subr.bf16.mxu0 0
        %3190 = vmatpush1.bf16.msra.mxu0 %v3173
        %3191 = vmatprep.subr.bf16.mxu0 0
        %3192 = vmatpush2.bf16.msra.mxu0 0
        %3193 = vmatprep.subr.bf16.mxu0 0
        %3194 = vmatpush2.bf16.msra.mxu0 0
        %3195 = vmatprep.subr.bf16.mxu0 0
        %3196 = vmatpush2.bf16.msra.mxu0 0
        %3197 = vmatprep.subr.bf16.mxu0 0
        %3198 = vmatpush2.bf16.msra.mxu0 0
        %3199 = vmatprep.subr.bf16.mxu0 0
        %3200 = vmatpush2.bf16.msra.mxu0 0
        %3201 = vmatprep.subr.bf16.mxu0 0
        %3202 = vmatpush2.bf16.msra.mxu0 0
        %3203 = vmatprep.subr.bf16.mxu0 0
        %3204 = vmatpush2.bf16.msra.mxu0 0
        %3205 = vmatprep.subr.bf16.mxu0 0
        %3206 = vmatpush2.bf16.msra.mxu0 0
        %3207 = vmatprep.mubr.bf16.mxu0 0
        %3208 = vmatmul.mubr.bf16.gmra.mxu0 %v3170
        %v3209 = vpop.f32.mrf.mxu0
        %v3210 = vadd.f32 0.0, %v3209
        %v3211 = vpop.f32.mrf.mxu0
        %v3212 = vpop.f32.mrf.mxu0
        %v3213 = vpop.f32.mrf.mxu0
        %3214 = vdwg.mxu0
        %v3215 = vadd.f32 %v3116, 1e-20
        %v3216 = vadd.f32 %v3119, 1e-20
        %v3217 = vrcp.pop %v3215
        %v3218 = vrcp.pop %v3216
        %v3219 = vmul.f32 %v3164, %v3217
        %v3220 = vmul.f32 %v3210, %v3218
        %3222 = vrot.lane.b32.xlu0 %v2986, 96
        %v3223 = vpop.permute.xlu0 %3222
        %3225 = vrot.lane.b32.xlu0 %v2988, 96
        %v3226 = vpop.permute.xlu0 %3225
        %v3228 = vsel %vm2992, %v3223, 0
        %v3231 = vsel %vm2992, %v3226, 0
        %3233 = vmatprep.subr.bf16.mxu0 0
        %3234 = vmatpush1.bf16.xpose.msra.mxu0 0
        %3235 = vmatprep.subr.bf16.mxu0 0
        %3236 = vmatpush1.bf16.xpose.msra.mxu0 0
        %3237 = vmatprep.subr.bf16.mxu0 0
        %3238 = vmatpush1.bf16.xpose.msra.mxu0 0
        %3239 = vmatprep.subr.bf16.mxu0 0
        %3240 = vmatpush1.bf16.xpose.msra.mxu0 0
        %3241 = vmatprep.subr.bf16.mxu0 0
        %3242 = vmatpush1.bf16.xpose.msra.mxu0 0
        %3243 = vmatprep.subr.bf16.mxu0 0
        %3244 = vmatpush1.bf16.xpose.msra.mxu0 0
        %3245 = vmatprep.subr.bf16.mxu0 0
        %3246 = vmatpush1.bf16.xpose.msra.mxu0 0
        %3247 = vmatprep.subr.bf16.mxu0 0
        %3248 = vmatpush1.bf16.xpose.msra.mxu0 %v3231
        %3249 = vmatprep.subr.bf16.mxu0 0
        %3250 = vmatpush2.bf16.xpose.msra.mxu0 0
        %3251 = vmatprep.subr.bf16.mxu0 0
        %3252 = vmatpush2.bf16.xpose.msra.mxu0 0
        %3253 = vmatprep.subr.bf16.mxu0 0
        %3254 = vmatpush2.bf16.xpose.msra.mxu0 0
        %3255 = vmatprep.subr.bf16.mxu0 0
        %3256 = vmatpush2.bf16.xpose.msra.mxu0 0
        %3257 = vmatprep.subr.bf16.mxu0 0
        %3258 = vmatpush2.bf16.xpose.msra.mxu0 0
        %3259 = vmatprep.subr.bf16.mxu0 0
        %3260 = vmatpush2.bf16.xpose.msra.mxu0 0
        %3261 = vmatprep.subr.bf16.mxu0 0
        %3262 = vmatpush2.bf16.xpose.msra.mxu0 0
        %3263 = vmatprep.subr.bf16.mxu0 0
        %3264 = vmatpush2.bf16.xpose.msra.mxu0 0
        %3265 = vmatprep.mubr.bf16.mxu0 0
        %3266 = vmatmul.mubr.bf16.gmra.mxu0 %v3228
        %v3267 = vpop.f32.mrf.mxu0
        %v3268 = vadd.f32 0.0, %v3267
        %v3269 = vpop.f32.mrf.mxu0
        %v3270 = vpop.f32.mrf.mxu0
        %v3271 = vpop.f32.mrf.mxu0
        %3272 = vdwg.mxu0
        %3274 = vrot.lane.b32.xlu0 %v2987, 96
        %v3275 = vpop.permute.xlu0 %3274
        %3277 = vrot.lane.b32.xlu0 %v2989, 96
        %v3278 = vpop.permute.xlu0 %3277
        %v3280 = vsel %vm2992, %v3275, 0
        %v3283 = vsel %vm2992, %v3278, 0
        %3285 = vmatprep.subr.bf16.mxu0 0
        %3286 = vmatpush1.bf16.xpose.msra.mxu0 0
        %3287 = vmatprep.subr.bf16.mxu0 0
        %3288 = vmatpush1.bf16.xpose.msra.mxu0 0
        %3289 = vmatprep.subr.bf16.mxu0 0
        %3290 = vmatpush1.bf16.xpose.msra.mxu0 0
        %3291 = vmatprep.subr.bf16.mxu0 0
        %3292 = vmatpush1.bf16.xpose.msra.mxu0 0
        %3293 = vmatprep.subr.bf16.mxu0 0
        %3294 = vmatpush1.bf16.xpose.msra.mxu0 0
        %3295 = vmatprep.subr.bf16.mxu0 0
        %3296 = vmatpush1.bf16.xpose.msra.mxu0 0
        %3297 = vmatprep.subr.bf16.mxu0 0
        %3298 = vmatpush1.bf16.xpose.msra.mxu0 0
        %3299 = vmatprep.subr.bf16.mxu0 0
        %3300 = vmatpush1.bf16.xpose.msra.mxu0 %v3283
        %3301 = vmatprep.subr.bf16.mxu0 0
        %3302 = vmatpush2.bf16.xpose.msra.mxu0 0
        %3303 = vmatprep.subr.bf16.mxu0 0
        %3304 = vmatpush2.bf16.xpose.msra.mxu0 0
        %3305 = vmatprep.subr.bf16.mxu0 0
        %3306 = vmatpush2.bf16.xpose.msra.mxu0 0
        %3307 = vmatprep.subr.bf16.mxu0 0
        %3308 = vmatpush2.bf16.xpose.msra.mxu0 0
        %3309 = vmatprep.subr.bf16.mxu0 0
        %3310 = vmatpush2.bf16.xpose.msra.mxu0 0
        %3311 = vmatprep.subr.bf16.mxu0 0
        %3312 = vmatpush2.bf16.xpose.msra.mxu0 0
        %3313 = vmatprep.subr.bf16.mxu0 0
        %3314 = vmatpush2.bf16.xpose.msra.mxu0 0
        %3315 = vmatprep.subr.bf16.mxu0 0
        %3316 = vmatpush2.bf16.xpose.msra.mxu0 0
        %3317 = vmatprep.mubr.bf16.mxu0 0
        %3318 = vmatmul.mubr.bf16.gmra.mxu0 %v3280
        %v3319 = vpop.f32.mrf.mxu0
        %v3320 = vadd.f32 0.0, %v3319
        %v3321 = vpop.f32.mrf.mxu0
        %v3322 = vpop.f32.mrf.mxu0
        %v3323 = vpop.f32.mrf.mxu0
        %3324 = vdwg.mxu0
        %v3325 = vmul.f32 %v3268, 0.17677669
        %v3326 = vmul.f32 %v3320, 0.17677669
        %v3327 = vadd.f32 %v3325, %v3092
        %v3328 = vadd.f32 %v3326, %v3096
        %v3329 = vsel %vm3101, %v3327, -inf
        %3330 = vmax.xlane.f32.xlu0 %v3329
        %v3331 = vpop.xlane.xlu0 %3330
        %v3332 = vsel %vm3101, %v3328, -inf
        %3333 = vmax.xlane.f32.xlu0 %v3332
        %v3334 = vpop.xlane.xlu0 %3333
        %v3335 = vsub.f32 %v3327, %v3331
        %v3336 = vsub.f32 %v3328, %v3334
        %v3337 = vmul.f32 %v3335, 1.442695
        %v3338 = vpow.pop %v3337
        %v3339 = vmul.f32 %v3336, 1.442695
        %v3340 = vpow.pop %v3339
        %v3341 = vsel %vm3101, %v3338, 0.0
        %3342 = vadd.xlane.f32.xlu0 %v3341
        %v3343 = vpop.xlane.xlu0 %3342
        %v3344 = vsel %vm3101, %v3340, 0.0
        %3345 = vadd.xlane.f32.xlu0 %v3344
        %v3346 = vpop.xlane.xlu0 %3345
        %v3347 = vpack.c.bf16 %v3338, %v3338
        %v3348 = vpack.c.bf16 %v3340, %v3340
        %3350 = vrot.lane.b32.xlu0 %v2990, 96
        %v3351 = vpop.permute.xlu0 %3350
        %v3353 = vsel %vm3101, %v3347, 0
        %v3356 = vsel %vm3125, %v3351, 0
        %3358 = vmatprep.subr.bf16.mxu0 0
        %3359 = vmatpush1.bf16.msra.mxu0 0
        %3360 = vmatprep.subr.bf16.mxu0 0
        %3361 = vmatpush1.bf16.msra.mxu0 0
        %3362 = vmatprep.subr.bf16.mxu0 0
        %3363 = vmatpush1.bf16.msra.mxu0 0
        %3364 = vmatprep.subr.bf16.mxu0 0
        %3365 = vmatpush1.bf16.msra.mxu0 0
        %3366 = vmatprep.subr.bf16.mxu0 0
        %3367 = vmatpush1.bf16.msra.mxu0 0
        %3368 = vmatprep.subr.bf16.mxu0 0
        %3369 = vmatpush1.bf16.msra.mxu0 0
        %3370 = vmatprep.subr.bf16.mxu0 0
        %3371 = vmatpush1.bf16.msra.mxu0 0
        %3372 = vmatprep.subr.bf16.mxu0 0
        %3373 = vmatpush1.bf16.msra.mxu0 %v3356
        %3374 = vmatprep.subr.bf16.mxu0 0
        %3375 = vmatpush2.bf16.msra.mxu0 0
        %3376 = vmatprep.subr.bf16.mxu0 0
        %3377 = vmatpush2.bf16.msra.mxu0 0
        %3378 = vmatprep.subr.bf16.mxu0 0
        %3379 = vmatpush2.bf16.msra.mxu0 0
        %3380 = vmatprep.subr.bf16.mxu0 0
        %3381 = vmatpush2.bf16.msra.mxu0 0
        %3382 = vmatprep.subr.bf16.mxu0 0
        %3383 = vmatpush2.bf16.msra.mxu0 0
        %3384 = vmatprep.subr.bf16.mxu0 0
        %3385 = vmatpush2.bf16.msra.mxu0 0
        %3386 = vmatprep.subr.bf16.mxu0 0
        %3387 = vmatpush2.bf16.msra.mxu0 0
        %3388 = vmatprep.subr.bf16.mxu0 0
        %3389 = vmatpush2.bf16.msra.mxu0 0
        %3390 = vmatprep.mubr.bf16.mxu0 0
        %3391 = vmatmul.mubr.bf16.gmra.mxu0 %v3353
        %v3392 = vpop.f32.mrf.mxu0
        %v3393 = vadd.f32 0.0, %v3392
        %v3394 = vpop.f32.mrf.mxu0
        %v3395 = vpop.f32.mrf.mxu0
        %v3396 = vpop.f32.mrf.mxu0
        %3397 = vdwg.mxu0
        %3399 = vrot.lane.b32.xlu0 %v2991, 96
        %v3400 = vpop.permute.xlu0 %3399
        %v3402 = vsel %vm3101, %v3348, 0
        %v3405 = vsel %vm3125, %v3400, 0
        %3407 = vmatprep.subr.bf16.mxu0 0
        %3408 = vmatpush1.bf16.msra.mxu0 0
        %3409 = vmatprep.subr.bf16.mxu0 0
        %3410 = vmatpush1.bf16.msra.mxu0 0
        %3411 = vmatprep.subr.bf16.mxu0 0
        %3412 = vmatpush1.bf16.msra.mxu0 0
        %3413 = vmatprep.subr.bf16.mxu0 0
        %3414 = vmatpush1.bf16.msra.mxu0 0
        %3415 = vmatprep.subr.bf16.mxu0 0
        %3416 = vmatpush1.bf16.msra.mxu0 0
        %3417 = vmatprep.subr.bf16.mxu0 0
        %3418 = vmatpush1.bf16.msra.mxu0 0
        %3419 = vmatprep.subr.bf16.mxu0 0
        %3420 = vmatpush1.bf16.msra.mxu0 0
        %3421 = vmatprep.subr.bf16.mxu0 0
        %3422 = vmatpush1.bf16.msra.mxu0 %v3405
        %3423 = vmatprep.subr.bf16.mxu0 0
        %3424 = vmatpush2.bf16.msra.mxu0 0
        %3425 = vmatprep.subr.bf16.mxu0 0
        %3426 = vmatpush2.bf16.msra.mxu0 0
        %3427 = vmatprep.subr.bf16.mxu0 0
        %3428 = vmatpush2.bf16.msra.mxu0 0
        %3429 = vmatprep.subr.bf16.mxu0 0
        %3430 = vmatpush2.bf16.msra.mxu0 0
        %3431 = vmatprep.subr.bf16.mxu0 0
        %3432 = vmatpush2.bf16.msra.mxu0 0
        %3433 = vmatprep.subr.bf16.mxu0 0
        %3434 = vmatpush2.bf16.msra.mxu0 0
        %3435 = vmatprep.subr.bf16.mxu0 0
        %3436 = vmatpush2.bf16.msra.mxu0 0
        %3437 = vmatprep.subr.bf16.mxu0 0
        %3438 = vmatpush2.bf16.msra.mxu0 0
        %3439 = vmatprep.mubr.bf16.mxu0 0
        %3440 = vmatmul.mubr.bf16.gmra.mxu0 %v3402
        %v3441 = vpop.f32.mrf.mxu0
        %v3442 = vadd.f32 0.0, %v3441
        %v3443 = vpop.f32.mrf.mxu0
        %v3444 = vpop.f32.mrf.mxu0
        %v3445 = vpop.f32.mrf.mxu0
        %3446 = vdwg.mxu0
        %v3447 = vadd.f32 %v3343, 1e-20
        %v3448 = vadd.f32 %v3346, 1e-20
        %v3449 = vrcp.pop %v3447
        %v3450 = vrcp.pop %v3448
        %v3451 = vmul.f32 %v3393, %v3449
        %v3452 = vmul.f32 %v3442, %v3450
        %3453 = vrot.lane.b32.xlu0 %v2986, 64
        %v3454 = vpop.permute.xlu0 %3453
        %3455 = vrot.lane.b32.xlu0 %v2988, 64
        %v3456 = vpop.permute.xlu0 %3455
        %v3458 = vsel %vm2992, %v3454, 0
        %v3461 = vsel %vm2992, %v3456, 0
        %3463 = vmatprep.subr.bf16.mxu0 0
        %3464 = vmatpush1.bf16.xpose.msra.mxu0 0
        %3465 = vmatprep.subr.bf16.mxu0 0
        %3466 = vmatpush1.bf16.xpose.msra.mxu0 0
        %3467 = vmatprep.subr.bf16.mxu0 0
        %3468 = vmatpush1.bf16.xpose.msra.mxu0 0
        %3469 = vmatprep.subr.bf16.mxu0 0
        %3470 = vmatpush1.bf16.xpose.msra.mxu0 0
        %3471 = vmatprep.subr.bf16.mxu0 0
        %3472 = vmatpush1.bf16.xpose.msra.mxu0 0
        %3473 = vmatprep.subr.bf16.mxu0 0
        %3474 = vmatpush1.bf16.xpose.msra.mxu0 0
        %3475 = vmatprep.subr.bf16.mxu0 0
        %3476 = vmatpush1.bf16.xpose.msra.mxu0 0
        %3477 = vmatprep.subr.bf16.mxu0 0
        %3478 = vmatpush1.bf16.xpose.msra.mxu0 %v3461
        %3479 = vmatprep.subr.bf16.mxu0 0
        %3480 = vmatpush2.bf16.xpose.msra.mxu0 0
        %3481 = vmatprep.subr.bf16.mxu0 0
        %3482 = vmatpush2.bf16.xpose.msra.mxu0 0
        %3483 = vmatprep.subr.bf16.mxu0 0
        %3484 = vmatpush2.bf16.xpose.msra.mxu0 0
        %3485 = vmatprep.subr.bf16.mxu0 0
        %3486 = vmatpush2.bf16.xpose.msra.mxu0 0
        %3487 = vmatprep.subr.bf16.mxu0 0
        %3488 = vmatpush2.bf16.xpose.msra.mxu0 0
        %3489 = vmatprep.subr.bf16.mxu0 0
        %3490 = vmatpush2.bf16.xpose.msra.mxu0 0
        %3491 = vmatprep.subr.bf16.mxu0 0
        %3492 = vmatpush2.bf16.xpose.msra.mxu0 0
        %3493 = vmatprep.subr.bf16.mxu0 0
        %3494 = vmatpush2.bf16.xpose.msra.mxu0 0
        %3495 = vmatprep.mubr.bf16.mxu0 0
        %3496 = vmatmul.mubr.bf16.gmra.mxu0 %v3458
        %v3497 = vpop.f32.mrf.mxu0
        %v3498 = vadd.f32 0.0, %v3497
        %v3499 = vpop.f32.mrf.mxu0
        %v3500 = vpop.f32.mrf.mxu0
        %v3501 = vpop.f32.mrf.mxu0
        %3502 = vdwg.mxu0
        %3503 = vrot.lane.b32.xlu0 %v2987, 64
        %v3504 = vpop.permute.xlu0 %3503
        %3505 = vrot.lane.b32.xlu0 %v2989, 64
        %v3506 = vpop.permute.xlu0 %3505
        %v3508 = vsel %vm2992, %v3504, 0
        %v3511 = vsel %vm2992, %v3506, 0
        %3513 = vmatprep.subr.bf16.mxu0 0
        %3514 = vmatpush1.bf16.xpose.msra.mxu0 0
        %3515 = vmatprep.subr.bf16.mxu0 0
        %3516 = vmatpush1.bf16.xpose.msra.mxu0 0
        %3517 = vmatprep.subr.bf16.mxu0 0
        %3518 = vmatpush1.bf16.xpose.msra.mxu0 0
        %3519 = vmatprep.subr.bf16.mxu0 0
        %3520 = vmatpush1.bf16.xpose.msra.mxu0 0
        %3521 = vmatprep.subr.bf16.mxu0 0
        %3522 = vmatpush1.bf16.xpose.msra.mxu0 0
        %3523 = vmatprep.subr.bf16.mxu0 0
        %3524 = vmatpush1.bf16.xpose.msra.mxu0 0
        %3525 = vmatprep.subr.bf16.mxu0 0
        %3526 = vmatpush1.bf16.xpose.msra.mxu0 0
        %3527 = vmatprep.subr.bf16.mxu0 0
        %3528 = vmatpush1.bf16.xpose.msra.mxu0 %v3511
        %3529 = vmatprep.subr.bf16.mxu0 0
        %3530 = vmatpush2.bf16.xpose.msra.mxu0 0
        %3531 = vmatprep.subr.bf16.mxu0 0
        %3532 = vmatpush2.bf16.xpose.msra.mxu0 0
        %3533 = vmatprep.subr.bf16.mxu0 0
        %3534 = vmatpush2.bf16.xpose.msra.mxu0 0
        %3535 = vmatprep.subr.bf16.mxu0 0
        %3536 = vmatpush2.bf16.xpose.msra.mxu0 0
        %3537 = vmatprep.subr.bf16.mxu0 0
        %3538 = vmatpush2.bf16.xpose.msra.mxu0 0
        %3539 = vmatprep.subr.bf16.mxu0 0
        %3540 = vmatpush2.bf16.xpose.msra.mxu0 0
        %3541 = vmatprep.subr.bf16.mxu0 0
        %3542 = vmatpush2.bf16.xpose.msra.mxu0 0
        %3543 = vmatprep.subr.bf16.mxu0 0
        %3544 = vmatpush2.bf16.xpose.msra.mxu0 0
        %3545 = vmatprep.mubr.bf16.mxu0 0
        %3546 = vmatmul.mubr.bf16.gmra.mxu0 %v3508
        %v3547 = vpop.f32.mrf.mxu0
        %v3548 = vadd.f32 0.0, %v3547
        %v3549 = vpop.f32.mrf.mxu0
        %v3550 = vpop.f32.mrf.mxu0
        %v3551 = vpop.f32.mrf.mxu0
        %3552 = vdwg.mxu0
        %v3553 = vmul.f32 %v3498, 0.17677669
        %v3554 = vmul.f32 %v3548, 0.17677669
        %v3555 = vadd.f32 %v3553, %v3092
        %v3556 = vadd.f32 %v3554, %v3096
        %v3557 = vsel %vm3101, %v3555, -inf
        %3558 = vmax.xlane.f32.xlu0 %v3557
        %v3559 = vpop.xlane.xlu0 %3558
        %v3560 = vsel %vm3101, %v3556, -inf
        %3561 = vmax.xlane.f32.xlu0 %v3560
        %v3562 = vpop.xlane.xlu0 %3561
        %v3563 = vsub.f32 %v3555, %v3559
        %v3564 = vsub.f32 %v3556, %v3562
        %v3565 = vmul.f32 %v3563, 1.442695
        %v3566 = vpow.pop %v3565
        %v3567 = vmul.f32 %v3564, 1.442695
        %v3568 = vpow.pop %v3567
        %v3569 = vsel %vm3101, %v3566, 0.0
        %3570 = vadd.xlane.f32.xlu0 %v3569
        %v3571 = vpop.xlane.xlu0 %3570
        %v3572 = vsel %vm3101, %v3568, 0.0
        %3573 = vadd.xlane.f32.xlu0 %v3572
        %v3574 = vpop.xlane.xlu0 %3573
        %v3575 = vpack.c.bf16 %v3566, %v3566
        %v3576 = vpack.c.bf16 %v3568, %v3568
        %3577 = vrot.lane.b32.xlu0 %v2990, 64
        %v3578 = vpop.permute.xlu0 %3577
        %v3580 = vsel %vm3101, %v3575, 0
        %v3583 = vsel %vm3125, %v3578, 0
        %3585 = vmatprep.subr.bf16.mxu0 0
        %3586 = vmatpush1.bf16.msra.mxu0 0
        %3587 = vmatprep.subr.bf16.mxu0 0
        %3588 = vmatpush1.bf16.msra.mxu0 0
        %3589 = vmatprep.subr.bf16.mxu0 0
        %3590 = vmatpush1.bf16.msra.mxu0 0
        %3591 = vmatprep.subr.bf16.mxu0 0
        %3592 = vmatpush1.bf16.msra.mxu0 0
        %3593 = vmatprep.subr.bf16.mxu0 0
        %3594 = vmatpush1.bf16.msra.mxu0 0
        %3595 = vmatprep.subr.bf16.mxu0 0
        %3596 = vmatpush1.bf16.msra.mxu0 0
        %3597 = vmatprep.subr.bf16.mxu0 0
        %3598 = vmatpush1.bf16.msra.mxu0 0
        %3599 = vmatprep.subr.bf16.mxu0 0
        %3600 = vmatpush1.bf16.msra.mxu0 %v3583
        %3601 = vmatprep.subr.bf16.mxu0 0
        %3602 = vmatpush2.bf16.msra.mxu0 0
        %3603 = vmatprep.subr.bf16.mxu0 0
        %3604 = vmatpush2.bf16.msra.mxu0 0
        %3605 = vmatprep.subr.bf16.mxu0 0
        %3606 = vmatpush2.bf16.msra.mxu0 0
        %3607 = vmatprep.subr.bf16.mxu0 0
        %3608 = vmatpush2.bf16.msra.mxu0 0
        %3609 = vmatprep.subr.bf16.mxu0 0
        %3610 = vmatpush2.bf16.msra.mxu0 0
        %3611 = vmatprep.subr.bf16.mxu0 0
        %3612 = vmatpush2.bf16.msra.mxu0 0
        %3613 = vmatprep.subr.bf16.mxu0 0
        %3614 = vmatpush2.bf16.msra.mxu0 0
        %3615 = vmatprep.subr.bf16.mxu0 0
        %3616 = vmatpush2.bf16.msra.mxu0 0
        %3617 = vmatprep.mubr.bf16.mxu0 0
        %3618 = vmatmul.mubr.bf16.gmra.mxu0 %v3580
        %v3619 = vpop.f32.mrf.mxu0
        %v3620 = vadd.f32 0.0, %v3619
        %v3621 = vpop.f32.mrf.mxu0
        %v3622 = vpop.f32.mrf.mxu0
        %v3623 = vpop.f32.mrf.mxu0
        %3624 = vdwg.mxu0
        %3625 = vrot.lane.b32.xlu0 %v2991, 64
        %v3626 = vpop.permute.xlu0 %3625
        %v3628 = vsel %vm3101, %v3576, 0
        %v3631 = vsel %vm3125, %v3626, 0
        %3633 = vmatprep.subr.bf16.mxu0 0
        %3634 = vmatpush1.bf16.msra.mxu0 0
        %3635 = vmatprep.subr.bf16.mxu0 0
        %3636 = vmatpush1.bf16.msra.mxu0 0
        %3637 = vmatprep.subr.bf16.mxu0 0
        %3638 = vmatpush1.bf16.msra.mxu0 0
        %3639 = vmatprep.subr.bf16.mxu0 0
        %3640 = vmatpush1.bf16.msra.mxu0 0
        %3641 = vmatprep.subr.bf16.mxu0 0
        %3642 = vmatpush1.bf16.msra.mxu0 0
        %3643 = vmatprep.subr.bf16.mxu0 0
        %3644 = vmatpush1.bf16.msra.mxu0 0
        %3645 = vmatprep.subr.bf16.mxu0 0
        %3646 = vmatpush1.bf16.msra.mxu0 0
        %3647 = vmatprep.subr.bf16.mxu0 0
        %3648 = vmatpush1.bf16.msra.mxu0 %v3631
        %3649 = vmatprep.subr.bf16.mxu0 0
        %3650 = vmatpush2.bf16.msra.mxu0 0
        %3651 = vmatprep.subr.bf16.mxu0 0
        %3652 = vmatpush2.bf16.msra.mxu0 0
        %3653 = vmatprep.subr.bf16.mxu0 0
        %3654 = vmatpush2.bf16.msra.mxu0 0
        %3655 = vmatprep.subr.bf16.mxu0 0
        %3656 = vmatpush2.bf16.msra.mxu0 0
        %3657 = vmatprep.subr.bf16.mxu0 0
        %3658 = vmatpush2.bf16.msra.mxu0 0
        %3659 = vmatprep.subr.bf16.mxu0 0
        %3660 = vmatpush2.bf16.msra.mxu0 0
        %3661 = vmatprep.subr.bf16.mxu0 0
        %3662 = vmatpush2.bf16.msra.mxu0 0
        %3663 = vmatprep.subr.bf16.mxu0 0
        %3664 = vmatpush2.bf16.msra.mxu0 0
        %3665 = vmatprep.mubr.bf16.mxu0 0
        %3666 = vmatmul.mubr.bf16.gmra.mxu0 %v3628
        %v3667 = vpop.f32.mrf.mxu0
        %v3668 = vadd.f32 0.0, %v3667
        %v3669 = vpop.f32.mrf.mxu0
        %v3670 = vpop.f32.mrf.mxu0
        %v3671 = vpop.f32.mrf.mxu0
        %3672 = vdwg.mxu0
        %v3673 = vadd.f32 %v3571, 1e-20
        %v3674 = vadd.f32 %v3574, 1e-20
        %v3675 = vrcp.pop %v3673
        %v3676 = vrcp.pop %v3674
        %v3677 = vmul.f32 %v3620, %v3675
        %v3678 = vmul.f32 %v3668, %v3676
        %3679 = vrot.lane.b32.xlu0 %v2986, 32
        %v3680 = vpop.permute.xlu0 %3679
        %3681 = vrot.lane.b32.xlu0 %v2988, 32
        %v3682 = vpop.permute.xlu0 %3681
        %v3684 = vsel %vm2992, %v3680, 0
        %v3687 = vsel %vm2992, %v3682, 0
        %3689 = vmatprep.subr.bf16.mxu0 0
        %3690 = vmatpush1.bf16.xpose.msra.mxu0 0
        %3691 = vmatprep.subr.bf16.mxu0 0
        %3692 = vmatpush1.bf16.xpose.msra.mxu0 0
        %3693 = vmatprep.subr.bf16.mxu0 0
        %3694 = vmatpush1.bf16.xpose.msra.mxu0 0
        %3695 = vmatprep.subr.bf16.mxu0 0
        %3696 = vmatpush1.bf16.xpose.msra.mxu0 0
        %3697 = vmatprep.subr.bf16.mxu0 0
        %3698 = vmatpush1.bf16.xpose.msra.mxu0 0
        %3699 = vmatprep.subr.bf16.mxu0 0
        %3700 = vmatpush1.bf16.xpose.msra.mxu0 0
        %3701 = vmatprep.subr.bf16.mxu0 0
        %3702 = vmatpush1.bf16.xpose.msra.mxu0 0
        %3703 = vmatprep.subr.bf16.mxu0 0
        %3704 = vmatpush1.bf16.xpose.msra.mxu0 %v3687
        %3705 = vmatprep.subr.bf16.mxu0 0
        %3706 = vmatpush2.bf16.xpose.msra.mxu0 0
        %3707 = vmatprep.subr.bf16.mxu0 0
        %3708 = vmatpush2.bf16.xpose.msra.mxu0 0
        %3709 = vmatprep.subr.bf16.mxu0 0
        %3710 = vmatpush2.bf16.xpose.msra.mxu0 0
        %3711 = vmatprep.subr.bf16.mxu0 0
        %3712 = vmatpush2.bf16.xpose.msra.mxu0 0
        %3713 = vmatprep.subr.bf16.mxu0 0
        %3714 = vmatpush2.bf16.xpose.msra.mxu0 0
        %3715 = vmatprep.subr.bf16.mxu0 0
        %3716 = vmatpush2.bf16.xpose.msra.mxu0 0
        %3717 = vmatprep.subr.bf16.mxu0 0
        %3718 = vmatpush2.bf16.xpose.msra.mxu0 0
        %3719 = vmatprep.subr.bf16.mxu0 0
        %3720 = vmatpush2.bf16.xpose.msra.mxu0 0
        %3721 = vmatprep.mubr.bf16.mxu0 0
        %3722 = vmatmul.mubr.bf16.gmra.mxu0 %v3684
        %v3723 = vpop.f32.mrf.mxu0
        %v3724 = vadd.f32 0.0, %v3723
        %v3725 = vpop.f32.mrf.mxu0
        %v3726 = vpop.f32.mrf.mxu0
        %v3727 = vpop.f32.mrf.mxu0
        %3728 = vdwg.mxu0
        %3729 = vrot.lane.b32.xlu0 %v2987, 32
        %v3730 = vpop.permute.xlu0 %3729
        %3731 = vrot.lane.b32.xlu0 %v2989, 32
        %v3732 = vpop.permute.xlu0 %3731
        %v3734 = vsel %vm2992, %v3730, 0
        %v3737 = vsel %vm2992, %v3732, 0
        %3739 = vmatprep.subr.bf16.mxu0 0
        %3740 = vmatpush1.bf16.xpose.msra.mxu0 0
        %3741 = vmatprep.subr.bf16.mxu0 0
        %3742 = vmatpush1.bf16.xpose.msra.mxu0 0
        %3743 = vmatprep.subr.bf16.mxu0 0
        %3744 = vmatpush1.bf16.xpose.msra.mxu0 0
        %3745 = vmatprep.subr.bf16.mxu0 0
        %3746 = vmatpush1.bf16.xpose.msra.mxu0 0
        %3747 = vmatprep.subr.bf16.mxu0 0
        %3748 = vmatpush1.bf16.xpose.msra.mxu0 0
        %3749 = vmatprep.subr.bf16.mxu0 0
        %3750 = vmatpush1.bf16.xpose.msra.mxu0 0
        %3751 = vmatprep.subr.bf16.mxu0 0
        %3752 = vmatpush1.bf16.xpose.msra.mxu0 0
        %3753 = vmatprep.subr.bf16.mxu0 0
        %3754 = vmatpush1.bf16.xpose.msra.mxu0 %v3737
        %3755 = vmatprep.subr.bf16.mxu0 0
        %3756 = vmatpush2.bf16.xpose.msra.mxu0 0
        %3757 = vmatprep.subr.bf16.mxu0 0
        %3758 = vmatpush2.bf16.xpose.msra.mxu0 0
        %3759 = vmatprep.subr.bf16.mxu0 0
        %3760 = vmatpush2.bf16.xpose.msra.mxu0 0
        %3761 = vmatprep.subr.bf16.mxu0 0
        %3762 = vmatpush2.bf16.xpose.msra.mxu0 0
        %3763 = vmatprep.subr.bf16.mxu0 0
        %3764 = vmatpush2.bf16.xpose.msra.mxu0 0
        %3765 = vmatprep.subr.bf16.mxu0 0
        %3766 = vmatpush2.bf16.xpose.msra.mxu0 0
        %3767 = vmatprep.subr.bf16.mxu0 0
        %3768 = vmatpush2.bf16.xpose.msra.mxu0 0
        %3769 = vmatprep.subr.bf16.mxu0 0
        %3770 = vmatpush2.bf16.xpose.msra.mxu0 0
        %3771 = vmatprep.mubr.bf16.mxu0 0
        %3772 = vmatmul.mubr.bf16.gmra.mxu0 %v3734
        %v3773 = vpop.f32.mrf.mxu0
        %v3774 = vadd.f32 0.0, %v3773
        %v3775 = vpop.f32.mrf.mxu0
        %v3776 = vpop.f32.mrf.mxu0
        %v3777 = vpop.f32.mrf.mxu0
        %3778 = vdwg.mxu0
        %v3779 = vmul.f32 %v3724, 0.17677669
        %v3780 = vmul.f32 %v3774, 0.17677669
        %v3781 = vadd.f32 %v3779, %v3092
        %v3782 = vadd.f32 %v3780, %v3096
        %v3783 = vsel %vm3101, %v3781, -inf
        %3784 = vmax.xlane.f32.xlu0 %v3783
        %v3785 = vpop.xlane.xlu0 %3784
        %v3786 = vsel %vm3101, %v3782, -inf
        %3787 = vmax.xlane.f32.xlu0 %v3786
        %v3788 = vpop.xlane.xlu0 %3787
        %v3789 = vsub.f32 %v3781, %v3785
        %v3790 = vsub.f32 %v3782, %v3788
        %v3791 = vmul.f32 %v3789, 1.442695
        %v3792 = vpow.pop %v3791
        %v3793 = vmul.f32 %v3790, 1.442695
        %v3794 = vpow.pop %v3793
        %v3795 = vsel %vm3101, %v3792, 0.0
        %3796 = vadd.xlane.f32.xlu0 %v3795
        %v3797 = vpop.xlane.xlu0 %3796
        %v3798 = vsel %vm3101, %v3794, 0.0
        %3799 = vadd.xlane.f32.xlu0 %v3798
        %v3800 = vpop.xlane.xlu0 %3799
        %v3801 = vpack.c.bf16 %v3792, %v3792
        %v3802 = vpack.c.bf16 %v3794, %v3794
        %3803 = vrot.lane.b32.xlu0 %v2990, 32
        %v3804 = vpop.permute.xlu0 %3803
        %v3806 = vsel %vm3101, %v3801, 0
        %v3809 = vsel %vm3125, %v3804, 0
        %3811 = vmatprep.subr.bf16.mxu0 0
        %3812 = vmatpush1.bf16.msra.mxu0 0
        %3813 = vmatprep.subr.bf16.mxu0 0
        %3814 = vmatpush1.bf16.msra.mxu0 0
        %3815 = vmatprep.subr.bf16.mxu0 0
        %3816 = vmatpush1.bf16.msra.mxu0 0
        %3817 = vmatprep.subr.bf16.mxu0 0
        %3818 = vmatpush1.bf16.msra.mxu0 0
        %3819 = vmatprep.subr.bf16.mxu0 0
        %3820 = vmatpush1.bf16.msra.mxu0 0
        %3821 = vmatprep.subr.bf16.mxu0 0
        %3822 = vmatpush1.bf16.msra.mxu0 0
        %3823 = vmatprep.subr.bf16.mxu0 0
        %3824 = vmatpush1.bf16.msra.mxu0 0
        %3825 = vmatprep.subr.bf16.mxu0 0
        %3826 = vmatpush1.bf16.msra.mxu0 %v3809
        %3827 = vmatprep.subr.bf16.mxu0 0
        %3828 = vmatpush2.bf16.msra.mxu0 0
        %3829 = vmatprep.subr.bf16.mxu0 0
        %3830 = vmatpush2.bf16.msra.mxu0 0
        %3831 = vmatprep.subr.bf16.mxu0 0
        %3832 = vmatpush2.bf16.msra.mxu0 0
        %3833 = vmatprep.subr.bf16.mxu0 0
        %3834 = vmatpush2.bf16.msra.mxu0 0
        %3835 = vmatprep.subr.bf16.mxu0 0
        %3836 = vmatpush2.bf16.msra.mxu0 0
        %3837 = vmatprep.subr.bf16.mxu0 0
        %3838 = vmatpush2.bf16.msra.mxu0 0
        %3839 = vmatprep.subr.bf16.mxu0 0
        %3840 = vmatpush2.bf16.msra.mxu0 0
        %3841 = vmatprep.subr.bf16.mxu0 0
        %3842 = vmatpush2.bf16.msra.mxu0 0
        %3843 = vmatprep.mubr.bf16.mxu0 0
        %3844 = vmatmul.mubr.bf16.gmra.mxu0 %v3806
        %v3845 = vpop.f32.mrf.mxu0
        %v3846 = vadd.f32 0.0, %v3845
        %v3847 = vpop.f32.mrf.mxu0
        %v3848 = vpop.f32.mrf.mxu0
        %v3849 = vpop.f32.mrf.mxu0
        %3850 = vdwg.mxu0
        %3851 = vrot.lane.b32.xlu0 %v2991, 32
        %v3852 = vpop.permute.xlu0 %3851
        %v3854 = vsel %vm3101, %v3802, 0
        %v3857 = vsel %vm3125, %v3852, 0
        %3859 = vmatprep.subr.bf16.mxu0 0
        %3860 = vmatpush1.bf16.msra.mxu0 0
        %3861 = vmatprep.subr.bf16.mxu0 0
        %3862 = vmatpush1.bf16.msra.mxu0 0
        %3863 = vmatprep.subr.bf16.mxu0 0
        %3864 = vmatpush1.bf16.msra.mxu0 0
        %3865 = vmatprep.subr.bf16.mxu0 0
        %3866 = vmatpush1.bf16.msra.mxu0 0
        %3867 = vmatprep.subr.bf16.mxu0 0
        %3868 = vmatpush1.bf16.msra.mxu0 0
        %3869 = vmatprep.subr.bf16.mxu0 0
        %3870 = vmatpush1.bf16.msra.mxu0 0
        %3871 = vmatprep.subr.bf16.mxu0 0
        %3872 = vmatpush1.bf16.msra.mxu0 0
        %3873 = vmatprep.subr.bf16.mxu0 0
        %3874 = vmatpush1.bf16.msra.mxu0 %v3857
        %3875 = vmatprep.subr.bf16.mxu0 0
        %3876 = vmatpush2.bf16.msra.mxu0 0
        %3877 = vmatprep.subr.bf16.mxu0 0
        %3878 = vmatpush2.bf16.msra.mxu0 0
        %3879 = vmatprep.subr.bf16.mxu0 0
        %3880 = vmatpush2.bf16.msra.mxu0 0
        %3881 = vmatprep.subr.bf16.mxu0 0
        %3882 = vmatpush2.bf16.msra.mxu0 0
        %3883 = vmatprep.subr.bf16.mxu0 0
        %3884 = vmatpush2.bf16.msra.mxu0 0
        %3885 = vmatprep.subr.bf16.mxu0 0
        %3886 = vmatpush2.bf16.msra.mxu0 0
        %3887 = vmatprep.subr.bf16.mxu0 0
        %3888 = vmatpush2.bf16.msra.mxu0 0
        %3889 = vmatprep.subr.bf16.mxu0 0
        %3890 = vmatpush2.bf16.msra.mxu0 0
        %3891 = vmatprep.mubr.bf16.mxu0 0
        %3892 = vmatmul.mubr.bf16.gmra.mxu0 %v3854
        %v3893 = vpop.f32.mrf.mxu0
        %v3894 = vadd.f32 0.0, %v3893
        %v3895 = vpop.f32.mrf.mxu0
        %v3896 = vpop.f32.mrf.mxu0
        %v3897 = vpop.f32.mrf.mxu0
        %3898 = vdwg.mxu0
        %v3899 = vadd.f32 %v3797, 1e-20
        %v3900 = vadd.f32 %v3800, 1e-20
        %v3901 = vrcp.pop %v3899
        %v3902 = vrcp.pop %v3900
        %v3903 = vmul.f32 %v3846, %v3901
        %v3904 = vmul.f32 %v3894, %v3902
        %3907 = vrot.lane.b32.xlu0 %v3451, 32
        %v3908 = vpop.permute.xlu0 %3907
        %3909 = vrot.lane.b32.xlu0 %v3452, 32
        %v3910 = vpop.permute.xlu0 %3909
        %3915 = vrot.lane.b32.xlu0 %v3677, 64
        %v3916 = vpop.permute.xlu0 %3915
        %3917 = vrot.lane.b32.xlu0 %v3678, 64
        %v3918 = vpop.permute.xlu0 %3917
        %3923 = vrot.lane.b32.xlu0 %v3903, 96
        %v3924 = vpop.permute.xlu0 %3923
        %3925 = vrot.lane.b32.xlu0 %v3904, 96
        %v3926 = vpop.permute.xlu0 %3925
        %v3929 = vsel %vm2992, %v3219, %v3908
        %v3930 = vsel %vm2992, %v3220, %v3910
        %vm3931 = vcmask 523264
        %v3932 = vsel %vm3931, %v3929, %v3916
        %v3933 = vsel %vm3931, %v3930, %v3918
        %vm3934 = vcmask 785408
        %v3935 = vsel %vm3934, %v3932, %v3924
        %v3936 = vsel %vm3934, %v3933, %v3926
        %v3937 = vpack.c.bf16 %v3936, %v3935
        %v3938 = vld [vmem:[%s970] sm:$0xf]
        %v3939 = vld [vmem:[%s970 + $0x4] sm:$0xf]
        %v3940 = vld [vmem:[%s970 + $0x8] sm:$0xf]
        %v3941 = vld [vmem:[%s970 + $0xc] sm:$0xf]
        %v3942 = vld [vmem:[%s970 + $0x10] sm:$0xf]
        %v3943 = vld [vmem:[%s970 + $0x14] sm:$0xf]
        %v3944 = vld [vmem:[%s970 + $0x18] sm:$0xf]
        %v3945 = vld [vmem:[%s970 + $0x1c] sm:$0xf]
        %v3946 = vld [vmem:[%s970 + $0x20] sm:$0xf]
        %v3947 = vld [vmem:[%s970 + $0x24] sm:$0xf]
        %v3948 = vld [vmem:[%s970 + $0x28] sm:$0xf]
        %v3949 = vld [vmem:[%s970 + $0x2c] sm:$0xf]
        %v3950 = vld [vmem:[%s970 + $0x30] sm:$0xf]
        %v3951 = vld [vmem:[%s970 + $0x34] sm:$0xf]
        %v3952 = vld [vmem:[%s970 + $0x38] sm:$0xf]
        %v3953 = vld [vmem:[%s970 + $0x3c] sm:$0xf]
        %v3954 = vld [vmem:[%s974] sm:$0x7]
        %v3955 = vlaneseq
        %v3956 = vshrl.u32 %v3955, 7
        %v3957 = vsub.s32 0, %v3956
        %v3958 = vrot.slane %v3954, %v3957
        %v3975 = vunpack.c.l.b16 %v3938
        %v3976 = vunpack.c.l.b16 %v3939
        %v3977 = vunpack.c.l.b16 %v3940
        %v3978 = vunpack.c.l.b16 %v3941
        %v3979 = vunpack.c.l.b16 %v3942
        %v3980 = vunpack.c.l.b16 %v3943
        %v3981 = vunpack.c.l.b16 %v3944
        %v3982 = vunpack.c.l.b16 %v3945
        %v3983 = vunpack.c.l.b16 %v3946
        %v3984 = vunpack.c.l.b16 %v3947
        %v3985 = vunpack.c.l.b16 %v3948
        %v3986 = vunpack.c.l.b16 %v3949
        %v3987 = vunpack.c.l.b16 %v3950
        %v3988 = vunpack.c.l.b16 %v3951
        %v3989 = vunpack.c.l.b16 %v3952
        %v3990 = vunpack.c.l.b16 %v3953
        %v3991 = vpack.c.b16 %v3976, %v3975
        %v3992 = vpack.c.b16 %v3978, %v3977
        %v3993 = vpack.c.b16 %v3980, %v3979
        %v3994 = vpack.c.b16 %v3982, %v3981
        %v3995 = vpack.c.b16 %v3984, %v3983
        %v3996 = vpack.c.b16 %v3986, %v3985
        %v3997 = vpack.c.b16 %v3988, %v3987
        %v3998 = vpack.c.b16 %v3990, %v3989
        %4007 = vmatprep.subr.bf16.mxu0 0
        %4008 = vmatpush1.bf16.msra.mxu0 %v3998
        %4009 = vmatprep.subr.bf16.mxu0 0
        %4010 = vmatpush1.bf16.msra.mxu0 %v3997
        %4011 = vmatprep.subr.bf16.mxu0 0
        %4012 = vmatpush1.bf16.msra.mxu0 %v3996
        %4013 = vmatprep.subr.bf16.mxu0 0
        %4014 = vmatpush1.bf16.msra.mxu0 %v3995
        %4015 = vmatprep.subr.bf16.mxu0 0
        %4016 = vmatpush1.bf16.msra.mxu0 %v3994
        %4017 = vmatprep.subr.bf16.mxu0 0
        %4018 = vmatpush1.bf16.msra.mxu0 %v3993
        %4019 = vmatprep.subr.bf16.mxu0 0
        %4020 = vmatpush1.bf16.msra.mxu0 %v3992
        %4021 = vmatprep.subr.bf16.mxu0 0
        %4022 = vmatpush1.bf16.msra.mxu0 %v3991
        %4023 = vmatprep.subr.bf16.mxu0 0
        %4024 = vmatpush2.bf16.msra.mxu0 0
        %4025 = vmatprep.subr.bf16.mxu0 0
        %4026 = vmatpush2.bf16.msra.mxu0 0
        %4027 = vmatprep.subr.bf16.mxu0 0
        %4028 = vmatpush2.bf16.msra.mxu0 0
        %4029 = vmatprep.subr.bf16.mxu0 0
        %4030 = vmatpush2.bf16.msra.mxu0 0
        %4031 = vmatprep.subr.bf16.mxu0 0
        %4032 = vmatpush2.bf16.msra.mxu0 0
        %4033 = vmatprep.subr.bf16.mxu0 0
        %4034 = vmatpush2.bf16.msra.mxu0 0
        %4035 = vmatprep.subr.bf16.mxu0 0
        %4036 = vmatpush2.bf16.msra.mxu0 0
        %4037 = vmatprep.subr.bf16.mxu0 0
        %4038 = vmatpush2.bf16.msra.mxu0 0
        %4039 = vmatprep.mubr.bf16.mxu0 0
        %4040 = vmatmul.mubr.bf16.gmra.mxu0 %v3937
        %v4041 = vpop.f32.mrf.mxu0
        %v4042 = vadd.f32 %v3958, %v4041
        %v4043 = vpop.f32.mrf.mxu0
        %v4044 = vpop.f32.mrf.mxu0
        %v4045 = vadd.f32 %v3958, %v4044
        %v4046 = vpop.f32.mrf.mxu0
        %4047 = vdwg.mxu0
        %v4048 = vadd.f32 %v4042, %v2826
        %v4049 = vadd.f32 %v4045, %v2829
        %v4050 = vlaneseq
        %v4051 = vshrl.u32 %v4050, 7
        %v4052 = vsub.s32 1, %v4051
        %v4053 = vrot.slane %v3954, %v4052
        %v4054 = vmul.f32 %v4048, %v4053
        %v4055 = vmul.f32 %v4049, %v4053
        %v4056 = vlaneseq
        %v4057 = vshrl.u32 %v4056, 7
        %v4058 = vsub.s32 2, %v4057
        %v4059 = vrot.slane %v3954, %v4058
        %v4060 = vadd.f32 %v4054, %v4059
        %v4061 = vadd.f32 %v4055, %v4059
        %v4062 = vld [vmem:[%s979] sm:$0xff]
        %v4063 = vld [vmem:[%s979 + $0x8] sm:$0xff]
        %v4064 = vld [vmem:[%s984] sm:$0xff]
        %v4065 = vld [vmem:[%s984 + $0x8] sm:$0xf]
        %v4066 = vld [vmem:[%s797] sm:$0xff]
        %v4067 = vld [vmem:[%s797 + $0x8] sm:$0xff]
        %v4068 = vld [vmem:[%s797 + $0x10] sm:$0xff]
        %v4069 = vld [vmem:[%s797 + $0x18] sm:$0xff]
        %v4070 = vld [vmem:[%s797 + $0x20] sm:$0xff]
        %v4071 = vld [vmem:[%s797 + $0x28] sm:$0xff]
        %v4072 = vld [vmem:[%s797 + $0x30] sm:$0xff]
        %v4073 = vld [vmem:[%s797 + $0x38] sm:$0xff]
        %v4074 = vld [vmem:[%s797 + $0x40] sm:$0xff]
        %v4075 = vld [vmem:[%s797 + $0x48] sm:$0xff]
        %v4076 = vld [vmem:[%s797 + $0x50] sm:$0xff]
        %v4077 = vld [vmem:[%s797 + $0x58] sm:$0xff]
        %v4078 = vld [vmem:[%s797 + $0x60] sm:$0xff]
        %v4079 = vld [vmem:[%s797 + $0x68] sm:$0xff]
        %v4080 = vld [vmem:[%s797 + $0x70] sm:$0xff]
        %v4081 = vld [vmem:[%s797 + $0x78] sm:$0xff]
        %v4082 = vld [vmem:[%s797 + $0x80] sm:$0xff]
        %v4083 = vld [vmem:[%s797 + $0x88] sm:$0xff]
        %v4084 = vld [vmem:[%s797 + $0x90] sm:$0xff]
        %v4085 = vld [vmem:[%s797 + $0x98] sm:$0xff]
        %v4086 = vld [vmem:[%s797 + $0xa0] sm:$0xff]
        %v4087 = vld [vmem:[%s797 + $0xa8] sm:$0xff]
        %v4088 = vld [vmem:[%s797 + $0xb0] sm:$0xff]
        %v4089 = vld [vmem:[%s797 + $0xb8] sm:$0xff]
        %v4090 = vld [vmem:[%s797 + $0xc0] sm:$0xff]
        %v4091 = vld [vmem:[%s797 + $0xc8] sm:$0xff]
        %v4092 = vld [vmem:[%s797 + $0xd0] sm:$0xff]
        %v4093 = vld [vmem:[%s797 + $0xd8] sm:$0xff]
        %v4094 = vld [vmem:[%s797 + $0xe0] sm:$0xff]
        %v4095 = vld [vmem:[%s797 + $0xe8] sm:$0xff]
        %v4096 = vld [vmem:[%s797 + $0xf0] sm:$0xff]
        %v4097 = vld [vmem:[%s797 + $0xf8] sm:$0xff]
        %v4098 = vpack.c.bf16 %v4061, %v4060
        %v4101 = vlaneseq
        %v4102 = vshrl.u32 %v4101, 7
        %v4103 = vsub.s32 0, %v4102
        %v4104 = vrot.slane %v4062, %v4103
        %v4105 = vlaneseq
        %v4106 = vshrl.u32 %v4105, 7
        %v4107 = vsub.s32 4, %v4106
        %v4108 = vrot.slane %v4062, %v4107
        %v4109 = vlaneseq
        %v4110 = vshrl.u32 %v4109, 7
        %v4111 = vsub.s32 0, %v4110
        %v4112 = vrot.slane %v4063, %v4111
        %v4113 = vlaneseq
        %v4114 = vshrl.u32 %v4113, 7
        %v4115 = vsub.s32 4, %v4114
        %v4116 = vrot.slane %v4063, %v4115
        %v4121 = vlaneseq
        %v4122 = vshrl.u32 %v4121, 7
        %v4123 = vsub.s32 0, %v4122
        %v4124 = vrot.slane %v4104, %v4123
        %v4125 = vlaneseq
        %v4126 = vshrl.u32 %v4125, 7
        %v4127 = vsub.s32 0, %v4126
        %v4128 = vrot.slane %v4108, %v4127
        %v4129 = vlaneseq
        %v4130 = vshrl.u32 %v4129, 7
        %v4131 = vsub.s32 0, %v4130
        %v4132 = vrot.slane %v4112, %v4131
        %v4133 = vlaneseq
        %v4134 = vshrl.u32 %v4133, 7
        %v4135 = vsub.s32 0, %v4134
        %v4136 = vrot.slane %v4116, %v4135
        %v4169 = vunpack.c.l.b16 %v4066
        %v4170 = vunpack.c.h.b16 %v4066
        %v4171 = vunpack.c.l.b16 %v4067
        %v4172 = vunpack.c.h.b16 %v4067
        %v4173 = vunpack.c.l.b16 %v4068
        %v4174 = vunpack.c.h.b16 %v4068
        %v4175 = vunpack.c.l.b16 %v4069
        %v4176 = vunpack.c.h.b16 %v4069
        %v4177 = vunpack.c.l.b16 %v4070
        %v4178 = vunpack.c.h.b16 %v4070
        %v4179 = vunpack.c.l.b16 %v4071
        %v4180 = vunpack.c.h.b16 %v4071
        %v4181 = vunpack.c.l.b16 %v4072
        %v4182 = vunpack.c.h.b16 %v4072
        %v4183 = vunpack.c.l.b16 %v4073
        %v4184 = vunpack.c.h.b16 %v4073
        %v4185 = vunpack.c.l.b16 %v4074
        %v4186 = vunpack.c.h.b16 %v4074
        %v4187 = vunpack.c.l.b16 %v4075
        %v4188 = vunpack.c.h.b16 %v4075
        %v4189 = vunpack.c.l.b16 %v4076
        %v4190 = vunpack.c.h.b16 %v4076
        %v4191 = vunpack.c.l.b16 %v4077
        %v4192 = vunpack.c.h.b16 %v4077
        %v4193 = vunpack.c.l.b16 %v4078
        %v4194 = vunpack.c.h.b16 %v4078
        %v4195 = vunpack.c.l.b16 %v4079
        %v4196 = vunpack.c.h.b16 %v4079
        %v4197 = vunpack.c.l.b16 %v4080
        %v4198 = vunpack.c.h.b16 %v4080
        %v4199 = vunpack.c.l.b16 %v4081
        %v4200 = vunpack.c.h.b16 %v4081
        %v4201 = vunpack.c.l.b16 %v4082
        %v4202 = vunpack.c.h.b16 %v4082
        %v4203 = vunpack.c.l.b16 %v4083
        %v4204 = vunpack.c.h.b16 %v4083
        %v4205 = vunpack.c.l.b16 %v4084
        %v4206 = vunpack.c.h.b16 %v4084
        %v4207 = vunpack.c.l.b16 %v4085
        %v4208 = vunpack.c.h.b16 %v4085
        %v4209 = vunpack.c.l.b16 %v4086
        %v4210 = vunpack.c.h.b16 %v4086
        %v4211 = vunpack.c.l.b16 %v4087
        %v4212 = vunpack.c.h.b16 %v4087
        %v4213 = vunpack.c.l.b16 %v4088
        %v4214 = vunpack.c.h.b16 %v4088
        %v4215 = vunpack.c.l.b16 %v4089
        %v4216 = vunpack.c.h.b16 %v4089
        %v4217 = vunpack.c.l.b16 %v4090
        %v4218 = vunpack.c.h.b16 %v4090
        %v4219 = vunpack.c.l.b16 %v4091
        %v4220 = vunpack.c.h.b16 %v4091
        %v4221 = vunpack.c.l.b16 %v4092
        %v4222 = vunpack.c.h.b16 %v4092
        %v4223 = vunpack.c.l.b16 %v4093
        %v4224 = vunpack.c.h.b16 %v4093
        %v4225 = vunpack.c.l.b16 %v4094
        %v4226 = vunpack.c.h.b16 %v4094
        %v4227 = vunpack.c.l.b16 %v4095
        %v4228 = vunpack.c.h.b16 %v4095
        %v4229 = vunpack.c.l.b16 %v4096
        %v4230 = vunpack.c.h.b16 %v4096
        %v4231 = vunpack.c.l.b16 %v4097
        %v4232 = vunpack.c.h.b16 %v4097
        %v4233 = vpack.c.b16 %v4173, %v4169
        %v4234 = vpack.c.b16 %v4174, %v4170
        %v4235 = vpack.c.b16 %v4175, %v4171
        %v4236 = vpack.c.b16 %v4176, %v4172
        %v4237 = vpack.c.b16 %v4181, %v4177
        %v4238 = vpack.c.b16 %v4182, %v4178
        %v4239 = vpack.c.b16 %v4183, %v4179
        %v4240 = vpack.c.b16 %v4184, %v4180
        %v4241 = vpack.c.b16 %v4189, %v4185
        %v4242 = vpack.c.b16 %v4190, %v4186
        %v4243 = vpack.c.b16 %v4191, %v4187
        %v4244 = vpack.c.b16 %v4192, %v4188
        %v4245 = vpack.c.b16 %v4197, %v4193
        %v4246 = vpack.c.b16 %v4198, %v4194
        %v4247 = vpack.c.b16 %v4199, %v4195
        %v4248 = vpack.c.b16 %v4200, %v4196
        %v4249 = vpack.c.b16 %v4205, %v4201
        %v4250 = vpack.c.b16 %v4206, %v4202
        %v4251 = vpack.c.b16 %v4207, %v4203
        %v4252 = vpack.c.b16 %v4208, %v4204
        %v4253 = vpack.c.b16 %v4213, %v4209
        %v4254 = vpack.c.b16 %v4214, %v4210
        %v4255 = vpack.c.b16 %v4215, %v4211
        %v4256 = vpack.c.b16 %v4216, %v4212
        %v4257 = vpack.c.b16 %v4221, %v4217
        %v4258 = vpack.c.b16 %v4222, %v4218
        %v4259 = vpack.c.b16 %v4223, %v4219
        %v4260 = vpack.c.b16 %v4224, %v4220
        %v4261 = vpack.c.b16 %v4229, %v4225
        %v4262 = vpack.c.b16 %v4230, %v4226
        %v4263 = vpack.c.b16 %v4231, %v4227
        %v4264 = vpack.c.b16 %v4232, %v4228
        %4297 = vmatprep.subr.bf16.mxu0 %v4262
        %4298 = vmatpush1.bf16.msra.mxu0 %v4261
        %4299 = vmatprep.subr.bf16.mxu0 %v4258
        %4300 = vmatpush1.bf16.msra.mxu0 %v4257
        %4301 = vmatprep.subr.bf16.mxu0 %v4254
        %4302 = vmatpush1.bf16.msra.mxu0 %v4253
        %4303 = vmatprep.subr.bf16.mxu0 %v4250
        %4304 = vmatpush1.bf16.msra.mxu0 %v4249
        %4305 = vmatprep.subr.bf16.mxu0 %v4246
        %4306 = vmatpush1.bf16.msra.mxu0 %v4245
        %4307 = vmatprep.subr.bf16.mxu0 %v4242
        %4308 = vmatpush1.bf16.msra.mxu0 %v4241
        %4309 = vmatprep.subr.bf16.mxu0 %v4238
        %4310 = vmatpush1.bf16.msra.mxu0 %v4237
        %4311 = vmatprep.subr.bf16.mxu0 %v4234
        %4312 = vmatpush1.bf16.msra.mxu0 %v4233
        %4313 = vmatprep.subr.bf16.mxu0 0
        %4314 = vmatpush2.bf16.msra.mxu0 0
        %4315 = vmatprep.subr.bf16.mxu0 0
        %4316 = vmatpush2.bf16.msra.mxu0 0
        %4317 = vmatprep.subr.bf16.mxu0 0
        %4318 = vmatpush2.bf16.msra.mxu0 0
        %4319 = vmatprep.subr.bf16.mxu0 0
        %4320 = vmatpush2.bf16.msra.mxu0 0
        %4321 = vmatprep.subr.bf16.mxu0 0
        %4322 = vmatpush2.bf16.msra.mxu0 0
        %4323 = vmatprep.subr.bf16.mxu0 0
        %4324 = vmatpush2.bf16.msra.mxu0 0
        %4325 = vmatprep.subr.bf16.mxu0 0
        %4326 = vmatpush2.bf16.msra.mxu0 0
        %4327 = vmatprep.subr.bf16.mxu0 0
        %4328 = vmatpush2.bf16.msra.mxu0 0
        %4329 = vmatprep.mubr.bf16.mxu0 0
        %4330 = vmatmul.mubr.bf16.gmra.mxu0 %v4098
        %v4331 = vpop.f32.mrf.mxu0
        %v4332 = vadd.f32 %v4124, %v4331
        %v4333 = vpop.f32.mrf.mxu0
        %v4334 = vadd.f32 %v4128, %v4333
        %v4335 = vpop.f32.mrf.mxu0
        %v4336 = vadd.f32 %v4124, %v4335
        %v4337 = vpop.f32.mrf.mxu0
        %v4338 = vadd.f32 %v4128, %v4337
        %4339 = vdwg.mxu0
        %4340 = vmatprep.subr.bf16.mxu0 %v4264
        %4341 = vmatpush1.bf16.msra.mxu0 %v4263
        %4342 = vmatprep.subr.bf16.mxu0 %v4260
        %4343 = vmatpush1.bf16.msra.mxu0 %v4259
        %4344 = vmatprep.subr.bf16.mxu0 %v4256
        %4345 = vmatpush1.bf16.msra.mxu0 %v4255
        %4346 = vmatprep.subr.bf16.mxu0 %v4252
        %4347 = vmatpush1.bf16.msra.mxu0 %v4251
        %4348 = vmatprep.subr.bf16.mxu0 %v4248
        %4349 = vmatpush1.bf16.msra.mxu0 %v4247
        %4350 = vmatprep.subr.bf16.mxu0 %v4244
        %4351 = vmatpush1.bf16.msra.mxu0 %v4243
        %4352 = vmatprep.subr.bf16.mxu0 %v4240
        %4353 = vmatpush1.bf16.msra.mxu0 %v4239
        %4354 = vmatprep.subr.bf16.mxu0 %v4236
        %4355 = vmatpush1.bf16.msra.mxu0 %v4235
        %4356 = vmatprep.subr.bf16.mxu0 0
        %4357 = vmatpush2.bf16.msra.mxu0 0
        %4358 = vmatprep.subr.bf16.mxu0 0
        %4359 = vmatpush2.bf16.msra.mxu0 0
        %4360 = vmatprep.subr.bf16.mxu0 0
        %4361 = vmatpush2.bf16.msra.mxu0 0
        %4362 = vmatprep.subr.bf16.mxu0 0
        %4363 = vmatpush2.bf16.msra.mxu0 0
        %4364 = vmatprep.subr.bf16.mxu0 0
        %4365 = vmatpush2.bf16.msra.mxu0 0
        %4366 = vmatprep.subr.bf16.mxu0 0
        %4367 = vmatpush2.bf16.msra.mxu0 0
        %4368 = vmatprep.subr.bf16.mxu0 0
        %4369 = vmatpush2.bf16.msra.mxu0 0
        %4370 = vmatprep.subr.bf16.mxu0 0
        %4371 = vmatpush2.bf16.msra.mxu0 0
        %4372 = vmatprep.mubr.bf16.mxu0 0
        %4373 = vmatmul.mubr.bf16.gmra.mxu0 %v4098
        %v4374 = vpop.f32.mrf.mxu0
        %v4375 = vadd.f32 %v4132, %v4374
        %v4376 = vpop.f32.mrf.mxu0
        %v4377 = vadd.f32 %v4136, %v4376
        %v4378 = vpop.f32.mrf.mxu0
        %v4379 = vadd.f32 %v4132, %v4378
        %v4380 = vpop.f32.mrf.mxu0
        %v4381 = vadd.f32 %v4136, %v4380
        %4382 = vdwg.mxu0
        %v4383 = vmax.f32 %v4332, 0.0
        %v4384 = vmax.f32 %v4334, 0.0
        %v4385 = vmax.f32 %v4375, 0.0
        %v4386 = vmax.f32 %v4377, 0.0
        %v4387 = vmax.f32 %v4336, 0.0
        %v4388 = vmax.f32 %v4338, 0.0
        %v4389 = vmax.f32 %v4379, 0.0
        %v4390 = vmax.f32 %v4381, 0.0
        %v4391 = vld [vmem:[%s806] sm:$0xf]
        %v4392 = vld [vmem:[%s806 + $0x4] sm:$0xf]
        %v4393 = vld [vmem:[%s806 + $0x8] sm:$0xf]
        %v4394 = vld [vmem:[%s806 + $0xc] sm:$0xf]
        %v4395 = vld [vmem:[%s806 + $0x10] sm:$0xf]
        %v4396 = vld [vmem:[%s806 + $0x14] sm:$0xf]
        %v4397 = vld [vmem:[%s806 + $0x18] sm:$0xf]
        %v4398 = vld [vmem:[%s806 + $0x1c] sm:$0xf]
        %v4399 = vld [vmem:[%s806 + $0x20] sm:$0xf]
        %v4400 = vld [vmem:[%s806 + $0x24] sm:$0xf]
        %v4401 = vld [vmem:[%s806 + $0x28] sm:$0xf]
        %v4402 = vld [vmem:[%s806 + $0x2c] sm:$0xf]
        %v4403 = vld [vmem:[%s806 + $0x30] sm:$0xf]
        %v4404 = vld [vmem:[%s806 + $0x34] sm:$0xf]
        %v4405 = vld [vmem:[%s806 + $0x38] sm:$0xf]
        %v4406 = vld [vmem:[%s806 + $0x3c] sm:$0xf]
        %v4407 = vld [vmem:[%s806 + $0x40] sm:$0xf]
        %v4408 = vld [vmem:[%s806 + $0x44] sm:$0xf]
        %v4409 = vld [vmem:[%s806 + $0x48] sm:$0xf]
        %v4410 = vld [vmem:[%s806 + $0x4c] sm:$0xf]
        %v4411 = vld [vmem:[%s806 + $0x50] sm:$0xf]
        %v4412 = vld [vmem:[%s806 + $0x54] sm:$0xf]
        %v4413 = vld [vmem:[%s806 + $0x58] sm:$0xf]
        %v4414 = vld [vmem:[%s806 + $0x5c] sm:$0xf]
        %v4415 = vld [vmem:[%s806 + $0x60] sm:$0xf]
        %v4416 = vld [vmem:[%s806 + $0x64] sm:$0xf]
        %v4417 = vld [vmem:[%s806 + $0x68] sm:$0xf]
        %v4418 = vld [vmem:[%s806 + $0x6c] sm:$0xf]
        %v4419 = vld [vmem:[%s806 + $0x70] sm:$0xf]
        %v4420 = vld [vmem:[%s806 + $0x74] sm:$0xf]
        %v4421 = vld [vmem:[%s806 + $0x78] sm:$0xf]
        %v4422 = vld [vmem:[%s806 + $0x7c] sm:$0xf]
        %v4423 = vld [vmem:[%s806 + $0x80] sm:$0xf]
        %v4424 = vld [vmem:[%s806 + $0x84] sm:$0xf]
        %v4425 = vld [vmem:[%s806 + $0x88] sm:$0xf]
        %v4426 = vld [vmem:[%s806 + $0x8c] sm:$0xf]
        %v4427 = vld [vmem:[%s806 + $0x90] sm:$0xf]
        %v4428 = vld [vmem:[%s806 + $0x94] sm:$0xf]
        %v4429 = vld [vmem:[%s806 + $0x98] sm:$0xf]
        %v4430 = vld [vmem:[%s806 + $0x9c] sm:$0xf]
        %v4431 = vld [vmem:[%s806 + $0xa0] sm:$0xf]
        %v4432 = vld [vmem:[%s806 + $0xa4] sm:$0xf]
        %v4433 = vld [vmem:[%s806 + $0xa8] sm:$0xf]
        %v4434 = vld [vmem:[%s806 + $0xac] sm:$0xf]
        %v4435 = vld [vmem:[%s806 + $0xb0] sm:$0xf]
        %v4436 = vld [vmem:[%s806 + $0xb4] sm:$0xf]
        %v4437 = vld [vmem:[%s806 + $0xb8] sm:$0xf]
        %v4438 = vld [vmem:[%s806 + $0xbc] sm:$0xf]
        %v4439 = vld [vmem:[%s806 + $0xc0] sm:$0xf]
        %v4440 = vld [vmem:[%s806 + $0xc4] sm:$0xf]
        %v4441 = vld [vmem:[%s806 + $0xc8] sm:$0xf]
        %v4442 = vld [vmem:[%s806 + $0xcc] sm:$0xf]
        %v4443 = vld [vmem:[%s806 + $0xd0] sm:$0xf]
        %v4444 = vld [vmem:[%s806 + $0xd4] sm:$0xf]
        %v4445 = vld [vmem:[%s806 + $0xd8] sm:$0xf]
        %v4446 = vld [vmem:[%s806 + $0xdc] sm:$0xf]
        %v4447 = vld [vmem:[%s806 + $0xe0] sm:$0xf]
        %v4448 = vld [vmem:[%s806 + $0xe4] sm:$0xf]
        %v4449 = vld [vmem:[%s806 + $0xe8] sm:$0xf]
        %v4450 = vld [vmem:[%s806 + $0xec] sm:$0xf]
        %v4451 = vld [vmem:[%s806 + $0xf0] sm:$0xf]
        %v4452 = vld [vmem:[%s806 + $0xf4] sm:$0xf]
        %v4453 = vld [vmem:[%s806 + $0xf8] sm:$0xf]
        %v4454 = vld [vmem:[%s806 + $0xfc] sm:$0xf]
        %v4455 = vpack.c.bf16 %v4387, %v4383
        %v4456 = vpack.c.bf16 %v4388, %v4384
        %v4457 = vpack.c.bf16 %v4389, %v4385
        %v4458 = vpack.c.bf16 %v4390, %v4386
        %v4459 = vlaneseq
        %v4460 = vshrl.u32 %v4459, 7
        %v4461 = vsub.s32 0, %v4460
        %v4462 = vrot.slane %v4064, %v4461
        %v4527 = vunpack.c.l.b16 %v4391
        %v4528 = vunpack.c.l.b16 %v4392
        %v4529 = vunpack.c.l.b16 %v4393
        %v4530 = vunpack.c.l.b16 %v4394
        %v4531 = vunpack.c.l.b16 %v4395
        %v4532 = vunpack.c.l.b16 %v4396
        %v4533 = vunpack.c.l.b16 %v4397
        %v4534 = vunpack.c.l.b16 %v4398
        %v4535 = vunpack.c.l.b16 %v4399
        %v4536 = vunpack.c.l.b16 %v4400
        %v4537 = vunpack.c.l.b16 %v4401
        %v4538 = vunpack.c.l.b16 %v4402
        %v4539 = vunpack.c.l.b16 %v4403
        %v4540 = vunpack.c.l.b16 %v4404
        %v4541 = vunpack.c.l.b16 %v4405
        %v4542 = vunpack.c.l.b16 %v4406
        %v4543 = vunpack.c.l.b16 %v4407
        %v4544 = vunpack.c.l.b16 %v4408
        %v4545 = vunpack.c.l.b16 %v4409
        %v4546 = vunpack.c.l.b16 %v4410
        %v4547 = vunpack.c.l.b16 %v4411
        %v4548 = vunpack.c.l.b16 %v4412
        %v4549 = vunpack.c.l.b16 %v4413
        %v4550 = vunpack.c.l.b16 %v4414
        %v4551 = vunpack.c.l.b16 %v4415
        %v4552 = vunpack.c.l.b16 %v4416
        %v4553 = vunpack.c.l.b16 %v4417
        %v4554 = vunpack.c.l.b16 %v4418
        %v4555 = vunpack.c.l.b16 %v4419
        %v4556 = vunpack.c.l.b16 %v4420
        %v4557 = vunpack.c.l.b16 %v4421
        %v4558 = vunpack.c.l.b16 %v4422
        %v4559 = vunpack.c.l.b16 %v4423
        %v4560 = vunpack.c.l.b16 %v4424
        %v4561 = vunpack.c.l.b16 %v4425
        %v4562 = vunpack.c.l.b16 %v4426
        %v4563 = vunpack.c.l.b16 %v4427
        %v4564 = vunpack.c.l.b16 %v4428
        %v4565 = vunpack.c.l.b16 %v4429
        %v4566 = vunpack.c.l.b16 %v4430
        %v4567 = vunpack.c.l.b16 %v4431
        %v4568 = vunpack.c.l.b16 %v4432
        %v4569 = vunpack.c.l.b16 %v4433
        %v4570 = vunpack.c.l.b16 %v4434
        %v4571 = vunpack.c.l.b16 %v4435
        %v4572 = vunpack.c.l.b16 %v4436
        %v4573 = vunpack.c.l.b16 %v4437
        %v4574 = vunpack.c.l.b16 %v4438
        %v4575 = vunpack.c.l.b16 %v4439
        %v4576 = vunpack.c.l.b16 %v4440
        %v4577 = vunpack.c.l.b16 %v4441
        %v4578 = vunpack.c.l.b16 %v4442
        %v4579 = vunpack.c.l.b16 %v4443
        %v4580 = vunpack.c.l.b16 %v4444
        %v4581 = vunpack.c.l.b16 %v4445
        %v4582 = vunpack.c.l.b16 %v4446
        %v4583 = vunpack.c.l.b16 %v4447
        %v4584 = vunpack.c.l.b16 %v4448
        %v4585 = vunpack.c.l.b16 %v4449
        %v4586 = vunpack.c.l.b16 %v4450
        %v4587 = vunpack.c.l.b16 %v4451
        %v4588 = vunpack.c.l.b16 %v4452
        %v4589 = vunpack.c.l.b16 %v4453
        %v4590 = vunpack.c.l.b16 %v4454
        %v4591 = vpack.c.b16 %v4528, %v4527
        %v4592 = vpack.c.b16 %v4530, %v4529
        %v4593 = vpack.c.b16 %v4532, %v4531
        %v4594 = vpack.c.b16 %v4534, %v4533
        %v4595 = vpack.c.b16 %v4536, %v4535
        %v4596 = vpack.c.b16 %v4538, %v4537
        %v4597 = vpack.c.b16 %v4540, %v4539
        %v4598 = vpack.c.b16 %v4542, %v4541
        %v4599 = vpack.c.b16 %v4544, %v4543
        %v4600 = vpack.c.b16 %v4546, %v4545
        %v4601 = vpack.c.b16 %v4548, %v4547
        %v4602 = vpack.c.b16 %v4550, %v4549
        %v4603 = vpack.c.b16 %v4552, %v4551
        %v4604 = vpack.c.b16 %v4554, %v4553
        %v4605 = vpack.c.b16 %v4556, %v4555
        %v4606 = vpack.c.b16 %v4558, %v4557
        %v4607 = vpack.c.b16 %v4560, %v4559
        %v4608 = vpack.c.b16 %v4562, %v4561
        %v4609 = vpack.c.b16 %v4564, %v4563
        %v4610 = vpack.c.b16 %v4566, %v4565
        %v4611 = vpack.c.b16 %v4568, %v4567
        %v4612 = vpack.c.b16 %v4570, %v4569
        %v4613 = vpack.c.b16 %v4572, %v4571
        %v4614 = vpack.c.b16 %v4574, %v4573
        %v4615 = vpack.c.b16 %v4576, %v4575
        %v4616 = vpack.c.b16 %v4578, %v4577
        %v4617 = vpack.c.b16 %v4580, %v4579
        %v4618 = vpack.c.b16 %v4582, %v4581
        %v4619 = vpack.c.b16 %v4584, %v4583
        %v4620 = vpack.c.b16 %v4586, %v4585
        %v4621 = vpack.c.b16 %v4588, %v4587
        %v4622 = vpack.c.b16 %v4590, %v4589
        %4655 = vmatprep.subr.bf16.mxu0 0
        %4656 = vmatpush1.bf16.msra.mxu0 %v4598
        %4657 = vmatprep.subr.bf16.mxu0 0
        %4658 = vmatpush1.bf16.msra.mxu0 %v4597
        %4659 = vmatprep.subr.bf16.mxu0 0
        %4660 = vmatpush1.bf16.msra.mxu0 %v4596
        %4661 = vmatprep.subr.bf16.mxu0 0
        %4662 = vmatpush1.bf16.msra.mxu0 %v4595
        %4663 = vmatprep.subr.bf16.mxu0 0
        %4664 = vmatpush1.bf16.msra.mxu0 %v4594
        %4665 = vmatprep.subr.bf16.mxu0 0
        %4666 = vmatpush1.bf16.msra.mxu0 %v4593
        %4667 = vmatprep.subr.bf16.mxu0 0
        %4668 = vmatpush1.bf16.msra.mxu0 %v4592
        %4669 = vmatprep.subr.bf16.mxu0 0
        %4670 = vmatpush1.bf16.msra.mxu0 %v4591
        %4671 = vmatprep.subr.bf16.mxu0 0
        %4672 = vmatpush2.bf16.msra.mxu0 %v4606
        %4673 = vmatprep.subr.bf16.mxu0 0
        %4674 = vmatpush2.bf16.msra.mxu0 %v4605
        %4675 = vmatprep.subr.bf16.mxu0 0
        %4676 = vmatpush2.bf16.msra.mxu0 %v4604
        %4677 = vmatprep.subr.bf16.mxu0 0
        %4678 = vmatpush2.bf16.msra.mxu0 %v4603
        %4679 = vmatprep.subr.bf16.mxu0 0
        %4680 = vmatpush2.bf16.msra.mxu0 %v4602
        %4681 = vmatprep.subr.bf16.mxu0 0
        %4682 = vmatpush2.bf16.msra.mxu0 %v4601
        %4683 = vmatprep.subr.bf16.mxu0 0
        %4684 = vmatpush2.bf16.msra.mxu0 %v4600
        %4685 = vmatprep.subr.bf16.mxu0 0
        %4686 = vmatpush2.bf16.msra.mxu0 %v4599
        %4687 = vmatprep.mubr.bf16.mxu0 %v4456
        %4688 = vmatmul.mubr.bf16.gmra.mxu0 %v4455
        %v4689 = vpop.f32.mrf.mxu0
        %v4690 = vadd.f32 %v4462, %v4689
        %v4691 = vpop.f32.mrf.mxu0
        %v4692 = vpop.f32.mrf.mxu0
        %v4693 = vadd.f32 %v4462, %v4692
        %v4694 = vpop.f32.mrf.mxu0
        %4695 = vdwg.mxu0
        %4696 = vmatprep.subr.bf16.mxu0 0
        %4697 = vmatpush1.bf16.msra.mxu0 %v4614
        %4698 = vmatprep.subr.bf16.mxu0 0
        %4699 = vmatpush1.bf16.msra.mxu0 %v4613
        %4700 = vmatprep.subr.bf16.mxu0 0
        %4701 = vmatpush1.bf16.msra.mxu0 %v4612
        %4702 = vmatprep.subr.bf16.mxu0 0
        %4703 = vmatpush1.bf16.msra.mxu0 %v4611
        %4704 = vmatprep.subr.bf16.mxu0 0
        %4705 = vmatpush1.bf16.msra.mxu0 %v4610
        %4706 = vmatprep.subr.bf16.mxu0 0
        %4707 = vmatpush1.bf16.msra.mxu0 %v4609
        %4708 = vmatprep.subr.bf16.mxu0 0
        %4709 = vmatpush1.bf16.msra.mxu0 %v4608
        %4710 = vmatprep.subr.bf16.mxu0 0
        %4711 = vmatpush1.bf16.msra.mxu0 %v4607
        %4712 = vmatprep.subr.bf16.mxu0 0
        %4713 = vmatpush2.bf16.msra.mxu0 %v4622
        %4714 = vmatprep.subr.bf16.mxu0 0
        %4715 = vmatpush2.bf16.msra.mxu0 %v4621
        %4716 = vmatprep.subr.bf16.mxu0 0
        %4717 = vmatpush2.bf16.msra.mxu0 %v4620
        %4718 = vmatprep.subr.bf16.mxu0 0
        %4719 = vmatpush2.bf16.msra.mxu0 %v4619
        %4720 = vmatprep.subr.bf16.mxu0 0
        %4721 = vmatpush2.bf16.msra.mxu0 %v4618
        %4722 = vmatprep.subr.bf16.mxu0 0
        %4723 = vmatpush2.bf16.msra.mxu0 %v4617
        %4724 = vmatprep.subr.bf16.mxu0 0
        %4725 = vmatpush2.bf16.msra.mxu0 %v4616
        %4726 = vmatprep.subr.bf16.mxu0 0
        %4727 = vmatpush2.bf16.msra.mxu0 %v4615
        %4728 = vmatprep.mubr.bf16.mxu0 %v4458
        %4729 = vmatmul.mubr.bf16.gmra.mxu0 %v4457
        %v4730 = vpop.f32.mrf.mxu0
        %v4731 = vadd.f32 %v4690, %v4730
        %v4732 = vpop.f32.mrf.mxu0
        %v4733 = vpop.f32.mrf.mxu0
        %v4734 = vadd.f32 %v4693, %v4733
        %v4735 = vpop.f32.mrf.mxu0
        %4736 = vdwg.mxu0
        %v4737 = vadd.f32 %v4731, %v4060
        %v4738 = vadd.f32 %v4734, %v4061
        %v4739 = vlaneseq
        %v4740 = vshrl.u32 %v4739, 7
        %v4741 = vsub.s32 1, %v4740
        %v4742 = vrot.slane %v4064, %v4741
        %v4743 = vmul.f32 %v4737, %v4742
        %v4744 = vmul.f32 %v4738, %v4742
        %v4745 = vlaneseq
        %v4746 = vshrl.u32 %v4745, 7
        %v4747 = vsub.s32 2, %v4746
        %v4748 = vrot.slane %v4064, %v4747
        %v4749 = vadd.f32 %v4743, %v4748
        %v4750 = vadd.f32 %v4744, %v4748
        %v4751 = vld [vmem:[%s797 + $0x100] sm:$0xff]
        %v4752 = vld [vmem:[%s797 + $0x108] sm:$0xff]
        %v4753 = vld [vmem:[%s797 + $0x110] sm:$0xff]
        %v4754 = vld [vmem:[%s797 + $0x118] sm:$0xff]
        %v4755 = vld [vmem:[%s797 + $0x120] sm:$0xff]
        %v4756 = vld [vmem:[%s797 + $0x128] sm:$0xff]
        %v4757 = vld [vmem:[%s797 + $0x130] sm:$0xff]
        %v4758 = vld [vmem:[%s797 + $0x138] sm:$0xff]
        %v4759 = vld [vmem:[%s797 + $0x140] sm:$0xff]
        %v4760 = vld [vmem:[%s797 + $0x148] sm:$0xff]
        %v4761 = vld [vmem:[%s797 + $0x150] sm:$0xff]
        %v4762 = vld [vmem:[%s797 + $0x158] sm:$0xff]
        %v4763 = vld [vmem:[%s797 + $0x160] sm:$0xff]
        %v4764 = vld [vmem:[%s797 + $0x168] sm:$0xff]
        %v4765 = vld [vmem:[%s797 + $0x170] sm:$0xff]
        %v4766 = vld [vmem:[%s797 + $0x178] sm:$0xff]
        %v4767 = vld [vmem:[%s797 + $0x180] sm:$0xff]
        %v4768 = vld [vmem:[%s797 + $0x188] sm:$0xff]
        %v4769 = vld [vmem:[%s797 + $0x190] sm:$0xff]
        %v4770 = vld [vmem:[%s797 + $0x198] sm:$0xff]
        %v4771 = vld [vmem:[%s797 + $0x1a0] sm:$0xff]
        %v4772 = vld [vmem:[%s797 + $0x1a8] sm:$0xff]
        %v4773 = vld [vmem:[%s797 + $0x1b0] sm:$0xff]
        %v4774 = vld [vmem:[%s797 + $0x1b8] sm:$0xff]
        %v4775 = vld [vmem:[%s797 + $0x1c0] sm:$0xff]
        %v4776 = vld [vmem:[%s797 + $0x1c8] sm:$0xff]
        %v4777 = vld [vmem:[%s797 + $0x1d0] sm:$0xff]
        %v4778 = vld [vmem:[%s797 + $0x1d8] sm:$0xff]
        %v4779 = vld [vmem:[%s797 + $0x1e0] sm:$0xff]
        %v4780 = vld [vmem:[%s797 + $0x1e8] sm:$0xff]
        %v4781 = vld [vmem:[%s797 + $0x1f0] sm:$0xff]
        %v4782 = vld [vmem:[%s797 + $0x1f8] sm:$0xff]
        %v4783 = vpack.c.bf16 %v4750, %v4749
        %v4784 = vlaneseq
        %v4785 = vshrl.u32 %v4784, 7
        %v4786 = vsub.s32 1, %v4785
        %v4787 = vrot.slane %v4062, %v4786
        %v4788 = vlaneseq
        %v4789 = vshrl.u32 %v4788, 7
        %v4790 = vsub.s32 5, %v4789
        %v4791 = vrot.slane %v4062, %v4790
        %v4792 = vlaneseq
        %v4793 = vshrl.u32 %v4792, 7
        %v4794 = vsub.s32 1, %v4793
        %v4795 = vrot.slane %v4063, %v4794
        %v4796 = vlaneseq
        %v4797 = vshrl.u32 %v4796, 7
        %v4798 = vsub.s32 5, %v4797
        %v4799 = vrot.slane %v4063, %v4798
        %v4804 = vlaneseq
        %v4805 = vshrl.u32 %v4804, 7
        %v4806 = vsub.s32 1, %v4805
        %v4807 = vrot.slane %v4787, %v4806
        %v4808 = vlaneseq
        %v4809 = vshrl.u32 %v4808, 7
        %v4810 = vsub.s32 1, %v4809
        %v4811 = vrot.slane %v4791, %v4810
        %v4812 = vlaneseq
        %v4813 = vshrl.u32 %v4812, 7
        %v4814 = vsub.s32 1, %v4813
        %v4815 = vrot.slane %v4795, %v4814
        %v4816 = vlaneseq
        %v4817 = vshrl.u32 %v4816, 7
        %v4818 = vsub.s32 1, %v4817
        %v4819 = vrot.slane %v4799, %v4818
        %v4852 = vunpack.c.l.b16 %v4751
        %v4853 = vunpack.c.h.b16 %v4751
        %v4854 = vunpack.c.l.b16 %v4752
        %v4855 = vunpack.c.h.b16 %v4752
        %v4856 = vunpack.c.l.b16 %v4753
        %v4857 = vunpack.c.h.b16 %v4753
        %v4858 = vunpack.c.l.b16 %v4754
        %v4859 = vunpack.c.h.b16 %v4754
        %v4860 = vunpack.c.l.b16 %v4755
        %v4861 = vunpack.c.h.b16 %v4755
        %v4862 = vunpack.c.l.b16 %v4756
        %v4863 = vunpack.c.h.b16 %v4756
        %v4864 = vunpack.c.l.b16 %v4757
        %v4865 = vunpack.c.h.b16 %v4757
        %v4866 = vunpack.c.l.b16 %v4758
        %v4867 = vunpack.c.h.b16 %v4758
        %v4868 = vunpack.c.l.b16 %v4759
        %v4869 = vunpack.c.h.b16 %v4759
        %v4870 = vunpack.c.l.b16 %v4760
        %v4871 = vunpack.c.h.b16 %v4760
        %v4872 = vunpack.c.l.b16 %v4761
        %v4873 = vunpack.c.h.b16 %v4761
        %v4874 = vunpack.c.l.b16 %v4762
        %v4875 = vunpack.c.h.b16 %v4762
        %v4876 = vunpack.c.l.b16 %v4763
        %v4877 = vunpack.c.h.b16 %v4763
        %v4878 = vunpack.c.l.b16 %v4764
        %v4879 = vunpack.c.h.b16 %v4764
        %v4880 = vunpack.c.l.b16 %v4765
        %v4881 = vunpack.c.h.b16 %v4765
        %v4882 = vunpack.c.l.b16 %v4766
        %v4883 = vunpack.c.h.b16 %v4766
        %v4884 = vunpack.c.l.b16 %v4767
        %v4885 = vunpack.c.h.b16 %v4767
        %v4886 = vunpack.c.l.b16 %v4768
        %v4887 = vunpack.c.h.b16 %v4768
        %v4888 = vunpack.c.l.b16 %v4769
        %v4889 = vunpack.c.h.b16 %v4769
        %v4890 = vunpack.c.l.b16 %v4770
        %v4891 = vunpack.c.h.b16 %v4770
        %v4892 = vunpack.c.l.b16 %v4771
        %v4893 = vunpack.c.h.b16 %v4771
        %v4894 = vunpack.c.l.b16 %v4772
        %v4895 = vunpack.c.h.b16 %v4772
        %v4896 = vunpack.c.l.b16 %v4773
        %v4897 = vunpack.c.h.b16 %v4773
        %v4898 = vunpack.c.l.b16 %v4774
        %v4899 = vunpack.c.h.b16 %v4774
        %v4900 = vunpack.c.l.b16 %v4775
        %v4901 = vunpack.c.h.b16 %v4775
        %v4902 = vunpack.c.l.b16 %v4776
        %v4903 = vunpack.c.h.b16 %v4776
        %v4904 = vunpack.c.l.b16 %v4777
        %v4905 = vunpack.c.h.b16 %v4777
        %v4906 = vunpack.c.l.b16 %v4778
        %v4907 = vunpack.c.h.b16 %v4778
        %v4908 = vunpack.c.l.b16 %v4779
        %v4909 = vunpack.c.h.b16 %v4779
        %v4910 = vunpack.c.l.b16 %v4780
        %v4911 = vunpack.c.h.b16 %v4780
        %v4912 = vunpack.c.l.b16 %v4781
        %v4913 = vunpack.c.h.b16 %v4781
        %v4914 = vunpack.c.l.b16 %v4782
        %v4915 = vunpack.c.h.b16 %v4782
        %v4916 = vpack.c.b16 %v4856, %v4852
        %v4917 = vpack.c.b16 %v4857, %v4853
        %v4918 = vpack.c.b16 %v4858, %v4854
        %v4919 = vpack.c.b16 %v4859, %v4855
        %v4920 = vpack.c.b16 %v4864, %v4860
        %v4921 = vpack.c.b16 %v4865, %v4861
        %v4922 = vpack.c.b16 %v4866, %v4862
        %v4923 = vpack.c.b16 %v4867, %v4863
        %v4924 = vpack.c.b16 %v4872, %v4868
        %v4925 = vpack.c.b16 %v4873, %v4869
        %v4926 = vpack.c.b16 %v4874, %v4870
        %v4927 = vpack.c.b16 %v4875, %v4871
        %v4928 = vpack.c.b16 %v4880, %v4876
        %v4929 = vpack.c.b16 %v4881, %v4877
        %v4930 = vpack.c.b16 %v4882, %v4878
        %v4931 = vpack.c.b16 %v4883, %v4879
        %v4932 = vpack.c.b16 %v4888, %v4884
        %v4933 = vpack.c.b16 %v4889, %v4885
        %v4934 = vpack.c.b16 %v4890, %v4886
        %v4935 = vpack.c.b16 %v4891, %v4887
        %v4936 = vpack.c.b16 %v4896, %v4892
        %v4937 = vpack.c.b16 %v4897, %v4893
        %v4938 = vpack.c.b16 %v4898, %v4894
        %v4939 = vpack.c.b16 %v4899, %v4895
        %v4940 = vpack.c.b16 %v4904, %v4900
        %v4941 = vpack.c.b16 %v4905, %v4901
        %v4942 = vpack.c.b16 %v4906, %v4902
        %v4943 = vpack.c.b16 %v4907, %v4903
        %v4944 = vpack.c.b16 %v4912, %v4908
        %v4945 = vpack.c.b16 %v4913, %v4909
        %v4946 = vpack.c.b16 %v4914, %v4910
        %v4947 = vpack.c.b16 %v4915, %v4911
        %4980 = vmatprep.subr.bf16.mxu0 %v4945
        %4981 = vmatpush1.bf16.msra.mxu0 %v4944
        %4982 = vmatprep.subr.bf16.mxu0 %v4941
        %4983 = vmatpush1.bf16.msra.mxu0 %v4940
        %4984 = vmatprep.subr.bf16.mxu0 %v4937
        %4985 = vmatpush1.bf16.msra.mxu0 %v4936
        %4986 = vmatprep.subr.bf16.mxu0 %v4933
        %4987 = vmatpush1.bf16.msra.mxu0 %v4932
        %4988 = vmatprep.subr.bf16.mxu0 %v4929
        %4989 = vmatpush1.bf16.msra.mxu0 %v4928
        %4990 = vmatprep.subr.bf16.mxu0 %v4925
        %4991 = vmatpush1.bf16.msra.mxu0 %v4924
        %4992 = vmatprep.subr.bf16.mxu0 %v4921
        %4993 = vmatpush1.bf16.msra.mxu0 %v4920
        %4994 = vmatprep.subr.bf16.mxu0 %v4917
        %4995 = vmatpush1.bf16.msra.mxu0 %v4916
        %4996 = vmatprep.subr.bf16.mxu0 0
        %4997 = vmatpush2.bf16.msra.mxu0 0
        %4998 = vmatprep.subr.bf16.mxu0 0
        %4999 = vmatpush2.bf16.msra.mxu0 0
        %5000 = vmatprep.subr.bf16.mxu0 0
        %5001 = vmatpush2.bf16.msra.mxu0 0
        %5002 = vmatprep.subr.bf16.mxu0 0
        %5003 = vmatpush2.bf16.msra.mxu0 0
        %5004 = vmatprep.subr.bf16.mxu0 0
        %5005 = vmatpush2.bf16.msra.mxu0 0
        %5006 = vmatprep.subr.bf16.mxu0 0
        %5007 = vmatpush2.bf16.msra.mxu0 0
        %5008 = vmatprep.subr.bf16.mxu0 0
        %5009 = vmatpush2.bf16.msra.mxu0 0
        %5010 = vmatprep.subr.bf16.mxu0 0
        %5011 = vmatpush2.bf16.msra.mxu0 0
        %5012 = vmatprep.mubr.bf16.mxu0 0
        %5013 = vmatmul.mubr.bf16.gmra.mxu0 %v4783
        %v5014 = vpop.f32.mrf.mxu0
        %v5015 = vadd.f32 %v4807, %v5014
        %v5016 = vpop.f32.mrf.mxu0
        %v5017 = vadd.f32 %v4811, %v5016
        %v5018 = vpop.f32.mrf.mxu0
        %v5019 = vadd.f32 %v4807, %v5018
        %v5020 = vpop.f32.mrf.mxu0
        %v5021 = vadd.f32 %v4811, %v5020
        %5022 = vdwg.mxu0
        %5023 = vmatprep.subr.bf16.mxu0 %v4947
        %5024 = vmatpush1.bf16.msra.mxu0 %v4946
        %5025 = vmatprep.subr.bf16.mxu0 %v4943
        %5026 = vmatpush1.bf16.msra.mxu0 %v4942
        %5027 = vmatprep.subr.bf16.mxu0 %v4939
        %5028 = vmatpush1.bf16.msra.mxu0 %v4938
        %5029 = vmatprep.subr.bf16.mxu0 %v4935
        %5030 = vmatpush1.bf16.msra.mxu0 %v4934
        %5031 = vmatprep.subr.bf16.mxu0 %v4931
        %5032 = vmatpush1.bf16.msra.mxu0 %v4930
        %5033 = vmatprep.subr.bf16.mxu0 %v4927
        %5034 = vmatpush1.bf16.msra.mxu0 %v4926
        %5035 = vmatprep.subr.bf16.mxu0 %v4923
        %5036 = vmatpush1.bf16.msra.mxu0 %v4922
        %5037 = vmatprep.subr.bf16.mxu0 %v4919
        %5038 = vmatpush1.bf16.msra.mxu0 %v4918
        %5039 = vmatprep.subr.bf16.mxu0 0
        %5040 = vmatpush2.bf16.msra.mxu0 0
        %5041 = vmatprep.subr.bf16.mxu0 0
        %5042 = vmatpush2.bf16.msra.mxu0 0
        %5043 = vmatprep.subr.bf16.mxu0 0
        %5044 = vmatpush2.bf16.msra.mxu0 0
        %5045 = vmatprep.subr.bf16.mxu0 0
        %5046 = vmatpush2.bf16.msra.mxu0 0
        %5047 = vmatprep.subr.bf16.mxu0 0
        %5048 = vmatpush2.bf16.msra.mxu0 0
        %5049 = vmatprep.subr.bf16.mxu0 0
        %5050 = vmatpush2.bf16.msra.mxu0 0
        %5051 = vmatprep.subr.bf16.mxu0 0
        %5052 = vmatpush2.bf16.msra.mxu0 0
        %5053 = vmatprep.subr.bf16.mxu0 0
        %5054 = vmatpush2.bf16.msra.mxu0 0
        %5055 = vmatprep.mubr.bf16.mxu0 0
        %5056 = vmatmul.mubr.bf16.gmra.mxu0 %v4783
        %v5057 = vpop.f32.mrf.mxu0
        %v5058 = vadd.f32 %v4815, %v5057
        %v5059 = vpop.f32.mrf.mxu0
        %v5060 = vadd.f32 %v4819, %v5059
        %v5061 = vpop.f32.mrf.mxu0
        %v5062 = vadd.f32 %v4815, %v5061
        %v5063 = vpop.f32.mrf.mxu0
        %v5064 = vadd.f32 %v4819, %v5063
        %5065 = vdwg.mxu0
        %v5066 = vmax.f32 %v5015, 0.0
        %v5067 = vmax.f32 %v5017, 0.0
        %v5068 = vmax.f32 %v5058, 0.0
        %v5069 = vmax.f32 %v5060, 0.0
        %v5070 = vmax.f32 %v5019, 0.0
        %v5071 = vmax.f32 %v5021, 0.0
        %v5072 = vmax.f32 %v5062, 0.0
        %v5073 = vmax.f32 %v5064, 0.0
        %v5074 = vld [vmem:[%s806 + $0x100] sm:$0xf]
        %v5075 = vld [vmem:[%s806 + $0x104] sm:$0xf]
        %v5076 = vld [vmem:[%s806 + $0x108] sm:$0xf]
        %v5077 = vld [vmem:[%s806 + $0x10c] sm:$0xf]
        %v5078 = vld [vmem:[%s806 + $0x110] sm:$0xf]
        %v5079 = vld [vmem:[%s806 + $0x114] sm:$0xf]
        %v5080 = vld [vmem:[%s806 + $0x118] sm:$0xf]
        %v5081 = vld [vmem:[%s806 + $0x11c] sm:$0xf]
        %v5082 = vld [vmem:[%s806 + $0x120] sm:$0xf]
        %v5083 = vld [vmem:[%s806 + $0x124] sm:$0xf]
        %v5084 = vld [vmem:[%s806 + $0x128] sm:$0xf]
        %v5085 = vld [vmem:[%s806 + $0x12c] sm:$0xf]
        %v5086 = vld [vmem:[%s806 + $0x130] sm:$0xf]
        %v5087 = vld [vmem:[%s806 + $0x134] sm:$0xf]
        %v5088 = vld [vmem:[%s806 + $0x138] sm:$0xf]
        %v5089 = vld [vmem:[%s806 + $0x13c] sm:$0xf]
        %v5090 = vld [vmem:[%s806 + $0x140] sm:$0xf]
        %v5091 = vld [vmem:[%s806 + $0x144] sm:$0xf]
        %v5092 = vld [vmem:[%s806 + $0x148] sm:$0xf]
        %v5093 = vld [vmem:[%s806 + $0x14c] sm:$0xf]
        %v5094 = vld [vmem:[%s806 + $0x150] sm:$0xf]
        %v5095 = vld [vmem:[%s806 + $0x154] sm:$0xf]
        %v5096 = vld [vmem:[%s806 + $0x158] sm:$0xf]
        %v5097 = vld [vmem:[%s806 + $0x15c] sm:$0xf]
        %v5098 = vld [vmem:[%s806 + $0x160] sm:$0xf]
        %v5099 = vld [vmem:[%s806 + $0x164] sm:$0xf]
        %v5100 = vld [vmem:[%s806 + $0x168] sm:$0xf]
        %v5101 = vld [vmem:[%s806 + $0x16c] sm:$0xf]
        %v5102 = vld [vmem:[%s806 + $0x170] sm:$0xf]
        %v5103 = vld [vmem:[%s806 + $0x174] sm:$0xf]
        %v5104 = vld [vmem:[%s806 + $0x178] sm:$0xf]
        %v5105 = vld [vmem:[%s806 + $0x17c] sm:$0xf]
        %v5106 = vld [vmem:[%s806 + $0x180] sm:$0xf]
        %v5107 = vld [vmem:[%s806 + $0x184] sm:$0xf]
        %v5108 = vld [vmem:[%s806 + $0x188] sm:$0xf]
        %v5109 = vld [vmem:[%s806 + $0x18c] sm:$0xf]
        %v5110 = vld [vmem:[%s806 + $0x190] sm:$0xf]
        %v5111 = vld [vmem:[%s806 + $0x194] sm:$0xf]
        %v5112 = vld [vmem:[%s806 + $0x198] sm:$0xf]
        %v5113 = vld [vmem:[%s806 + $0x19c] sm:$0xf]
        %v5114 = vld [vmem:[%s806 + $0x1a0] sm:$0xf]
        %v5115 = vld [vmem:[%s806 + $0x1a4] sm:$0xf]
        %v5116 = vld [vmem:[%s806 + $0x1a8] sm:$0xf]
        %v5117 = vld [vmem:[%s806 + $0x1ac] sm:$0xf]
        %v5118 = vld [vmem:[%s806 + $0x1b0] sm:$0xf]
        %v5119 = vld [vmem:[%s806 + $0x1b4] sm:$0xf]
        %v5120 = vld [vmem:[%s806 + $0x1b8] sm:$0xf]
        %v5121 = vld [vmem:[%s806 + $0x1bc] sm:$0xf]
        %v5122 = vld [vmem:[%s806 + $0x1c0] sm:$0xf]
        %v5123 = vld [vmem:[%s806 + $0x1c4] sm:$0xf]
        %v5124 = vld [vmem:[%s806 + $0x1c8] sm:$0xf]
        %v5125 = vld [vmem:[%s806 + $0x1cc] sm:$0xf]
        %v5126 = vld [vmem:[%s806 + $0x1d0] sm:$0xf]
        %v5127 = vld [vmem:[%s806 + $0x1d4] sm:$0xf]
        %v5128 = vld [vmem:[%s806 + $0x1d8] sm:$0xf]
        %v5129 = vld [vmem:[%s806 + $0x1dc] sm:$0xf]
        %v5130 = vld [vmem:[%s806 + $0x1e0] sm:$0xf]
        %v5131 = vld [vmem:[%s806 + $0x1e4] sm:$0xf]
        %v5132 = vld [vmem:[%s806 + $0x1e8] sm:$0xf]
        %v5133 = vld [vmem:[%s806 + $0x1ec] sm:$0xf]
        %v5134 = vld [vmem:[%s806 + $0x1f0] sm:$0xf]
        %v5135 = vld [vmem:[%s806 + $0x1f4] sm:$0xf]
        %v5136 = vld [vmem:[%s806 + $0x1f8] sm:$0xf]
        %v5137 = vld [vmem:[%s806 + $0x1fc] sm:$0xf]
        %v5138 = vpack.c.bf16 %v5070, %v5066
        %v5139 = vpack.c.bf16 %v5071, %v5067
        %v5140 = vpack.c.bf16 %v5072, %v5068
        %v5141 = vpack.c.bf16 %v5073, %v5069
        %v5142 = vlaneseq
        %v5143 = vshrl.u32 %v5142, 7
        %v5144 = vsub.s32 3, %v5143
        %v5145 = vrot.slane %v4064, %v5144
        %v5210 = vunpack.c.l.b16 %v5074
        %v5211 = vunpack.c.l.b16 %v5075
        %v5212 = vunpack.c.l.b16 %v5076
        %v5213 = vunpack.c.l.b16 %v5077
        %v5214 = vunpack.c.l.b16 %v5078
        %v5215 = vunpack.c.l.b16 %v5079
        %v5216 = vunpack.c.l.b16 %v5080
        %v5217 = vunpack.c.l.b16 %v5081
        %v5218 = vunpack.c.l.b16 %v5082
        %v5219 = vunpack.c.l.b16 %v5083
        %v5220 = vunpack.c.l.b16 %v5084
        %v5221 = vunpack.c.l.b16 %v5085
        %v5222 = vunpack.c.l.b16 %v5086
        %v5223 = vunpack.c.l.b16 %v5087
        %v5224 = vunpack.c.l.b16 %v5088
        %v5225 = vunpack.c.l.b16 %v5089
        %v5226 = vunpack.c.l.b16 %v5090
        %v5227 = vunpack.c.l.b16 %v5091
        %v5228 = vunpack.c.l.b16 %v5092
        %v5229 = vunpack.c.l.b16 %v5093
        %v5230 = vunpack.c.l.b16 %v5094
        %v5231 = vunpack.c.l.b16 %v5095
        %v5232 = vunpack.c.l.b16 %v5096
        %v5233 = vunpack.c.l.b16 %v5097
        %v5234 = vunpack.c.l.b16 %v5098
        %v5235 = vunpack.c.l.b16 %v5099
        %v5236 = vunpack.c.l.b16 %v5100
        %v5237 = vunpack.c.l.b16 %v5101
        %v5238 = vunpack.c.l.b16 %v5102
        %v5239 = vunpack.c.l.b16 %v5103
        %v5240 = vunpack.c.l.b16 %v5104
        %v5241 = vunpack.c.l.b16 %v5105
        %v5242 = vunpack.c.l.b16 %v5106
        %v5243 = vunpack.c.l.b16 %v5107
        %v5244 = vunpack.c.l.b16 %v5108
        %v5245 = vunpack.c.l.b16 %v5109
        %v5246 = vunpack.c.l.b16 %v5110
        %v5247 = vunpack.c.l.b16 %v5111
        %v5248 = vunpack.c.l.b16 %v5112
        %v5249 = vunpack.c.l.b16 %v5113
        %v5250 = vunpack.c.l.b16 %v5114
        %v5251 = vunpack.c.l.b16 %v5115
        %v5252 = vunpack.c.l.b16 %v5116
        %v5253 = vunpack.c.l.b16 %v5117
        %v5254 = vunpack.c.l.b16 %v5118
        %v5255 = vunpack.c.l.b16 %v5119
        %v5256 = vunpack.c.l.b16 %v5120
        %v5257 = vunpack.c.l.b16 %v5121
        %v5258 = vunpack.c.l.b16 %v5122
        %v5259 = vunpack.c.l.b16 %v5123
        %v5260 = vunpack.c.l.b16 %v5124
        %v5261 = vunpack.c.l.b16 %v5125
        %v5262 = vunpack.c.l.b16 %v5126
        %v5263 = vunpack.c.l.b16 %v5127
        %v5264 = vunpack.c.l.b16 %v5128
        %v5265 = vunpack.c.l.b16 %v5129
        %v5266 = vunpack.c.l.b16 %v5130
        %v5267 = vunpack.c.l.b16 %v5131
        %v5268 = vunpack.c.l.b16 %v5132
        %v5269 = vunpack.c.l.b16 %v5133
        %v5270 = vunpack.c.l.b16 %v5134
        %v5271 = vunpack.c.l.b16 %v5135
        %v5272 = vunpack.c.l.b16 %v5136
        %v5273 = vunpack.c.l.b16 %v5137
        %v5274 = vpack.c.b16 %v5211, %v5210
        %v5275 = vpack.c.b16 %v5213, %v5212
        %v5276 = vpack.c.b16 %v5215, %v5214
        %v5277 = vpack.c.b16 %v5217, %v5216
        %v5278 = vpack.c.b16 %v5219, %v5218
        %v5279 = vpack.c.b16 %v5221, %v5220
        %v5280 = vpack.c.b16 %v5223, %v5222
        %v5281 = vpack.c.b16 %v5225, %v5224
        %v5282 = vpack.c.b16 %v5227, %v5226
        %v5283 = vpack.c.b16 %v5229, %v5228
        %v5284 = vpack.c.b16 %v5231, %v5230
        %v5285 = vpack.c.b16 %v5233, %v5232
        %v5286 = vpack.c.b16 %v5235, %v5234
        %v5287 = vpack.c.b16 %v5237, %v5236
        %v5288 = vpack.c.b16 %v5239, %v5238
        %v5289 = vpack.c.b16 %v5241, %v5240
        %v5290 = vpack.c.b16 %v5243, %v5242
        %v5291 = vpack.c.b16 %v5245, %v5244
        %v5292 = vpack.c.b16 %v5247, %v5246
        %v5293 = vpack.c.b16 %v5249, %v5248
        %v5294 = vpack.c.b16 %v5251, %v5250
        %v5295 = vpack.c.b16 %v5253, %v5252
        %v5296 = vpack.c.b16 %v5255, %v5254
        %v5297 = vpack.c.b16 %v5257, %v5256
        %v5298 = vpack.c.b16 %v5259, %v5258
        %v5299 = vpack.c.b16 %v5261, %v5260
        %v5300 = vpack.c.b16 %v5263, %v5262
        %v5301 = vpack.c.b16 %v5265, %v5264
        %v5302 = vpack.c.b16 %v5267, %v5266
        %v5303 = vpack.c.b16 %v5269, %v5268
        %v5304 = vpack.c.b16 %v5271, %v5270
        %v5305 = vpack.c.b16 %v5273, %v5272
        %5338 = vmatprep.subr.bf16.mxu0 0
        %5339 = vmatpush1.bf16.msra.mxu0 %v5281
        %5340 = vmatprep.subr.bf16.mxu0 0
        %5341 = vmatpush1.bf16.msra.mxu0 %v5280
        %5342 = vmatprep.subr.bf16.mxu0 0
        %5343 = vmatpush1.bf16.msra.mxu0 %v5279
        %5344 = vmatprep.subr.bf16.mxu0 0
        %5345 = vmatpush1.bf16.msra.mxu0 %v5278
        %5346 = vmatprep.subr.bf16.mxu0 0
        %5347 = vmatpush1.bf16.msra.mxu0 %v5277
        %5348 = vmatprep.subr.bf16.mxu0 0
        %5349 = vmatpush1.bf16.msra.mxu0 %v5276
        %5350 = vmatprep.subr.bf16.mxu0 0
        %5351 = vmatpush1.bf16.msra.mxu0 %v5275
        %5352 = vmatprep.subr.bf16.mxu0 0
        %5353 = vmatpush1.bf16.msra.mxu0 %v5274
        %5354 = vmatprep.subr.bf16.mxu0 0
        %5355 = vmatpush2.bf16.msra.mxu0 %v5289
        %5356 = vmatprep.subr.bf16.mxu0 0
        %5357 = vmatpush2.bf16.msra.mxu0 %v5288
        %5358 = vmatprep.subr.bf16.mxu0 0
        %5359 = vmatpush2.bf16.msra.mxu0 %v5287
        %5360 = vmatprep.subr.bf16.mxu0 0
        %5361 = vmatpush2.bf16.msra.mxu0 %v5286
        %5362 = vmatprep.subr.bf16.mxu0 0
        %5363 = vmatpush2.bf16.msra.mxu0 %v5285
        %5364 = vmatprep.subr.bf16.mxu0 0
        %5365 = vmatpush2.bf16.msra.mxu0 %v5284
        %5366 = vmatprep.subr.bf16.mxu0 0
        %5367 = vmatpush2.bf16.msra.mxu0 %v5283
        %5368 = vmatprep.subr.bf16.mxu0 0
        %5369 = vmatpush2.bf16.msra.mxu0 %v5282
        %5370 = vmatprep.mubr.bf16.mxu0 %v5139
        %5371 = vmatmul.mubr.bf16.gmra.mxu0 %v5138
        %v5372 = vpop.f32.mrf.mxu0
        %v5373 = vadd.f32 %v5145, %v5372
        %v5374 = vpop.f32.mrf.mxu0
        %v5375 = vpop.f32.mrf.mxu0
        %v5376 = vadd.f32 %v5145, %v5375
        %v5377 = vpop.f32.mrf.mxu0
        %5378 = vdwg.mxu0
        %5379 = vmatprep.subr.bf16.mxu0 0
        %5380 = vmatpush1.bf16.msra.mxu0 %v5297
        %5381 = vmatprep.subr.bf16.mxu0 0
        %5382 = vmatpush1.bf16.msra.mxu0 %v5296
        %5383 = vmatprep.subr.bf16.mxu0 0
        %5384 = vmatpush1.bf16.msra.mxu0 %v5295
        %5385 = vmatprep.subr.bf16.mxu0 0
        %5386 = vmatpush1.bf16.msra.mxu0 %v5294
        %5387 = vmatprep.subr.bf16.mxu0 0
        %5388 = vmatpush1.bf16.msra.mxu0 %v5293
        %5389 = vmatprep.subr.bf16.mxu0 0
        %5390 = vmatpush1.bf16.msra.mxu0 %v5292
        %5391 = vmatprep.subr.bf16.mxu0 0
        %5392 = vmatpush1.bf16.msra.mxu0 %v5291
        %5393 = vmatprep.subr.bf16.mxu0 0
        %5394 = vmatpush1.bf16.msra.mxu0 %v5290
        %5395 = vmatprep.subr.bf16.mxu0 0
        %5396 = vmatpush2.bf16.msra.mxu0 %v5305
        %5397 = vmatprep.subr.bf16.mxu0 0
        %5398 = vmatpush2.bf16.msra.mxu0 %v5304
        %5399 = vmatprep.subr.bf16.mxu0 0
        %5400 = vmatpush2.bf16.msra.mxu0 %v5303
        %5401 = vmatprep.subr.bf16.mxu0 0
        %5402 = vmatpush2.bf16.msra.mxu0 %v5302
        %5403 = vmatprep.subr.bf16.mxu0 0
        %5404 = vmatpush2.bf16.msra.mxu0 %v5301
        %5405 = vmatprep.subr.bf16.mxu0 0
        %5406 = vmatpush2.bf16.msra.mxu0 %v5300
        %5407 = vmatprep.subr.bf16.mxu0 0
        %5408 = vmatpush2.bf16.msra.mxu0 %v5299
        %5409 = vmatprep.subr.bf16.mxu0 0
        %5410 = vmatpush2.bf16.msra.mxu0 %v5298
        %5411 = vmatprep.mubr.bf16.mxu0 %v5141
        %5412 = vmatmul.mubr.bf16.gmra.mxu0 %v5140
        %v5413 = vpop.f32.mrf.mxu0
        %v5414 = vadd.f32 %v5373, %v5413
        %v5415 = vpop.f32.mrf.mxu0
        %v5416 = vpop.f32.mrf.mxu0
        %v5417 = vadd.f32 %v5376, %v5416
        %v5418 = vpop.f32.mrf.mxu0
        %5419 = vdwg.mxu0
        %v5420 = vadd.f32 %v5414, %v4749
        %v5421 = vadd.f32 %v5417, %v4750
        %v5422 = vlaneseq
        %v5423 = vshrl.u32 %v5422, 7
        %v5424 = vsub.s32 4, %v5423
        %v5425 = vrot.slane %v4064, %v5424
        %v5426 = vmul.f32 %v5420, %v5425
        %v5427 = vmul.f32 %v5421, %v5425
        %v5428 = vlaneseq
        %v5429 = vshrl.u32 %v5428, 7
        %v5430 = vsub.s32 5, %v5429
        %v5431 = vrot.slane %v4064, %v5430
        %v5432 = vadd.f32 %v5426, %v5431
        %v5433 = vadd.f32 %v5427, %v5431
        %v5434 = vld [vmem:[%s797 + $0x200] sm:$0xff]
        %v5435 = vld [vmem:[%s797 + $0x208] sm:$0xff]
        %v5436 = vld [vmem:[%s797 + $0x210] sm:$0xff]
        %v5437 = vld [vmem:[%s797 + $0x218] sm:$0xff]
        %v5438 = vld [vmem:[%s797 + $0x220] sm:$0xff]
        %v5439 = vld [vmem:[%s797 + $0x228] sm:$0xff]
        %v5440 = vld [vmem:[%s797 + $0x230] sm:$0xff]
        %v5441 = vld [vmem:[%s797 + $0x238] sm:$0xff]
        %v5442 = vld [vmem:[%s797 + $0x240] sm:$0xff]
        %v5443 = vld [vmem:[%s797 + $0x248] sm:$0xff]
        %v5444 = vld [vmem:[%s797 + $0x250] sm:$0xff]
        %v5445 = vld [vmem:[%s797 + $0x258] sm:$0xff]
        %v5446 = vld [vmem:[%s797 + $0x260] sm:$0xff]
        %v5447 = vld [vmem:[%s797 + $0x268] sm:$0xff]
        %v5448 = vld [vmem:[%s797 + $0x270] sm:$0xff]
        %v5449 = vld [vmem:[%s797 + $0x278] sm:$0xff]
        %v5450 = vld [vmem:[%s797 + $0x280] sm:$0xff]
        %v5451 = vld [vmem:[%s797 + $0x288] sm:$0xff]
        %v5452 = vld [vmem:[%s797 + $0x290] sm:$0xff]
        %v5453 = vld [vmem:[%s797 + $0x298] sm:$0xff]
        %v5454 = vld [vmem:[%s797 + $0x2a0] sm:$0xff]
        %v5455 = vld [vmem:[%s797 + $0x2a8] sm:$0xff]
        %v5456 = vld [vmem:[%s797 + $0x2b0] sm:$0xff]
        %v5457 = vld [vmem:[%s797 + $0x2b8] sm:$0xff]
        %v5458 = vld [vmem:[%s797 + $0x2c0] sm:$0xff]
        %v5459 = vld [vmem:[%s797 + $0x2c8] sm:$0xff]
        %v5460 = vld [vmem:[%s797 + $0x2d0] sm:$0xff]
        %v5461 = vld [vmem:[%s797 + $0x2d8] sm:$0xff]
        %v5462 = vld [vmem:[%s797 + $0x2e0] sm:$0xff]
        %v5463 = vld [vmem:[%s797 + $0x2e8] sm:$0xff]
        %v5464 = vld [vmem:[%s797 + $0x2f0] sm:$0xff]
        %v5465 = vld [vmem:[%s797 + $0x2f8] sm:$0xff]
        %v5466 = vpack.c.bf16 %v5433, %v5432
        %v5467 = vlaneseq
        %v5468 = vshrl.u32 %v5467, 7
        %v5469 = vsub.s32 2, %v5468
        %v5470 = vrot.slane %v4062, %v5469
        %v5471 = vlaneseq
        %v5472 = vshrl.u32 %v5471, 7
        %v5473 = vsub.s32 6, %v5472
        %v5474 = vrot.slane %v4062, %v5473
        %v5475 = vlaneseq
        %v5476 = vshrl.u32 %v5475, 7
        %v5477 = vsub.s32 2, %v5476
        %v5478 = vrot.slane %v4063, %v5477
        %v5479 = vlaneseq
        %v5480 = vshrl.u32 %v5479, 7
        %v5481 = vsub.s32 6, %v5480
        %v5482 = vrot.slane %v4063, %v5481
        %v5487 = vlaneseq
        %v5488 = vshrl.u32 %v5487, 7
        %v5489 = vsub.s32 2, %v5488
        %v5490 = vrot.slane %v5470, %v5489
        %v5491 = vlaneseq
        %v5492 = vshrl.u32 %v5491, 7
        %v5493 = vsub.s32 2, %v5492
        %v5494 = vrot.slane %v5474, %v5493
        %v5495 = vlaneseq
        %v5496 = vshrl.u32 %v5495, 7
        %v5497 = vsub.s32 2, %v5496
        %v5498 = vrot.slane %v5478, %v5497
        %v5499 = vlaneseq
        %v5500 = vshrl.u32 %v5499, 7
        %v5501 = vsub.s32 2, %v5500
        %v5502 = vrot.slane %v5482, %v5501
        %v5535 = vunpack.c.l.b16 %v5434
        %v5536 = vunpack.c.h.b16 %v5434
        %v5537 = vunpack.c.l.b16 %v5435
        %v5538 = vunpack.c.h.b16 %v5435
        %v5539 = vunpack.c.l.b16 %v5436
        %v5540 = vunpack.c.h.b16 %v5436
        %v5541 = vunpack.c.l.b16 %v5437
        %v5542 = vunpack.c.h.b16 %v5437
        %v5543 = vunpack.c.l.b16 %v5438
        %v5544 = vunpack.c.h.b16 %v5438
        %v5545 = vunpack.c.l.b16 %v5439
        %v5546 = vunpack.c.h.b16 %v5439
        %v5547 = vunpack.c.l.b16 %v5440
        %v5548 = vunpack.c.h.b16 %v5440
        %v5549 = vunpack.c.l.b16 %v5441
        %v5550 = vunpack.c.h.b16 %v5441
        %v5551 = vunpack.c.l.b16 %v5442
        %v5552 = vunpack.c.h.b16 %v5442
        %v5553 = vunpack.c.l.b16 %v5443
        %v5554 = vunpack.c.h.b16 %v5443
        %v5555 = vunpack.c.l.b16 %v5444
        %v5556 = vunpack.c.h.b16 %v5444
        %v5557 = vunpack.c.l.b16 %v5445
        %v5558 = vunpack.c.h.b16 %v5445
        %v5559 = vunpack.c.l.b16 %v5446
        %v5560 = vunpack.c.h.b16 %v5446
        %v5561 = vunpack.c.l.b16 %v5447
        %v5562 = vunpack.c.h.b16 %v5447
        %v5563 = vunpack.c.l.b16 %v5448
        %v5564 = vunpack.c.h.b16 %v5448
        %v5565 = vunpack.c.l.b16 %v5449
        %v5566 = vunpack.c.h.b16 %v5449
        %v5567 = vunpack.c.l.b16 %v5450
        %v5568 = vunpack.c.h.b16 %v5450
        %v5569 = vunpack.c.l.b16 %v5451
        %v5570 = vunpack.c.h.b16 %v5451
        %v5571 = vunpack.c.l.b16 %v5452
        %v5572 = vunpack.c.h.b16 %v5452
        %v5573 = vunpack.c.l.b16 %v5453
        %v5574 = vunpack.c.h.b16 %v5453
        %v5575 = vunpack.c.l.b16 %v5454
        %v5576 = vunpack.c.h.b16 %v5454
        %v5577 = vunpack.c.l.b16 %v5455
        %v5578 = vunpack.c.h.b16 %v5455
        %v5579 = vunpack.c.l.b16 %v5456
        %v5580 = vunpack.c.h.b16 %v5456
        %v5581 = vunpack.c.l.b16 %v5457
        %v5582 = vunpack.c.h.b16 %v5457
        %v5583 = vunpack.c.l.b16 %v5458
        %v5584 = vunpack.c.h.b16 %v5458
        %v5585 = vunpack.c.l.b16 %v5459
        %v5586 = vunpack.c.h.b16 %v5459
        %v5587 = vunpack.c.l.b16 %v5460
        %v5588 = vunpack.c.h.b16 %v5460
        %v5589 = vunpack.c.l.b16 %v5461
        %v5590 = vunpack.c.h.b16 %v5461
        %v5591 = vunpack.c.l.b16 %v5462
        %v5592 = vunpack.c.h.b16 %v5462
        %v5593 = vunpack.c.l.b16 %v5463
        %v5594 = vunpack.c.h.b16 %v5463
        %v5595 = vunpack.c.l.b16 %v5464
        %v5596 = vunpack.c.h.b16 %v5464
        %v5597 = vunpack.c.l.b16 %v5465
        %v5598 = vunpack.c.h.b16 %v5465
        %v5599 = vpack.c.b16 %v5539, %v5535
        %v5600 = vpack.c.b16 %v5540, %v5536
        %v5601 = vpack.c.b16 %v5541, %v5537
        %v5602 = vpack.c.b16 %v5542, %v5538
        %v5603 = vpack.c.b16 %v5547, %v5543
        %v5604 = vpack.c.b16 %v5548, %v5544
        %v5605 = vpack.c.b16 %v5549, %v5545
        %v5606 = vpack.c.b16 %v5550, %v5546
        %v5607 = vpack.c.b16 %v5555, %v5551
        %v5608 = vpack.c.b16 %v5556, %v5552
        %v5609 = vpack.c.b16 %v5557, %v5553
        %v5610 = vpack.c.b16 %v5558, %v5554
        %v5611 = vpack.c.b16 %v5563, %v5559
        %v5612 = vpack.c.b16 %v5564, %v5560
        %v5613 = vpack.c.b16 %v5565, %v5561
        %v5614 = vpack.c.b16 %v5566, %v5562
        %v5615 = vpack.c.b16 %v5571, %v5567
        %v5616 = vpack.c.b16 %v5572, %v5568
        %v5617 = vpack.c.b16 %v5573, %v5569
        %v5618 = vpack.c.b16 %v5574, %v5570
        %v5619 = vpack.c.b16 %v5579, %v5575
        %v5620 = vpack.c.b16 %v5580, %v5576
        %v5621 = vpack.c.b16 %v5581, %v5577
        %v5622 = vpack.c.b16 %v5582, %v5578
        %v5623 = vpack.c.b16 %v5587, %v5583
        %v5624 = vpack.c.b16 %v5588, %v5584
        %v5625 = vpack.c.b16 %v5589, %v5585
        %v5626 = vpack.c.b16 %v5590, %v5586
        %v5627 = vpack.c.b16 %v5595, %v5591
        %v5628 = vpack.c.b16 %v5596, %v5592
        %v5629 = vpack.c.b16 %v5597, %v5593
        %v5630 = vpack.c.b16 %v5598, %v5594
        %5663 = vmatprep.subr.bf16.mxu0 %v5628
        %5664 = vmatpush1.bf16.msra.mxu0 %v5627
        %5665 = vmatprep.subr.bf16.mxu0 %v5624
        %5666 = vmatpush1.bf16.msra.mxu0 %v5623
        %5667 = vmatprep.subr.bf16.mxu0 %v5620
        %5668 = vmatpush1.bf16.msra.mxu0 %v5619
        %5669 = vmatprep.subr.bf16.mxu0 %v5616
        %5670 = vmatpush1.bf16.msra.mxu0 %v5615
        %5671 = vmatprep.subr.bf16.mxu0 %v5612
        %5672 = vmatpush1.bf16.msra.mxu0 %v5611
        %5673 = vmatprep.subr.bf16.mxu0 %v5608
        %5674 = vmatpush1.bf16.msra.mxu0 %v5607
        %5675 = vmatprep.subr.bf16.mxu0 %v5604
        %5676 = vmatpush1.bf16.msra.mxu0 %v5603
        %5677 = vmatprep.subr.bf16.mxu0 %v5600
        %5678 = vmatpush1.bf16.msra.mxu0 %v5599
        %5679 = vmatprep.subr.bf16.mxu0 0
        %5680 = vmatpush2.bf16.msra.mxu0 0
        %5681 = vmatprep.subr.bf16.mxu0 0
        %5682 = vmatpush2.bf16.msra.mxu0 0
        %5683 = vmatprep.subr.bf16.mxu0 0
        %5684 = vmatpush2.bf16.msra.mxu0 0
        %5685 = vmatprep.subr.bf16.mxu0 0
        %5686 = vmatpush2.bf16.msra.mxu0 0
        %5687 = vmatprep.subr.bf16.mxu0 0
        %5688 = vmatpush2.bf16.msra.mxu0 0
        %5689 = vmatprep.subr.bf16.mxu0 0
        %5690 = vmatpush2.bf16.msra.mxu0 0
        %5691 = vmatprep.subr.bf16.mxu0 0
        %5692 = vmatpush2.bf16.msra.mxu0 0
        %5693 = vmatprep.subr.bf16.mxu0 0
        %5694 = vmatpush2.bf16.msra.mxu0 0
        %5695 = vmatprep.mubr.bf16.mxu0 0
        %5696 = vmatmul.mubr.bf16.gmra.mxu0 %v5466
        %v5697 = vpop.f32.mrf.mxu0
        %v5698 = vadd.f32 %v5490, %v5697
        %v5699 = vpop.f32.mrf.mxu0
        %v5700 = vadd.f32 %v5494, %v5699
        %v5701 = vpop.f32.mrf.mxu0
        %v5702 = vadd.f32 %v5490, %v5701
        %v5703 = vpop.f32.mrf.mxu0
        %v5704 = vadd.f32 %v5494, %v5703
        %5705 = vdwg.mxu0
        %5706 = vmatprep.subr.bf16.mxu0 %v5630
        %5707 = vmatpush1.bf16.msra.mxu0 %v5629
        %5708 = vmatprep.subr.bf16.mxu0 %v5626
        %5709 = vmatpush1.bf16.msra.mxu0 %v5625
        %5710 = vmatprep.subr.bf16.mxu0 %v5622
        %5711 = vmatpush1.bf16.msra.mxu0 %v5621
        %5712 = vmatprep.subr.bf16.mxu0 %v5618
        %5713 = vmatpush1.bf16.msra.mxu0 %v5617
        %5714 = vmatprep.subr.bf16.mxu0 %v5614
        %5715 = vmatpush1.bf16.msra.mxu0 %v5613
        %5716 = vmatprep.subr.bf16.mxu0 %v5610
        %5717 = vmatpush1.bf16.msra.mxu0 %v5609
        %5718 = vmatprep.subr.bf16.mxu0 %v5606
        %5719 = vmatpush1.bf16.msra.mxu0 %v5605
        %5720 = vmatprep.subr.bf16.mxu0 %v5602
        %5721 = vmatpush1.bf16.msra.mxu0 %v5601
        %5722 = vmatprep.subr.bf16.mxu0 0
        %5723 = vmatpush2.bf16.msra.mxu0 0
        %5724 = vmatprep.subr.bf16.mxu0 0
        %5725 = vmatpush2.bf16.msra.mxu0 0
        %5726 = vmatprep.subr.bf16.mxu0 0
        %5727 = vmatpush2.bf16.msra.mxu0 0
        %5728 = vmatprep.subr.bf16.mxu0 0
        %5729 = vmatpush2.bf16.msra.mxu0 0
        %5730 = vmatprep.subr.bf16.mxu0 0
        %5731 = vmatpush2.bf16.msra.mxu0 0
        %5732 = vmatprep.subr.bf16.mxu0 0
        %5733 = vmatpush2.bf16.msra.mxu0 0
        %5734 = vmatprep.subr.bf16.mxu0 0
        %5735 = vmatpush2.bf16.msra.mxu0 0
        %5736 = vmatprep.subr.bf16.mxu0 0
        %5737 = vmatpush2.bf16.msra.mxu0 0
        %5738 = vmatprep.mubr.bf16.mxu0 0
        %5739 = vmatmul.mubr.bf16.gmra.mxu0 %v5466
        %v5740 = vpop.f32.mrf.mxu0
        %v5741 = vadd.f32 %v5498, %v5740
        %v5742 = vpop.f32.mrf.mxu0
        %v5743 = vadd.f32 %v5502, %v5742
        %v5744 = vpop.f32.mrf.mxu0
        %v5745 = vadd.f32 %v5498, %v5744
        %v5746 = vpop.f32.mrf.mxu0
        %v5747 = vadd.f32 %v5502, %v5746
        %5748 = vdwg.mxu0
        %v5749 = vmax.f32 %v5698, 0.0
        %v5750 = vmax.f32 %v5700, 0.0
        %v5751 = vmax.f32 %v5741, 0.0
        %v5752 = vmax.f32 %v5743, 0.0
        %v5753 = vmax.f32 %v5702, 0.0
        %v5754 = vmax.f32 %v5704, 0.0
        %v5755 = vmax.f32 %v5745, 0.0
        %v5756 = vmax.f32 %v5747, 0.0
        %v5757 = vld [vmem:[%s806 + $0x200] sm:$0xf]
        %v5758 = vld [vmem:[%s806 + $0x204] sm:$0xf]
        %v5759 = vld [vmem:[%s806 + $0x208] sm:$0xf]
        %v5760 = vld [vmem:[%s806 + $0x20c] sm:$0xf]
        %v5761 = vld [vmem:[%s806 + $0x210] sm:$0xf]
        %v5762 = vld [vmem:[%s806 + $0x214] sm:$0xf]
        %v5763 = vld [vmem:[%s806 + $0x218] sm:$0xf]
        %v5764 = vld [vmem:[%s806 + $0x21c] sm:$0xf]
        %v5765 = vld [vmem:[%s806 + $0x220] sm:$0xf]
        %v5766 = vld [vmem:[%s806 + $0x224] sm:$0xf]
        %v5767 = vld [vmem:[%s806 + $0x228] sm:$0xf]
        %v5768 = vld [vmem:[%s806 + $0x22c] sm:$0xf]
        %v5769 = vld [vmem:[%s806 + $0x230] sm:$0xf]
        %v5770 = vld [vmem:[%s806 + $0x234] sm:$0xf]
        %v5771 = vld [vmem:[%s806 + $0x238] sm:$0xf]
        %v5772 = vld [vmem:[%s806 + $0x23c] sm:$0xf]
        %v5773 = vld [vmem:[%s806 + $0x240] sm:$0xf]
        %v5774 = vld [vmem:[%s806 + $0x244] sm:$0xf]
        %v5775 = vld [vmem:[%s806 + $0x248] sm:$0xf]
        %v5776 = vld [vmem:[%s806 + $0x24c] sm:$0xf]
        %v5777 = vld [vmem:[%s806 + $0x250] sm:$0xf]
        %v5778 = vld [vmem:[%s806 + $0x254] sm:$0xf]
        %v5779 = vld [vmem:[%s806 + $0x258] sm:$0xf]
        %v5780 = vld [vmem:[%s806 + $0x25c] sm:$0xf]
        %v5781 = vld [vmem:[%s806 + $0x260] sm:$0xf]
        %v5782 = vld [vmem:[%s806 + $0x264] sm:$0xf]
        %v5783 = vld [vmem:[%s806 + $0x268] sm:$0xf]
        %v5784 = vld [vmem:[%s806 + $0x26c] sm:$0xf]
        %v5785 = vld [vmem:[%s806 + $0x270] sm:$0xf]
        %v5786 = vld [vmem:[%s806 + $0x274] sm:$0xf]
        %v5787 = vld [vmem:[%s806 + $0x278] sm:$0xf]
        %v5788 = vld [vmem:[%s806 + $0x27c] sm:$0xf]
        %v5789 = vld [vmem:[%s806 + $0x280] sm:$0xf]
        %v5790 = vld [vmem:[%s806 + $0x284] sm:$0xf]
        %v5791 = vld [vmem:[%s806 + $0x288] sm:$0xf]
        %v5792 = vld [vmem:[%s806 + $0x28c] sm:$0xf]
        %v5793 = vld [vmem:[%s806 + $0x290] sm:$0xf]
        %v5794 = vld [vmem:[%s806 + $0x294] sm:$0xf]
        %v5795 = vld [vmem:[%s806 + $0x298] sm:$0xf]
        %v5796 = vld [vmem:[%s806 + $0x29c] sm:$0xf]
        %v5797 = vld [vmem:[%s806 + $0x2a0] sm:$0xf]
        %v5798 = vld [vmem:[%s806 + $0x2a4] sm:$0xf]
        %v5799 = vld [vmem:[%s806 + $0x2a8] sm:$0xf]
        %v5800 = vld [vmem:[%s806 + $0x2ac] sm:$0xf]
        %v5801 = vld [vmem:[%s806 + $0x2b0] sm:$0xf]
        %v5802 = vld [vmem:[%s806 + $0x2b4] sm:$0xf]
        %v5803 = vld [vmem:[%s806 + $0x2b8] sm:$0xf]
        %v5804 = vld [vmem:[%s806 + $0x2bc] sm:$0xf]
        %v5805 = vld [vmem:[%s806 + $0x2c0] sm:$0xf]
        %v5806 = vld [vmem:[%s806 + $0x2c4] sm:$0xf]
        %v5807 = vld [vmem:[%s806 + $0x2c8] sm:$0xf]
        %v5808 = vld [vmem:[%s806 + $0x2cc] sm:$0xf]
        %v5809 = vld [vmem:[%s806 + $0x2d0] sm:$0xf]
        %v5810 = vld [vmem:[%s806 + $0x2d4] sm:$0xf]
        %v5811 = vld [vmem:[%s806 + $0x2d8] sm:$0xf]
        %v5812 = vld [vmem:[%s806 + $0x2dc] sm:$0xf]
        %v5813 = vld [vmem:[%s806 + $0x2e0] sm:$0xf]
        %v5814 = vld [vmem:[%s806 + $0x2e4] sm:$0xf]
        %v5815 = vld [vmem:[%s806 + $0x2e8] sm:$0xf]
        %v5816 = vld [vmem:[%s806 + $0x2ec] sm:$0xf]
        %v5817 = vld [vmem:[%s806 + $0x2f0] sm:$0xf]
        %v5818 = vld [vmem:[%s806 + $0x2f4] sm:$0xf]
        %v5819 = vld [vmem:[%s806 + $0x2f8] sm:$0xf]
        %v5820 = vld [vmem:[%s806 + $0x2fc] sm:$0xf]
        %v5821 = vpack.c.bf16 %v5753, %v5749
        %v5822 = vpack.c.bf16 %v5754, %v5750
        %v5823 = vpack.c.bf16 %v5755, %v5751
        %v5824 = vpack.c.bf16 %v5756, %v5752
        %v5825 = vlaneseq
        %v5826 = vshrl.u32 %v5825, 7
        %v5827 = vsub.s32 6, %v5826
        %v5828 = vrot.slane %v4064, %v5827
        %v5893 = vunpack.c.l.b16 %v5757
        %v5894 = vunpack.c.l.b16 %v5758
        %v5895 = vunpack.c.l.b16 %v5759
        %v5896 = vunpack.c.l.b16 %v5760
        %v5897 = vunpack.c.l.b16 %v5761
        %v5898 = vunpack.c.l.b16 %v5762
        %v5899 = vunpack.c.l.b16 %v5763
        %v5900 = vunpack.c.l.b16 %v5764
        %v5901 = vunpack.c.l.b16 %v5765
        %v5902 = vunpack.c.l.b16 %v5766
        %v5903 = vunpack.c.l.b16 %v5767
        %v5904 = vunpack.c.l.b16 %v5768
        %v5905 = vunpack.c.l.b16 %v5769
        %v5906 = vunpack.c.l.b16 %v5770
        %v5907 = vunpack.c.l.b16 %v5771
        %v5908 = vunpack.c.l.b16 %v5772
        %v5909 = vunpack.c.l.b16 %v5773
        %v5910 = vunpack.c.l.b16 %v5774
        %v5911 = vunpack.c.l.b16 %v5775
        %v5912 = vunpack.c.l.b16 %v5776
        %v5913 = vunpack.c.l.b16 %v5777
        %v5914 = vunpack.c.l.b16 %v5778
        %v5915 = vunpack.c.l.b16 %v5779
        %v5916 = vunpack.c.l.b16 %v5780
        %v5917 = vunpack.c.l.b16 %v5781
        %v5918 = vunpack.c.l.b16 %v5782
        %v5919 = vunpack.c.l.b16 %v5783
        %v5920 = vunpack.c.l.b16 %v5784
        %v5921 = vunpack.c.l.b16 %v5785
        %v5922 = vunpack.c.l.b16 %v5786
        %v5923 = vunpack.c.l.b16 %v5787
        %v5924 = vunpack.c.l.b16 %v5788
        %v5925 = vunpack.c.l.b16 %v5789
        %v5926 = vunpack.c.l.b16 %v5790
        %v5927 = vunpack.c.l.b16 %v5791
        %v5928 = vunpack.c.l.b16 %v5792
        %v5929 = vunpack.c.l.b16 %v5793
        %v5930 = vunpack.c.l.b16 %v5794
        %v5931 = vunpack.c.l.b16 %v5795
        %v5932 = vunpack.c.l.b16 %v5796
        %v5933 = vunpack.c.l.b16 %v5797
        %v5934 = vunpack.c.l.b16 %v5798
        %v5935 = vunpack.c.l.b16 %v5799
        %v5936 = vunpack.c.l.b16 %v5800
        %v5937 = vunpack.c.l.b16 %v5801
        %v5938 = vunpack.c.l.b16 %v5802
        %v5939 = vunpack.c.l.b16 %v5803
        %v5940 = vunpack.c.l.b16 %v5804
        %v5941 = vunpack.c.l.b16 %v5805
        %v5942 = vunpack.c.l.b16 %v5806
        %v5943 = vunpack.c.l.b16 %v5807
        %v5944 = vunpack.c.l.b16 %v5808
        %v5945 = vunpack.c.l.b16 %v5809
        %v5946 = vunpack.c.l.b16 %v5810
        %v5947 = vunpack.c.l.b16 %v5811
        %v5948 = vunpack.c.l.b16 %v5812
        %v5949 = vunpack.c.l.b16 %v5813
        %v5950 = vunpack.c.l.b16 %v5814
        %v5951 = vunpack.c.l.b16 %v5815
        %v5952 = vunpack.c.l.b16 %v5816
        %v5953 = vunpack.c.l.b16 %v5817
        %v5954 = vunpack.c.l.b16 %v5818
        %v5955 = vunpack.c.l.b16 %v5819
        %v5956 = vunpack.c.l.b16 %v5820
        %v5957 = vpack.c.b16 %v5894, %v5893
        %v5958 = vpack.c.b16 %v5896, %v5895
        %v5959 = vpack.c.b16 %v5898, %v5897
        %v5960 = vpack.c.b16 %v5900, %v5899
        %v5961 = vpack.c.b16 %v5902, %v5901
        %v5962 = vpack.c.b16 %v5904, %v5903
        %v5963 = vpack.c.b16 %v5906, %v5905
        %v5964 = vpack.c.b16 %v5908, %v5907
        %v5965 = vpack.c.b16 %v5910, %v5909
        %v5966 = vpack.c.b16 %v5912, %v5911
        %v5967 = vpack.c.b16 %v5914, %v5913
        %v5968 = vpack.c.b16 %v5916, %v5915
        %v5969 = vpack.c.b16 %v5918, %v5917
        %v5970 = vpack.c.b16 %v5920, %v5919
        %v5971 = vpack.c.b16 %v5922, %v5921
        %v5972 = vpack.c.b16 %v5924, %v5923
        %v5973 = vpack.c.b16 %v5926, %v5925
        %v5974 = vpack.c.b16 %v5928, %v5927
        %v5975 = vpack.c.b16 %v5930, %v5929
        %v5976 = vpack.c.b16 %v5932, %v5931
        %v5977 = vpack.c.b16 %v5934, %v5933
        %v5978 = vpack.c.b16 %v5936, %v5935
        %v5979 = vpack.c.b16 %v5938, %v5937
        %v5980 = vpack.c.b16 %v5940, %v5939
        %v5981 = vpack.c.b16 %v5942, %v5941
        %v5982 = vpack.c.b16 %v5944, %v5943
        %v5983 = vpack.c.b16 %v5946, %v5945
        %v5984 = vpack.c.b16 %v5948, %v5947
        %v5985 = vpack.c.b16 %v5950, %v5949
        %v5986 = vpack.c.b16 %v5952, %v5951
        %v5987 = vpack.c.b16 %v5954, %v5953
        %v5988 = vpack.c.b16 %v5956, %v5955
        %6021 = vmatprep.subr.bf16.mxu0 0
        %6022 = vmatpush1.bf16.msra.mxu0 %v5964
        %6023 = vmatprep.subr.bf16.mxu0 0
        %6024 = vmatpush1.bf16.msra.mxu0 %v5963
        %6025 = vmatprep.subr.bf16.mxu0 0
        %6026 = vmatpush1.bf16.msra.mxu0 %v5962
        %6027 = vmatprep.subr.bf16.mxu0 0
        %6028 = vmatpush1.bf16.msra.mxu0 %v5961
        %6029 = vmatprep.subr.bf16.mxu0 0
        %6030 = vmatpush1.bf16.msra.mxu0 %v5960
        %6031 = vmatprep.subr.bf16.mxu0 0
        %6032 = vmatpush1.bf16.msra.mxu0 %v5959
        %6033 = vmatprep.subr.bf16.mxu0 0
        %6034 = vmatpush1.bf16.msra.mxu0 %v5958
        %6035 = vmatprep.subr.bf16.mxu0 0
        %6036 = vmatpush1.bf16.msra.mxu0 %v5957
        %6037 = vmatprep.subr.bf16.mxu0 0
        %6038 = vmatpush2.bf16.msra.mxu0 %v5972
        %6039 = vmatprep.subr.bf16.mxu0 0
        %6040 = vmatpush2.bf16.msra.mxu0 %v5971
        %6041 = vmatprep.subr.bf16.mxu0 0
        %6042 = vmatpush2.bf16.msra.mxu0 %v5970
        %6043 = vmatprep.subr.bf16.mxu0 0
        %6044 = vmatpush2.bf16.msra.mxu0 %v5969
        %6045 = vmatprep.subr.bf16.mxu0 0
        %6046 = vmatpush2.bf16.msra.mxu0 %v5968
        %6047 = vmatprep.subr.bf16.mxu0 0
        %6048 = vmatpush2.bf16.msra.mxu0 %v5967
        %6049 = vmatprep.subr.bf16.mxu0 0
        %6050 = vmatpush2.bf16.msra.mxu0 %v5966
        %6051 = vmatprep.subr.bf16.mxu0 0
        %6052 = vmatpush2.bf16.msra.mxu0 %v5965
        %6053 = vmatprep.mubr.bf16.mxu0 %v5822
        %6054 = vmatmul.mubr.bf16.gmra.mxu0 %v5821
        %v6055 = vpop.f32.mrf.mxu0
        %v6056 = vadd.f32 %v5828, %v6055
        %v6057 = vpop.f32.mrf.mxu0
        %v6058 = vpop.f32.mrf.mxu0
        %v6059 = vadd.f32 %v5828, %v6058
        %v6060 = vpop.f32.mrf.mxu0
        %6061 = vdwg.mxu0
        %6062 = vmatprep.subr.bf16.mxu0 0
        %6063 = vmatpush1.bf16.msra.mxu0 %v5980
        %6064 = vmatprep.subr.bf16.mxu0 0
        %6065 = vmatpush1.bf16.msra.mxu0 %v5979
        %6066 = vmatprep.subr.bf16.mxu0 0
        %6067 = vmatpush1.bf16.msra.mxu0 %v5978
        %6068 = vmatprep.subr.bf16.mxu0 0
        %6069 = vmatpush1.bf16.msra.mxu0 %v5977
        %6070 = vmatprep.subr.bf16.mxu0 0
        %6071 = vmatpush1.bf16.msra.mxu0 %v5976
        %6072 = vmatprep.subr.bf16.mxu0 0
        %6073 = vmatpush1.bf16.msra.mxu0 %v5975
        %6074 = vmatprep.subr.bf16.mxu0 0
        %6075 = vmatpush1.bf16.msra.mxu0 %v5974
        %6076 = vmatprep.subr.bf16.mxu0 0
        %6077 = vmatpush1.bf16.msra.mxu0 %v5973
        %6078 = vmatprep.subr.bf16.mxu0 0
        %6079 = vmatpush2.bf16.msra.mxu0 %v5988
        %6080 = vmatprep.subr.bf16.mxu0 0
        %6081 = vmatpush2.bf16.msra.mxu0 %v5987
        %6082 = vmatprep.subr.bf16.mxu0 0
        %6083 = vmatpush2.bf16.msra.mxu0 %v5986
        %6084 = vmatprep.subr.bf16.mxu0 0
        %6085 = vmatpush2.bf16.msra.mxu0 %v5985
        %6086 = vmatprep.subr.bf16.mxu0 0
        %6087 = vmatpush2.bf16.msra.mxu0 %v5984
        %6088 = vmatprep.subr.bf16.mxu0 0
        %6089 = vmatpush2.bf16.msra.mxu0 %v5983
        %6090 = vmatprep.subr.bf16.mxu0 0
        %6091 = vmatpush2.bf16.msra.mxu0 %v5982
        %6092 = vmatprep.subr.bf16.mxu0 0
        %6093 = vmatpush2.bf16.msra.mxu0 %v5981
        %6094 = vmatprep.mubr.bf16.mxu0 %v5824
        %6095 = vmatmul.mubr.bf16.gmra.mxu0 %v5823
        %v6096 = vpop.f32.mrf.mxu0
        %v6097 = vadd.f32 %v6056, %v6096
        %v6098 = vpop.f32.mrf.mxu0
        %v6099 = vpop.f32.mrf.mxu0
        %v6100 = vadd.f32 %v6059, %v6099
        %v6101 = vpop.f32.mrf.mxu0
        %6102 = vdwg.mxu0
        %v6103 = vadd.f32 %v6097, %v5432
        %v6104 = vadd.f32 %v6100, %v5433
        %v6105 = vlaneseq
        %v6106 = vshrl.u32 %v6105, 7
        %v6107 = vsub.s32 7, %v6106
        %v6108 = vrot.slane %v4064, %v6107
        %v6109 = vmul.f32 %v6103, %v6108
        %v6110 = vmul.f32 %v6104, %v6108
        %v6111 = vlaneseq
        %v6112 = vshrl.u32 %v6111, 7
        %v6113 = vsub.s32 0, %v6112
        %v6114 = vrot.slane %v4065, %v6113
        %v6115 = vadd.f32 %v6109, %v6114
        %v6116 = vadd.f32 %v6110, %v6114
        %v6117 = vld [vmem:[%s797 + $0x300] sm:$0xff]
        %v6118 = vld [vmem:[%s797 + $0x308] sm:$0xff]
        %v6119 = vld [vmem:[%s797 + $0x310] sm:$0xff]
        %v6120 = vld [vmem:[%s797 + $0x318] sm:$0xff]
        %v6121 = vld [vmem:[%s797 + $0x320] sm:$0xff]
        %v6122 = vld [vmem:[%s797 + $0x328] sm:$0xff]
        %v6123 = vld [vmem:[%s797 + $0x330] sm:$0xff]
        %v6124 = vld [vmem:[%s797 + $0x338] sm:$0xff]
        %v6125 = vld [vmem:[%s797 + $0x340] sm:$0xff]
        %v6126 = vld [vmem:[%s797 + $0x348] sm:$0xff]
        %v6127 = vld [vmem:[%s797 + $0x350] sm:$0xff]
        %v6128 = vld [vmem:[%s797 + $0x358] sm:$0xff]
        %v6129 = vld [vmem:[%s797 + $0x360] sm:$0xff]
        %v6130 = vld [vmem:[%s797 + $0x368] sm:$0xff]
        %v6131 = vld [vmem:[%s797 + $0x370] sm:$0xff]
        %v6132 = vld [vmem:[%s797 + $0x378] sm:$0xff]
        %v6133 = vld [vmem:[%s797 + $0x380] sm:$0xff]
        %v6134 = vld [vmem:[%s797 + $0x388] sm:$0xff]
        %v6135 = vld [vmem:[%s797 + $0x390] sm:$0xff]
        %v6136 = vld [vmem:[%s797 + $0x398] sm:$0xff]
        %v6137 = vld [vmem:[%s797 + $0x3a0] sm:$0xff]
        %v6138 = vld [vmem:[%s797 + $0x3a8] sm:$0xff]
        %v6139 = vld [vmem:[%s797 + $0x3b0] sm:$0xff]
        %v6140 = vld [vmem:[%s797 + $0x3b8] sm:$0xff]
        %v6141 = vld [vmem:[%s797 + $0x3c0] sm:$0xff]
        %v6142 = vld [vmem:[%s797 + $0x3c8] sm:$0xff]
        %v6143 = vld [vmem:[%s797 + $0x3d0] sm:$0xff]
        %v6144 = vld [vmem:[%s797 + $0x3d8] sm:$0xff]
        %v6145 = vld [vmem:[%s797 + $0x3e0] sm:$0xff]
        %v6146 = vld [vmem:[%s797 + $0x3e8] sm:$0xff]
        %v6147 = vld [vmem:[%s797 + $0x3f0] sm:$0xff]
        %v6148 = vld [vmem:[%s797 + $0x3f8] sm:$0xff]
        %v6149 = vpack.c.bf16 %v6116, %v6115
        %v6150 = vlaneseq
        %v6151 = vshrl.u32 %v6150, 7
        %v6152 = vsub.s32 3, %v6151
        %v6153 = vrot.slane %v4062, %v6152
        %v6154 = vlaneseq
        %v6155 = vshrl.u32 %v6154, 7
        %v6156 = vsub.s32 7, %v6155
        %v6157 = vrot.slane %v4062, %v6156
        %v6158 = vlaneseq
        %v6159 = vshrl.u32 %v6158, 7
        %v6160 = vsub.s32 3, %v6159
        %v6161 = vrot.slane %v4063, %v6160
        %v6162 = vlaneseq
        %v6163 = vshrl.u32 %v6162, 7
        %v6164 = vsub.s32 7, %v6163
        %v6165 = vrot.slane %v4063, %v6164
        %v6170 = vlaneseq
        %v6171 = vshrl.u32 %v6170, 7
        %v6172 = vsub.s32 3, %v6171
        %v6173 = vrot.slane %v6153, %v6172
        %v6174 = vlaneseq
        %v6175 = vshrl.u32 %v6174, 7
        %v6176 = vsub.s32 3, %v6175
        %v6177 = vrot.slane %v6157, %v6176
        %v6178 = vlaneseq
        %v6179 = vshrl.u32 %v6178, 7
        %v6180 = vsub.s32 3, %v6179
        %v6181 = vrot.slane %v6161, %v6180
        %v6182 = vlaneseq
        %v6183 = vshrl.u32 %v6182, 7
        %v6184 = vsub.s32 3, %v6183
        %v6185 = vrot.slane %v6165, %v6184
        %v6218 = vunpack.c.l.b16 %v6117
        %v6219 = vunpack.c.h.b16 %v6117
        %v6220 = vunpack.c.l.b16 %v6118
        %v6221 = vunpack.c.h.b16 %v6118
        %v6222 = vunpack.c.l.b16 %v6119
        %v6223 = vunpack.c.h.b16 %v6119
        %v6224 = vunpack.c.l.b16 %v6120
        %v6225 = vunpack.c.h.b16 %v6120
        %v6226 = vunpack.c.l.b16 %v6121
        %v6227 = vunpack.c.h.b16 %v6121
        %v6228 = vunpack.c.l.b16 %v6122
        %v6229 = vunpack.c.h.b16 %v6122
        %v6230 = vunpack.c.l.b16 %v6123
        %v6231 = vunpack.c.h.b16 %v6123
        %v6232 = vunpack.c.l.b16 %v6124
        %v6233 = vunpack.c.h.b16 %v6124
        %v6234 = vunpack.c.l.b16 %v6125
        %v6235 = vunpack.c.h.b16 %v6125
        %v6236 = vunpack.c.l.b16 %v6126
        %v6237 = vunpack.c.h.b16 %v6126
        %v6238 = vunpack.c.l.b16 %v6127
        %v6239 = vunpack.c.h.b16 %v6127
        %v6240 = vunpack.c.l.b16 %v6128
        %v6241 = vunpack.c.h.b16 %v6128
        %v6242 = vunpack.c.l.b16 %v6129
        %v6243 = vunpack.c.h.b16 %v6129
        %v6244 = vunpack.c.l.b16 %v6130
        %v6245 = vunpack.c.h.b16 %v6130
        %v6246 = vunpack.c.l.b16 %v6131
        %v6247 = vunpack.c.h.b16 %v6131
        %v6248 = vunpack.c.l.b16 %v6132
        %v6249 = vunpack.c.h.b16 %v6132
        %v6250 = vunpack.c.l.b16 %v6133
        %v6251 = vunpack.c.h.b16 %v6133
        %v6252 = vunpack.c.l.b16 %v6134
        %v6253 = vunpack.c.h.b16 %v6134
        %v6254 = vunpack.c.l.b16 %v6135
        %v6255 = vunpack.c.h.b16 %v6135
        %v6256 = vunpack.c.l.b16 %v6136
        %v6257 = vunpack.c.h.b16 %v6136
        %v6258 = vunpack.c.l.b16 %v6137
        %v6259 = vunpack.c.h.b16 %v6137
        %v6260 = vunpack.c.l.b16 %v6138
        %v6261 = vunpack.c.h.b16 %v6138
        %v6262 = vunpack.c.l.b16 %v6139
        %v6263 = vunpack.c.h.b16 %v6139
        %v6264 = vunpack.c.l.b16 %v6140
        %v6265 = vunpack.c.h.b16 %v6140
        %v6266 = vunpack.c.l.b16 %v6141
        %v6267 = vunpack.c.h.b16 %v6141
        %v6268 = vunpack.c.l.b16 %v6142
        %v6269 = vunpack.c.h.b16 %v6142
        %v6270 = vunpack.c.l.b16 %v6143
        %v6271 = vunpack.c.h.b16 %v6143
        %v6272 = vunpack.c.l.b16 %v6144
        %v6273 = vunpack.c.h.b16 %v6144
        %v6274 = vunpack.c.l.b16 %v6145
        %v6275 = vunpack.c.h.b16 %v6145
        %v6276 = vunpack.c.l.b16 %v6146
        %v6277 = vunpack.c.h.b16 %v6146
        %v6278 = vunpack.c.l.b16 %v6147
        %v6279 = vunpack.c.h.b16 %v6147
        %v6280 = vunpack.c.l.b16 %v6148
        %v6281 = vunpack.c.h.b16 %v6148
        %v6282 = vpack.c.b16 %v6222, %v6218
        %v6283 = vpack.c.b16 %v6223, %v6219
        %v6284 = vpack.c.b16 %v6224, %v6220
        %v6285 = vpack.c.b16 %v6225, %v6221
        %v6286 = vpack.c.b16 %v6230, %v6226
        %v6287 = vpack.c.b16 %v6231, %v6227
        %v6288 = vpack.c.b16 %v6232, %v6228
        %v6289 = vpack.c.b16 %v6233, %v6229
        %v6290 = vpack.c.b16 %v6238, %v6234
        %v6291 = vpack.c.b16 %v6239, %v6235
        %v6292 = vpack.c.b16 %v6240, %v6236
        %v6293 = vpack.c.b16 %v6241, %v6237
        %v6294 = vpack.c.b16 %v6246, %v6242
        %v6295 = vpack.c.b16 %v6247, %v6243
        %v6296 = vpack.c.b16 %v6248, %v6244
        %v6297 = vpack.c.b16 %v6249, %v6245
        %v6298 = vpack.c.b16 %v6254, %v6250
        %v6299 = vpack.c.b16 %v6255, %v6251
        %v6300 = vpack.c.b16 %v6256, %v6252
        %v6301 = vpack.c.b16 %v6257, %v6253
        %v6302 = vpack.c.b16 %v6262, %v6258
        %v6303 = vpack.c.b16 %v6263, %v6259
        %v6304 = vpack.c.b16 %v6264, %v6260
        %v6305 = vpack.c.b16 %v6265, %v6261
        %v6306 = vpack.c.b16 %v6270, %v6266
        %v6307 = vpack.c.b16 %v6271, %v6267
        %v6308 = vpack.c.b16 %v6272, %v6268
        %v6309 = vpack.c.b16 %v6273, %v6269
        %v6310 = vpack.c.b16 %v6278, %v6274
        %v6311 = vpack.c.b16 %v6279, %v6275
        %v6312 = vpack.c.b16 %v6280, %v6276
        %v6313 = vpack.c.b16 %v6281, %v6277
        %6346 = vmatprep.subr.bf16.mxu0 %v6311
        %6347 = vmatpush1.bf16.msra.mxu0 %v6310
        %6348 = vmatprep.subr.bf16.mxu0 %v6307
        %6349 = vmatpush1.bf16.msra.mxu0 %v6306
        %6350 = vmatprep.subr.bf16.mxu0 %v6303
        %6351 = vmatpush1.bf16.msra.mxu0 %v6302
        %6352 = vmatprep.subr.bf16.mxu0 %v6299
        %6353 = vmatpush1.bf16.msra.mxu0 %v6298
        %6354 = vmatprep.subr.bf16.mxu0 %v6295
        %6355 = vmatpush1.bf16.msra.mxu0 %v6294
        %6356 = vmatprep.subr.bf16.mxu0 %v6291
        %6357 = vmatpush1.bf16.msra.mxu0 %v6290
        %6358 = vmatprep.subr.bf16.mxu0 %v6287
        %6359 = vmatpush1.bf16.msra.mxu0 %v6286
        %6360 = vmatprep.subr.bf16.mxu0 %v6283
        %6361 = vmatpush1.bf16.msra.mxu0 %v6282
        %6362 = vmatprep.subr.bf16.mxu0 0
        %6363 = vmatpush2.bf16.msra.mxu0 0
        %6364 = vmatprep.subr.bf16.mxu0 0
        %6365 = vmatpush2.bf16.msra.mxu0 0
        %6366 = vmatprep.subr.bf16.mxu0 0
        %6367 = vmatpush2.bf16.msra.mxu0 0
        %6368 = vmatprep.subr.bf16.mxu0 0
        %6369 = vmatpush2.bf16.msra.mxu0 0
        %6370 = vmatprep.subr.bf16.mxu0 0
        %6371 = vmatpush2.bf16.msra.mxu0 0
        %6372 = vmatprep.subr.bf16.mxu0 0
        %6373 = vmatpush2.bf16.msra.mxu0 0
        %6374 = vmatprep.subr.bf16.mxu0 0
        %6375 = vmatpush2.bf16.msra.mxu0 0
        %6376 = vmatprep.subr.bf16.mxu0 0
        %6377 = vmatpush2.bf16.msra.mxu0 0
        %6378 = vmatprep.mubr.bf16.mxu0 0
        %6379 = vmatmul.mubr.bf16.gmra.mxu0 %v6149
        %v6380 = vpop.f32.mrf.mxu0
        %v6381 = vadd.f32 %v6173, %v6380
        %v6382 = vpop.f32.mrf.mxu0
        %v6383 = vadd.f32 %v6177, %v6382
        %v6384 = vpop.f32.mrf.mxu0
        %v6385 = vadd.f32 %v6173, %v6384
        %v6386 = vpop.f32.mrf.mxu0
        %v6387 = vadd.f32 %v6177, %v6386
        %6388 = vdwg.mxu0
        %6389 = vmatprep.subr.bf16.mxu0 %v6313
        %6390 = vmatpush1.bf16.msra.mxu0 %v6312
        %6391 = vmatprep.subr.bf16.mxu0 %v6309
        %6392 = vmatpush1.bf16.msra.mxu0 %v6308
        %6393 = vmatprep.subr.bf16.mxu0 %v6305
        %6394 = vmatpush1.bf16.msra.mxu0 %v6304
        %6395 = vmatprep.subr.bf16.mxu0 %v6301
        %6396 = vmatpush1.bf16.msra.mxu0 %v6300
        %6397 = vmatprep.subr.bf16.mxu0 %v6297
        %6398 = vmatpush1.bf16.msra.mxu0 %v6296
        %6399 = vmatprep.subr.bf16.mxu0 %v6293
        %6400 = vmatpush1.bf16.msra.mxu0 %v6292
        %6401 = vmatprep.subr.bf16.mxu0 %v6289
        %6402 = vmatpush1.bf16.msra.mxu0 %v6288
        %6403 = vmatprep.subr.bf16.mxu0 %v6285
        %6404 = vmatpush1.bf16.msra.mxu0 %v6284
        %6405 = vmatprep.subr.bf16.mxu0 0
        %6406 = vmatpush2.bf16.msra.mxu0 0
        %6407 = vmatprep.subr.bf16.mxu0 0
        %6408 = vmatpush2.bf16.msra.mxu0 0
        %6409 = vmatprep.subr.bf16.mxu0 0
        %6410 = vmatpush2.bf16.msra.mxu0 0
        %6411 = vmatprep.subr.bf16.mxu0 0
        %6412 = vmatpush2.bf16.msra.mxu0 0
        %6413 = vmatprep.subr.bf16.mxu0 0
        %6414 = vmatpush2.bf16.msra.mxu0 0
        %6415 = vmatprep.subr.bf16.mxu0 0
        %6416 = vmatpush2.bf16.msra.mxu0 0
        %6417 = vmatprep.subr.bf16.mxu0 0
        %6418 = vmatpush2.bf16.msra.mxu0 0
        %6419 = vmatprep.subr.bf16.mxu0 0
        %6420 = vmatpush2.bf16.msra.mxu0 0
        %6421 = vmatprep.mubr.bf16.mxu0 0
        %6422 = vmatmul.mubr.bf16.gmra.mxu0 %v6149
        %v6423 = vpop.f32.mrf.mxu0
        %v6424 = vadd.f32 %v6181, %v6423
        %v6425 = vpop.f32.mrf.mxu0
        %v6426 = vadd.f32 %v6185, %v6425
        %v6427 = vpop.f32.mrf.mxu0
        %v6428 = vadd.f32 %v6181, %v6427
        %v6429 = vpop.f32.mrf.mxu0
        %v6430 = vadd.f32 %v6185, %v6429
        %6431 = vdwg.mxu0
        %v6432 = vmax.f32 %v6381, 0.0
        %v6433 = vmax.f32 %v6383, 0.0
        %v6434 = vmax.f32 %v6424, 0.0
        %v6435 = vmax.f32 %v6426, 0.0
        %v6436 = vmax.f32 %v6385, 0.0
        %v6437 = vmax.f32 %v6387, 0.0
        %v6438 = vmax.f32 %v6428, 0.0
        %v6439 = vmax.f32 %v6430, 0.0
        %v6440 = vld [vmem:[%s806 + $0x300] sm:$0xf]
        %v6441 = vld [vmem:[%s806 + $0x304] sm:$0xf]
        %v6442 = vld [vmem:[%s806 + $0x308] sm:$0xf]
        %v6443 = vld [vmem:[%s806 + $0x30c] sm:$0xf]
        %v6444 = vld [vmem:[%s806 + $0x310] sm:$0xf]
        %v6445 = vld [vmem:[%s806 + $0x314] sm:$0xf]
        %v6446 = vld [vmem:[%s806 + $0x318] sm:$0xf]
        %v6447 = vld [vmem:[%s806 + $0x31c] sm:$0xf]
        %v6448 = vld [vmem:[%s806 + $0x320] sm:$0xf]
        %v6449 = vld [vmem:[%s806 + $0x324] sm:$0xf]
        %v6450 = vld [vmem:[%s806 + $0x328] sm:$0xf]
        %v6451 = vld [vmem:[%s806 + $0x32c] sm:$0xf]
        %v6452 = vld [vmem:[%s806 + $0x330] sm:$0xf]
        %v6453 = vld [vmem:[%s806 + $0x334] sm:$0xf]
        %v6454 = vld [vmem:[%s806 + $0x338] sm:$0xf]
        %v6455 = vld [vmem:[%s806 + $0x33c] sm:$0xf]
        %v6456 = vld [vmem:[%s806 + $0x340] sm:$0xf]
        %v6457 = vld [vmem:[%s806 + $0x344] sm:$0xf]
        %v6458 = vld [vmem:[%s806 + $0x348] sm:$0xf]
        %v6459 = vld [vmem:[%s806 + $0x34c] sm:$0xf]
        %v6460 = vld [vmem:[%s806 + $0x350] sm:$0xf]
        %v6461 = vld [vmem:[%s806 + $0x354] sm:$0xf]
        %v6462 = vld [vmem:[%s806 + $0x358] sm:$0xf]
        %v6463 = vld [vmem:[%s806 + $0x35c] sm:$0xf]
        %v6464 = vld [vmem:[%s806 + $0x360] sm:$0xf]
        %v6465 = vld [vmem:[%s806 + $0x364] sm:$0xf]
        %v6466 = vld [vmem:[%s806 + $0x368] sm:$0xf]
        %v6467 = vld [vmem:[%s806 + $0x36c] sm:$0xf]
        %v6468 = vld [vmem:[%s806 + $0x370] sm:$0xf]
        %v6469 = vld [vmem:[%s806 + $0x374] sm:$0xf]
        %v6470 = vld [vmem:[%s806 + $0x378] sm:$0xf]
        %v6471 = vld [vmem:[%s806 + $0x37c] sm:$0xf]
        %v6472 = vld [vmem:[%s806 + $0x380] sm:$0xf]
        %v6473 = vld [vmem:[%s806 + $0x384] sm:$0xf]
        %v6474 = vld [vmem:[%s806 + $0x388] sm:$0xf]
        %v6475 = vld [vmem:[%s806 + $0x38c] sm:$0xf]
        %v6476 = vld [vmem:[%s806 + $0x390] sm:$0xf]
        %v6477 = vld [vmem:[%s806 + $0x394] sm:$0xf]
        %v6478 = vld [vmem:[%s806 + $0x398] sm:$0xf]
        %v6479 = vld [vmem:[%s806 + $0x39c] sm:$0xf]
        %v6480 = vld [vmem:[%s806 + $0x3a0] sm:$0xf]
        %v6481 = vld [vmem:[%s806 + $0x3a4] sm:$0xf]
        %v6482 = vld [vmem:[%s806 + $0x3a8] sm:$0xf]
        %v6483 = vld [vmem:[%s806 + $0x3ac] sm:$0xf]
        %v6484 = vld [vmem:[%s806 + $0x3b0] sm:$0xf]
        %v6485 = vld [vmem:[%s806 + $0x3b4] sm:$0xf]
        %v6486 = vld [vmem:[%s806 + $0x3b8] sm:$0xf]
        %v6487 = vld [vmem:[%s806 + $0x3bc] sm:$0xf]
        %v6488 = vld [vmem:[%s806 + $0x3c0] sm:$0xf]
        %v6489 = vld [vmem:[%s806 + $0x3c4] sm:$0xf]
        %v6490 = vld [vmem:[%s806 + $0x3c8] sm:$0xf]
        %v6491 = vld [vmem:[%s806 + $0x3cc] sm:$0xf]
        %v6492 = vld [vmem:[%s806 + $0x3d0] sm:$0xf]
        %v6493 = vld [vmem:[%s806 + $0x3d4] sm:$0xf]
        %v6494 = vld [vmem:[%s806 + $0x3d8] sm:$0xf]
        %v6495 = vld [vmem:[%s806 + $0x3dc] sm:$0xf]
        %v6496 = vld [vmem:[%s806 + $0x3e0] sm:$0xf]
        %v6497 = vld [vmem:[%s806 + $0x3e4] sm:$0xf]
        %v6498 = vld [vmem:[%s806 + $0x3e8] sm:$0xf]
        %v6499 = vld [vmem:[%s806 + $0x3ec] sm:$0xf]
        %v6500 = vld [vmem:[%s806 + $0x3f0] sm:$0xf]
        %v6501 = vld [vmem:[%s806 + $0x3f4] sm:$0xf]
        %v6502 = vld [vmem:[%s806 + $0x3f8] sm:$0xf]
        %v6503 = vld [vmem:[%s806 + $0x3fc] sm:$0xf]
        %v6504 = vpack.c.bf16 %v6436, %v6432
        %v6505 = vpack.c.bf16 %v6437, %v6433
        %v6506 = vpack.c.bf16 %v6438, %v6434
        %v6507 = vpack.c.bf16 %v6439, %v6435
        %v6508 = vlaneseq
        %v6509 = vshrl.u32 %v6508, 7
        %v6510 = vsub.s32 1, %v6509
        %v6511 = vrot.slane %v4065, %v6510
        %v6576 = vunpack.c.l.b16 %v6440
        %v6577 = vunpack.c.l.b16 %v6441
        %v6578 = vunpack.c.l.b16 %v6442
        %v6579 = vunpack.c.l.b16 %v6443
        %v6580 = vunpack.c.l.b16 %v6444
        %v6581 = vunpack.c.l.b16 %v6445
        %v6582 = vunpack.c.l.b16 %v6446
        %v6583 = vunpack.c.l.b16 %v6447
        %v6584 = vunpack.c.l.b16 %v6448
        %v6585 = vunpack.c.l.b16 %v6449
        %v6586 = vunpack.c.l.b16 %v6450
        %v6587 = vunpack.c.l.b16 %v6451
        %v6588 = vunpack.c.l.b16 %v6452
        %v6589 = vunpack.c.l.b16 %v6453
        %v6590 = vunpack.c.l.b16 %v6454
        %v6591 = vunpack.c.l.b16 %v6455
        %v6592 = vunpack.c.l.b16 %v6456
        %v6593 = vunpack.c.l.b16 %v6457
        %v6594 = vunpack.c.l.b16 %v6458
        %v6595 = vunpack.c.l.b16 %v6459
        %v6596 = vunpack.c.l.b16 %v6460
        %v6597 = vunpack.c.l.b16 %v6461
        %v6598 = vunpack.c.l.b16 %v6462
        %v6599 = vunpack.c.l.b16 %v6463
        %v6600 = vunpack.c.l.b16 %v6464
        %v6601 = vunpack.c.l.b16 %v6465
        %v6602 = vunpack.c.l.b16 %v6466
        %v6603 = vunpack.c.l.b16 %v6467
        %v6604 = vunpack.c.l.b16 %v6468
        %v6605 = vunpack.c.l.b16 %v6469
        %v6606 = vunpack.c.l.b16 %v6470
        %v6607 = vunpack.c.l.b16 %v6471
        %v6608 = vunpack.c.l.b16 %v6472
        %v6609 = vunpack.c.l.b16 %v6473
        %v6610 = vunpack.c.l.b16 %v6474
        %v6611 = vunpack.c.l.b16 %v6475
        %v6612 = vunpack.c.l.b16 %v6476
        %v6613 = vunpack.c.l.b16 %v6477
        %v6614 = vunpack.c.l.b16 %v6478
        %v6615 = vunpack.c.l.b16 %v6479
        %v6616 = vunpack.c.l.b16 %v6480
        %v6617 = vunpack.c.l.b16 %v6481
        %v6618 = vunpack.c.l.b16 %v6482
        %v6619 = vunpack.c.l.b16 %v6483
        %v6620 = vunpack.c.l.b16 %v6484
        %v6621 = vunpack.c.l.b16 %v6485
        %v6622 = vunpack.c.l.b16 %v6486
        %v6623 = vunpack.c.l.b16 %v6487
        %v6624 = vunpack.c.l.b16 %v6488
        %v6625 = vunpack.c.l.b16 %v6489
        %v6626 = vunpack.c.l.b16 %v6490
        %v6627 = vunpack.c.l.b16 %v6491
        %v6628 = vunpack.c.l.b16 %v6492
        %v6629 = vunpack.c.l.b16 %v6493
        %v6630 = vunpack.c.l.b16 %v6494
        %v6631 = vunpack.c.l.b16 %v6495
        %v6632 = vunpack.c.l.b16 %v6496
        %v6633 = vunpack.c.l.b16 %v6497
        %v6634 = vunpack.c.l.b16 %v6498
        %v6635 = vunpack.c.l.b16 %v6499
        %v6636 = vunpack.c.l.b16 %v6500
        %v6637 = vunpack.c.l.b16 %v6501
        %v6638 = vunpack.c.l.b16 %v6502
        %v6639 = vunpack.c.l.b16 %v6503
        %v6640 = vpack.c.b16 %v6577, %v6576
        %v6641 = vpack.c.b16 %v6579, %v6578
        %v6642 = vpack.c.b16 %v6581, %v6580
        %v6643 = vpack.c.b16 %v6583, %v6582
        %v6644 = vpack.c.b16 %v6585, %v6584
        %v6645 = vpack.c.b16 %v6587, %v6586
        %v6646 = vpack.c.b16 %v6589, %v6588
        %v6647 = vpack.c.b16 %v6591, %v6590
        %v6648 = vpack.c.b16 %v6593, %v6592
        %v6649 = vpack.c.b16 %v6595, %v6594
        %v6650 = vpack.c.b16 %v6597, %v6596
        %v6651 = vpack.c.b16 %v6599, %v6598
        %v6652 = vpack.c.b16 %v6601, %v6600
        %v6653 = vpack.c.b16 %v6603, %v6602
        %v6654 = vpack.c.b16 %v6605, %v6604
        %v6655 = vpack.c.b16 %v6607, %v6606
        %v6656 = vpack.c.b16 %v6609, %v6608
        %v6657 = vpack.c.b16 %v6611, %v6610
        %v6658 = vpack.c.b16 %v6613, %v6612
        %v6659 = vpack.c.b16 %v6615, %v6614
        %v6660 = vpack.c.b16 %v6617, %v6616
        %v6661 = vpack.c.b16 %v6619, %v6618
        %v6662 = vpack.c.b16 %v6621, %v6620
        %v6663 = vpack.c.b16 %v6623, %v6622
        %v6664 = vpack.c.b16 %v6625, %v6624
        %v6665 = vpack.c.b16 %v6627, %v6626
        %v6666 = vpack.c.b16 %v6629, %v6628
        %v6667 = vpack.c.b16 %v6631, %v6630
        %v6668 = vpack.c.b16 %v6633, %v6632
        %v6669 = vpack.c.b16 %v6635, %v6634
        %v6670 = vpack.c.b16 %v6637, %v6636
        %v6671 = vpack.c.b16 %v6639, %v6638
        %6704 = vmatprep.subr.bf16.mxu0 0
        %6705 = vmatpush1.bf16.msra.mxu0 %v6647
        %6706 = vmatprep.subr.bf16.mxu0 0
        %6707 = vmatpush1.bf16.msra.mxu0 %v6646
        %6708 = vmatprep.subr.bf16.mxu0 0
        %6709 = vmatpush1.bf16.msra.mxu0 %v6645
        %6710 = vmatprep.subr.bf16.mxu0 0
        %6711 = vmatpush1.bf16.msra.mxu0 %v6644
        %6712 = vmatprep.subr.bf16.mxu0 0
        %6713 = vmatpush1.bf16.msra.mxu0 %v6643
        %6714 = vmatprep.subr.bf16.mxu0 0
        %6715 = vmatpush1.bf16.msra.mxu0 %v6642
        %6716 = vmatprep.subr.bf16.mxu0 0
        %6717 = vmatpush1.bf16.msra.mxu0 %v6641
        %6718 = vmatprep.subr.bf16.mxu0 0
        %6719 = vmatpush1.bf16.msra.mxu0 %v6640
        %6720 = vmatprep.subr.bf16.mxu0 0
        %6721 = vmatpush2.bf16.msra.mxu0 %v6655
        %6722 = vmatprep.subr.bf16.mxu0 0
        %6723 = vmatpush2.bf16.msra.mxu0 %v6654
        %6724 = vmatprep.subr.bf16.mxu0 0
        %6725 = vmatpush2.bf16.msra.mxu0 %v6653
        %6726 = vmatprep.subr.bf16.mxu0 0
        %6727 = vmatpush2.bf16.msra.mxu0 %v6652
        %6728 = vmatprep.subr.bf16.mxu0 0
        %6729 = vmatpush2.bf16.msra.mxu0 %v6651
        %6730 = vmatprep.subr.bf16.mxu0 0
        %6731 = vmatpush2.bf16.msra.mxu0 %v6650
        %6732 = vmatprep.subr.bf16.mxu0 0
        %6733 = vmatpush2.bf16.msra.mxu0 %v6649
        %6734 = vmatprep.subr.bf16.mxu0 0
        %6735 = vmatpush2.bf16.msra.mxu0 %v6648
        %6736 = vmatprep.mubr.bf16.mxu0 %v6505
        %6737 = vmatmul.mubr.bf16.gmra.mxu0 %v6504
        %v6738 = vpop.f32.mrf.mxu0
        %v6739 = vadd.f32 %v6511, %v6738
        %v6740 = vpop.f32.mrf.mxu0
        %v6741 = vpop.f32.mrf.mxu0
        %v6742 = vadd.f32 %v6511, %v6741
        %v6743 = vpop.f32.mrf.mxu0
        %6744 = vdwg.mxu0
        %6745 = vmatprep.subr.bf16.mxu0 0
        %6746 = vmatpush1.bf16.msra.mxu0 %v6663
        %6747 = vmatprep.subr.bf16.mxu0 0
        %6748 = vmatpush1.bf16.msra.mxu0 %v6662
        %6749 = vmatprep.subr.bf16.mxu0 0
        %6750 = vmatpush1.bf16.msra.mxu0 %v6661
        %6751 = vmatprep.subr.bf16.mxu0 0
        %6752 = vmatpush1.bf16.msra.mxu0 %v6660
        %6753 = vmatprep.subr.bf16.mxu0 0
        %6754 = vmatpush1.bf16.msra.mxu0 %v6659
        %6755 = vmatprep.subr.bf16.mxu0 0
        %6756 = vmatpush1.bf16.msra.mxu0 %v6658
        %6757 = vmatprep.subr.bf16.mxu0 0
        %6758 = vmatpush1.bf16.msra.mxu0 %v6657
        %6759 = vmatprep.subr.bf16.mxu0 0
        %6760 = vmatpush1.bf16.msra.mxu0 %v6656
        %6761 = vmatprep.subr.bf16.mxu0 0
        %6762 = vmatpush2.bf16.msra.mxu0 %v6671
        %6763 = vmatprep.subr.bf16.mxu0 0
        %6764 = vmatpush2.bf16.msra.mxu0 %v6670
        %6765 = vmatprep.subr.bf16.mxu0 0
        %6766 = vmatpush2.bf16.msra.mxu0 %v6669
        %6767 = vmatprep.subr.bf16.mxu0 0
        %6768 = vmatpush2.bf16.msra.mxu0 %v6668
        %6769 = vmatprep.subr.bf16.mxu0 0
        %6770 = vmatpush2.bf16.msra.mxu0 %v6667
        %6771 = vmatprep.subr.bf16.mxu0 0
        %6772 = vmatpush2.bf16.msra.mxu0 %v6666
        %6773 = vmatprep.subr.bf16.mxu0 0
        %6774 = vmatpush2.bf16.msra.mxu0 %v6665
        %6775 = vmatprep.subr.bf16.mxu0 0
        %6776 = vmatpush2.bf16.msra.mxu0 %v6664
        %6777 = vmatprep.mubr.bf16.mxu0 %v6507
        %6778 = vmatmul.mubr.bf16.gmra.mxu0 %v6506
        %v6779 = vpop.f32.mrf.mxu0
        %v6780 = vadd.f32 %v6739, %v6779
        %v6781 = vpop.f32.mrf.mxu0
        %v6782 = vpop.f32.mrf.mxu0
        %v6783 = vadd.f32 %v6742, %v6782
        %v6784 = vpop.f32.mrf.mxu0
        %6785 = vdwg.mxu0
        %v6786 = vadd.f32 %v6780, %v6115
        %v6787 = vadd.f32 %v6783, %v6116
        %v6788 = vlaneseq
        %v6789 = vshrl.u32 %v6788, 7
        %v6790 = vsub.s32 2, %v6789
        %v6791 = vrot.slane %v4065, %v6790
        %v6792 = vmul.f32 %v6786, %v6791
        %v6793 = vmul.f32 %v6787, %v6791
        %v6794 = vlaneseq
        %v6795 = vshrl.u32 %v6794, 7
        %v6796 = vsub.s32 3, %v6795
        %v6797 = vrot.slane %v4065, %v6796
        %v6798 = vadd.f32 %v6792, %v6797
        %v6799 = vadd.f32 %v6793, %v6797
        %v6800 = vpack.c.bf16 %v6799, %v6798
        %v6801 = vld [vmem:[%s815] sm:$0xff]
        %v6802 = vld [vmem:[%s815 + $0x8] sm:$0xff]
        %v6803 = vld [vmem:[%s815 + $0x10] sm:$0xff]
        %v6804 = vld [vmem:[%s815 + $0x18] sm:$0xff]
        %v6805 = vld [vmem:[%s815 + $0x20] sm:$0xff]
        %v6806 = vld [vmem:[%s815 + $0x28] sm:$0xff]
        %v6807 = vld [vmem:[%s815 + $0x30] sm:$0xff]
        %v6808 = vld [vmem:[%s815 + $0x38] sm:$0xff]
        %v6809 = vld [vmem:[%s815 + $0x40] sm:$0xff]
        %v6810 = vld [vmem:[%s815 + $0x48] sm:$0xff]
        %v6811 = vld [vmem:[%s815 + $0x50] sm:$0xff]
        %v6812 = vld [vmem:[%s815 + $0x58] sm:$0xff]
        %v6813 = vld [vmem:[%s815 + $0x60] sm:$0xff]
        %v6814 = vld [vmem:[%s815 + $0x68] sm:$0xff]
        %v6815 = vld [vmem:[%s815 + $0x70] sm:$0xff]
        %v6816 = vld [vmem:[%s815 + $0x78] sm:$0xff]
        %v6817 = vld [vmem:[%s815 + $0x80] sm:$0xff]
        %v6818 = vld [vmem:[%s815 + $0x88] sm:$0xff]
        %v6819 = vld [vmem:[%s815 + $0x90] sm:$0xff]
        %v6820 = vld [vmem:[%s815 + $0x98] sm:$0xff]
        %v6821 = vld [vmem:[%s815 + $0xa0] sm:$0xff]
        %v6822 = vld [vmem:[%s815 + $0xa8] sm:$0xff]
        %v6823 = vld [vmem:[%s815 + $0xb0] sm:$0xff]
        %v6824 = vld [vmem:[%s815 + $0xb8] sm:$0xff]
        %v6825 = vld [vmem:[%s815 + $0xc0] sm:$0xff]
        %v6826 = vld [vmem:[%s815 + $0xc8] sm:$0xff]
        %v6827 = vld [vmem:[%s815 + $0xd0] sm:$0xff]
        %v6828 = vld [vmem:[%s815 + $0xd8] sm:$0xff]
        %v6829 = vld [vmem:[%s815 + $0xe0] sm:$0xff]
        %v6830 = vld [vmem:[%s815 + $0xe8] sm:$0xff]
        %v6831 = vld [vmem:[%s815 + $0xf0] sm:$0xff]
        %v6832 = vld [vmem:[%s815 + $0xf8] sm:$0xff]
        %v6833 = vld [vmem:[%s989] sm:$0x77]
        %v6834 = vld [vmem:[%s989 + $0x8] sm:$0x77]
        %v6837 = vlaneseq
        %v6838 = vshrl.u32 %v6837, 7
        %v6839 = vsub.s32 0, %v6838
        %v6840 = vrot.slane %v6833, %v6839
        %v6841 = vlaneseq
        %v6842 = vshrl.u32 %v6841, 7
        %v6843 = vsub.s32 4, %v6842
        %v6844 = vrot.slane %v6833, %v6843
        %v6845 = vlaneseq
        %v6846 = vshrl.u32 %v6845, 7
        %v6847 = vsub.s32 0, %v6846
        %v6848 = vrot.slane %v6834, %v6847
        %v6849 = vlaneseq
        %v6850 = vshrl.u32 %v6849, 7
        %v6851 = vsub.s32 4, %v6850
        %v6852 = vrot.slane %v6834, %v6851
        %v6857 = vlaneseq
        %v6858 = vshrl.u32 %v6857, 7
        %v6859 = vsub.s32 0, %v6858
        %v6860 = vrot.slane %v6840, %v6859
        %v6861 = vlaneseq
        %v6862 = vshrl.u32 %v6861, 7
        %v6863 = vsub.s32 0, %v6862
        %v6864 = vrot.slane %v6844, %v6863
        %v6865 = vlaneseq
        %v6866 = vshrl.u32 %v6865, 7
        %v6867 = vsub.s32 0, %v6866
        %v6868 = vrot.slane %v6848, %v6867
        %v6869 = vlaneseq
        %v6870 = vshrl.u32 %v6869, 7
        %v6871 = vsub.s32 0, %v6870
        %v6872 = vrot.slane %v6852, %v6871
        %v6905 = vunpack.c.l.b16 %v6801
        %v6906 = vunpack.c.h.b16 %v6801
        %v6907 = vunpack.c.l.b16 %v6802
        %v6908 = vunpack.c.h.b16 %v6802
        %v6909 = vunpack.c.l.b16 %v6803
        %v6910 = vunpack.c.h.b16 %v6803
        %v6911 = vunpack.c.l.b16 %v6804
        %v6912 = vunpack.c.h.b16 %v6804
        %v6913 = vunpack.c.l.b16 %v6805
        %v6914 = vunpack.c.h.b16 %v6805
        %v6915 = vunpack.c.l.b16 %v6806
        %v6916 = vunpack.c.h.b16 %v6806
        %v6917 = vunpack.c.l.b16 %v6807
        %v6918 = vunpack.c.h.b16 %v6807
        %v6919 = vunpack.c.l.b16 %v6808
        %v6920 = vunpack.c.h.b16 %v6808
        %v6921 = vunpack.c.l.b16 %v6809
        %v6922 = vunpack.c.h.b16 %v6809
        %v6923 = vunpack.c.l.b16 %v6810
        %v6924 = vunpack.c.h.b16 %v6810
        %v6925 = vunpack.c.l.b16 %v6811
        %v6926 = vunpack.c.h.b16 %v6811
        %v6927 = vunpack.c.l.b16 %v6812
        %v6928 = vunpack.c.h.b16 %v6812
        %v6929 = vunpack.c.l.b16 %v6813
        %v6930 = vunpack.c.h.b16 %v6813
        %v6931 = vunpack.c.l.b16 %v6814
        %v6932 = vunpack.c.h.b16 %v6814
        %v6933 = vunpack.c.l.b16 %v6815
        %v6934 = vunpack.c.h.b16 %v6815
        %v6935 = vunpack.c.l.b16 %v6816
        %v6936 = vunpack.c.h.b16 %v6816
        %v6937 = vunpack.c.l.b16 %v6817
        %v6938 = vunpack.c.h.b16 %v6817
        %v6939 = vunpack.c.l.b16 %v6818
        %v6940 = vunpack.c.h.b16 %v6818
        %v6941 = vunpack.c.l.b16 %v6819
        %v6942 = vunpack.c.h.b16 %v6819
        %v6943 = vunpack.c.l.b16 %v6820
        %v6944 = vunpack.c.h.b16 %v6820
        %v6945 = vunpack.c.l.b16 %v6821
        %v6946 = vunpack.c.h.b16 %v6821
        %v6947 = vunpack.c.l.b16 %v6822
        %v6948 = vunpack.c.h.b16 %v6822
        %v6949 = vunpack.c.l.b16 %v6823
        %v6950 = vunpack.c.h.b16 %v6823
        %v6951 = vunpack.c.l.b16 %v6824
        %v6952 = vunpack.c.h.b16 %v6824
        %v6953 = vunpack.c.l.b16 %v6825
        %v6954 = vunpack.c.h.b16 %v6825
        %v6955 = vunpack.c.l.b16 %v6826
        %v6956 = vunpack.c.h.b16 %v6826
        %v6957 = vunpack.c.l.b16 %v6827
        %v6958 = vunpack.c.h.b16 %v6827
        %v6959 = vunpack.c.l.b16 %v6828
        %v6960 = vunpack.c.h.b16 %v6828
        %v6961 = vunpack.c.l.b16 %v6829
        %v6962 = vunpack.c.h.b16 %v6829
        %v6963 = vunpack.c.l.b16 %v6830
        %v6964 = vunpack.c.h.b16 %v6830
        %v6965 = vunpack.c.l.b16 %v6831
        %v6966 = vunpack.c.h.b16 %v6831
        %v6967 = vunpack.c.l.b16 %v6832
        %v6968 = vunpack.c.h.b16 %v6832
        %v6969 = vpack.c.b16 %v6909, %v6905
        %v6970 = vpack.c.b16 %v6910, %v6906
        %v6971 = vpack.c.b16 %v6911, %v6907
        %v6972 = vpack.c.b16 %v6912, %v6908
        %v6973 = vpack.c.b16 %v6917, %v6913
        %v6974 = vpack.c.b16 %v6918, %v6914
        %v6975 = vpack.c.b16 %v6919, %v6915
        %v6976 = vpack.c.b16 %v6920, %v6916
        %v6977 = vpack.c.b16 %v6925, %v6921
        %v6978 = vpack.c.b16 %v6926, %v6922
        %v6979 = vpack.c.b16 %v6927, %v6923
        %v6980 = vpack.c.b16 %v6928, %v6924
        %v6981 = vpack.c.b16 %v6933, %v6929
        %v6982 = vpack.c.b16 %v6934, %v6930
        %v6983 = vpack.c.b16 %v6935, %v6931
        %v6984 = vpack.c.b16 %v6936, %v6932
        %v6985 = vpack.c.b16 %v6941, %v6937
        %v6986 = vpack.c.b16 %v6942, %v6938
        %v6987 = vpack.c.b16 %v6943, %v6939
        %v6988 = vpack.c.b16 %v6944, %v6940
        %v6989 = vpack.c.b16 %v6949, %v6945
        %v6990 = vpack.c.b16 %v6950, %v6946
        %v6991 = vpack.c.b16 %v6951, %v6947
        %v6992 = vpack.c.b16 %v6952, %v6948
        %v6993 = vpack.c.b16 %v6957, %v6953
        %v6994 = vpack.c.b16 %v6958, %v6954
        %v6995 = vpack.c.b16 %v6959, %v6955
        %v6996 = vpack.c.b16 %v6960, %v6956
        %v6997 = vpack.c.b16 %v6965, %v6961
        %v6998 = vpack.c.b16 %v6966, %v6962
        %v6999 = vpack.c.b16 %v6967, %v6963
        %v7000 = vpack.c.b16 %v6968, %v6964
        %7033 = vmatprep.subr.bf16.mxu0 %v6998
        %7034 = vmatpush1.bf16.msra.mxu0 %v6997
        %7035 = vmatprep.subr.bf16.mxu0 %v6994
        %7036 = vmatpush1.bf16.msra.mxu0 %v6993
        %7037 = vmatprep.subr.bf16.mxu0 %v6990
        %7038 = vmatpush1.bf16.msra.mxu0 %v6989
        %7039 = vmatprep.subr.bf16.mxu0 %v6986
        %7040 = vmatpush1.bf16.msra.mxu0 %v6985
        %7041 = vmatprep.subr.bf16.mxu0 %v6982
        %7042 = vmatpush1.bf16.msra.mxu0 %v6981
        %7043 = vmatprep.subr.bf16.mxu0 %v6978
        %7044 = vmatpush1.bf16.msra.mxu0 %v6977
        %7045 = vmatprep.subr.bf16.mxu0 %v6974
        %7046 = vmatpush1.bf16.msra.mxu0 %v6973
        %7047 = vmatprep.subr.bf16.mxu0 %v6970
        %7048 = vmatpush1.bf16.msra.mxu0 %v6969
        %7049 = vmatprep.subr.bf16.mxu0 0
        %7050 = vmatpush2.bf16.msra.mxu0 0
        %7051 = vmatprep.subr.bf16.mxu0 0
        %7052 = vmatpush2.bf16.msra.mxu0 0
        %7053 = vmatprep.subr.bf16.mxu0 0
        %7054 = vmatpush2.bf16.msra.mxu0 0
        %7055 = vmatprep.subr.bf16.mxu0 0
        %7056 = vmatpush2.bf16.msra.mxu0 0
        %7057 = vmatprep.subr.bf16.mxu0 0
        %7058 = vmatpush2.bf16.msra.mxu0 0
        %7059 = vmatprep.subr.bf16.mxu0 0
        %7060 = vmatpush2.bf16.msra.mxu0 0
        %7061 = vmatprep.subr.bf16.mxu0 0
        %7062 = vmatpush2.bf16.msra.mxu0 0
        %7063 = vmatprep.subr.bf16.mxu0 0
        %7064 = vmatpush2.bf16.msra.mxu0 0
        %7065 = vmatprep.mubr.bf16.mxu0 0
        %7066 = vmatmul.mubr.bf16.gmra.mxu0 %v6800
        %v7067 = vpop.f32.mrf.mxu0
        %v7068 = vadd.f32 %v6860, %v7067
        %v7069 = vpop.f32.mrf.mxu0
        %v7070 = vadd.f32 %v6864, %v7069
        %v7071 = vpop.f32.mrf.mxu0
        %v7072 = vadd.f32 %v6860, %v7071
        %v7073 = vpop.f32.mrf.mxu0
        %v7074 = vadd.f32 %v6864, %v7073
        %7075 = vdwg.mxu0
        %7076 = vmatprep.subr.bf16.mxu0 %v7000
        %7077 = vmatpush1.bf16.msra.mxu0 %v6999
        %7078 = vmatprep.subr.bf16.mxu0 %v6996
        %7079 = vmatpush1.bf16.msra.mxu0 %v6995
        %7080 = vmatprep.subr.bf16.mxu0 %v6992
        %7081 = vmatpush1.bf16.msra.mxu0 %v6991
        %7082 = vmatprep.subr.bf16.mxu0 %v6988
        %7083 = vmatpush1.bf16.msra.mxu0 %v6987
        %7084 = vmatprep.subr.bf16.mxu0 %v6984
        %7085 = vmatpush1.bf16.msra.mxu0 %v6983
        %7086 = vmatprep.subr.bf16.mxu0 %v6980
        %7087 = vmatpush1.bf16.msra.mxu0 %v6979
        %7088 = vmatprep.subr.bf16.mxu0 %v6976
        %7089 = vmatpush1.bf16.msra.mxu0 %v6975
        %7090 = vmatprep.subr.bf16.mxu0 %v6972
        %7091 = vmatpush1.bf16.msra.mxu0 %v6971
        %7092 = vmatprep.subr.bf16.mxu0 0
        %7093 = vmatpush2.bf16.msra.mxu0 0
        %7094 = vmatprep.subr.bf16.mxu0 0
        %7095 = vmatpush2.bf16.msra.mxu0 0
        %7096 = vmatprep.subr.bf16.mxu0 0
        %7097 = vmatpush2.bf16.msra.mxu0 0
        %7098 = vmatprep.subr.bf16.mxu0 0
        %7099 = vmatpush2.bf16.msra.mxu0 0
        %7100 = vmatprep.subr.bf16.mxu0 0
        %7101 = vmatpush2.bf16.msra.mxu0 0
        %7102 = vmatprep.subr.bf16.mxu0 0
        %7103 = vmatpush2.bf16.msra.mxu0 0
        %7104 = vmatprep.subr.bf16.mxu0 0
        %7105 = vmatpush2.bf16.msra.mxu0 0
        %7106 = vmatprep.subr.bf16.mxu0 0
        %7107 = vmatpush2.bf16.msra.mxu0 0
        %7108 = vmatprep.mubr.bf16.mxu0 0
        %7109 = vmatmul.mubr.bf16.gmra.mxu0 %v6800
        %v7110 = vpop.f32.mrf.mxu0
        %v7111 = vadd.f32 %v6868, %v7110
        %v7112 = vpop.f32.mrf.mxu0
        %v7113 = vadd.f32 %v6872, %v7112
        %v7114 = vpop.f32.mrf.mxu0
        %v7115 = vadd.f32 %v6868, %v7114
        %v7116 = vpop.f32.mrf.mxu0
        %v7117 = vadd.f32 %v6872, %v7116
        %7118 = vdwg.mxu0
        %v7119 = vadd.f32 %v7068, %v1915
        %v7120 = vadd.f32 %v7070, %v1916
        %v7121 = vadd.f32 %v7111, %v1917
        %v7122 = vadd.f32 %v7113, %v1918
        %v7123 = vadd.f32 %v7072, %v1919
        %v7124 = vadd.f32 %v7074, %v1920
        %v7125 = vadd.f32 %v7115, %v1921
        %v7126 = vadd.f32 %v7117, %v1922
        %v7127 = vlaneseq
        %v7128 = vshrl.u32 %v7127, 7
        %v7129 = vsub.s32 1, %v7128
        %v7130 = vrot.slane %v6833, %v7129
        %v7131 = vlaneseq
        %v7132 = vshrl.u32 %v7131, 7
        %v7133 = vsub.s32 5, %v7132
        %v7134 = vrot.slane %v6833, %v7133
        %v7135 = vlaneseq
        %v7136 = vshrl.u32 %v7135, 7
        %v7137 = vsub.s32 1, %v7136
        %v7138 = vrot.slane %v6834, %v7137
        %v7139 = vlaneseq
        %v7140 = vshrl.u32 %v7139, 7
        %v7141 = vsub.s32 5, %v7140
        %v7142 = vrot.slane %v6834, %v7141
        %v7147 = vlaneseq
        %v7148 = vshrl.u32 %v7147, 7
        %v7149 = vsub.s32 1, %v7148
        %v7150 = vrot.slane %v7130, %v7149
        %v7151 = vlaneseq
        %v7152 = vshrl.u32 %v7151, 7
        %v7153 = vsub.s32 1, %v7152
        %v7154 = vrot.slane %v7134, %v7153
        %v7155 = vlaneseq
        %v7156 = vshrl.u32 %v7155, 7
        %v7157 = vsub.s32 1, %v7156
        %v7158 = vrot.slane %v7138, %v7157
        %v7159 = vlaneseq
        %v7160 = vshrl.u32 %v7159, 7
        %v7161 = vsub.s32 1, %v7160
        %v7162 = vrot.slane %v7142, %v7161
        %v7163 = vmul.f32 %v7119, %v7150
        %v7164 = vmul.f32 %v7120, %v7154
        %v7165 = vmul.f32 %v7121, %v7158
        %v7166 = vmul.f32 %v7122, %v7162
        %v7167 = vmul.f32 %v7123, %v7150
        %v7168 = vmul.f32 %v7124, %v7154
        %v7169 = vmul.f32 %v7125, %v7158
        %v7170 = vmul.f32 %v7126, %v7162
        %v7171 = vlaneseq
        %v7172 = vshrl.u32 %v7171, 7
        %v7173 = vsub.s32 2, %v7172
        %v7174 = vrot.slane %v6833, %v7173
        %v7175 = vlaneseq
        %v7176 = vshrl.u32 %v7175, 7
        %v7177 = vsub.s32 6, %v7176
        %v7178 = vrot.slane %v6833, %v7177
        %v7179 = vlaneseq
        %v7180 = vshrl.u32 %v7179, 7
        %v7181 = vsub.s32 2, %v7180
        %v7182 = vrot.slane %v6834, %v7181
        %v7183 = vlaneseq
        %v7184 = vshrl.u32 %v7183, 7
        %v7185 = vsub.s32 6, %v7184
        %v7186 = vrot.slane %v6834, %v7185
        %v7191 = vlaneseq
        %v7192 = vshrl.u32 %v7191, 7
        %v7193 = vsub.s32 2, %v7192
        %v7194 = vrot.slane %v7174, %v7193
        %v7195 = vlaneseq
        %v7196 = vshrl.u32 %v7195, 7
        %v7197 = vsub.s32 2, %v7196
        %v7198 = vrot.slane %v7178, %v7197
        %v7199 = vlaneseq
        %v7200 = vshrl.u32 %v7199, 7
        %v7201 = vsub.s32 2, %v7200
        %v7202 = vrot.slane %v7182, %v7201
        %v7203 = vlaneseq
        %v7204 = vshrl.u32 %v7203, 7
        %v7205 = vsub.s32 2, %v7204
        %v7206 = vrot.slane %v7186, %v7205
        %v7207 = vadd.f32 %v7163, %v7194
        %v7208 = vadd.f32 %v7164, %v7198
        %v7209 = vadd.f32 %v7165, %v7202
        %v7210 = vadd.f32 %v7166, %v7206
        %v7211 = vadd.f32 %v7167, %v7194
        %v7212 = vadd.f32 %v7168, %v7198
        %v7213 = vadd.f32 %v7169, %v7202
        %v7214 = vadd.f32 %v7170, %v7206
        %7215 = vst [vmem:[#allocation2] sm:$0xff] %v7207
        %7216 = vst [vmem:[#allocation2 + $0x8] sm:$0xff] %v7208
        %7217 = vst [vmem:[#allocation2 + $0x10] sm:$0xff] %v7209
        %7218 = vst [vmem:[#allocation2 + $0x18] sm:$0xff] %v7210
        %7219 = vst [vmem:[#allocation2 + $0x20] sm:$0xff] %v7211
        %7220 = vst [vmem:[#allocation2 + $0x28] sm:$0xff] %v7212
        %7221 = vst [vmem:[#allocation2 + $0x30] sm:$0xff] %v7213
        %7222 = vst [vmem:[#allocation2 + $0x38] sm:$0xff] %v7214
        %p7223 = scmp.eq.s32.totalorder %s38, 1
        // Predicated region
        $region133: #{mobilebert_classifier_forward.1} parent=95 // pred_check
          %p7224 = pneg %p7223
        $region134: #{mobilebert_classifier_forward.1} parent=95 // pred_check_branch
          %7226 = sbr.rel (%p7224) target = $region136
        $region135: #{mobilebert_classifier_forward.1} parent=95 // pred_region
          %v7227 = vld [vmem:[#allocation12] sm:$0x77]
          %v7228 = vld [vmem:[#allocation12 + $0x8] sm:$0x77]
          %v7229 = vld [vmem:[#allocation2] sm:$0xff]
          %v7230 = vld [vmem:[#allocation2 + $0x8] sm:$0xff]
          %v7231 = vld [vmem:[#allocation2 + $0x10] sm:$0xff]
          %v7232 = vld [vmem:[#allocation2 + $0x18] sm:$0xff]
          %v7233 = vld [vmem:[#allocation2 + $0x20] sm:$0xff]
          %v7234 = vld [vmem:[#allocation2 + $0x28] sm:$0xff]
          %v7235 = vld [vmem:[#allocation2 + $0x30] sm:$0xff]
          %v7236 = vld [vmem:[#allocation2 + $0x38] sm:$0xff]
          %v7237 = vpack.c.bf16 %v7229, %v7229
          %v7238 = vpack.c.bf16 %v7230, %v7230
          %v7239 = vpack.c.bf16 %v7231, %v7231
          %v7240 = vpack.c.bf16 %v7232, %v7232
          %v7241 = vpack.c.bf16 %v7233, %v7233
          %v7242 = vpack.c.bf16 %v7234, %v7234
          %v7243 = vpack.c.bf16 %v7235, %v7235
          %v7244 = vpack.c.bf16 %v7236, %v7236
          %v7245 = vld [vmem:[#allocation11] sm:$0xff]
          %v7246 = vld [vmem:[#allocation11 + $0x8] sm:$0xff]
          %v7247 = vld [vmem:[#allocation11 + $0x10] sm:$0xff]
          %v7248 = vld [vmem:[#allocation11 + $0x18] sm:$0xff]
          %v7249 = vld [vmem:[#allocation11 + $0x20] sm:$0xff]
          %v7250 = vld [vmem:[#allocation11 + $0x28] sm:$0xff]
          %v7251 = vld [vmem:[#allocation11 + $0x30] sm:$0xff]
          %v7252 = vld [vmem:[#allocation11 + $0x38] sm:$0xff]
          %v7253 = vld [vmem:[#allocation11 + $0x40] sm:$0xff]
          %v7254 = vld [vmem:[#allocation11 + $0x48] sm:$0xff]
          %v7255 = vld [vmem:[#allocation11 + $0x50] sm:$0xff]
          %v7256 = vld [vmem:[#allocation11 + $0x58] sm:$0xff]
          %v7257 = vld [vmem:[#allocation11 + $0x60] sm:$0xff]
          %v7258 = vld [vmem:[#allocation11 + $0x68] sm:$0xff]
          %v7259 = vld [vmem:[#allocation11 + $0x70] sm:$0xff]
          %v7260 = vld [vmem:[#allocation11 + $0x78] sm:$0xff]
          %v7261 = vld [vmem:[#allocation11 + $0x80] sm:$0xff]
          %v7262 = vld [vmem:[#allocation11 + $0x88] sm:$0xff]
          %v7263 = vld [vmem:[#allocation11 + $0x90] sm:$0xff]
          %v7264 = vld [vmem:[#allocation11 + $0x98] sm:$0xff]
          %v7265 = vld [vmem:[#allocation11 + $0xa0] sm:$0xff]
          %v7266 = vld [vmem:[#allocation11 + $0xa8] sm:$0xff]
          %v7267 = vld [vmem:[#allocation11 + $0xb0] sm:$0xff]
          %v7268 = vld [vmem:[#allocation11 + $0xb8] sm:$0xff]
          %v7269 = vld [vmem:[#allocation11 + $0xc0] sm:$0xff]
          %v7270 = vld [vmem:[#allocation11 + $0xc8] sm:$0xff]
          %v7271 = vld [vmem:[#allocation11 + $0xd0] sm:$0xff]
          %v7272 = vld [vmem:[#allocation11 + $0xd8] sm:$0xff]
          %v7273 = vld [vmem:[#allocation11 + $0xe0] sm:$0xff]
          %v7274 = vld [vmem:[#allocation11 + $0xe8] sm:$0xff]
          %v7275 = vld [vmem:[#allocation11 + $0xf0] sm:$0xff]
          %v7276 = vld [vmem:[#allocation11 + $0xf8] sm:$0xff]
          %v7277 = vld [vmem:[#allocation11 + $0x100] sm:$0xff]
          %v7278 = vld [vmem:[#allocation11 + $0x108] sm:$0xff]
          %v7279 = vld [vmem:[#allocation11 + $0x110] sm:$0xff]
          %v7280 = vld [vmem:[#allocation11 + $0x118] sm:$0xff]
          %v7281 = vld [vmem:[#allocation11 + $0x120] sm:$0xff]
          %v7282 = vld [vmem:[#allocation11 + $0x128] sm:$0xff]
          %v7283 = vld [vmem:[#allocation11 + $0x130] sm:$0xff]
          %v7284 = vld [vmem:[#allocation11 + $0x138] sm:$0xff]
          %v7285 = vld [vmem:[#allocation11 + $0x140] sm:$0xff]
          %v7286 = vld [vmem:[#allocation11 + $0x148] sm:$0xff]
          %v7287 = vld [vmem:[#allocation11 + $0x150] sm:$0xff]
          %v7288 = vld [vmem:[#allocation11 + $0x158] sm:$0xff]
          %v7289 = vld [vmem:[#allocation11 + $0x160] sm:$0xff]
          %v7290 = vld [vmem:[#allocation11 + $0x168] sm:$0xff]
          %v7291 = vld [vmem:[#allocation11 + $0x170] sm:$0xff]
          %v7292 = vld [vmem:[#allocation11 + $0x178] sm:$0xff]
          %v7293 = vld [vmem:[#allocation11 + $0x180] sm:$0xff]
          %v7294 = vld [vmem:[#allocation11 + $0x188] sm:$0xff]
          %v7295 = vld [vmem:[#allocation11 + $0x190] sm:$0xff]
          %v7296 = vld [vmem:[#allocation11 + $0x198] sm:$0xff]
          %v7297 = vld [vmem:[#allocation11 + $0x1a0] sm:$0xff]
          %v7298 = vld [vmem:[#allocation11 + $0x1a8] sm:$0xff]
          %v7299 = vld [vmem:[#allocation11 + $0x1b0] sm:$0xff]
          %v7300 = vld [vmem:[#allocation11 + $0x1b8] sm:$0xff]
          %v7301 = vld [vmem:[#allocation11 + $0x1c0] sm:$0xff]
          %v7302 = vld [vmem:[#allocation11 + $0x1c8] sm:$0xff]
          %v7303 = vld [vmem:[#allocation11 + $0x1d0] sm:$0xff]
          %v7304 = vld [vmem:[#allocation11 + $0x1d8] sm:$0xff]
          %v7305 = vld [vmem:[#allocation11 + $0x1e0] sm:$0xff]
          %v7306 = vld [vmem:[#allocation11 + $0x1e8] sm:$0xff]
          %v7307 = vld [vmem:[#allocation11 + $0x1f0] sm:$0xff]
          %v7308 = vld [vmem:[#allocation11 + $0x1f8] sm:$0xff]
          %v7309 = vld [vmem:[#allocation11 + $0x200] sm:$0xff]
          %v7310 = vld [vmem:[#allocation11 + $0x208] sm:$0xff]
          %v7311 = vld [vmem:[#allocation11 + $0x210] sm:$0xff]
          %v7312 = vld [vmem:[#allocation11 + $0x218] sm:$0xff]
          %v7313 = vld [vmem:[#allocation11 + $0x220] sm:$0xff]
          %v7314 = vld [vmem:[#allocation11 + $0x228] sm:$0xff]
          %v7315 = vld [vmem:[#allocation11 + $0x230] sm:$0xff]
          %v7316 = vld [vmem:[#allocation11 + $0x238] sm:$0xff]
          %v7317 = vld [vmem:[#allocation11 + $0x240] sm:$0xff]
          %v7318 = vld [vmem:[#allocation11 + $0x248] sm:$0xff]
          %v7319 = vld [vmem:[#allocation11 + $0x250] sm:$0xff]
          %v7320 = vld [vmem:[#allocation11 + $0x258] sm:$0xff]
          %v7321 = vld [vmem:[#allocation11 + $0x260] sm:$0xff]
          %v7322 = vld [vmem:[#allocation11 + $0x268] sm:$0xff]
          %v7323 = vld [vmem:[#allocation11 + $0x270] sm:$0xff]
          %v7324 = vld [vmem:[#allocation11 + $0x278] sm:$0xff]
          %v7325 = vld [vmem:[#allocation11 + $0x280] sm:$0xff]
          %v7326 = vld [vmem:[#allocation11 + $0x288] sm:$0xff]
          %v7327 = vld [vmem:[#allocation11 + $0x290] sm:$0xff]
          %v7328 = vld [vmem:[#allocation11 + $0x298] sm:$0xff]
          %v7329 = vld [vmem:[#allocation11 + $0x2a0] sm:$0xff]
          %v7330 = vld [vmem:[#allocation11 + $0x2a8] sm:$0xff]
          %v7331 = vld [vmem:[#allocation11 + $0x2b0] sm:$0xff]
          %v7332 = vld [vmem:[#allocation11 + $0x2b8] sm:$0xff]
          %v7333 = vld [vmem:[#allocation11 + $0x2c0] sm:$0xff]
          %v7334 = vld [vmem:[#allocation11 + $0x2c8] sm:$0xff]
          %v7335 = vld [vmem:[#allocation11 + $0x2d0] sm:$0xff]
          %v7336 = vld [vmem:[#allocation11 + $0x2d8] sm:$0xff]
          %v7337 = vld [vmem:[#allocation11 + $0x2e0] sm:$0xff]
          %v7338 = vld [vmem:[#allocation11 + $0x2e8] sm:$0xff]
          %v7339 = vld [vmem:[#allocation11 + $0x2f0] sm:$0xff]
          %v7340 = vld [vmem:[#allocation11 + $0x2f8] sm:$0xff]
          %v7341 = vld [vmem:[#allocation11 + $0x300] sm:$0xff]
          %v7342 = vld [vmem:[#allocation11 + $0x308] sm:$0xff]
          %v7343 = vld [vmem:[#allocation11 + $0x310] sm:$0xff]
          %v7344 = vld [vmem:[#allocation11 + $0x318] sm:$0xff]
          %v7345 = vld [vmem:[#allocation11 + $0x320] sm:$0xff]
          %v7346 = vld [vmem:[#allocation11 + $0x328] sm:$0xff]
          %v7347 = vld [vmem:[#allocation11 + $0x330] sm:$0xff]
          %v7348 = vld [vmem:[#allocation11 + $0x338] sm:$0xff]
          %v7349 = vld [vmem:[#allocation11 + $0x340] sm:$0xff]
          %v7350 = vld [vmem:[#allocation11 + $0x348] sm:$0xff]
          %v7351 = vld [vmem:[#allocation11 + $0x350] sm:$0xff]
          %v7352 = vld [vmem:[#allocation11 + $0x358] sm:$0xff]
          %v7353 = vld [vmem:[#allocation11 + $0x360] sm:$0xff]
          %v7354 = vld [vmem:[#allocation11 + $0x368] sm:$0xff]
          %v7355 = vld [vmem:[#allocation11 + $0x370] sm:$0xff]
          %v7356 = vld [vmem:[#allocation11 + $0x378] sm:$0xff]
          %v7357 = vld [vmem:[#allocation11 + $0x380] sm:$0xff]
          %v7358 = vld [vmem:[#allocation11 + $0x388] sm:$0xff]
          %v7359 = vld [vmem:[#allocation11 + $0x390] sm:$0xff]
          %v7360 = vld [vmem:[#allocation11 + $0x398] sm:$0xff]
          %v7361 = vld [vmem:[#allocation11 + $0x3a0] sm:$0xff]
          %v7362 = vld [vmem:[#allocation11 + $0x3a8] sm:$0xff]
          %v7363 = vld [vmem:[#allocation11 + $0x3b0] sm:$0xff]
          %v7364 = vld [vmem:[#allocation11 + $0x3b8] sm:$0xff]
          %v7365 = vld [vmem:[#allocation11 + $0x3c0] sm:$0xff]
          %v7366 = vld [vmem:[#allocation11 + $0x3c8] sm:$0xff]
          %v7367 = vld [vmem:[#allocation11 + $0x3d0] sm:$0xff]
          %v7368 = vld [vmem:[#allocation11 + $0x3d8] sm:$0xff]
          %v7369 = vld [vmem:[#allocation11 + $0x3e0] sm:$0xff]
          %v7370 = vld [vmem:[#allocation11 + $0x3e8] sm:$0xff]
          %v7371 = vld [vmem:[#allocation11 + $0x3f0] sm:$0xff]
          %v7372 = vld [vmem:[#allocation11 + $0x3f8] sm:$0xff]
          %v7375 = vlaneseq
          %v7376 = vshrl.u32 %v7375, 7
          %v7377 = vsub.s32 0, %v7376
          %v7378 = vrot.slane %v7227, %v7377
          %v7379 = vlaneseq
          %v7380 = vshrl.u32 %v7379, 7
          %v7381 = vsub.s32 4, %v7380
          %v7382 = vrot.slane %v7227, %v7381
          %v7383 = vlaneseq
          %v7384 = vshrl.u32 %v7383, 7
          %v7385 = vsub.s32 0, %v7384
          %v7386 = vrot.slane %v7228, %v7385
          %v7387 = vlaneseq
          %v7388 = vshrl.u32 %v7387, 7
          %v7389 = vsub.s32 4, %v7388
          %v7390 = vrot.slane %v7228, %v7389
          %v7395 = vlaneseq
          %v7396 = vshrl.u32 %v7395, 7
          %v7397 = vsub.s32 0, %v7396
          %v7398 = vrot.slane %v7378, %v7397
          %v7399 = vlaneseq
          %v7400 = vshrl.u32 %v7399, 7
          %v7401 = vsub.s32 0, %v7400
          %v7402 = vrot.slane %v7382, %v7401
          %v7403 = vlaneseq
          %v7404 = vshrl.u32 %v7403, 7
          %v7405 = vsub.s32 0, %v7404
          %v7406 = vrot.slane %v7386, %v7405
          %v7407 = vlaneseq
          %v7408 = vshrl.u32 %v7407, 7
          %v7409 = vsub.s32 0, %v7408
          %v7410 = vrot.slane %v7390, %v7409
          %v7419 = vunpack.c.l.b16 %v7237
          %v7420 = vunpack.c.l.b16 %v7238
          %v7421 = vunpack.c.l.b16 %v7239
          %v7422 = vunpack.c.l.b16 %v7240
          %v7423 = vunpack.c.l.b16 %v7241
          %v7424 = vunpack.c.l.b16 %v7242
          %v7425 = vunpack.c.l.b16 %v7243
          %v7426 = vunpack.c.l.b16 %v7244
          %v7427 = vrot.slane %v7423, 7
          %vm7428 = vcmask 1041409
          %v7429 = vsel %vm7428, %v7427, %v7419
          %v7430 = vrot.slane %v7424, 7
          %v7431 = vsel %vm7428, %v7430, %v7420
          %v7432 = vrot.slane %v7425, 7
          %v7433 = vsel %vm7428, %v7432, %v7421
          %v7434 = vrot.slane %v7426, 7
          %v7435 = vsel %vm7428, %v7434, %v7422
          %v7436 = vpack.c.b16 %v7429, %v7429
          %v7437 = vpack.c.b16 %v7431, %v7431
          %v7438 = vpack.c.b16 %v7433, %v7433
          %v7439 = vpack.c.b16 %v7435, %v7435
          %v7572 = vunpack.c.l.b16 %v7245
          %v7573 = vunpack.c.h.b16 %v7245
          %v7574 = vunpack.c.l.b16 %v7246
          %v7575 = vunpack.c.h.b16 %v7246
          %v7576 = vunpack.c.l.b16 %v7247
          %v7577 = vunpack.c.h.b16 %v7247
          %v7578 = vunpack.c.l.b16 %v7248
          %v7579 = vunpack.c.h.b16 %v7248
          %v7580 = vunpack.c.l.b16 %v7249
          %v7581 = vunpack.c.h.b16 %v7249
          %v7582 = vunpack.c.l.b16 %v7250
          %v7583 = vunpack.c.h.b16 %v7250
          %v7584 = vunpack.c.l.b16 %v7251
          %v7585 = vunpack.c.h.b16 %v7251
          %v7586 = vunpack.c.l.b16 %v7252
          %v7587 = vunpack.c.h.b16 %v7252
          %v7588 = vunpack.c.l.b16 %v7253
          %v7589 = vunpack.c.h.b16 %v7253
          %v7590 = vunpack.c.l.b16 %v7254
          %v7591 = vunpack.c.h.b16 %v7254
          %v7592 = vunpack.c.l.b16 %v7255
          %v7593 = vunpack.c.h.b16 %v7255
          %v7594 = vunpack.c.l.b16 %v7256
          %v7595 = vunpack.c.h.b16 %v7256
          %v7596 = vunpack.c.l.b16 %v7257
          %v7597 = vunpack.c.h.b16 %v7257
          %v7598 = vunpack.c.l.b16 %v7258
          %v7599 = vunpack.c.h.b16 %v7258
          %v7600 = vunpack.c.l.b16 %v7259
          %v7601 = vunpack.c.h.b16 %v7259
          %v7602 = vunpack.c.l.b16 %v7260
          %v7603 = vunpack.c.h.b16 %v7260
          %v7604 = vunpack.c.l.b16 %v7261
          %v7605 = vunpack.c.h.b16 %v7261
          %v7606 = vunpack.c.l.b16 %v7262
          %v7607 = vunpack.c.h.b16 %v7262
          %v7608 = vunpack.c.l.b16 %v7263
          %v7609 = vunpack.c.h.b16 %v7263
          %v7610 = vunpack.c.l.b16 %v7264
          %v7611 = vunpack.c.h.b16 %v7264
          %v7612 = vunpack.c.l.b16 %v7265
          %v7613 = vunpack.c.h.b16 %v7265
          %v7614 = vunpack.c.l.b16 %v7266
          %v7615 = vunpack.c.h.b16 %v7266
          %v7616 = vunpack.c.l.b16 %v7267
          %v7617 = vunpack.c.h.b16 %v7267
          %v7618 = vunpack.c.l.b16 %v7268
          %v7619 = vunpack.c.h.b16 %v7268
          %v7620 = vunpack.c.l.b16 %v7269
          %v7621 = vunpack.c.h.b16 %v7269
          %v7622 = vunpack.c.l.b16 %v7270
          %v7623 = vunpack.c.h.b16 %v7270
          %v7624 = vunpack.c.l.b16 %v7271
          %v7625 = vunpack.c.h.b16 %v7271
          %v7626 = vunpack.c.l.b16 %v7272
          %v7627 = vunpack.c.h.b16 %v7272
          %v7628 = vunpack.c.l.b16 %v7273
          %v7629 = vunpack.c.h.b16 %v7273
          %v7630 = vunpack.c.l.b16 %v7274
          %v7631 = vunpack.c.h.b16 %v7274
          %v7632 = vunpack.c.l.b16 %v7275
          %v7633 = vunpack.c.h.b16 %v7275
          %v7634 = vunpack.c.l.b16 %v7276
          %v7635 = vunpack.c.h.b16 %v7276
          %v7636 = vunpack.c.l.b16 %v7277
          %v7637 = vunpack.c.h.b16 %v7277
          %v7638 = vunpack.c.l.b16 %v7278
          %v7639 = vunpack.c.h.b16 %v7278
          %v7640 = vunpack.c.l.b16 %v7279
          %v7641 = vunpack.c.h.b16 %v7279
          %v7642 = vunpack.c.l.b16 %v7280
          %v7643 = vunpack.c.h.b16 %v7280
          %v7644 = vunpack.c.l.b16 %v7281
          %v7645 = vunpack.c.h.b16 %v7281
          %v7646 = vunpack.c.l.b16 %v7282
          %v7647 = vunpack.c.h.b16 %v7282
          %v7648 = vunpack.c.l.b16 %v7283
          %v7649 = vunpack.c.h.b16 %v7283
          %v7650 = vunpack.c.l.b16 %v7284
          %v7651 = vunpack.c.h.b16 %v7284
          %v7652 = vunpack.c.l.b16 %v7285
          %v7653 = vunpack.c.h.b16 %v7285
          %v7654 = vunpack.c.l.b16 %v7286
          %v7655 = vunpack.c.h.b16 %v7286
          %v7656 = vunpack.c.l.b16 %v7287
          %v7657 = vunpack.c.h.b16 %v7287
          %v7658 = vunpack.c.l.b16 %v7288
          %v7659 = vunpack.c.h.b16 %v7288
          %v7660 = vunpack.c.l.b16 %v7289
          %v7661 = vunpack.c.h.b16 %v7289
          %v7662 = vunpack.c.l.b16 %v7290
          %v7663 = vunpack.c.h.b16 %v7290
          %v7664 = vunpack.c.l.b16 %v7291
          %v7665 = vunpack.c.h.b16 %v7291
          %v7666 = vunpack.c.l.b16 %v7292
          %v7667 = vunpack.c.h.b16 %v7292
          %v7668 = vunpack.c.l.b16 %v7293
          %v7669 = vunpack.c.h.b16 %v7293
          %v7670 = vunpack.c.l.b16 %v7294
          %v7671 = vunpack.c.h.b16 %v7294
          %v7672 = vunpack.c.l.b16 %v7295
          %v7673 = vunpack.c.h.b16 %v7295
          %v7674 = vunpack.c.l.b16 %v7296
          %v7675 = vunpack.c.h.b16 %v7296
          %v7676 = vunpack.c.l.b16 %v7297
          %v7677 = vunpack.c.h.b16 %v7297
          %v7678 = vunpack.c.l.b16 %v7298
          %v7679 = vunpack.c.h.b16 %v7298
          %v7680 = vunpack.c.l.b16 %v7299
          %v7681 = vunpack.c.h.b16 %v7299
          %v7682 = vunpack.c.l.b16 %v7300
          %v7683 = vunpack.c.h.b16 %v7300
          %v7684 = vunpack.c.l.b16 %v7301
          %v7685 = vunpack.c.h.b16 %v7301
          %v7686 = vunpack.c.l.b16 %v7302
          %v7687 = vunpack.c.h.b16 %v7302
          %v7688 = vunpack.c.l.b16 %v7303
          %v7689 = vunpack.c.h.b16 %v7303
          %v7690 = vunpack.c.l.b16 %v7304
          %v7691 = vunpack.c.h.b16 %v7304
          %v7692 = vunpack.c.l.b16 %v7305
          %v7693 = vunpack.c.h.b16 %v7305
          %v7694 = vunpack.c.l.b16 %v7306
          %v7695 = vunpack.c.h.b16 %v7306
          %v7696 = vunpack.c.l.b16 %v7307
          %v7697 = vunpack.c.h.b16 %v7307
          %v7698 = vunpack.c.l.b16 %v7308
          %v7699 = vunpack.c.h.b16 %v7308
          %v7700 = vunpack.c.l.b16 %v7309
          %v7701 = vunpack.c.h.b16 %v7309
          %v7702 = vunpack.c.l.b16 %v7310
          %v7703 = vunpack.c.h.b16 %v7310
          %v7704 = vunpack.c.l.b16 %v7311
          %v7705 = vunpack.c.h.b16 %v7311
          %v7706 = vunpack.c.l.b16 %v7312
          %v7707 = vunpack.c.h.b16 %v7312
          %v7708 = vunpack.c.l.b16 %v7313
          %v7709 = vunpack.c.h.b16 %v7313
          %v7710 = vunpack.c.l.b16 %v7314
          %v7711 = vunpack.c.h.b16 %v7314
          %v7712 = vunpack.c.l.b16 %v7315
          %v7713 = vunpack.c.h.b16 %v7315
          %v7714 = vunpack.c.l.b16 %v7316
          %v7715 = vunpack.c.h.b16 %v7316
          %v7716 = vunpack.c.l.b16 %v7317
          %v7717 = vunpack.c.h.b16 %v7317
          %v7718 = vunpack.c.l.b16 %v7318
          %v7719 = vunpack.c.h.b16 %v7318
          %v7720 = vunpack.c.l.b16 %v7319
          %v7721 = vunpack.c.h.b16 %v7319
          %v7722 = vunpack.c.l.b16 %v7320
          %v7723 = vunpack.c.h.b16 %v7320
          %v7724 = vunpack.c.l.b16 %v7321
          %v7725 = vunpack.c.h.b16 %v7321
          %v7726 = vunpack.c.l.b16 %v7322
          %v7727 = vunpack.c.h.b16 %v7322
          %v7728 = vunpack.c.l.b16 %v7323
          %v7729 = vunpack.c.h.b16 %v7323
          %v7730 = vunpack.c.l.b16 %v7324
          %v7731 = vunpack.c.h.b16 %v7324
          %v7732 = vunpack.c.l.b16 %v7325
          %v7733 = vunpack.c.h.b16 %v7325
          %v7734 = vunpack.c.l.b16 %v7326
          %v7735 = vunpack.c.h.b16 %v7326
          %v7736 = vunpack.c.l.b16 %v7327
          %v7737 = vunpack.c.h.b16 %v7327
          %v7738 = vunpack.c.l.b16 %v7328
          %v7739 = vunpack.c.h.b16 %v7328
          %v7740 = vunpack.c.l.b16 %v7329
          %v7741 = vunpack.c.h.b16 %v7329
          %v7742 = vunpack.c.l.b16 %v7330
          %v7743 = vunpack.c.h.b16 %v7330
          %v7744 = vunpack.c.l.b16 %v7331
          %v7745 = vunpack.c.h.b16 %v7331
          %v7746 = vunpack.c.l.b16 %v7332
          %v7747 = vunpack.c.h.b16 %v7332
          %v7748 = vunpack.c.l.b16 %v7333
          %v7749 = vunpack.c.h.b16 %v7333
          %v7750 = vunpack.c.l.b16 %v7334
          %v7751 = vunpack.c.h.b16 %v7334
          %v7752 = vunpack.c.l.b16 %v7335
          %v7753 = vunpack.c.h.b16 %v7335
          %v7754 = vunpack.c.l.b16 %v7336
          %v7755 = vunpack.c.h.b16 %v7336
          %v7756 = vunpack.c.l.b16 %v7337
          %v7757 = vunpack.c.h.b16 %v7337
          %v7758 = vunpack.c.l.b16 %v7338
          %v7759 = vunpack.c.h.b16 %v7338
          %v7760 = vunpack.c.l.b16 %v7339
          %v7761 = vunpack.c.h.b16 %v7339
          %v7762 = vunpack.c.l.b16 %v7340
          %v7763 = vunpack.c.h.b16 %v7340
          %v7764 = vunpack.c.l.b16 %v7341
          %v7765 = vunpack.c.h.b16 %v7341
          %v7766 = vunpack.c.l.b16 %v7342
          %v7767 = vunpack.c.h.b16 %v7342
          %v7768 = vunpack.c.l.b16 %v7343
          %v7769 = vunpack.c.h.b16 %v7343
          %v7770 = vunpack.c.l.b16 %v7344
          %v7771 = vunpack.c.h.b16 %v7344
          %v7772 = vunpack.c.l.b16 %v7345
          %v7773 = vunpack.c.h.b16 %v7345
          %v7774 = vunpack.c.l.b16 %v7346
          %v7775 = vunpack.c.h.b16 %v7346
          %v7776 = vunpack.c.l.b16 %v7347
          %v7777 = vunpack.c.h.b16 %v7347
          %v7778 = vunpack.c.l.b16 %v7348
          %v7779 = vunpack.c.h.b16 %v7348
          %v7780 = vunpack.c.l.b16 %v7349
          %v7781 = vunpack.c.h.b16 %v7349
          %v7782 = vunpack.c.l.b16 %v7350
          %v7783 = vunpack.c.h.b16 %v7350
          %v7784 = vunpack.c.l.b16 %v7351
          %v7785 = vunpack.c.h.b16 %v7351
          %v7786 = vunpack.c.l.b16 %v7352
          %v7787 = vunpack.c.h.b16 %v7352
          %v7788 = vunpack.c.l.b16 %v7353
          %v7789 = vunpack.c.h.b16 %v7353
          %v7790 = vunpack.c.l.b16 %v7354
          %v7791 = vunpack.c.h.b16 %v7354
          %v7792 = vunpack.c.l.b16 %v7355
          %v7793 = vunpack.c.h.b16 %v7355
          %v7794 = vunpack.c.l.b16 %v7356
          %v7795 = vunpack.c.h.b16 %v7356
          %v7796 = vunpack.c.l.b16 %v7357
          %v7797 = vunpack.c.h.b16 %v7357
          %v7798 = vunpack.c.l.b16 %v7358
          %v7799 = vunpack.c.h.b16 %v7358
          %v7800 = vunpack.c.l.b16 %v7359
          %v7801 = vunpack.c.h.b16 %v7359
          %v7802 = vunpack.c.l.b16 %v7360
          %v7803 = vunpack.c.h.b16 %v7360
          %v7804 = vunpack.c.l.b16 %v7361
          %v7805 = vunpack.c.h.b16 %v7361
          %v7806 = vunpack.c.l.b16 %v7362
          %v7807 = vunpack.c.h.b16 %v7362
          %v7808 = vunpack.c.l.b16 %v7363
          %v7809 = vunpack.c.h.b16 %v7363
          %v7810 = vunpack.c.l.b16 %v7364
          %v7811 = vunpack.c.h.b16 %v7364
          %v7812 = vunpack.c.l.b16 %v7365
          %v7813 = vunpack.c.h.b16 %v7365
          %v7814 = vunpack.c.l.b16 %v7366
          %v7815 = vunpack.c.h.b16 %v7366
          %v7816 = vunpack.c.l.b16 %v7367
          %v7817 = vunpack.c.h.b16 %v7367
          %v7818 = vunpack.c.l.b16 %v7368
          %v7819 = vunpack.c.h.b16 %v7368
          %v7820 = vunpack.c.l.b16 %v7369
          %v7821 = vunpack.c.h.b16 %v7369
          %v7822 = vunpack.c.l.b16 %v7370
          %v7823 = vunpack.c.h.b16 %v7370
          %v7824 = vunpack.c.l.b16 %v7371
          %v7825 = vunpack.c.h.b16 %v7371
          %v7826 = vunpack.c.l.b16 %v7372
          %v7827 = vunpack.c.h.b16 %v7372
          %v7828 = vpack.c.b16 %v7576, %v7572
          %v7829 = vpack.c.b16 %v7577, %v7573
          %v7830 = vpack.c.b16 %v7578, %v7574
          %v7831 = vpack.c.b16 %v7579, %v7575
          %v7832 = vpack.c.b16 %v7584, %v7580
          %v7833 = vpack.c.b16 %v7585, %v7581
          %v7834 = vpack.c.b16 %v7586, %v7582
          %v7835 = vpack.c.b16 %v7587, %v7583
          %v7836 = vpack.c.b16 %v7592, %v7588
          %v7837 = vpack.c.b16 %v7593, %v7589
          %v7838 = vpack.c.b16 %v7594, %v7590
          %v7839 = vpack.c.b16 %v7595, %v7591
          %v7840 = vpack.c.b16 %v7600, %v7596
          %v7841 = vpack.c.b16 %v7601, %v7597
          %v7842 = vpack.c.b16 %v7602, %v7598
          %v7843 = vpack.c.b16 %v7603, %v7599
          %v7844 = vpack.c.b16 %v7608, %v7604
          %v7845 = vpack.c.b16 %v7609, %v7605
          %v7846 = vpack.c.b16 %v7610, %v7606
          %v7847 = vpack.c.b16 %v7611, %v7607
          %v7848 = vpack.c.b16 %v7616, %v7612
          %v7849 = vpack.c.b16 %v7617, %v7613
          %v7850 = vpack.c.b16 %v7618, %v7614
          %v7851 = vpack.c.b16 %v7619, %v7615
          %v7852 = vpack.c.b16 %v7624, %v7620
          %v7853 = vpack.c.b16 %v7625, %v7621
          %v7854 = vpack.c.b16 %v7626, %v7622
          %v7855 = vpack.c.b16 %v7627, %v7623
          %v7856 = vpack.c.b16 %v7632, %v7628
          %v7857 = vpack.c.b16 %v7633, %v7629
          %v7858 = vpack.c.b16 %v7634, %v7630
          %v7859 = vpack.c.b16 %v7635, %v7631
          %v7860 = vpack.c.b16 %v7640, %v7636
          %v7861 = vpack.c.b16 %v7641, %v7637
          %v7862 = vpack.c.b16 %v7642, %v7638
          %v7863 = vpack.c.b16 %v7643, %v7639
          %v7864 = vpack.c.b16 %v7648, %v7644
          %v7865 = vpack.c.b16 %v7649, %v7645
          %v7866 = vpack.c.b16 %v7650, %v7646
          %v7867 = vpack.c.b16 %v7651, %v7647
          %v7868 = vpack.c.b16 %v7656, %v7652
          %v7869 = vpack.c.b16 %v7657, %v7653
          %v7870 = vpack.c.b16 %v7658, %v7654
          %v7871 = vpack.c.b16 %v7659, %v7655
          %v7872 = vpack.c.b16 %v7664, %v7660
          %v7873 = vpack.c.b16 %v7665, %v7661
          %v7874 = vpack.c.b16 %v7666, %v7662
          %v7875 = vpack.c.b16 %v7667, %v7663
          %v7876 = vpack.c.b16 %v7672, %v7668
          %v7877 = vpack.c.b16 %v7673, %v7669
          %v7878 = vpack.c.b16 %v7674, %v7670
          %v7879 = vpack.c.b16 %v7675, %v7671
          %v7880 = vpack.c.b16 %v7680, %v7676
          %v7881 = vpack.c.b16 %v7681, %v7677
          %v7882 = vpack.c.b16 %v7682, %v7678
          %v7883 = vpack.c.b16 %v7683, %v7679
          %v7884 = vpack.c.b16 %v7688, %v7684
          %v7885 = vpack.c.b16 %v7689, %v7685
          %v7886 = vpack.c.b16 %v7690, %v7686
          %v7887 = vpack.c.b16 %v7691, %v7687
          %v7888 = vpack.c.b16 %v7696, %v7692
          %v7889 = vpack.c.b16 %v7697, %v7693
          %v7890 = vpack.c.b16 %v7698, %v7694
          %v7891 = vpack.c.b16 %v7699, %v7695
          %v7892 = vpack.c.b16 %v7704, %v7700
          %v7893 = vpack.c.b16 %v7705, %v7701
          %v7894 = vpack.c.b16 %v7706, %v7702
          %v7895 = vpack.c.b16 %v7707, %v7703
          %v7896 = vpack.c.b16 %v7712, %v7708
          %v7897 = vpack.c.b16 %v7713, %v7709
          %v7898 = vpack.c.b16 %v7714, %v7710
          %v7899 = vpack.c.b16 %v7715, %v7711
          %v7900 = vpack.c.b16 %v7720, %v7716
          %v7901 = vpack.c.b16 %v7721, %v7717
          %v7902 = vpack.c.b16 %v7722, %v7718
          %v7903 = vpack.c.b16 %v7723, %v7719
          %v7904 = vpack.c.b16 %v7728, %v7724
          %v7905 = vpack.c.b16 %v7729, %v7725
          %v7906 = vpack.c.b16 %v7730, %v7726
          %v7907 = vpack.c.b16 %v7731, %v7727
          %v7908 = vpack.c.b16 %v7736, %v7732
          %v7909 = vpack.c.b16 %v7737, %v7733
          %v7910 = vpack.c.b16 %v7738, %v7734
          %v7911 = vpack.c.b16 %v7739, %v7735
          %v7912 = vpack.c.b16 %v7744, %v7740
          %v7913 = vpack.c.b16 %v7745, %v7741
          %v7914 = vpack.c.b16 %v7746, %v7742
          %v7915 = vpack.c.b16 %v7747, %v7743
          %v7916 = vpack.c.b16 %v7752, %v7748
          %v7917 = vpack.c.b16 %v7753, %v7749
          %v7918 = vpack.c.b16 %v7754, %v7750
          %v7919 = vpack.c.b16 %v7755, %v7751
          %v7920 = vpack.c.b16 %v7760, %v7756
          %v7921 = vpack.c.b16 %v7761, %v7757
          %v7922 = vpack.c.b16 %v7762, %v7758
          %v7923 = vpack.c.b16 %v7763, %v7759
          %v7924 = vpack.c.b16 %v7768, %v7764
          %v7925 = vpack.c.b16 %v7769, %v7765
          %v7926 = vpack.c.b16 %v7770, %v7766
          %v7927 = vpack.c.b16 %v7771, %v7767
          %v7928 = vpack.c.b16 %v7776, %v7772
          %v7929 = vpack.c.b16 %v7777, %v7773
          %v7930 = vpack.c.b16 %v7778, %v7774
          %v7931 = vpack.c.b16 %v7779, %v7775
          %v7932 = vpack.c.b16 %v7784, %v7780
          %v7933 = vpack.c.b16 %v7785, %v7781
          %v7934 = vpack.c.b16 %v7786, %v7782
          %v7935 = vpack.c.b16 %v7787, %v7783
          %v7936 = vpack.c.b16 %v7792, %v7788
          %v7937 = vpack.c.b16 %v7793, %v7789
          %v7938 = vpack.c.b16 %v7794, %v7790
          %v7939 = vpack.c.b16 %v7795, %v7791
          %v7940 = vpack.c.b16 %v7800, %v7796
          %v7941 = vpack.c.b16 %v7801, %v7797
          %v7942 = vpack.c.b16 %v7802, %v7798
          %v7943 = vpack.c.b16 %v7803, %v7799
          %v7944 = vpack.c.b16 %v7808, %v7804
          %v7945 = vpack.c.b16 %v7809, %v7805
          %v7946 = vpack.c.b16 %v7810, %v7806
          %v7947 = vpack.c.b16 %v7811, %v7807
          %v7948 = vpack.c.b16 %v7816, %v7812
          %v7949 = vpack.c.b16 %v7817, %v7813
          %v7950 = vpack.c.b16 %v7818, %v7814
          %v7951 = vpack.c.b16 %v7819, %v7815
          %v7952 = vpack.c.b16 %v7824, %v7820
          %v7953 = vpack.c.b16 %v7825, %v7821
          %v7954 = vpack.c.b16 %v7826, %v7822
          %v7955 = vpack.c.b16 %v7827, %v7823
          %8084 = vmatprep.subr.bf16.mxu0 %v7857
          %8085 = vmatpush1.bf16.msra.mxu0 %v7856
          %8086 = vmatprep.subr.bf16.mxu0 %v7853
          %8087 = vmatpush1.bf16.msra.mxu0 %v7852
          %8088 = vmatprep.subr.bf16.mxu0 %v7849
          %8089 = vmatpush1.bf16.msra.mxu0 %v7848
          %8090 = vmatprep.subr.bf16.mxu0 %v7845
          %8091 = vmatpush1.bf16.msra.mxu0 %v7844
          %8092 = vmatprep.subr.bf16.mxu0 %v7841
          %8093 = vmatpush1.bf16.msra.mxu0 %v7840
          %8094 = vmatprep.subr.bf16.mxu0 %v7837
          %8095 = vmatpush1.bf16.msra.mxu0 %v7836
          %8096 = vmatprep.subr.bf16.mxu0 %v7833
          %8097 = vmatpush1.bf16.msra.mxu0 %v7832
          %8098 = vmatprep.subr.bf16.mxu0 %v7829
          %8099 = vmatpush1.bf16.msra.mxu0 %v7828
          %8100 = vmatprep.subr.bf16.mxu0 %v7889
          %8101 = vmatpush2.bf16.msra.mxu0 %v7888
          %8102 = vmatprep.subr.bf16.mxu0 %v7885
          %8103 = vmatpush2.bf16.msra.mxu0 %v7884
          %8104 = vmatprep.subr.bf16.mxu0 %v7881
          %8105 = vmatpush2.bf16.msra.mxu0 %v7880
          %8106 = vmatprep.subr.bf16.mxu0 %v7877
          %8107 = vmatpush2.bf16.msra.mxu0 %v7876
          %8108 = vmatprep.subr.bf16.mxu0 %v7873
          %8109 = vmatpush2.bf16.msra.mxu0 %v7872
          %8110 = vmatprep.subr.bf16.mxu0 %v7869
          %8111 = vmatpush2.bf16.msra.mxu0 %v7868
          %8112 = vmatprep.subr.bf16.mxu0 %v7865
          %8113 = vmatpush2.bf16.msra.mxu0 %v7864
          %8114 = vmatprep.subr.bf16.mxu0 %v7861
          %8115 = vmatpush2.bf16.msra.mxu0 %v7860
          %8116 = vmatprep.mubr.bf16.mxu0 %v7437
          %8117 = vmatmul.mubr.bf16.gmra.mxu0 %v7436
          %v8118 = vpop.f32.mrf.mxu0
          %v8119 = vadd.f32 %v7398, %v8118
          %v8120 = vpop.f32.mrf.mxu0
          %v8121 = vadd.f32 %v7402, %v8120
          %v8122 = vpop.f32.mrf.mxu0
          %v8123 = vpop.f32.mrf.mxu0
          %8124 = vdwg.mxu0
          %8125 = vmatprep.subr.bf16.mxu0 %v7921
          %8126 = vmatpush1.bf16.msra.mxu0 %v7920
          %8127 = vmatprep.subr.bf16.mxu0 %v7917
          %8128 = vmatpush1.bf16.msra.mxu0 %v7916
          %8129 = vmatprep.subr.bf16.mxu0 %v7913
          %8130 = vmatpush1.bf16.msra.mxu0 %v7912
          %8131 = vmatprep.subr.bf16.mxu0 %v7909
          %8132 = vmatpush1.bf16.msra.mxu0 %v7908
          %8133 = vmatprep.subr.bf16.mxu0 %v7905
          %8134 = vmatpush1.bf16.msra.mxu0 %v7904
          %8135 = vmatprep.subr.bf16.mxu0 %v7901
          %8136 = vmatpush1.bf16.msra.mxu0 %v7900
          %8137 = vmatprep.subr.bf16.mxu0 %v7897
          %8138 = vmatpush1.bf16.msra.mxu0 %v7896
          %8139 = vmatprep.subr.bf16.mxu0 %v7893
          %8140 = vmatpush1.bf16.msra.mxu0 %v7892
          %8141 = vmatprep.subr.bf16.mxu0 %v7953
          %8142 = vmatpush2.bf16.msra.mxu0 %v7952
          %8143 = vmatprep.subr.bf16.mxu0 %v7949
          %8144 = vmatpush2.bf16.msra.mxu0 %v7948
          %8145 = vmatprep.subr.bf16.mxu0 %v7945
          %8146 = vmatpush2.bf16.msra.mxu0 %v7944
          %8147 = vmatprep.subr.bf16.mxu0 %v7941
          %8148 = vmatpush2.bf16.msra.mxu0 %v7940
          %8149 = vmatprep.subr.bf16.mxu0 %v7937
          %8150 = vmatpush2.bf16.msra.mxu0 %v7936
          %8151 = vmatprep.subr.bf16.mxu0 %v7933
          %8152 = vmatpush2.bf16.msra.mxu0 %v7932
          %8153 = vmatprep.subr.bf16.mxu0 %v7929
          %8154 = vmatpush2.bf16.msra.mxu0 %v7928
          %8155 = vmatprep.subr.bf16.mxu0 %v7925
          %8156 = vmatpush2.bf16.msra.mxu0 %v7924
          %8157 = vmatprep.mubr.bf16.mxu0 %v7439
          %8158 = vmatmul.mubr.bf16.gmra.mxu0 %v7438
          %v8159 = vpop.f32.mrf.mxu0
          %v8160 = vadd.f32 %v8119, %v8159
          %v8161 = vpop.f32.mrf.mxu0
          %v8162 = vadd.f32 %v8121, %v8161
          %v8163 = vpop.f32.mrf.mxu0
          %v8164 = vpop.f32.mrf.mxu0
          %8165 = vdwg.mxu0
          %8166 = vmatprep.subr.bf16.mxu0 %v7859
          %8167 = vmatpush1.bf16.msra.mxu0 %v7858
          %8168 = vmatprep.subr.bf16.mxu0 %v7855
          %8169 = vmatpush1.bf16.msra.mxu0 %v7854
          %8170 = vmatprep.subr.bf16.mxu0 %v7851
          %8171 = vmatpush1.bf16.msra.mxu0 %v7850
          %8172 = vmatprep.subr.bf16.mxu0 %v7847
          %8173 = vmatpush1.bf16.msra.mxu0 %v7846
          %8174 = vmatprep.subr.bf16.mxu0 %v7843
          %8175 = vmatpush1.bf16.msra.mxu0 %v7842
          %8176 = vmatprep.subr.bf16.mxu0 %v7839
          %8177 = vmatpush1.bf16.msra.mxu0 %v7838
          %8178 = vmatprep.subr.bf16.mxu0 %v7835
          %8179 = vmatpush1.bf16.msra.mxu0 %v7834
          %8180 = vmatprep.subr.bf16.mxu0 %v7831
          %8181 = vmatpush1.bf16.msra.mxu0 %v7830
          %8182 = vmatprep.subr.bf16.mxu0 %v7891
          %8183 = vmatpush2.bf16.msra.mxu0 %v7890
          %8184 = vmatprep.subr.bf16.mxu0 %v7887
          %8185 = vmatpush2.bf16.msra.mxu0 %v7886
          %8186 = vmatprep.subr.bf16.mxu0 %v7883
          %8187 = vmatpush2.bf16.msra.mxu0 %v7882
          %8188 = vmatprep.subr.bf16.mxu0 %v7879
          %8189 = vmatpush2.bf16.msra.mxu0 %v7878
          %8190 = vmatprep.subr.bf16.mxu0 %v7875
          %8191 = vmatpush2.bf16.msra.mxu0 %v7874
          %8192 = vmatprep.subr.bf16.mxu0 %v7871
          %8193 = vmatpush2.bf16.msra.mxu0 %v7870
          %8194 = vmatprep.subr.bf16.mxu0 %v7867
          %8195 = vmatpush2.bf16.msra.mxu0 %v7866
          %8196 = vmatprep.subr.bf16.mxu0 %v7863
          %8197 = vmatpush2.bf16.msra.mxu0 %v7862
          %8198 = vmatprep.mubr.bf16.mxu0 %v7437
          %8199 = vmatmul.mubr.bf16.gmra.mxu0 %v7436
          %v8200 = vpop.f32.mrf.mxu0
          %v8201 = vadd.f32 %v7406, %v8200
          %v8202 = vpop.f32.mrf.mxu0
          %v8203 = vadd.f32 %v7410, %v8202
          %v8204 = vpop.f32.mrf.mxu0
          %v8205 = vpop.f32.mrf.mxu0
          %8206 = vdwg.mxu0
          %8207 = vmatprep.subr.bf16.mxu0 %v7923
          %8208 = vmatpush1.bf16.msra.mxu0 %v7922
          %8209 = vmatprep.subr.bf16.mxu0 %v7919
          %8210 = vmatpush1.bf16.msra.mxu0 %v7918
          %8211 = vmatprep.subr.bf16.mxu0 %v7915
          %8212 = vmatpush1.bf16.msra.mxu0 %v7914
          %8213 = vmatprep.subr.bf16.mxu0 %v7911
          %8214 = vmatpush1.bf16.msra.mxu0 %v7910
          %8215 = vmatprep.subr.bf16.mxu0 %v7907
          %8216 = vmatpush1.bf16.msra.mxu0 %v7906
          %8217 = vmatprep.subr.bf16.mxu0 %v7903
          %8218 = vmatpush1.bf16.msra.mxu0 %v7902
          %8219 = vmatprep.subr.bf16.mxu0 %v7899
          %8220 = vmatpush1.bf16.msra.mxu0 %v7898
          %8221 = vmatprep.subr.bf16.mxu0 %v7895
          %8222 = vmatpush1.bf16.msra.mxu0 %v7894
          %8223 = vmatprep.subr.bf16.mxu0 %v7955
          %8224 = vmatpush2.bf16.msra.mxu0 %v7954
          %8225 = vmatprep.subr.bf16.mxu0 %v7951
          %8226 = vmatpush2.bf16.msra.mxu0 %v7950
          %8227 = vmatprep.subr.bf16.mxu0 %v7947
          %8228 = vmatpush2.bf16.msra.mxu0 %v7946
          %8229 = vmatprep.subr.bf16.mxu0 %v7943
          %8230 = vmatpush2.bf16.msra.mxu0 %v7942
          %8231 = vmatprep.subr.bf16.mxu0 %v7939
          %8232 = vmatpush2.bf16.msra.mxu0 %v7938
          %8233 = vmatprep.subr.bf16.mxu0 %v7935
          %8234 = vmatpush2.bf16.msra.mxu0 %v7934
          %8235 = vmatprep.subr.bf16.mxu0 %v7931
          %8236 = vmatpush2.bf16.msra.mxu0 %v7930
          %8237 = vmatprep.subr.bf16.mxu0 %v7927
          %8238 = vmatpush2.bf16.msra.mxu0 %v7926
          %8239 = vmatprep.mubr.bf16.mxu0 %v7439
          %8240 = vmatmul.mubr.bf16.gmra.mxu0 %v7438
          %v8241 = vpop.f32.mrf.mxu0
          %v8242 = vadd.f32 %v8201, %v8241
          %v8243 = vpop.f32.mrf.mxu0
          %v8244 = vadd.f32 %v8203, %v8243
          %v8245 = vpop.f32.mrf.mxu0
          %v8246 = vpop.f32.mrf.mxu0
          %8247 = vdwg.mxu0
          %v8248 = vtanh.pop %v8160
          %v8249 = vtanh.pop %v8162
          %v8250 = vtanh.pop %v8242
          %v8251 = vtanh.pop %v8244
          %v8252 = vlaneseq
          %v8253 = vshrl.u32 %v8252, 7
          %v8254 = vsub.s32 1, %v8253
          %v8255 = vrot.slane %v7227, %v8254
          %v8256 = vlaneseq
          %v8257 = vshrl.u32 %v8256, 7
          %v8258 = vsub.s32 5, %v8257
          %v8259 = vrot.slane %v7227, %v8258
          %v8260 = vlaneseq
          %v8261 = vshrl.u32 %v8260, 7
          %v8262 = vsub.s32 1, %v8261
          %v8263 = vrot.slane %v7228, %v8262
          %v8264 = vlaneseq
          %v8265 = vshrl.u32 %v8264, 7
          %v8266 = vsub.s32 5, %v8265
          %v8267 = vrot.slane %v7228, %v8266
          %v8272 = vlaneseq
          %v8273 = vshrl.u32 %v8272, 7
          %v8274 = vsub.s32 1, %v8273
          %v8275 = vrot.slane %v8255, %v8274
          %v8276 = vlaneseq
          %v8277 = vshrl.u32 %v8276, 7
          %v8278 = vsub.s32 1, %v8277
          %v8279 = vrot.slane %v8259, %v8278
          %v8280 = vlaneseq
          %v8281 = vshrl.u32 %v8280, 7
          %v8282 = vsub.s32 1, %v8281
          %v8283 = vrot.slane %v8263, %v8282
          %v8284 = vlaneseq
          %v8285 = vshrl.u32 %v8284, 7
          %v8286 = vsub.s32 1, %v8285
          %v8287 = vrot.slane %v8267, %v8286
          %v8288 = vmul.f32 %v8248, %v8275
          %v8289 = vmul.f32 %v8249, %v8279
          %v8290 = vmul.f32 %v8250, %v8283
          %v8291 = vmul.f32 %v8251, %v8287
          %vm8292 = vcmask 1041408
          %v8293 = vsel %vm8292, %v8288, 0.0
          %v8294 = vsel %vm8292, %v8289, 0.0
          %v8295 = vadd.f32 %v8293, %v8294
          %v8296 = vsel %vm8292, %v8290, 0.0
          %v8297 = vadd.f32 %v8295, %v8296
          %v8298 = vsel %vm8292, %v8291, 0.0
          %v8299 = vadd.f32 %v8297, %v8298
          %8300 = vadd.xlane.f32.xlu0 %v8299
          %v8301 = vpop.xlane.xlu0 %8300
          %v8302 = vlaneseq
          %v8303 = vshrl.u32 %v8302, 7
          %v8304 = vsub.s32 2, %v8303
          %v8305 = vrot.slane %v7227, %v8304
          %v8306 = vadd.f32 %v8301, %v8305
          %8308 = vset.pattern.permute.xlu0 0
          %8309 = vperm.xlu0 %8308, %v8306
          %v8310 = vpop.permute.xlu0 %8309
          %8312 = vst [vmem:[%s993] sm:$0x3] %v8310
        $region136: #{mobilebert_classifier_forward.1} parent=95 // pred_fallthru
          _
        %p8313 = scmp.lt.s32.totalorder %s37, 0
        %s8314 = scalar_select %p8313, %s37, 0
        %s8315 = smul.addr %s8314, 2
        %s8316 = scalar_lea.vmem %s19, %s8315
        // Predicated region
        $region137: #{mobilebert_classifier_forward.1} parent=95 // pred_check
          %p8317 = pneg %p532
        $region138: #{mobilebert_classifier_forward.1} parent=95 // pred_check_branch
          %8319 = sbr.rel (%p8317) target = $region140
        $region139: #{mobilebert_classifier_forward.1} parent=95 // pred_region
          _
        $region140: #{mobilebert_classifier_forward.1} parent=95 // pred_fallthru
          _
        // Predicated region
        $region141: #{mobilebert_classifier_forward.1} parent=95 // pred_check
          %p8320 = pneg %p532
        $region142: #{mobilebert_classifier_forward.1} parent=95 // pred_check_branch
          %8322 = sbr.rel (%p8320) target = $region144
        $region143: #{mobilebert_classifier_forward.1} parent=95 // pred_region
          %p8323 = scmp.lt.s32.totalorder %s37, 0
          %s8324 = scalar_select %p8323, %s37, 0
          %s8325 = smul.addr %s8324, 2
          %s8326 = scalar_lea.vmem %s19, %s8325
        $region144: #{mobilebert_classifier_forward.1} parent=95 // pred_fallthru
          _
      $region96: #{mobilebert_classifier_forward.1} parent=5 // pred_fallthru
        _
      %p8327 = scmp.le.s32.totalorder 2, %s28
      // Predicated region
      $region145: #{mobilebert_classifier_forward.1} parent=5 // pred_check
        %p8328 = pneg %p8327
      $region146: #{mobilebert_classifier_forward.1} parent=5 // pred_check_branch
        %8330 = sbr.rel (%p8328) target = $region148
      $region147: #{mobilebert_classifier_forward.1} parent=5 // pred_region
        %s8331 = ssub.s32 %s28, 2
      $region148: #{mobilebert_classifier_forward.1} parent=5 // pred_fallthru
        _
    $region6: #{mobilebert_classifier_forward.1} parent=1 // loop_footer
      %s32 = sadd.s32 1, %s28
    $region7: #{mobilebert_classifier_forward.1} parent=1 // loop_footer_branch
      %27 = sbr.rel target = $region3
    $region8: #{mobilebert_classifier_forward.1} parent=1 // loop_exit
      _
    %8332 = vsyncpa [#allocation4], 1
    %s8333 = scalar_lea.sflag [#allocation4], 1
    %8334 = vsyncpa %s8333, 1
    %8335 = vsyncpa [#allocation6], 1
    %8336 = vsyncpa [#allocation13], 1

</llo_original>
